<compile_context>
chip_gen: v7x
topology: tpu7x:2x2x1
jax: 0.10.0
libtpu: 0.0.40
codegen_flags: <defaults>
</compile_context>

<pallas_src>
import functools

import jax
import jax.numpy as jnp
from jax.experimental import pallas as pl
from jax.experimental.pallas import tpu as pltpu

# synthetic small hyper-parameters (stand-ins for opt.*)
FEAT_ID = 16
FEAT_NID = 8
FEAT_NIZ = 16
NUM_CLS = 8
FEAT_G = 8                     # feat_G * 8 = 64 generator channels
LRELU_SLOPE = 0.2
BN_EPS = 1e-5


def _round_up(x, m):
    return (x + m - 1) // m * m


def _cpad(c):
    """Channel padding so 4*C (matmul K / N) is a multiple of 128."""
    return max(32, _round_up(c, 32))


# ---------------------------------------------------------------------------
# Pallas kernels
# ---------------------------------------------------------------------------
def _mm_bias_act_kernel(a_ref, b_ref, bias_ref, o_ref, *, act, slope):
    """Single-K-step matmul: out = act(A @ B + bias).  f32 accumulate/epilogue."""
    y = jnp.dot(a_ref[...], b_ref[...], preferred_element_type=jnp.float32)
    y = y + bias_ref[...]
    if act == "leaky_relu":
        y = jnp.where(y >= 0.0, y, y * slope)
    elif act == "tanh":
        y = jnp.tanh(y)
    o_ref[...] = y.astype(o_ref.dtype)


def matmul_bias_act(a, b, bias, act, out_dtype=jnp.bfloat16):
    """act(a @ b + bias).  K and N are multiples of 128 (channel padding), so the
    whole K/N fits in one block and the grid is 1-D over M only."""
    M, K = a.shape
    Kb, N = b.shape
    assert K == Kb and K % 128 == 0 and N % 128 == 0
    tm = min(1024, _round_up(M, 16))
    Mp = _round_up(M, tm)
    a_p = a if Mp == M else jnp.pad(a, ((0, Mp - M), (0, 0)))
    out = pl.pallas_call(
        functools.partial(_mm_bias_act_kernel, act=act, slope=LRELU_SLOPE),
        out_shape=jax.ShapeDtypeStruct((Mp, N), out_dtype),
        grid_spec=pltpu.PrefetchScalarGridSpec(
            num_scalar_prefetch=0,
            grid=(Mp // tm,),
            in_specs=[
                pl.BlockSpec((tm, K), lambda i: (i, 0)),
                pl.BlockSpec((K, N), lambda i: (0, 0)),
                pl.BlockSpec((1, N), lambda i: (0, 0)),
            ],
            out_specs=pl.BlockSpec((tm, N), lambda i: (i, 0)),
        ),
        compiler_params=pltpu.CompilerParams(
            dimension_semantics=("parallel",)),
    )(a_p.astype(jnp.bfloat16), b, bias)
    return out if Mp == M else out[:M]


def _fc_d1_kernel(x_ref, w1_ref, b1_ref, w2_ref, b2_ref, o_ref, *, slope):
    """Fused G_fc (Linear+BN1d+LeakyReLU) and the (6,2)-kernel deconv on a 1x1 input."""
    h = jnp.dot(x_ref[...], w1_ref[...], preferred_element_type=jnp.float32)
    h = h + b1_ref[...]
    h = jnp.where(h >= 0.0, h, h * slope).astype(jnp.bfloat16)
    y = jnp.dot(h, w2_ref[...], preferred_element_type=jnp.float32)
    y = y + b2_ref[...]
    y = jnp.where(y >= 0.0, y, y * slope)
    o_ref[...] = y.astype(o_ref.dtype)


def fc_d1_fused(x_p, fc_w, fc_b, d1_w, d1_b):
    Bp, Kp = x_p.shape
    H1 = fc_w.shape[1]
    N2 = d1_w.shape[1]
    return pl.pallas_call(
        functools.partial(_fc_d1_kernel, slope=LRELU_SLOPE),
        out_shape=jax.ShapeDtypeStruct((Bp, N2), jnp.bfloat16),
        grid_spec=pltpu.PrefetchScalarGridSpec(
            num_scalar_prefetch=0,
            grid=(1,),
            in_specs=[
                pl.BlockSpec((Bp, Kp), lambda i: (0, 0)),
                pl.BlockSpec((Kp, H1), lambda i: (0, 0)),
                pl.BlockSpec((1, H1), lambda i: (0, 0)),
                pl.BlockSpec((H1, N2), lambda i: (0, 0)),
                pl.BlockSpec((1, N2), lambda i: (0, 0)),
            ],
            out_specs=pl.BlockSpec((Bp, N2), lambda i: (0, 0)),
        ),
        compiler_params=pltpu.CompilerParams(
            dimension_semantics=("arbitrary",)),
    )(x_p, fc_w, fc_b, d1_w, d1_b)


# ---------------------------------------------------------------------------
# Sub-pixel ConvTranspose2d(k=4, s=2, p=1) glue
# ---------------------------------------------------------------------------
def _subpixel_patches(x_pad):
    """x_pad: zero-bordered NHWC (N, H+2, W+2, C) -> ((N*(H+1)*(W+1), 4*C), H+1, W+1).
    Each row is one 2x2 input window; all four output phases share it."""
    n, hp, wp, c = x_pad.shape
    hq, wq = hp - 1, wp - 1
    p = jnp.concatenate(
        [x_pad[:, :hq, :wq, :], x_pad[:, :hq, 1:, :],
         x_pad[:, 1:, :wq, :], x_pad[:, 1:, 1:, :]], axis=-1)
    return p.reshape(n * hq * wq, 4 * c), hq, wq


def _zero_border(y):
    """Zero the garbage border rows/cols; the result doubles as the next layer's
    spatially padded input."""
    n, h, w, c = y.shape
    rok = (jnp.arange(h) > 0) & (jnp.arange(h) < h - 1)
    cok = (jnp.arange(w) > 0) & (jnp.arange(w) < w - 1)
    mask = rok[None, :, None, None] & cok[None, None, :, None]
    return jnp.where(mask, y, jnp.zeros((), y.dtype))


def deconv4s2p1(x_pad, w_mat, bias, act, out_dtype=jnp.bfloat16, keep_c=None):
    """ConvTranspose2d(k=4, s=2, p=1) + folded BN + activation, sub-pixel form.
    Returns the interleaved output in 'bordered' layout (N, 2H+2, 2W+2, Cout*):
    rows/cols 0 and -1 are invalid and must be zeroed (next layer) or sliced (final)."""
    n = x_pad.shape[0]
    coutp = w_mat.shape[1] // 4
    a, hq, wq = _subpixel_patches(x_pad)
    out = matmul_bias_act(a, w_mat, bias, act, out_dtype)         # (M, 4*coutp)
    y = out.reshape(n, hq, wq, 2, 2, coutp)
    if keep_c is not None:
        y = y[..., :keep_c]
        coutp = keep_c
    y = jnp.transpose(y, (0, 1, 3, 2, 4, 5)).reshape(n, 2 * hq, 2 * wq, coutp)
    return y


# ---------------------------------------------------------------------------
# Parameter construction (deterministic synthetic init mimicking init_weights)
# ---------------------------------------------------------------------------
def _bn2d_fold(key, c):
    gamma = 1.0 + 0.02 * jax.random.normal(key, (c,), jnp.float32)  # weights_init_normal
    beta = jnp.zeros((c,), jnp.float32)
    scale = gamma / jnp.sqrt(1.0 + BN_EPS)      # eval mode: mean=0, var=1
    return scale, beta


def _subpixel_weight(w_pt, cin_pad, cout_pad):
    """PyTorch ConvTranspose2d weight (Cin, Cout, 4, 4) -> stacked sub-pixel matmul
    weight (4*cin_pad, 4*cout_pad).  Rows: (ty, tx, ci) over the 2x2 input window;
    cols: (a, b, co) over the 2x2 output phase.  Kernel tap = taps[phase][window_tap]."""
    cin, cout = w_pt.shape[0], w_pt.shape[1]
    taps = ((2, 0), (3, 1))
    rows = []
    for ty in range(2):
        for tx in range(2):
            cols = []
            for a in range(2):
                for b in range(2):
                    blk = w_pt[:, :, taps[a][ty], taps[b][tx]]        # (cin, cout)
                    blk = jnp.pad(blk, ((0, cin_pad - cin), (0, cout_pad - cout)))
                    cols.append(blk)
            rows.append(jnp.concatenate(cols, axis=1))                # (cin_pad, 4*cout_pad)
    return jnp.concatenate(rows, axis=0)                              # (4*cin_pad, 4*cout_pad)


def generator_params(key):
    g8, g4, g2, g1 = FEAT_G * 8, FEAT_G * 4, FEAT_G * 2, FEAT_G
    in_dim = FEAT_ID * 8 * 2 + FEAT_NID * 8 + FEAT_NIZ + NUM_CLS      # 344
    in_dim_p = _round_up(in_dim, 128)                                 # 384
    h_pad = 128                                                       # fc hidden (64) padded
    ks = jax.random.split(key, 16)
    P = {}

    # G_fc: Linear(in_dim, g8) (bias=0) + BatchNorm1d(g8), both folded.
    w = jax.random.normal(ks[0], (in_dim, g8), jnp.float32) * (2.0 / g8) ** 0.5
    scale = jnp.ones((g8,), jnp.float32) / jnp.sqrt(1.0 + BN_EPS)     # BN1d default init
    w = w * scale[None, :]
    P["fc_w"] = jnp.pad(w, ((0, in_dim_p - in_dim), (0, h_pad - g8))).astype(jnp.bfloat16)
    P["fc_b"] = jnp.zeros((1, h_pad), jnp.float32)

    # First ConvTranspose2d(g8, g8, kernel=(6,2)) on a 1x1 input == matmul to (6,2,g8).
    kh, kw = 6, 2
    w = jax.random.normal(ks[1], (g8, g8, kh, kw), jnp.float32) * (2.0 / (g8 * kh * kw)) ** 0.5
    s, b = _bn2d_fold(ks[2], g8)
    w = w * s[None, :, None, None]
    d1 = jnp.transpose(w, (0, 2, 3, 1)).reshape(g8, kh * kw * g8)     # (64, 768)
    P["d1_w"] = jnp.pad(d1, ((0, h_pad - g8), (0, 0))).astype(jnp.bfloat16)
    P["d1_b"] = jnp.tile(b, kh * kw).reshape(1, kh * kw * g8).astype(jnp.float32)

    # Stride-2, k=4, p=1 transposed convs (BN folded); final layer no BN, Tanh.
    chans = [(g8, g8), (g8, g8), (g8, g4), (g4, g2), (g2, g1), (g1, 3)]
    layers = []
    kidx = 3
    for li, (cin, cout) in enumerate(chans):
        last = li == len(chans) - 1
        cinp, coutp = _cpad(cin), _cpad(cout)
        w = jax.random.normal(ks[kidx], (cin, cout, 4, 4), jnp.float32) * (2.0 / (cout * 16)) ** 0.5
        kidx += 1
        if last:
            beta = jnp.zeros((cout,), jnp.float32)
        else:
            s, beta = _bn2d_fold(ks[kidx], cout)
            kidx += 1
            w = w * s[None, :, None, None]
        w_mat = _subpixel_weight(w, cinp, coutp).astype(jnp.bfloat16)
        bias = jnp.tile(jnp.pad(beta, (0, coutp - cout)), 4).reshape(1, 4 * coutp)
        layers.append(dict(w=w_mat, b=bias.astype(jnp.float32)))
    P["deconv"] = layers
    return P


# ---------------------------------------------------------------------------
# Forward pass (whole graph jitted; 7 pallas_calls total)
# ---------------------------------------------------------------------------
@jax.jit
def generator_forward(params, inputs, labels):
    # combine = inputs[:, :2560] is computed but unused in the reference forward.
    x = jnp.concatenate([inputs, labels], axis=1)                     # (B, 344)
    bsz = x.shape[0]
    bp = _round_up(max(bsz, 16), 16)
    in_dim_p = params["fc_w"].shape[0]
    x_p = jnp.pad(x, ((0, bp - bsz), (0, in_dim_p - x.shape[1]))).astype(jnp.bfloat16)

    # G_fc (Linear+BN1d+LeakyReLU, Dropout=identity) fused with the (6,2) deconv-on-1x1.
    h = fc_d1_fused(x_p, params["fc_w"], params["fc_b"], params["d1_w"], params["d1_b"])
    x_pad = jnp.pad(h[:bsz].reshape(bsz, 6, 2, FEAT_G * 8),
                    ((0, 0), (1, 1), (1, 1), (0, 0)))                 # zero-bordered NHWC

    n_layers = len(params["deconv"])
    out = None
    for li, layer in enumerate(params["deconv"]):
        last = li == n_layers - 1
        if last:
            y = deconv4s2p1(x_pad, layer["w"], layer["b"], "tanh",
                            out_dtype=jnp.float32, keep_c=3)
            out = y[:, 1:-1, 1:-1, :]                                 # drop invalid border
        else:
            y = deconv4s2p1(x_pad, layer["w"], layer["b"], "leaky_relu")
            x_pad = _zero_border(y)                                   # becomes next padding
    return jnp.transpose(out, (0, 3, 1, 2))                           # NCHW like PyTorch


# ---------------------------------------------------------------------------
if __name__ == "__main__":
    key = jax.random.PRNGKey(0)
    kp, kx, kl = jax.random.split(key, 3)
    params = generator_params(kp)

    B = 2
    in_dim = FEAT_ID * 8 * 2 + FEAT_NID * 8 + FEAT_NIZ                # 336
    inputs = jax.random.normal(kx, (B, in_dim), jnp.float32)
    labels = jax.nn.one_hot(
        jax.random.randint(kl, (B,), 0, NUM_CLS), NUM_CLS, dtype=jnp.float32)

    out = generator_forward(params, inputs, labels)
    out = jax.block_until_ready(out)

    # 1x1 -> (6,2) -> six stride-2 upsamplings -> (384, 128), 3 output channels, tanh.
    assert out.shape == (B, 3, 384, 128)
    assert bool(jnp.all(jnp.isfinite(out)))
    assert bool(jnp.all(jnp.abs(out) <= 1.0 + 1e-6))
    assert float(jnp.std(out)) > 0.0
    print("KERNEL_OK")
</pallas_src>

<mosaic_0001>
module attributes {stable_mosaic.version = 11 : i64} {
  func.func @_fc_d1_kernel(%arg0: i32, %arg1: memref<16x384xbf16, #tpu.memory_space<vmem>>, %arg2: memref<384x128xbf16, #tpu.memory_space<vmem>>, %arg3: memref<1x128xf32, #tpu.memory_space<vmem>>, %arg4: memref<128x768xbf16, #tpu.memory_space<vmem>>, %arg5: memref<1x768xf32, #tpu.memory_space<vmem>>, %arg6: memref<16x768xbf16, #tpu.memory_space<vmem>>) attributes {dimension_semantics = [#tpu.dimension_semantics<arbitrary>], iteration_bounds = array<i64: 1>, scalar_prefetch = 0 : i64, scratch_operands = 0 : i64, tpu.core_type = #tpu.core_type<tc>, window_params = [{pipeline_mode = #tpu.pipeline_mode<synchronous>, transform_indices = @transform_0, window_bounds = array<i64: 16, 384>}, {pipeline_mode = #tpu.pipeline_mode<synchronous>, transform_indices = @transform_1, window_bounds = array<i64: 384, 128>}, {pipeline_mode = #tpu.pipeline_mode<synchronous>, transform_indices = @transform_2, window_bounds = array<i64: 1, 128>}, {pipeline_mode = #tpu.pipeline_mode<synchronous>, transform_indices = @transform_3, window_bounds = array<i64: 128, 768>}, {pipeline_mode = #tpu.pipeline_mode<synchronous>, transform_indices = @transform_4, window_bounds = array<i64: 1, 768>}, {pipeline_mode = #tpu.pipeline_mode<synchronous>, transform_indices = @transform_5, window_bounds = array<i64: 16, 768>}]} {
    %c0 = arith.constant 0 : index
    %c0_0 = arith.constant 0 : index
    %0 = vector.load %arg1[%c0, %c0_0] : memref<16x384xbf16, #tpu.memory_space<vmem>>, vector<16x384xbf16>
    %c0_1 = arith.constant 0 : index
    %c0_2 = arith.constant 0 : index
    %1 = vector.load %arg2[%c0_1, %c0_2] : memref<384x128xbf16, #tpu.memory_space<vmem>>, vector<384x128xbf16>
    %cst = arith.constant dense<0.000000e+00> : vector<16x128xf32>
    %2 = tpu.matmul %0, %1, %cst {dimension_numbers = #tpu.dot_dimension_numbers<[1], [0], [0], [1], [0, 0, 1, 1], [], []>} : vector<16x384xbf16>, vector<384x128xbf16>, vector<16x128xf32> -> vector<16x128xf32>
    %c0_3 = arith.constant 0 : index
    %c0_4 = arith.constant 0 : index
    %3 = vector.load %arg3[%c0_3, %c0_4] : memref<1x128xf32, #tpu.memory_space<vmem>>, vector<1x128xf32>
    %4 = vector.broadcast %3 : vector<1x128xf32> to vector<16x128xf32>
    %5 = arith.addf %2, %4 : vector<16x128xf32>
    %cst_5 = arith.constant 0.000000e+00 : f32
    %6 = vector.broadcast %cst_5 : f32 to vector<16x128xf32>
    %7 = arith.cmpf oge, %5, %6 : vector<16x128xf32>
    %cst_6 = arith.constant 2.000000e-01 : f32
    %8 = vector.broadcast %cst_6 : f32 to vector<16x128xf32>
    %9 = arith.mulf %5, %8 : vector<16x128xf32>
    %10 = arith.select %7, %5, %9 : vector<16x128xi1>, vector<16x128xf32>
    %11 = arith.truncf %10 : vector<16x128xf32> to vector<16x128xbf16>
    %c0_7 = arith.constant 0 : index
    %c0_8 = arith.constant 0 : index
    %12 = vector.load %arg4[%c0_7, %c0_8] : memref<128x768xbf16, #tpu.memory_space<vmem>>, vector<128x768xbf16>
    %cst_9 = arith.constant dense<0.000000e+00> : vector<16x768xf32>
    %13 = tpu.matmul %11, %12, %cst_9 {dimension_numbers = #tpu.dot_dimension_numbers<[1], [0], [0], [1], [0, 0, 1, 1], [], []>} : vector<16x128xbf16>, vector<128x768xbf16>, vector<16x768xf32> -> vector<16x768xf32>
    %c0_10 = arith.constant 0 : index
    %c0_11 = arith.constant 0 : index
    %14 = vector.load %arg5[%c0_10, %c0_11] : memref<1x768xf32, #tpu.memory_space<vmem>>, vector<1x768xf32>
    %15 = vector.broadcast %14 : vector<1x768xf32> to vector<16x768xf32>
    %16 = arith.addf %13, %15 : vector<16x768xf32>
    %cst_12 = arith.constant 0.000000e+00 : f32
    %17 = vector.broadcast %cst_12 : f32 to vector<16x768xf32>
    %18 = arith.cmpf oge, %16, %17 : vector<16x768xf32>
    %cst_13 = arith.constant 2.000000e-01 : f32
    %19 = vector.broadcast %cst_13 : f32 to vector<16x768xf32>
    %20 = arith.mulf %16, %19 : vector<16x768xf32>
    %21 = arith.select %18, %16, %20 : vector<16x768xi1>, vector<16x768xf32>
    %22 = arith.truncf %21 : vector<16x768xf32> to vector<16x768xbf16>
    %c0_14 = arith.constant 0 : index
    %c0_15 = arith.constant 0 : index
    %23 = vector.load %arg6[%c0_14, %c0_15] : memref<16x768xbf16, #tpu.memory_space<vmem>>, vector<16x768xbf16>
    tpu.vector_store %arg6[%c0_14, %c0_15], %22 {strides = array<i32>} : memref<16x768xbf16, #tpu.memory_space<vmem>>, vector<16x768xbf16>,
    return
  }
  func.func @transform_0(%arg0: i32) -> (i32, i32) {
    %c0_i32 = arith.constant 0 : i32
    %c0_i32_0 = arith.constant 0 : i32
    %c0_i32_1 = arith.constant 0 : i32
    return %c0_i32, %c0_i32_0 : i32, i32
  }
  func.func @transform_1(%arg0: i32) -> (i32, i32) {
    %c0_i32 = arith.constant 0 : i32
    %c0_i32_0 = arith.constant 0 : i32
    %c0_i32_1 = arith.constant 0 : i32
    return %c0_i32, %c0_i32_0 : i32, i32
  }
  func.func @transform_2(%arg0: i32) -> (i32, i32) {
    %c0_i32 = arith.constant 0 : i32
    %c0_i32_0 = arith.constant 0 : i32
    %c0_i32_1 = arith.constant 0 : i32
    return %c0_i32, %c0_i32_0 : i32, i32
  }
  func.func @transform_3(%arg0: i32) -> (i32, i32) {
    %c0_i32 = arith.constant 0 : i32
    %c0_i32_0 = arith.constant 0 : i32
    %c0_i32_1 = arith.constant 0 : i32
    return %c0_i32, %c0_i32_0 : i32, i32
  }
  func.func @transform_4(%arg0: i32) -> (i32, i32) {
    %c0_i32 = arith.constant 0 : i32
    %c0_i32_0 = arith.constant 0 : i32
    %c0_i32_1 = arith.constant 0 : i32
    return %c0_i32, %c0_i32_0 : i32, i32
  }
  func.func @transform_5(%arg0: i32) -> (i32, i32) {
    %c0_i32 = arith.constant 0 : i32
    %c0_i32_0 = arith.constant 0 : i32
    %c0_i32_1 = arith.constant 0 : i32
    return %c0_i32, %c0_i32_0 : i32, i32
  }
}

module attributes {stable_mosaic.version = 11 : i64} {
  func.func @_mm_bias_act_kernel(%arg0: i32, %arg1: memref<48x256xbf16, #tpu.memory_space<vmem>>, %arg2: memref<256x256xbf16, #tpu.memory_space<vmem>>, %arg3: memref<1x256xf32, #tpu.memory_space<vmem>>, %arg4: memref<48x256xbf16, #tpu.memory_space<vmem>>) attributes {dimension_semantics = [#tpu.dimension_semantics<parallel>], iteration_bounds = array<i64: 1>, scalar_prefetch = 0 : i64, scratch_operands = 0 : i64, tpu.core_type = #tpu.core_type<tc>, window_params = [{transform_indices = @transform_0, window_bounds = array<i64: 48, 256>}, {pipeline_mode = #tpu.pipeline_mode<synchronous>, transform_indices = @transform_1, window_bounds = array<i64: 256, 256>}, {pipeline_mode = #tpu.pipeline_mode<synchronous>, transform_indices = @transform_2, window_bounds = array<i64: 1, 256>}, {transform_indices = @transform_3, window_bounds = array<i64: 48, 256>}]} {
    %c0 = arith.constant 0 : index
    %c0_0 = arith.constant 0 : index
    %0 = vector.load %arg1[%c0, %c0_0] : memref<48x256xbf16, #tpu.memory_space<vmem>>, vector<48x256xbf16>
    %c0_1 = arith.constant 0 : index
    %c0_2 = arith.constant 0 : index
    %1 = vector.load %arg2[%c0_1, %c0_2] : memref<256x256xbf16, #tpu.memory_space<vmem>>, vector<256x256xbf16>
    %cst = arith.constant dense<0.000000e+00> : vector<48x256xf32>
    %2 = tpu.matmul %0, %1, %cst {dimension_numbers = #tpu.dot_dimension_numbers<[1], [0], [0], [1], [0, 0, 1, 1], [], []>} : vector<48x256xbf16>, vector<256x256xbf16>, vector<48x256xf32> -> vector<48x256xf32>
    %c0_3 = arith.constant 0 : index
    %c0_4 = arith.constant 0 : index
    %3 = vector.load %arg3[%c0_3, %c0_4] : memref<1x256xf32, #tpu.memory_space<vmem>>, vector<1x256xf32>
    %4 = vector.broadcast %3 : vector<1x256xf32> to vector<48x256xf32>
    %5 = arith.addf %2, %4 : vector<48x256xf32>
    %cst_5 = arith.constant 0.000000e+00 : f32
    %6 = vector.broadcast %cst_5 : f32 to vector<48x256xf32>
    %7 = arith.cmpf oge, %5, %6 : vector<48x256xf32>
    %cst_6 = arith.constant 2.000000e-01 : f32
    %8 = vector.broadcast %cst_6 : f32 to vector<48x256xf32>
    %9 = arith.mulf %5, %8 : vector<48x256xf32>
    %10 = arith.select %7, %5, %9 : vector<48x256xi1>, vector<48x256xf32>
    %11 = arith.truncf %10 : vector<48x256xf32> to vector<48x256xbf16>
    %c0_7 = arith.constant 0 : index
    %c0_8 = arith.constant 0 : index
    %12 = vector.load %arg4[%c0_7, %c0_8] : memref<48x256xbf16, #tpu.memory_space<vmem>>, vector<48x256xbf16>
    tpu.vector_store %arg4[%c0_7, %c0_8], %11 {strides = array<i32>} : memref<48x256xbf16, #tpu.memory_space<vmem>>, vector<48x256xbf16>,
    return
  }
  func.func @transform_0(%arg0: i32) -> (i32, i32) {
    %c0_i32 = arith.constant 0 : i32
    %c0_i32_0 = arith.constant 0 : i32
    return %arg0, %c0_i32 : i32, i32
  }
  func.func @transform_1(%arg0: i32) -> (i32, i32) {
    %c0_i32 = arith.constant 0 : i32
    %c0_i32_0 = arith.constant 0 : i32
    %c0_i32_1 = arith.constant 0 : i32
    return %c0_i32, %c0_i32_0 : i32, i32
  }
  func.func @transform_2(%arg0: i32) -> (i32, i32) {
    %c0_i32 = arith.constant 0 : i32
    %c0_i32_0 = arith.constant 0 : i32
    %c0_i32_1 = arith.constant 0 : i32
    return %c0_i32, %c0_i32_0 : i32, i32
  }
  func.func @transform_3(%arg0: i32) -> (i32, i32) {
    %c0_i32 = arith.constant 0 : i32
    %c0_i32_0 = arith.constant 0 : i32
    return %arg0, %c0_i32 : i32, i32
  }
}

module attributes {stable_mosaic.version = 11 : i64} {
  func.func @_mm_bias_act_kernel(%arg0: i32, %arg1: memref<144x256xbf16, #tpu.memory_space<vmem>>, %arg2: memref<256x256xbf16, #tpu.memory_space<vmem>>, %arg3: memref<1x256xf32, #tpu.memory_space<vmem>>, %arg4: memref<144x256xbf16, #tpu.memory_space<vmem>>) attributes {dimension_semantics = [#tpu.dimension_semantics<parallel>], iteration_bounds = array<i64: 1>, scalar_prefetch = 0 : i64, scratch_operands = 0 : i64, tpu.core_type = #tpu.core_type<tc>, window_params = [{transform_indices = @transform_0, window_bounds = array<i64: 144, 256>}, {pipeline_mode = #tpu.pipeline_mode<synchronous>, transform_indices = @transform_1, window_bounds = array<i64: 256, 256>}, {pipeline_mode = #tpu.pipeline_mode<synchronous>, transform_indices = @transform_2, window_bounds = array<i64: 1, 256>}, {transform_indices = @transform_3, window_bounds = array<i64: 144, 256>}]} {
    %c0 = arith.constant 0 : index
    %c0_0 = arith.constant 0 : index
    %0 = vector.load %arg1[%c0, %c0_0] : memref<144x256xbf16, #tpu.memory_space<vmem>>, vector<144x256xbf16>
    %c0_1 = arith.constant 0 : index
    %c0_2 = arith.constant 0 : index
    %1 = vector.load %arg2[%c0_1, %c0_2] : memref<256x256xbf16, #tpu.memory_space<vmem>>, vector<256x256xbf16>
    %cst = arith.constant dense<0.000000e+00> : vector<144x256xf32>
    %2 = tpu.matmul %0, %1, %cst {dimension_numbers = #tpu.dot_dimension_numbers<[1], [0], [0], [1], [0, 0, 1, 1], [], []>} : vector<144x256xbf16>, vector<256x256xbf16>, vector<144x256xf32> -> vector<144x256xf32>
    %c0_3 = arith.constant 0 : index
    %c0_4 = arith.constant 0 : index
    %3 = vector.load %arg3[%c0_3, %c0_4] : memref<1x256xf32, #tpu.memory_space<vmem>>, vector<1x256xf32>
    %4 = vector.broadcast %3 : vector<1x256xf32> to vector<144x256xf32>
    %5 = arith.addf %2, %4 : vector<144x256xf32>
    %cst_5 = arith.constant 0.000000e+00 : f32
    %6 = vector.broadcast %cst_5 : f32 to vector<144x256xf32>
    %7 = arith.cmpf oge, %5, %6 : vector<144x256xf32>
    %cst_6 = arith.constant 2.000000e-01 : f32
    %8 = vector.broadcast %cst_6 : f32 to vector<144x256xf32>
    %9 = arith.mulf %5, %8 : vector<144x256xf32>
    %10 = arith.select %7, %5, %9 : vector<144x256xi1>, vector<144x256xf32>
    %11 = arith.truncf %10 : vector<144x256xf32> to vector<144x256xbf16>
    %c0_7 = arith.constant 0 : index
    %c0_8 = arith.constant 0 : index
    %12 = vector.load %arg4[%c0_7, %c0_8] : memref<144x256xbf16, #tpu.memory_space<vmem>>, vector<144x256xbf16>
    tpu.vector_store %arg4[%c0_7, %c0_8], %11 {strides = array<i32>} : memref<144x256xbf16, #tpu.memory_space<vmem>>, vector<144x256xbf16>,
    return
  }
  func.func @transform_0(%arg0: i32) -> (i32, i32) {
    %c0_i32 = arith.constant 0 : i32
    %c0_i32_0 = arith.constant 0 : i32
    return %arg0, %c0_i32 : i32, i32
  }
  func.func @transform_1(%arg0: i32) -> (i32, i32) {
    %c0_i32 = arith.constant 0 : i32
    %c0_i32_0 = arith.constant 0 : i32
    %c0_i32_1 = arith.constant 0 : i32
    return %c0_i32, %c0_i32_0 : i32, i32
  }
  func.func @transform_2(%arg0: i32) -> (i32, i32) {
    %c0_i32 = arith.constant 0 : i32
    %c0_i32_0 = arith.constant 0 : i32
    %c0_i32_1 = arith.constant 0 : i32
    return %c0_i32, %c0_i32_0 : i32, i32
  }
  func.func @transform_3(%arg0: i32) -> (i32, i32) {
    %c0_i32 = arith.constant 0 : i32
    %c0_i32_0 = arith.constant 0 : i32
    return %arg0, %c0_i32 : i32, i32
  }
}

module attributes {stable_mosaic.version = 11 : i64} {
  func.func @_mm_bias_act_kernel(%arg0: i32, %arg1: memref<464x256xbf16, #tpu.memory_space<vmem>>, %arg2: memref<256x128xbf16, #tpu.memory_space<vmem>>, %arg3: memref<1x128xf32, #tpu.memory_space<vmem>>, %arg4: memref<464x128xbf16, #tpu.memory_space<vmem>>) attributes {dimension_semantics = [#tpu.dimension_semantics<parallel>], iteration_bounds = array<i64: 1>, scalar_prefetch = 0 : i64, scratch_operands = 0 : i64, tpu.core_type = #tpu.core_type<tc>, window_params = [{transform_indices = @transform_0, window_bounds = array<i64: 464, 256>}, {pipeline_mode = #tpu.pipeline_mode<synchronous>, transform_indices = @transform_1, window_bounds = array<i64: 256, 128>}, {pipeline_mode = #tpu.pipeline_mode<synchronous>, transform_indices = @transform_2, window_bounds = array<i64: 1, 128>}, {transform_indices = @transform_3, window_bounds = array<i64: 464, 128>}]} {
    %c0 = arith.constant 0 : index
    %c0_0 = arith.constant 0 : index
    %0 = vector.load %arg1[%c0, %c0_0] : memref<464x256xbf16, #tpu.memory_space<vmem>>, vector<464x256xbf16>
    %c0_1 = arith.constant 0 : index
    %c0_2 = arith.constant 0 : index
    %1 = vector.load %arg2[%c0_1, %c0_2] : memref<256x128xbf16, #tpu.memory_space<vmem>>, vector<256x128xbf16>
    %cst = arith.constant dense<0.000000e+00> : vector<464x128xf32>
    %2 = tpu.matmul %0, %1, %cst {dimension_numbers = #tpu.dot_dimension_numbers<[1], [0], [0], [1], [0, 0, 1, 1], [], []>} : vector<464x256xbf16>, vector<256x128xbf16>, vector<464x128xf32> -> vector<464x128xf32>
    %c0_3 = arith.constant 0 : index
    %c0_4 = arith.constant 0 : index
    %3 = vector.load %arg3[%c0_3, %c0_4] : memref<1x128xf32, #tpu.memory_space<vmem>>, vector<1x128xf32>
    %4 = vector.broadcast %3 : vector<1x128xf32> to vector<464x128xf32>
    %5 = arith.addf %2, %4 : vector<464x128xf32>
    %cst_5 = arith.constant 0.000000e+00 : f32
    %6 = vector.broadcast %cst_5 : f32 to vector<464x128xf32>
    %7 = arith.cmpf oge, %5, %6 : vector<464x128xf32>
    %cst_6 = arith.constant 2.000000e-01 : f32
    %8 = vector.broadcast %cst_6 : f32 to vector<464x128xf32>
    %9 = arith.mulf %5, %8 : vector<464x128xf32>
    %10 = arith.select %7, %5, %9 : vector<464x128xi1>, vector<464x128xf32>
    %11 = arith.truncf %10 : vector<464x128xf32> to vector<464x128xbf16>
    %c0_7 = arith.constant 0 : index
    %c0_8 = arith.constant 0 : index
    %12 = vector.load %arg4[%c0_7, %c0_8] : memref<464x128xbf16, #tpu.memory_space<vmem>>, vector<464x128xbf16>
    tpu.vector_store %arg4[%c0_7, %c0_8], %11 {strides = array<i32>} : memref<464x128xbf16, #tpu.memory_space<vmem>>, vector<464x128xbf16>,
    return
  }
  func.func @transform_0(%arg0: i32) -> (i32, i32) {
    %c0_i32 = arith.constant 0 : i32
    %c0_i32_0 = arith.constant 0 : i32
    return %arg0, %c0_i32 : i32, i32
  }
  func.func @transform_1(%arg0: i32) -> (i32, i32) {
    %c0_i32 = arith.constant 0 : i32
    %c0_i32_0 = arith.constant 0 : i32
    %c0_i32_1 = arith.constant 0 : i32
    return %c0_i32, %c0_i32_0 : i32, i32
  }
  func.func @transform_2(%arg0: i32) -> (i32, i32) {
    %c0_i32 = arith.constant 0 : i32
    %c0_i32_0 = arith.constant 0 : i32
    %c0_i32_1 = arith.constant 0 : i32
    return %c0_i32, %c0_i32_0 : i32, i32
  }
  func.func @transform_3(%arg0: i32) -> (i32, i32) {
    %c0_i32 = arith.constant 0 : i32
    %c0_i32_0 = arith.constant 0 : i32
    return %arg0, %c0_i32 : i32, i32
  }
}

module attributes {stable_mosaic.version = 11 : i64} {
  func.func @_mm_bias_act_kernel(%arg0: i32, %arg1: memref<1024x128xbf16, #tpu.memory_space<vmem>>, %arg2: memref<128x128xbf16, #tpu.memory_space<vmem>>, %arg3: memref<1x128xf32, #tpu.memory_space<vmem>>, %arg4: memref<1024x128xbf16, #tpu.memory_space<vmem>>) attributes {dimension_semantics = [#tpu.dimension_semantics<parallel>], iteration_bounds = array<i64: 2>, scalar_prefetch = 0 : i64, scratch_operands = 0 : i64, tpu.core_type = #tpu.core_type<tc>, window_params = [{transform_indices = @transform_0, window_bounds = array<i64: 1024, 128>}, {pipeline_mode = #tpu.pipeline_mode<synchronous>, transform_indices = @transform_1, window_bounds = array<i64: 128, 128>}, {pipeline_mode = #tpu.pipeline_mode<synchronous>, transform_indices = @transform_2, window_bounds = array<i64: 1, 128>}, {transform_indices = @transform_3, window_bounds = array<i64: 1024, 128>}]} {
    %c0 = arith.constant 0 : index
    %c0_0 = arith.constant 0 : index
    %0 = vector.load %arg1[%c0, %c0_0] : memref<1024x128xbf16, #tpu.memory_space<vmem>>, vector<1024x128xbf16>
    %c0_1 = arith.constant 0 : index
    %c0_2 = arith.constant 0 : index
    %1 = vector.load %arg2[%c0_1, %c0_2] : memref<128x128xbf16, #tpu.memory_space<vmem>>, vector<128x128xbf16>
    %cst = arith.constant dense<0.000000e+00> : vector<1024x128xf32>
    %2 = tpu.matmul %0, %1, %cst {dimension_numbers = #tpu.dot_dimension_numbers<[1], [0], [0], [1], [0, 0, 1, 1], [], []>} : vector<1024x128xbf16>, vector<128x128xbf16>, vector<1024x128xf32> -> vector<1024x128xf32>
    %c0_3 = arith.constant 0 : index
    %c0_4 = arith.constant 0 : index
    %3 = vector.load %arg3[%c0_3, %c0_4] : memref<1x128xf32, #tpu.memory_space<vmem>>, vector<1x128xf32>
    %4 = vector.broadcast %3 : vector<1x128xf32> to vector<1024x128xf32>
    %5 = arith.addf %2, %4 : vector<1024x128xf32>
    %cst_5 = arith.constant 0.000000e+00 : f32
    %6 = vector.broadcast %cst_5 : f32 to vector<1024x128xf32>
    %7 = arith.cmpf oge, %5, %6 : vector<1024x128xf32>
    %cst_6 = arith.constant 2.000000e-01 : f32
    %8 = vector.broadcast %cst_6 : f32 to vector<1024x128xf32>
    %9 = arith.mulf %5, %8 : vector<1024x128xf32>
    %10 = arith.select %7, %5, %9 : vector<1024x128xi1>, vector<1024x128xf32>
    %11 = arith.truncf %10 : vector<1024x128xf32> to vector<1024x128xbf16>
    %c0_7 = arith.constant 0 : index
    %c0_8 = arith.constant 0 : index
    %12 = vector.load %arg4[%c0_7, %c0_8] : memref<1024x128xbf16, #tpu.memory_space<vmem>>, vector<1024x128xbf16>
    tpu.vector_store %arg4[%c0_7, %c0_8], %11 {strides = array<i32>} : memref<1024x128xbf16, #tpu.memory_space<vmem>>, vector<1024x128xbf16>,
    return
  }
  func.func @transform_0(%arg0: i32) -> (i32, i32) {
    %c0_i32 = arith.constant 0 : i32
    %c0_i32_0 = arith.constant 0 : i32
    return %arg0, %c0_i32 : i32, i32
  }
  func.func @transform_1(%arg0: i32) -> (i32, i32) {
    %c0_i32 = arith.constant 0 : i32
    %c0_i32_0 = arith.constant 0 : i32
    %c0_i32_1 = arith.constant 0 : i32
    return %c0_i32, %c0_i32_0 : i32, i32
  }
  func.func @transform_2(%arg0: i32) -> (i32, i32) {
    %c0_i32 = arith.constant 0 : i32
    %c0_i32_0 = arith.constant 0 : i32
    %c0_i32_1 = arith.constant 0 : i32
    return %c0_i32, %c0_i32_0 : i32, i32
  }
  func.func @transform_3(%arg0: i32) -> (i32, i32) {
    %c0_i32 = arith.constant 0 : i32
    %c0_i32_0 = arith.constant 0 : i32
    return %arg0, %c0_i32 : i32, i32
  }
}

module attributes {stable_mosaic.version = 11 : i64} {
  func.func @_mm_bias_act_kernel(%arg0: i32, %arg1: memref<1024x128xbf16, #tpu.memory_space<vmem>>, %arg2: memref<128x128xbf16, #tpu.memory_space<vmem>>, %arg3: memref<1x128xf32, #tpu.memory_space<vmem>>, %arg4: memref<1024x128xbf16, #tpu.memory_space<vmem>>) attributes {dimension_semantics = [#tpu.dimension_semantics<parallel>], iteration_bounds = array<i64: 7>, scalar_prefetch = 0 : i64, scratch_operands = 0 : i64, tpu.core_type = #tpu.core_type<tc>, window_params = [{transform_indices = @transform_0, window_bounds = array<i64: 1024, 128>}, {pipeline_mode = #tpu.pipeline_mode<synchronous>, transform_indices = @transform_1, window_bounds = array<i64: 128, 128>}, {pipeline_mode = #tpu.pipeline_mode<synchronous>, transform_indices = @transform_2, window_bounds = array<i64: 1, 128>}, {transform_indices = @transform_3, window_bounds = array<i64: 1024, 128>}]} {
    %c0 = arith.constant 0 : index
    %c0_0 = arith.constant 0 : index
    %0 = vector.load %arg1[%c0, %c0_0] : memref<1024x128xbf16, #tpu.memory_space<vmem>>, vector<1024x128xbf16>
    %c0_1 = arith.constant 0 : index
    %c0_2 = arith.constant 0 : index
    %1 = vector.load %arg2[%c0_1, %c0_2] : memref<128x128xbf16, #tpu.memory_space<vmem>>, vector<128x128xbf16>
    %cst = arith.constant dense<0.000000e+00> : vector<1024x128xf32>
    %2 = tpu.matmul %0, %1, %cst {dimension_numbers = #tpu.dot_dimension_numbers<[1], [0], [0], [1], [0, 0, 1, 1], [], []>} : vector<1024x128xbf16>, vector<128x128xbf16>, vector<1024x128xf32> -> vector<1024x128xf32>
    %c0_3 = arith.constant 0 : index
    %c0_4 = arith.constant 0 : index
    %3 = vector.load %arg3[%c0_3, %c0_4] : memref<1x128xf32, #tpu.memory_space<vmem>>, vector<1x128xf32>
    %4 = vector.broadcast %3 : vector<1x128xf32> to vector<1024x128xf32>
    %5 = arith.addf %2, %4 : vector<1024x128xf32>
    %cst_5 = arith.constant 0.000000e+00 : f32
    %6 = vector.broadcast %cst_5 : f32 to vector<1024x128xf32>
    %7 = arith.cmpf oge, %5, %6 : vector<1024x128xf32>
    %cst_6 = arith.constant 2.000000e-01 : f32
    %8 = vector.broadcast %cst_6 : f32 to vector<1024x128xf32>
    %9 = arith.mulf %5, %8 : vector<1024x128xf32>
    %10 = arith.select %7, %5, %9 : vector<1024x128xi1>, vector<1024x128xf32>
    %11 = arith.truncf %10 : vector<1024x128xf32> to vector<1024x128xbf16>
    %c0_7 = arith.constant 0 : index
    %c0_8 = arith.constant 0 : index
    %12 = vector.load %arg4[%c0_7, %c0_8] : memref<1024x128xbf16, #tpu.memory_space<vmem>>, vector<1024x128xbf16>
    tpu.vector_store %arg4[%c0_7, %c0_8], %11 {strides = array<i32>} : memref<1024x128xbf16, #tpu.memory_space<vmem>>, vector<1024x128xbf16>,
    return
  }
  func.func @transform_0(%arg0: i32) -> (i32, i32) {
    %c0_i32 = arith.constant 0 : i32
    %c0_i32_0 = arith.constant 0 : i32
    return %arg0, %c0_i32 : i32, i32
  }
  func.func @transform_1(%arg0: i32) -> (i32, i32) {
    %c0_i32 = arith.constant 0 : i32
    %c0_i32_0 = arith.constant 0 : i32
    %c0_i32_1 = arith.constant 0 : i32
    return %c0_i32, %c0_i32_0 : i32, i32
  }
  func.func @transform_2(%arg0: i32) -> (i32, i32) {
    %c0_i32 = arith.constant 0 : i32
    %c0_i32_0 = arith.constant 0 : i32
    %c0_i32_1 = arith.constant 0 : i32
    return %c0_i32, %c0_i32_0 : i32, i32
  }
  func.func @transform_3(%arg0: i32) -> (i32, i32) {
    %c0_i32 = arith.constant 0 : i32
    %c0_i32_0 = arith.constant 0 : i32
    return %arg0, %c0_i32 : i32, i32
  }
}

module attributes {stable_mosaic.version = 11 : i64} {
  func.func @_mm_bias_act_kernel(%arg0: i32, %arg1: memref<1024x128xbf16, #tpu.memory_space<vmem>>, %arg2: memref<128x128xbf16, #tpu.memory_space<vmem>>, %arg3: memref<1x128xf32, #tpu.memory_space<vmem>>, %arg4: memref<1024x128xf32, #tpu.memory_space<vmem>>) attributes {dimension_semantics = [#tpu.dimension_semantics<parallel>], iteration_bounds = array<i64: 25>, scalar_prefetch = 0 : i64, scratch_operands = 0 : i64, tpu.core_type = #tpu.core_type<tc>, window_params = [{transform_indices = @transform_0, window_bounds = array<i64: 1024, 128>}, {pipeline_mode = #tpu.pipeline_mode<synchronous>, transform_indices = @transform_1, window_bounds = array<i64: 128, 128>}, {pipeline_mode = #tpu.pipeline_mode<synchronous>, transform_indices = @transform_2, window_bounds = array<i64: 1, 128>}, {transform_indices = @transform_3, window_bounds = array<i64: 1024, 128>}]} {
    %c0 = arith.constant 0 : index
    %c0_0 = arith.constant 0 : index
    %0 = vector.load %arg1[%c0, %c0_0] : memref<1024x128xbf16, #tpu.memory_space<vmem>>, vector<1024x128xbf16>
    %c0_1 = arith.constant 0 : index
    %c0_2 = arith.constant 0 : index
    %1 = vector.load %arg2[%c0_1, %c0_2] : memref<128x128xbf16, #tpu.memory_space<vmem>>, vector<128x128xbf16>
    %cst = arith.constant dense<0.000000e+00> : vector<1024x128xf32>
    %2 = tpu.matmul %0, %1, %cst {dimension_numbers = #tpu.dot_dimension_numbers<[1], [0], [0], [1], [0, 0, 1, 1], [], []>} : vector<1024x128xbf16>, vector<128x128xbf16>, vector<1024x128xf32> -> vector<1024x128xf32>
    %c0_3 = arith.constant 0 : index
    %c0_4 = arith.constant 0 : index
    %3 = vector.load %arg3[%c0_3, %c0_4] : memref<1x128xf32, #tpu.memory_space<vmem>>, vector<1x128xf32>
    %4 = vector.broadcast %3 : vector<1x128xf32> to vector<1024x128xf32>
    %5 = arith.addf %2, %4 : vector<1024x128xf32>
    %6 = math.tanh %5 : vector<1024x128xf32>
    %c0_5 = arith.constant 0 : index
    %c0_6 = arith.constant 0 : index
    %7 = vector.load %arg4[%c0_5, %c0_6] : memref<1024x128xf32, #tpu.memory_space<vmem>>, vector<1024x128xf32>
    tpu.vector_store %arg4[%c0_5, %c0_6], %6 {strides = array<i32>} : memref<1024x128xf32, #tpu.memory_space<vmem>>, vector<1024x128xf32>,
    return
  }
  func.func @transform_0(%arg0: i32) -> (i32, i32) {
    %c0_i32 = arith.constant 0 : i32
    %c0_i32_0 = arith.constant 0 : i32
    return %arg0, %c0_i32 : i32, i32
  }
  func.func @transform_1(%arg0: i32) -> (i32, i32) {
    %c0_i32 = arith.constant 0 : i32
    %c0_i32_0 = arith.constant 0 : i32
    %c0_i32_1 = arith.constant 0 : i32
    return %c0_i32, %c0_i32_0 : i32, i32
  }
  func.func @transform_2(%arg0: i32) -> (i32, i32) {
    %c0_i32 = arith.constant 0 : i32
    %c0_i32_0 = arith.constant 0 : i32
    %c0_i32_1 = arith.constant 0 : i32
    return %c0_i32, %c0_i32_0 : i32, i32
  }
  func.func @transform_3(%arg0: i32) -> (i32, i32) {
    %c0_i32 = arith.constant 0 : i32
    %c0_i32_0 = arith.constant 0 : i32
    return %arg0, %c0_i32 : i32, i32
  }
}

</mosaic_0001>

<llo_original>
// kernel: generator_forward.8
$region0: #{generator_forward.8}
  #allocation0 [shape = 'u32[]', space=smem, size = 0x4, offset = 0x4, fixed_abs, tag = 'smem constant byte address 0x4 - core index']
  #allocation1 [shape = 'u32[144,128]{1,0:T(1,128)}', space=vmem, size = 0x12000, scoped, tag = 'internal scratch']
  %s0 = inlined_call_operand.vmem [shape: bf16[48,256], index: 0, kind: input, shape index: {}]
  %s1 = inlined_call_operand.hbm [shape: bf16[256,256], index: 1, kind: input, shape index: {}]
  %s2 = inlined_call_operand.hbm [shape: f32[1,256], index: 2, kind: input, shape index: {}]
  %s3 = inlined_call_operand.vmem [shape: bf16[48,256], index: 3, kind: output, shape index: {}]
  %s4 = sld [smem:[#allocation0]]
  $region30: #{generator_forward.8} parent=0
    _
  %s6 = ssub.s32 1, %s4
  %s7 = scalar_select 0, %s6, %s4
  $region1: #{generator_forward.8} parent=0
    #allocation2 [shape = 'u8[131072]{0}', space=vmem, size = 0x20000, scoped, tag = 'input window, operand 1, single buffered']
    #allocation3 [shape = 's32[1]{0}', space=sflag, size = 0x4, scoped, tag = 'scoped memory for generator_forward.8']
    #allocation4 [shape = 'u8[1024]{0}', space=vmem, size = 0x400, scoped, tag = 'input window, operand 2, single buffered']
    #allocation5 [shape = 's32[1]{0}', space=sflag, size = 0x4, scoped, tag = 'scoped memory for generator_forward.8']
    %8 = vsyncpa [#allocation3], 0
    %9 = vsyncpa [#allocation5], 0
    // Predicated region
    $region2: #{generator_forward.8} parent=1 // pred_check
      _
    $region3: #{generator_forward.8} parent=1 // pred_check_branch
      %11 = sbr.rel (0) target = $region5
    $region4: #{generator_forward.8} parent=1 // pred_region
      _
    $region5: #{generator_forward.8} parent=1 // pred_fallthru
      _
    // Predicated region
    $region6: #{generator_forward.8} parent=1 // pred_check
      _
    $region7: #{generator_forward.8} parent=1 // pred_check_branch
      %13 = sbr.rel (0) target = $region9
    $region8: #{generator_forward.8} parent=1 // pred_region
      %s15 = ssub.s32 4096, 4096
      %16 = vsyncadd [#allocation3], %s15
      %s17 = sshll.u32 [#allocation2], 4
      %s18 = int_to_ptr.vmem [resolvable:$true] %s17
      %23 = dma.hbm_to_vmem [thread:$0]  %s1, 4096, %s18, [#allocation3], 128, 128, 8
    $region9: #{generator_forward.8} parent=1 // pred_fallthru
      _
    // Predicated region
    $region10: #{generator_forward.8} parent=1 // pred_check
      _
    $region11: #{generator_forward.8} parent=1 // pred_check_branch
      %25 = sbr.rel (0) target = $region13
    $region12: #{generator_forward.8} parent=1 // pred_region
      %s27 = ssub.s32 32, 32
      %28 = vsyncadd [#allocation5], %s27
      %s30 = sshll.u32 [#allocation4], 4
      %s31 = int_to_ptr.vmem [resolvable:$true] %s30
      %33 = dma.hbm_to_vmem [thread:$0]  %s2, 32, %s31, [#allocation5]
    $region13: #{generator_forward.8} parent=1 // pred_fallthru
      _
    // Predicated region
    $region14: #{generator_forward.8} parent=1 // pred_check
      _
    $region15: #{generator_forward.8} parent=1 // pred_check_branch
      %35 = sbr.rel (0) target = $region17
    $region16: #{generator_forward.8} parent=1 // pred_region
      %36 = dma.done [#allocation3], 4096
    $region17: #{generator_forward.8} parent=1 // pred_fallthru
      _
    // Predicated region
    $region18: #{generator_forward.8} parent=1 // pred_check
      _
    $region19: #{generator_forward.8} parent=1 // pred_check_branch
      %38 = sbr.rel (0) target = $region21
    $region20: #{generator_forward.8} parent=1 // pred_region
      %39 = dma.done [#allocation5], 32
    $region21: #{generator_forward.8} parent=1 // pred_fallthru
      _
    %v40 = vld [vmem:[%s0] sm:$0xff]
    %v41 = vld [vmem:[%s0 + $0x8] sm:$0xff]
    %v42 = vld [vmem:[%s0 + $0x10] sm:$0xff]
    %v43 = vld [vmem:[%s0 + $0x18] sm:$0xff]
    %v44 = vld [vmem:[%s0 + $0x20] sm:$0xff]
    %v45 = vld [vmem:[%s0 + $0x28] sm:$0xff]
    %v46 = vld [vmem:[#allocation2] sm:$0xff]
    %v47 = vld [vmem:[#allocation2 + $0x8] sm:$0xff]
    %v48 = vld [vmem:[#allocation2 + $0x10] sm:$0xff]
    %v49 = vld [vmem:[#allocation2 + $0x18] sm:$0xff]
    %v50 = vld [vmem:[#allocation2 + $0x20] sm:$0xff]
    %v51 = vld [vmem:[#allocation2 + $0x28] sm:$0xff]
    %v52 = vld [vmem:[#allocation2 + $0x30] sm:$0xff]
    %v53 = vld [vmem:[#allocation2 + $0x38] sm:$0xff]
    %v54 = vld [vmem:[#allocation2 + $0x40] sm:$0xff]
    %v55 = vld [vmem:[#allocation2 + $0x48] sm:$0xff]
    %v56 = vld [vmem:[#allocation2 + $0x50] sm:$0xff]
    %v57 = vld [vmem:[#allocation2 + $0x58] sm:$0xff]
    %v58 = vld [vmem:[#allocation2 + $0x60] sm:$0xff]
    %v59 = vld [vmem:[#allocation2 + $0x68] sm:$0xff]
    %v60 = vld [vmem:[#allocation2 + $0x70] sm:$0xff]
    %v61 = vld [vmem:[#allocation2 + $0x78] sm:$0xff]
    %v62 = vld [vmem:[#allocation2 + $0x80] sm:$0xff]
    %v63 = vld [vmem:[#allocation2 + $0x88] sm:$0xff]
    %v64 = vld [vmem:[#allocation2 + $0x90] sm:$0xff]
    %v65 = vld [vmem:[#allocation2 + $0x98] sm:$0xff]
    %v66 = vld [vmem:[#allocation2 + $0xa0] sm:$0xff]
    %v67 = vld [vmem:[#allocation2 + $0xa8] sm:$0xff]
    %v68 = vld [vmem:[#allocation2 + $0xb0] sm:$0xff]
    %v69 = vld [vmem:[#allocation2 + $0xb8] sm:$0xff]
    %v70 = vld [vmem:[#allocation2 + $0xc0] sm:$0xff]
    %v71 = vld [vmem:[#allocation2 + $0xc8] sm:$0xff]
    %v72 = vld [vmem:[#allocation2 + $0xd0] sm:$0xff]
    %v73 = vld [vmem:[#allocation2 + $0xd8] sm:$0xff]
    %v74 = vld [vmem:[#allocation2 + $0xe0] sm:$0xff]
    %v75 = vld [vmem:[#allocation2 + $0xe8] sm:$0xff]
    %v76 = vld [vmem:[#allocation2 + $0xf0] sm:$0xff]
    %v77 = vld [vmem:[#allocation2 + $0xf8] sm:$0xff]
    %v78 = vld [vmem:[#allocation4] sm:$0x3]
    %v80 = vlaneseq
    %v81 = vshrl.u32 %v80, 7
    %v82 = vsub.s32 0, %v81
    %v83 = vrot.slane %v78, %v82
    %v84 = vlaneseq
    %v85 = vshrl.u32 %v84, 7
    %v86 = vsub.s32 1, %v85
    %v87 = vrot.slane %v78, %v86
    %v96 = vunpack.c.l.b16 %v40
    %v97 = vunpack.c.h.b16 %v40
    %v98 = vunpack.c.l.b16 %v41
    %v99 = vunpack.c.h.b16 %v41
    %v100 = vunpack.c.l.b16 %v42
    %v101 = vunpack.c.h.b16 %v42
    %v102 = vunpack.c.l.b16 %v43
    %v103 = vunpack.c.h.b16 %v43
    %v104 = vunpack.c.l.b16 %v44
    %v105 = vunpack.c.h.b16 %v44
    %v106 = vunpack.c.l.b16 %v45
    %v107 = vunpack.c.h.b16 %v45
    %v108 = vpack.c.b16 %v98, %v96
    %v109 = vpack.c.b16 %v99, %v97
    %v110 = vpack.c.b16 %v102, %v100
    %v111 = vpack.c.b16 %v103, %v101
    %v112 = vpack.c.b16 %v106, %v104
    %v113 = vpack.c.b16 %v107, %v105
    %v152 = vunpack.c.l.b16 %v46
    %v153 = vunpack.c.h.b16 %v46
    %v154 = vunpack.c.l.b16 %v47
    %v155 = vunpack.c.h.b16 %v47
    %v156 = vunpack.c.l.b16 %v48
    %v157 = vunpack.c.h.b16 %v48
    %v158 = vunpack.c.l.b16 %v49
    %v159 = vunpack.c.h.b16 %v49
    %v160 = vunpack.c.l.b16 %v50
    %v161 = vunpack.c.h.b16 %v50
    %v162 = vunpack.c.l.b16 %v51
    %v163 = vunpack.c.h.b16 %v51
    %v164 = vunpack.c.l.b16 %v52
    %v165 = vunpack.c.h.b16 %v52
    %v166 = vunpack.c.l.b16 %v53
    %v167 = vunpack.c.h.b16 %v53
    %v168 = vunpack.c.l.b16 %v54
    %v169 = vunpack.c.h.b16 %v54
    %v170 = vunpack.c.l.b16 %v55
    %v171 = vunpack.c.h.b16 %v55
    %v172 = vunpack.c.l.b16 %v56
    %v173 = vunpack.c.h.b16 %v56
    %v174 = vunpack.c.l.b16 %v57
    %v175 = vunpack.c.h.b16 %v57
    %v176 = vunpack.c.l.b16 %v58
    %v177 = vunpack.c.h.b16 %v58
    %v178 = vunpack.c.l.b16 %v59
    %v179 = vunpack.c.h.b16 %v59
    %v180 = vunpack.c.l.b16 %v60
    %v181 = vunpack.c.h.b16 %v60
    %v182 = vunpack.c.l.b16 %v61
    %v183 = vunpack.c.h.b16 %v61
    %v184 = vunpack.c.l.b16 %v62
    %v185 = vunpack.c.h.b16 %v62
    %v186 = vunpack.c.l.b16 %v63
    %v187 = vunpack.c.h.b16 %v63
    %v188 = vunpack.c.l.b16 %v64
    %v189 = vunpack.c.h.b16 %v64
    %v190 = vunpack.c.l.b16 %v65
    %v191 = vunpack.c.h.b16 %v65
    %v192 = vunpack.c.l.b16 %v66
    %v193 = vunpack.c.h.b16 %v66
    %v194 = vunpack.c.l.b16 %v67
    %v195 = vunpack.c.h.b16 %v67
    %v196 = vunpack.c.l.b16 %v68
    %v197 = vunpack.c.h.b16 %v68
    %v198 = vunpack.c.l.b16 %v69
    %v199 = vunpack.c.h.b16 %v69
    %v200 = vunpack.c.l.b16 %v70
    %v201 = vunpack.c.h.b16 %v70
    %v202 = vunpack.c.l.b16 %v71
    %v203 = vunpack.c.h.b16 %v71
    %v204 = vunpack.c.l.b16 %v72
    %v205 = vunpack.c.h.b16 %v72
    %v206 = vunpack.c.l.b16 %v73
    %v207 = vunpack.c.h.b16 %v73
    %v208 = vunpack.c.l.b16 %v74
    %v209 = vunpack.c.h.b16 %v74
    %v210 = vunpack.c.l.b16 %v75
    %v211 = vunpack.c.h.b16 %v75
    %v212 = vunpack.c.l.b16 %v76
    %v213 = vunpack.c.h.b16 %v76
    %v214 = vunpack.c.l.b16 %v77
    %v215 = vunpack.c.h.b16 %v77
    %v216 = vpack.c.b16 %v154, %v152
    %v217 = vpack.c.b16 %v155, %v153
    %v218 = vpack.c.b16 %v158, %v156
    %v219 = vpack.c.b16 %v159, %v157
    %v220 = vpack.c.b16 %v162, %v160
    %v221 = vpack.c.b16 %v163, %v161
    %v222 = vpack.c.b16 %v166, %v164
    %v223 = vpack.c.b16 %v167, %v165
    %v224 = vpack.c.b16 %v170, %v168
    %v225 = vpack.c.b16 %v171, %v169
    %v226 = vpack.c.b16 %v174, %v172
    %v227 = vpack.c.b16 %v175, %v173
    %v228 = vpack.c.b16 %v178, %v176
    %v229 = vpack.c.b16 %v179, %v177
    %v230 = vpack.c.b16 %v182, %v180
    %v231 = vpack.c.b16 %v183, %v181
    %v232 = vpack.c.b16 %v186, %v184
    %v233 = vpack.c.b16 %v187, %v185
    %v234 = vpack.c.b16 %v190, %v188
    %v235 = vpack.c.b16 %v191, %v189
    %v236 = vpack.c.b16 %v194, %v192
    %v237 = vpack.c.b16 %v195, %v193
    %v238 = vpack.c.b16 %v198, %v196
    %v239 = vpack.c.b16 %v199, %v197
    %v240 = vpack.c.b16 %v202, %v200
    %v241 = vpack.c.b16 %v203, %v201
    %v242 = vpack.c.b16 %v206, %v204
    %v243 = vpack.c.b16 %v207, %v205
    %v244 = vpack.c.b16 %v210, %v208
    %v245 = vpack.c.b16 %v211, %v209
    %v246 = vpack.c.b16 %v214, %v212
    %v247 = vpack.c.b16 %v215, %v213
    %280 = vmatprep.subr.bf16.mxu0 %v217
    %281 = vmatpush1.bf16.msra.mxu0 %v216
    %282 = vmatprep.subr.bf16.mxu0 %v219
    %283 = vmatpush1.bf16.msra.mxu0 %v218
    %284 = vmatprep.subr.bf16.mxu0 %v221
    %285 = vmatpush1.bf16.msra.mxu0 %v220
    %286 = vmatprep.subr.bf16.mxu0 %v223
    %287 = vmatpush1.bf16.msra.mxu0 %v222
    %288 = vmatprep.subr.bf16.mxu0 %v225
    %289 = vmatpush1.bf16.msra.mxu0 %v224
    %290 = vmatprep.subr.bf16.mxu0 %v227
    %291 = vmatpush1.bf16.msra.mxu0 %v226
    %292 = vmatprep.subr.bf16.mxu0 %v229
    %293 = vmatpush1.bf16.msra.mxu0 %v228
    %294 = vmatprep.subr.bf16.mxu0 %v231
    %295 = vmatpush1.bf16.msra.mxu0 %v230
    %296 = vmatprep.subr.bf16.mxu0 %v233
    %297 = vmatpush1.bf16.msra.mxu0 %v232
    %298 = vmatprep.subr.bf16.mxu0 %v235
    %299 = vmatpush1.bf16.msra.mxu0 %v234
    %300 = vmatprep.subr.bf16.mxu0 %v237
    %301 = vmatpush1.bf16.msra.mxu0 %v236
    %302 = vmatprep.subr.bf16.mxu0 %v239
    %303 = vmatpush1.bf16.msra.mxu0 %v238
    %304 = vmatprep.subr.bf16.mxu0 %v241
    %305 = vmatpush1.bf16.msra.mxu0 %v240
    %306 = vmatprep.subr.bf16.mxu0 %v243
    %307 = vmatpush1.bf16.msra.mxu0 %v242
    %308 = vmatprep.subr.bf16.mxu0 %v245
    %309 = vmatpush1.bf16.msra.mxu0 %v244
    %310 = vmatprep.subr.bf16.mxu0 %v247
    %311 = vmatpush1.bf16.msra.mxu0 %v246
    %312 = vmatprep.mubr.bf16.mxu0 %v109
    %313 = vmatmul.mubr.bf16.gmra.mrb[0].mxu0 %v108
    %v314 = vpop.f32.mrb[0].mxu0
    %v315 = vadd.f32 %v83, %v314
    %v316 = vpop.f32.mrb[0].mxu0
    %v317 = vadd.f32 %v87, %v316
    %v318 = vpop.f32.mrb[0].mxu0
    %v319 = vadd.f32 %v83, %v318
    %v320 = vpop.f32.mrb[0].mxu0
    %v321 = vadd.f32 %v87, %v320
    %322 = vmatprep.mubr.bf16.mxu0 %v111
    %323 = vmatmul.mubr.bf16.gmra.mrb[0].mxu0 %v110
    %v324 = vpop.f32.mrb[0].mxu0
    %v325 = vadd.f32 %v83, %v324
    %v326 = vpop.f32.mrb[0].mxu0
    %v327 = vadd.f32 %v87, %v326
    %v328 = vpop.f32.mrb[0].mxu0
    %v329 = vadd.f32 %v83, %v328
    %v330 = vpop.f32.mrb[0].mxu0
    %v331 = vadd.f32 %v87, %v330
    %332 = vmatprep.mubr.bf16.mxu0 %v113
    %333 = vmatmul.mubr.bf16.gmra.mrb[0].mxu0 %v112
    %v334 = vpop.f32.mrb[0].mxu0
    %v335 = vadd.f32 %v83, %v334
    %v336 = vpop.f32.mrb[0].mxu0
    %v337 = vadd.f32 %v87, %v336
    %v338 = vpop.f32.mrb[0].mxu0
    %v339 = vadd.f32 %v83, %v338
    %v340 = vpop.f32.mrb[0].mxu0
    %v341 = vadd.f32 %v87, %v340
    %342 = vdwg.mxu0
    %vm343 = vcmp.ge.f32.partialorder %v315, 0.0
    %vm344 = vcmp.ge.f32.partialorder %v317, 0.0
    %vm345 = vcmp.ge.f32.partialorder %v319, 0.0
    %vm346 = vcmp.ge.f32.partialorder %v321, 0.0
    %vm347 = vcmp.ge.f32.partialorder %v325, 0.0
    %vm348 = vcmp.ge.f32.partialorder %v327, 0.0
    %vm349 = vcmp.ge.f32.partialorder %v329, 0.0
    %vm350 = vcmp.ge.f32.partialorder %v331, 0.0
    %vm351 = vcmp.ge.f32.partialorder %v335, 0.0
    %vm352 = vcmp.ge.f32.partialorder %v337, 0.0
    %vm353 = vcmp.ge.f32.partialorder %v339, 0.0
    %vm354 = vcmp.ge.f32.partialorder %v341, 0.0
    %v355 = vmul.f32 %v315, 0.2
    %v356 = vmul.f32 %v317, 0.2
    %v357 = vmul.f32 %v319, 0.2
    %v358 = vmul.f32 %v321, 0.2
    %v359 = vmul.f32 %v325, 0.2
    %v360 = vmul.f32 %v327, 0.2
    %v361 = vmul.f32 %v329, 0.2
    %v362 = vmul.f32 %v331, 0.2
    %v363 = vmul.f32 %v335, 0.2
    %v364 = vmul.f32 %v337, 0.2
    %v365 = vmul.f32 %v339, 0.2
    %v366 = vmul.f32 %v341, 0.2
    %v367 = vsel %vm343, %v315, %v355
    %v368 = vsel %vm344, %v317, %v356
    %v369 = vsel %vm345, %v319, %v357
    %v370 = vsel %vm346, %v321, %v358
    %v371 = vsel %vm347, %v325, %v359
    %v372 = vsel %vm348, %v327, %v360
    %v373 = vsel %vm349, %v329, %v361
    %v374 = vsel %vm350, %v331, %v362
    %v375 = vsel %vm351, %v335, %v363
    %v376 = vsel %vm352, %v337, %v364
    %v377 = vsel %vm353, %v339, %v365
    %v378 = vsel %vm354, %v341, %v366
    %v379 = vpack.c.bf16 %v369, %v367
    %v380 = vpack.c.bf16 %v370, %v368
    %v381 = vpack.c.bf16 %v373, %v371
    %v382 = vpack.c.bf16 %v374, %v372
    %v383 = vpack.c.bf16 %v377, %v375
    %v384 = vpack.c.bf16 %v378, %v376
    %v391 = vunpack.c.l.b16 %v379
    %v392 = vunpack.c.l.b16 %v380
    %v393 = vunpack.c.h.b16 %v379
    %v394 = vunpack.c.h.b16 %v380
    %v395 = vunpack.c.l.b16 %v381
    %v396 = vunpack.c.l.b16 %v382
    %v397 = vunpack.c.h.b16 %v381
    %v398 = vunpack.c.h.b16 %v382
    %v399 = vunpack.c.l.b16 %v383
    %v400 = vunpack.c.l.b16 %v384
    %v401 = vunpack.c.h.b16 %v383
    %v402 = vunpack.c.h.b16 %v384
    %v403 = vpack.c.b16 %v392, %v391
    %v404 = vpack.c.b16 %v394, %v393
    %v405 = vpack.c.b16 %v396, %v395
    %v406 = vpack.c.b16 %v398, %v397
    %v407 = vpack.c.b16 %v400, %v399
    %v408 = vpack.c.b16 %v402, %v401
    %415 = vst [vmem:[%s3] sm:$0xff] %v403
    %416 = vst [vmem:[%s3 + $0x8] sm:$0xff] %v404
    %417 = vst [vmem:[%s3 + $0x10] sm:$0xff] %v405
    %418 = vst [vmem:[%s3 + $0x18] sm:$0xff] %v406
    %419 = vst [vmem:[%s3 + $0x20] sm:$0xff] %v407
    %420 = vst [vmem:[%s3 + $0x28] sm:$0xff] %v408
    // Predicated region
    $region22: #{generator_forward.8} parent=1 // pred_check
      _
    $region23: #{generator_forward.8} parent=1 // pred_check_branch
      %422 = sbr.rel (0) target = $region25
    $region24: #{generator_forward.8} parent=1 // pred_region
      _
    $region25: #{generator_forward.8} parent=1 // pred_fallthru
      _
    // Predicated region
    $region26: #{generator_forward.8} parent=1 // pred_check
      _
    $region27: #{generator_forward.8} parent=1 // pred_check_branch
      %424 = sbr.rel (0) target = $region29
    $region28: #{generator_forward.8} parent=1 // pred_region
      _
    $region29: #{generator_forward.8} parent=1 // pred_fallthru
      _
    %425 = vsyncpa [#allocation3], 1
    %426 = vsyncpa [#allocation5], 1

// kernel: generator_forward.7
$region0: #{generator_forward.7}
  #allocation0 [shape = 'u32[]', space=smem, size = 0x4, offset = 0x4, fixed_abs, tag = 'smem constant byte address 0x4 - core index']
  #allocation1 [shape = 'u32[144,128]{1,0:T(1,128)}', space=vmem, size = 0x12000, scoped, tag = 'internal scratch']
  %s0 = inlined_call_operand.vmem [shape: bf16[16,384], index: 0, kind: input, shape index: {}]
  %s1 = inlined_call_operand.hbm [shape: bf16[384,128], index: 1, kind: input, shape index: {}]
  %s2 = inlined_call_operand.hbm [shape: f32[1,128], index: 2, kind: input, shape index: {}]
  %s3 = inlined_call_operand.hbm [shape: bf16[128,768], index: 3, kind: input, shape index: {}]
  %s4 = inlined_call_operand.hbm [shape: f32[1,768], index: 4, kind: input, shape index: {}]
  %s5 = inlined_call_operand.vmem [shape: bf16[16,768], index: 5, kind: output, shape index: {}]
  %s6 = sld [smem:[#allocation0]]
  $region46: #{generator_forward.7} parent=0
    _
  %s8 = ssub.s32 1, %s6
  %s9 = scalar_select 0, %s8, %s6
  $region1: #{generator_forward.7} parent=0
    #allocation2 [shape = 'u8[98304]{0}', space=vmem, size = 0x18000, scoped, tag = 'input window, operand 1, single buffered']
    #allocation3 [shape = 's32[1]{0}', space=sflag, size = 0x4, scoped, tag = 'scoped memory for generator_forward.7']
    #allocation4 [shape = 'u8[512]{0}', space=vmem, size = 0x400, scoped, tag = 'input window, operand 2, single buffered']
    #allocation5 [shape = 's32[1]{0}', space=sflag, size = 0x4, scoped, tag = 'scoped memory for generator_forward.7']
    #allocation6 [shape = 'u8[196608]{0}', space=vmem, size = 0x30000, scoped, tag = 'input window, operand 3, single buffered']
    #allocation7 [shape = 'u8[3072]{0}', space=vmem, size = 0xc00, scoped, tag = 'input window, operand 4, single buffered']
    #allocation8 [shape = 's32[1]{0}', space=sflag, size = 0x4, scoped, tag = 'scoped memory for generator_forward.7']
    %10 = vsyncpa [#allocation3], 0
    %11 = vsyncpa [#allocation5], 0
    %12 = vsyncpa [#allocation8], 0
    // Predicated region
    $region2: #{generator_forward.7} parent=1 // pred_check
      _
    $region3: #{generator_forward.7} parent=1 // pred_check_branch
      %14 = sbr.rel (0) target = $region5
    $region4: #{generator_forward.7} parent=1 // pred_region
      _
    $region5: #{generator_forward.7} parent=1 // pred_fallthru
      _
    // Predicated region
    $region6: #{generator_forward.7} parent=1 // pred_check
      _
    $region7: #{generator_forward.7} parent=1 // pred_check_branch
      %16 = sbr.rel (0) target = $region9
    $region8: #{generator_forward.7} parent=1 // pred_region
      %s18 = ssub.s32 3072, 3072
      %19 = vsyncadd [#allocation3], %s18
      %s20 = sshll.u32 [#allocation2], 4
      %s21 = int_to_ptr.vmem [resolvable:$true] %s20
      %26 = dma.hbm_to_vmem [thread:$0]  %s1, 3072, %s21, [#allocation3], 64, 64, 4
    $region9: #{generator_forward.7} parent=1 // pred_fallthru
      _
    // Predicated region
    $region10: #{generator_forward.7} parent=1 // pred_check
      _
    $region11: #{generator_forward.7} parent=1 // pred_check_branch
      %28 = sbr.rel (0) target = $region13
    $region12: #{generator_forward.7} parent=1 // pred_region
      %s30 = ssub.s32 16, 16
      %31 = vsyncadd [#allocation5], %s30
      %s33 = sshll.u32 [#allocation4], 4
      %s34 = int_to_ptr.vmem [resolvable:$true] %s33
      %36 = dma.hbm_to_vmem [thread:$0]  %s2, 16, %s34, [#allocation5]
    $region13: #{generator_forward.7} parent=1 // pred_fallthru
      _
    // Predicated region
    $region14: #{generator_forward.7} parent=1 // pred_check
      _
    $region15: #{generator_forward.7} parent=1 // pred_check_branch
      %38 = sbr.rel (0) target = $region17
    $region16: #{generator_forward.7} parent=1 // pred_region
      %s40 = ssub.s32 6144, 6144
      %41 = vsyncadd [#allocation5], %s40
      %s42 = sshll.u32 [#allocation6], 4
      %s43 = int_to_ptr.vmem [resolvable:$true] %s42
      %48 = dma.hbm_to_vmem [thread:$0]  %s3, 6144, %s43, [#allocation5], 384, 384, 24
    $region17: #{generator_forward.7} parent=1 // pred_fallthru
      _
    // Predicated region
    $region18: #{generator_forward.7} parent=1 // pred_check
      _
    $region19: #{generator_forward.7} parent=1 // pred_check_branch
      %50 = sbr.rel (0) target = $region21
    $region20: #{generator_forward.7} parent=1 // pred_region
      %s52 = ssub.s32 96, 96
      %53 = vsyncadd [#allocation8], %s52
      %s55 = sshll.u32 [#allocation7], 4
      %s56 = int_to_ptr.vmem [resolvable:$true] %s55
      %58 = dma.hbm_to_vmem [thread:$0]  %s4, 96, %s56, [#allocation8]
    $region21: #{generator_forward.7} parent=1 // pred_fallthru
      _
    // Predicated region
    $region22: #{generator_forward.7} parent=1 // pred_check
      _
    $region23: #{generator_forward.7} parent=1 // pred_check_branch
      %60 = sbr.rel (0) target = $region25
    $region24: #{generator_forward.7} parent=1 // pred_region
      %61 = dma.done [#allocation3], 3072
    $region25: #{generator_forward.7} parent=1 // pred_fallthru
      _
    // Predicated region
    $region26: #{generator_forward.7} parent=1 // pred_check
      _
    $region27: #{generator_forward.7} parent=1 // pred_check_branch
      %63 = sbr.rel (0) target = $region29
    $region28: #{generator_forward.7} parent=1 // pred_region
      %64 = dma.done [#allocation5], 16
    $region29: #{generator_forward.7} parent=1 // pred_fallthru
      _
    // Predicated region
    $region30: #{generator_forward.7} parent=1 // pred_check
      _
    $region31: #{generator_forward.7} parent=1 // pred_check_branch
      %66 = sbr.rel (0) target = $region33
    $region32: #{generator_forward.7} parent=1 // pred_region
      %67 = dma.done [#allocation5], 6144
    $region33: #{generator_forward.7} parent=1 // pred_fallthru
      _
    // Predicated region
    $region34: #{generator_forward.7} parent=1 // pred_check
      _
    $region35: #{generator_forward.7} parent=1 // pred_check_branch
      %69 = sbr.rel (0) target = $region37
    $region36: #{generator_forward.7} parent=1 // pred_region
      %70 = dma.done [#allocation8], 96
    $region37: #{generator_forward.7} parent=1 // pred_fallthru
      _
    %v72 = vld [vmem:[%s0] sm:$0xff]
    %v73 = vld [vmem:[%s0 + $0x8] sm:$0xf]
    %v74 = vld [vmem:[%s0 + $0xc] sm:$0xff]
    %v75 = vld [vmem:[%s0 + $0x14] sm:$0xf]
    %v76 = vld [vmem:[#allocation2] sm:$0xf]
    %v77 = vld [vmem:[#allocation2 + $0x4] sm:$0xf]
    %v78 = vld [vmem:[#allocation2 + $0x8] sm:$0xf]
    %v79 = vld [vmem:[#allocation2 + $0xc] sm:$0xf]
    %v80 = vld [vmem:[#allocation2 + $0x10] sm:$0xf]
    %v81 = vld [vmem:[#allocation2 + $0x14] sm:$0xf]
    %v82 = vld [vmem:[#allocation2 + $0x18] sm:$0xf]
    %v83 = vld [vmem:[#allocation2 + $0x1c] sm:$0xf]
    %v84 = vld [vmem:[#allocation2 + $0x20] sm:$0xf]
    %v85 = vld [vmem:[#allocation2 + $0x24] sm:$0xf]
    %v86 = vld [vmem:[#allocation2 + $0x28] sm:$0xf]
    %v87 = vld [vmem:[#allocation2 + $0x2c] sm:$0xf]
    %v88 = vld [vmem:[#allocation2 + $0x30] sm:$0xf]
    %v89 = vld [vmem:[#allocation2 + $0x34] sm:$0xf]
    %v90 = vld [vmem:[#allocation2 + $0x38] sm:$0xf]
    %v91 = vld [vmem:[#allocation2 + $0x3c] sm:$0xf]
    %v92 = vld [vmem:[#allocation2 + $0x40] sm:$0xf]
    %v93 = vld [vmem:[#allocation2 + $0x44] sm:$0xf]
    %v94 = vld [vmem:[#allocation2 + $0x48] sm:$0xf]
    %v95 = vld [vmem:[#allocation2 + $0x4c] sm:$0xf]
    %v96 = vld [vmem:[#allocation2 + $0x50] sm:$0xf]
    %v97 = vld [vmem:[#allocation2 + $0x54] sm:$0xf]
    %v98 = vld [vmem:[#allocation2 + $0x58] sm:$0xf]
    %v99 = vld [vmem:[#allocation2 + $0x5c] sm:$0xf]
    %v100 = vld [vmem:[#allocation2 + $0x60] sm:$0xf]
    %v101 = vld [vmem:[#allocation2 + $0x64] sm:$0xf]
    %v102 = vld [vmem:[#allocation2 + $0x68] sm:$0xf]
    %v103 = vld [vmem:[#allocation2 + $0x6c] sm:$0xf]
    %v104 = vld [vmem:[#allocation2 + $0x70] sm:$0xf]
    %v105 = vld [vmem:[#allocation2 + $0x74] sm:$0xf]
    %v106 = vld [vmem:[#allocation2 + $0x78] sm:$0xf]
    %v107 = vld [vmem:[#allocation2 + $0x7c] sm:$0xf]
    %v108 = vld [vmem:[#allocation2 + $0x80] sm:$0xf]
    %v109 = vld [vmem:[#allocation2 + $0x84] sm:$0xf]
    %v110 = vld [vmem:[#allocation2 + $0x88] sm:$0xf]
    %v111 = vld [vmem:[#allocation2 + $0x8c] sm:$0xf]
    %v112 = vld [vmem:[#allocation2 + $0x90] sm:$0xf]
    %v113 = vld [vmem:[#allocation2 + $0x94] sm:$0xf]
    %v114 = vld [vmem:[#allocation2 + $0x98] sm:$0xf]
    %v115 = vld [vmem:[#allocation2 + $0x9c] sm:$0xf]
    %v116 = vld [vmem:[#allocation2 + $0xa0] sm:$0xf]
    %v117 = vld [vmem:[#allocation2 + $0xa4] sm:$0xf]
    %v118 = vld [vmem:[#allocation2 + $0xa8] sm:$0xf]
    %v119 = vld [vmem:[#allocation2 + $0xac] sm:$0xf]
    %v120 = vld [vmem:[#allocation2 + $0xb0] sm:$0xf]
    %v121 = vld [vmem:[#allocation2 + $0xb4] sm:$0xf]
    %v122 = vld [vmem:[#allocation2 + $0xb8] sm:$0xf]
    %v123 = vld [vmem:[#allocation2 + $0xbc] sm:$0xf]
    %v124 = vld [vmem:[#allocation4] sm:$0x1]
    %v126 = vlaneseq
    %v127 = vshrl.u32 %v126, 7
    %v128 = vsub.s32 0, %v127
    %v129 = vrot.slane %v124, %v128
    %v135 = vunpack.c.l.b16 %v72
    %v136 = vunpack.c.h.b16 %v72
    %v137 = vunpack.c.l.b16 %v73
    %v138 = vunpack.c.l.b16 %v74
    %v139 = vunpack.c.h.b16 %v74
    %v140 = vunpack.c.l.b16 %v75
    %v141 = vpack.c.b16 %v138, %v135
    %v142 = vpack.c.b16 %v139, %v136
    %v143 = vpack.c.b16 %v140, %v137
    %v195 = vunpack.c.l.b16 %v76
    %v196 = vunpack.c.l.b16 %v77
    %v197 = vunpack.c.l.b16 %v78
    %v198 = vunpack.c.l.b16 %v79
    %v199 = vunpack.c.l.b16 %v80
    %v200 = vunpack.c.l.b16 %v81
    %v201 = vunpack.c.l.b16 %v82
    %v202 = vunpack.c.l.b16 %v83
    %v203 = vunpack.c.l.b16 %v84
    %v204 = vunpack.c.l.b16 %v85
    %v205 = vunpack.c.l.b16 %v86
    %v206 = vunpack.c.l.b16 %v87
    %v207 = vunpack.c.l.b16 %v88
    %v208 = vunpack.c.l.b16 %v89
    %v209 = vunpack.c.l.b16 %v90
    %v210 = vunpack.c.l.b16 %v91
    %v211 = vunpack.c.l.b16 %v92
    %v212 = vunpack.c.l.b16 %v93
    %v213 = vunpack.c.l.b16 %v94
    %v214 = vunpack.c.l.b16 %v95
    %v215 = vunpack.c.l.b16 %v96
    %v216 = vunpack.c.l.b16 %v97
    %v217 = vunpack.c.l.b16 %v98
    %v218 = vunpack.c.l.b16 %v99
    %v219 = vunpack.c.l.b16 %v100
    %v220 = vunpack.c.l.b16 %v101
    %v221 = vunpack.c.l.b16 %v102
    %v222 = vunpack.c.l.b16 %v103
    %v223 = vunpack.c.l.b16 %v104
    %v224 = vunpack.c.l.b16 %v105
    %v225 = vunpack.c.l.b16 %v106
    %v226 = vunpack.c.l.b16 %v107
    %v227 = vunpack.c.l.b16 %v108
    %v228 = vunpack.c.l.b16 %v109
    %v229 = vunpack.c.l.b16 %v110
    %v230 = vunpack.c.l.b16 %v111
    %v231 = vunpack.c.l.b16 %v112
    %v232 = vunpack.c.l.b16 %v113
    %v233 = vunpack.c.l.b16 %v114
    %v234 = vunpack.c.l.b16 %v115
    %v235 = vunpack.c.l.b16 %v116
    %v236 = vunpack.c.l.b16 %v117
    %v237 = vunpack.c.l.b16 %v118
    %v238 = vunpack.c.l.b16 %v119
    %v239 = vunpack.c.l.b16 %v120
    %v240 = vunpack.c.l.b16 %v121
    %v241 = vunpack.c.l.b16 %v122
    %v242 = vunpack.c.l.b16 %v123
    %v243 = vpack.c.b16 %v196, %v195
    %v244 = vpack.c.b16 %v198, %v197
    %v245 = vpack.c.b16 %v200, %v199
    %v246 = vpack.c.b16 %v202, %v201
    %v247 = vpack.c.b16 %v204, %v203
    %v248 = vpack.c.b16 %v206, %v205
    %v249 = vpack.c.b16 %v208, %v207
    %v250 = vpack.c.b16 %v210, %v209
    %v251 = vpack.c.b16 %v212, %v211
    %v252 = vpack.c.b16 %v214, %v213
    %v253 = vpack.c.b16 %v216, %v215
    %v254 = vpack.c.b16 %v218, %v217
    %v255 = vpack.c.b16 %v220, %v219
    %v256 = vpack.c.b16 %v222, %v221
    %v257 = vpack.c.b16 %v224, %v223
    %v258 = vpack.c.b16 %v226, %v225
    %v259 = vpack.c.b16 %v228, %v227
    %v260 = vpack.c.b16 %v230, %v229
    %v261 = vpack.c.b16 %v232, %v231
    %v262 = vpack.c.b16 %v234, %v233
    %v263 = vpack.c.b16 %v236, %v235
    %v264 = vpack.c.b16 %v238, %v237
    %v265 = vpack.c.b16 %v240, %v239
    %v266 = vpack.c.b16 %v242, %v241
    %291 = vmatprep.subr.bf16.mxu0 0
    %292 = vmatpush1.bf16.msra.mxu0 %v243
    %293 = vmatprep.subr.bf16.mxu0 0
    %294 = vmatpush1.bf16.msra.mxu0 %v244
    %295 = vmatprep.subr.bf16.mxu0 0
    %296 = vmatpush1.bf16.msra.mxu0 %v245
    %297 = vmatprep.subr.bf16.mxu0 0
    %298 = vmatpush1.bf16.msra.mxu0 %v246
    %299 = vmatprep.subr.bf16.mxu0 0
    %300 = vmatpush1.bf16.msra.mxu0 %v247
    %301 = vmatprep.subr.bf16.mxu0 0
    %302 = vmatpush1.bf16.msra.mxu0 %v248
    %303 = vmatprep.subr.bf16.mxu0 0
    %304 = vmatpush1.bf16.msra.mxu0 %v249
    %305 = vmatprep.subr.bf16.mxu0 0
    %306 = vmatpush1.bf16.msra.mxu0 %v250
    %307 = vmatprep.subr.bf16.mxu0 0
    %308 = vmatpush1.bf16.msra.mxu0 %v251
    %309 = vmatprep.subr.bf16.mxu0 0
    %310 = vmatpush1.bf16.msra.mxu0 %v252
    %311 = vmatprep.subr.bf16.mxu0 0
    %312 = vmatpush1.bf16.msra.mxu0 %v253
    %313 = vmatprep.subr.bf16.mxu0 0
    %314 = vmatpush1.bf16.msra.mxu0 %v254
    %315 = vmatprep.subr.bf16.mxu0 0
    %316 = vmatpush1.bf16.msra.mxu0 %v255
    %317 = vmatprep.subr.bf16.mxu0 0
    %318 = vmatpush1.bf16.msra.mxu0 %v256
    %319 = vmatprep.subr.bf16.mxu0 0
    %320 = vmatpush1.bf16.msra.mxu0 %v257
    %321 = vmatprep.subr.bf16.mxu0 0
    %322 = vmatpush1.bf16.msra.mxu0 %v258
    %323 = vmatprep.mubr.bf16.mxu0 %v142
    %324 = vmatmul.mubr.bf16.gmra.mrb[0].mxu0 %v141
    %v325 = vpop.f32.mrb[0].mxu0
    %v326 = vadd.f32 %v129, %v325
    %v327 = vpop.f32.mrb[0].mxu0
    %v328 = vpop.f32.mrb[0].mxu0
    %v329 = vadd.f32 %v129, %v328
    %v330 = vpop.f32.mrb[0].mxu0
    %331 = vdwg.mxu0
    %332 = vmatprep.subr.bf16.mxu0 0
    %333 = vmatpush1.bf16.msra.mxu0 %v259
    %334 = vmatprep.subr.bf16.mxu0 0
    %335 = vmatpush1.bf16.msra.mxu0 %v260
    %336 = vmatprep.subr.bf16.mxu0 0
    %337 = vmatpush1.bf16.msra.mxu0 %v261
    %338 = vmatprep.subr.bf16.mxu0 0
    %339 = vmatpush1.bf16.msra.mxu0 %v262
    %340 = vmatprep.subr.bf16.mxu0 0
    %341 = vmatpush1.bf16.msra.mxu0 %v263
    %342 = vmatprep.subr.bf16.mxu0 0
    %343 = vmatpush1.bf16.msra.mxu0 %v264
    %344 = vmatprep.subr.bf16.mxu0 0
    %345 = vmatpush1.bf16.msra.mxu0 %v265
    %346 = vmatprep.subr.bf16.mxu0 0
    %347 = vmatpush1.bf16.msra.mxu0 %v266
    %348 = vmatprep.subr.bf16.mxu0 0
    %349 = vmatpush1.bf16.msra.mxu0 0
    %350 = vmatprep.subr.bf16.mxu0 0
    %351 = vmatpush1.bf16.msra.mxu0 0
    %352 = vmatprep.subr.bf16.mxu0 0
    %353 = vmatpush1.bf16.msra.mxu0 0
    %354 = vmatprep.subr.bf16.mxu0 0
    %355 = vmatpush1.bf16.msra.mxu0 0
    %356 = vmatprep.subr.bf16.mxu0 0
    %357 = vmatpush1.bf16.msra.mxu0 0
    %358 = vmatprep.subr.bf16.mxu0 0
    %359 = vmatpush1.bf16.msra.mxu0 0
    %360 = vmatprep.subr.bf16.mxu0 0
    %361 = vmatpush1.bf16.msra.mxu0 0
    %362 = vmatprep.subr.bf16.mxu0 0
    %363 = vmatpush1.bf16.msra.mxu0 0
    %364 = vmatprep.mubr.bf16.mxu0 0
    %365 = vmatmul.mubr.bf16.gmra.mrb[0].mxu0 %v143
    %v366 = vpop.f32.mrb[0].mxu0
    %v367 = vadd.f32 %v326, %v366
    %v368 = vpop.f32.mrb[0].mxu0
    %v369 = vpop.f32.mrb[0].mxu0
    %v370 = vadd.f32 %v329, %v369
    %v371 = vpop.f32.mrb[0].mxu0
    %372 = vdwg.mxu0
    %vm373 = vcmp.ge.f32.partialorder %v367, 0.0
    %vm374 = vcmp.ge.f32.partialorder %v370, 0.0
    %v375 = vmul.f32 %v367, 0.2
    %v376 = vmul.f32 %v370, 0.2
    %v377 = vsel %vm373, %v367, %v375
    %v378 = vsel %vm374, %v370, %v376
    %v379 = vpack.c.bf16 %v378, %v377
    %v380 = vld [vmem:[#allocation6] sm:$0xff]
    %v381 = vld [vmem:[#allocation6 + $0x8] sm:$0xff]
    %v382 = vld [vmem:[#allocation6 + $0x10] sm:$0xff]
    %v383 = vld [vmem:[#allocation6 + $0x18] sm:$0xff]
    %v384 = vld [vmem:[#allocation6 + $0x20] sm:$0xff]
    %v385 = vld [vmem:[#allocation6 + $0x28] sm:$0xff]
    %v386 = vld [vmem:[#allocation6 + $0x30] sm:$0xff]
    %v387 = vld [vmem:[#allocation6 + $0x38] sm:$0xff]
    %v388 = vld [vmem:[#allocation6 + $0x40] sm:$0xff]
    %v389 = vld [vmem:[#allocation6 + $0x48] sm:$0xff]
    %v390 = vld [vmem:[#allocation6 + $0x50] sm:$0xff]
    %v391 = vld [vmem:[#allocation6 + $0x58] sm:$0xff]
    %v392 = vld [vmem:[#allocation6 + $0x60] sm:$0xff]
    %v393 = vld [vmem:[#allocation6 + $0x68] sm:$0xff]
    %v394 = vld [vmem:[#allocation6 + $0x70] sm:$0xff]
    %v395 = vld [vmem:[#allocation6 + $0x78] sm:$0xff]
    %v396 = vld [vmem:[#allocation6 + $0x80] sm:$0xff]
    %v397 = vld [vmem:[#allocation6 + $0x88] sm:$0xff]
    %v398 = vld [vmem:[#allocation6 + $0x90] sm:$0xff]
    %v399 = vld [vmem:[#allocation6 + $0x98] sm:$0xff]
    %v400 = vld [vmem:[#allocation6 + $0xa0] sm:$0xff]
    %v401 = vld [vmem:[#allocation6 + $0xa8] sm:$0xff]
    %v402 = vld [vmem:[#allocation6 + $0xb0] sm:$0xff]
    %v403 = vld [vmem:[#allocation6 + $0xb8] sm:$0xff]
    %v404 = vld [vmem:[#allocation6 + $0xc0] sm:$0xff]
    %v405 = vld [vmem:[#allocation6 + $0xc8] sm:$0xff]
    %v406 = vld [vmem:[#allocation6 + $0xd0] sm:$0xff]
    %v407 = vld [vmem:[#allocation6 + $0xd8] sm:$0xff]
    %v408 = vld [vmem:[#allocation6 + $0xe0] sm:$0xff]
    %v409 = vld [vmem:[#allocation6 + $0xe8] sm:$0xff]
    %v410 = vld [vmem:[#allocation6 + $0xf0] sm:$0xff]
    %v411 = vld [vmem:[#allocation6 + $0xf8] sm:$0xff]
    %v412 = vld [vmem:[#allocation6 + $0x100] sm:$0xff]
    %v413 = vld [vmem:[#allocation6 + $0x108] sm:$0xff]
    %v414 = vld [vmem:[#allocation6 + $0x110] sm:$0xff]
    %v415 = vld [vmem:[#allocation6 + $0x118] sm:$0xff]
    %v416 = vld [vmem:[#allocation6 + $0x120] sm:$0xff]
    %v417 = vld [vmem:[#allocation6 + $0x128] sm:$0xff]
    %v418 = vld [vmem:[#allocation6 + $0x130] sm:$0xff]
    %v419 = vld [vmem:[#allocation6 + $0x138] sm:$0xff]
    %v420 = vld [vmem:[#allocation6 + $0x140] sm:$0xff]
    %v421 = vld [vmem:[#allocation6 + $0x148] sm:$0xff]
    %v422 = vld [vmem:[#allocation6 + $0x150] sm:$0xff]
    %v423 = vld [vmem:[#allocation6 + $0x158] sm:$0xff]
    %v424 = vld [vmem:[#allocation6 + $0x160] sm:$0xff]
    %v425 = vld [vmem:[#allocation6 + $0x168] sm:$0xff]
    %v426 = vld [vmem:[#allocation6 + $0x170] sm:$0xff]
    %v427 = vld [vmem:[#allocation6 + $0x178] sm:$0xff]
    %v428 = vld [vmem:[#allocation7] sm:$0x3f]
    %v430 = vlaneseq
    %v431 = vshrl.u32 %v430, 7
    %v432 = vsub.s32 0, %v431
    %v433 = vrot.slane %v428, %v432
    %v434 = vlaneseq
    %v435 = vshrl.u32 %v434, 7
    %v436 = vsub.s32 1, %v435
    %v437 = vrot.slane %v428, %v436
    %v438 = vlaneseq
    %v439 = vshrl.u32 %v438, 7
    %v440 = vsub.s32 2, %v439
    %v441 = vrot.slane %v428, %v440
    %v442 = vlaneseq
    %v443 = vshrl.u32 %v442, 7
    %v444 = vsub.s32 3, %v443
    %v445 = vrot.slane %v428, %v444
    %v446 = vlaneseq
    %v447 = vshrl.u32 %v446, 7
    %v448 = vsub.s32 4, %v447
    %v449 = vrot.slane %v428, %v448
    %v450 = vlaneseq
    %v451 = vshrl.u32 %v450, 7
    %v452 = vsub.s32 5, %v451
    %v453 = vrot.slane %v428, %v452
    %v508 = vunpack.c.l.b16 %v380
    %v509 = vunpack.c.h.b16 %v380
    %v510 = vunpack.c.l.b16 %v381
    %v511 = vunpack.c.h.b16 %v381
    %v512 = vunpack.c.l.b16 %v382
    %v513 = vunpack.c.h.b16 %v382
    %v514 = vunpack.c.l.b16 %v383
    %v515 = vunpack.c.h.b16 %v383
    %v516 = vunpack.c.l.b16 %v384
    %v517 = vunpack.c.h.b16 %v384
    %v518 = vunpack.c.l.b16 %v385
    %v519 = vunpack.c.h.b16 %v385
    %v520 = vunpack.c.l.b16 %v386
    %v521 = vunpack.c.h.b16 %v386
    %v522 = vunpack.c.l.b16 %v387
    %v523 = vunpack.c.h.b16 %v387
    %v524 = vunpack.c.l.b16 %v388
    %v525 = vunpack.c.h.b16 %v388
    %v526 = vunpack.c.l.b16 %v389
    %v527 = vunpack.c.h.b16 %v389
    %v528 = vunpack.c.l.b16 %v390
    %v529 = vunpack.c.h.b16 %v390
    %v530 = vunpack.c.l.b16 %v391
    %v531 = vunpack.c.h.b16 %v391
    %v532 = vunpack.c.l.b16 %v392
    %v533 = vunpack.c.h.b16 %v392
    %v534 = vunpack.c.l.b16 %v393
    %v535 = vunpack.c.h.b16 %v393
    %v536 = vunpack.c.l.b16 %v394
    %v537 = vunpack.c.h.b16 %v394
    %v538 = vunpack.c.l.b16 %v395
    %v539 = vunpack.c.h.b16 %v395
    %v540 = vunpack.c.l.b16 %v396
    %v541 = vunpack.c.h.b16 %v396
    %v542 = vunpack.c.l.b16 %v397
    %v543 = vunpack.c.h.b16 %v397
    %v544 = vunpack.c.l.b16 %v398
    %v545 = vunpack.c.h.b16 %v398
    %v546 = vunpack.c.l.b16 %v399
    %v547 = vunpack.c.h.b16 %v399
    %v548 = vunpack.c.l.b16 %v400
    %v549 = vunpack.c.h.b16 %v400
    %v550 = vunpack.c.l.b16 %v401
    %v551 = vunpack.c.h.b16 %v401
    %v552 = vunpack.c.l.b16 %v402
    %v553 = vunpack.c.h.b16 %v402
    %v554 = vunpack.c.l.b16 %v403
    %v555 = vunpack.c.h.b16 %v403
    %v556 = vunpack.c.l.b16 %v404
    %v557 = vunpack.c.h.b16 %v404
    %v558 = vunpack.c.l.b16 %v405
    %v559 = vunpack.c.h.b16 %v405
    %v560 = vunpack.c.l.b16 %v406
    %v561 = vunpack.c.h.b16 %v406
    %v562 = vunpack.c.l.b16 %v407
    %v563 = vunpack.c.h.b16 %v407
    %v564 = vunpack.c.l.b16 %v408
    %v565 = vunpack.c.h.b16 %v408
    %v566 = vunpack.c.l.b16 %v409
    %v567 = vunpack.c.h.b16 %v409
    %v568 = vunpack.c.l.b16 %v410
    %v569 = vunpack.c.h.b16 %v410
    %v570 = vunpack.c.l.b16 %v411
    %v571 = vunpack.c.h.b16 %v411
    %v572 = vunpack.c.l.b16 %v412
    %v573 = vunpack.c.h.b16 %v412
    %v574 = vunpack.c.l.b16 %v413
    %v575 = vunpack.c.h.b16 %v413
    %v576 = vunpack.c.l.b16 %v414
    %v577 = vunpack.c.h.b16 %v414
    %v578 = vunpack.c.l.b16 %v415
    %v579 = vunpack.c.h.b16 %v415
    %v580 = vunpack.c.l.b16 %v416
    %v581 = vunpack.c.h.b16 %v416
    %v582 = vunpack.c.l.b16 %v417
    %v583 = vunpack.c.h.b16 %v417
    %v584 = vunpack.c.l.b16 %v418
    %v585 = vunpack.c.h.b16 %v418
    %v586 = vunpack.c.l.b16 %v419
    %v587 = vunpack.c.h.b16 %v419
    %v588 = vunpack.c.l.b16 %v420
    %v589 = vunpack.c.h.b16 %v420
    %v590 = vunpack.c.l.b16 %v421
    %v591 = vunpack.c.h.b16 %v421
    %v592 = vunpack.c.l.b16 %v422
    %v593 = vunpack.c.h.b16 %v422
    %v594 = vunpack.c.l.b16 %v423
    %v595 = vunpack.c.h.b16 %v423
    %v596 = vunpack.c.l.b16 %v424
    %v597 = vunpack.c.h.b16 %v424
    %v598 = vunpack.c.l.b16 %v425
    %v599 = vunpack.c.h.b16 %v425
    %v600 = vunpack.c.l.b16 %v426
    %v601 = vunpack.c.h.b16 %v426
    %v602 = vunpack.c.l.b16 %v427
    %v603 = vunpack.c.h.b16 %v427
    %v604 = vpack.c.b16 %v514, %v508
    %v605 = vpack.c.b16 %v515, %v509
    %v606 = vpack.c.b16 %v516, %v510
    %v607 = vpack.c.b16 %v517, %v511
    %v608 = vpack.c.b16 %v518, %v512
    %v609 = vpack.c.b16 %v519, %v513
    %v610 = vpack.c.b16 %v526, %v520
    %v611 = vpack.c.b16 %v527, %v521
    %v612 = vpack.c.b16 %v528, %v522
    %v613 = vpack.c.b16 %v529, %v523
    %v614 = vpack.c.b16 %v530, %v524
    %v615 = vpack.c.b16 %v531, %v525
    %v616 = vpack.c.b16 %v538, %v532
    %v617 = vpack.c.b16 %v539, %v533
    %v618 = vpack.c.b16 %v540, %v534
    %v619 = vpack.c.b16 %v541, %v535
    %v620 = vpack.c.b16 %v542, %v536
    %v621 = vpack.c.b16 %v543, %v537
    %v622 = vpack.c.b16 %v550, %v544
    %v623 = vpack.c.b16 %v551, %v545
    %v624 = vpack.c.b16 %v552, %v546
    %v625 = vpack.c.b16 %v553, %v547
    %v626 = vpack.c.b16 %v554, %v548
    %v627 = vpack.c.b16 %v555, %v549
    %v628 = vpack.c.b16 %v562, %v556
    %v629 = vpack.c.b16 %v563, %v557
    %v630 = vpack.c.b16 %v564, %v558
    %v631 = vpack.c.b16 %v565, %v559
    %v632 = vpack.c.b16 %v566, %v560
    %v633 = vpack.c.b16 %v567, %v561
    %v634 = vpack.c.b16 %v574, %v568
    %v635 = vpack.c.b16 %v575, %v569
    %v636 = vpack.c.b16 %v576, %v570
    %v637 = vpack.c.b16 %v577, %v571
    %v638 = vpack.c.b16 %v578, %v572
    %v639 = vpack.c.b16 %v579, %v573
    %v640 = vpack.c.b16 %v586, %v580
    %v641 = vpack.c.b16 %v587, %v581
    %v642 = vpack.c.b16 %v588, %v582
    %v643 = vpack.c.b16 %v589, %v583
    %v644 = vpack.c.b16 %v590, %v584
    %v645 = vpack.c.b16 %v591, %v585
    %v646 = vpack.c.b16 %v598, %v592
    %v647 = vpack.c.b16 %v599, %v593
    %v648 = vpack.c.b16 %v600, %v594
    %v649 = vpack.c.b16 %v601, %v595
    %v650 = vpack.c.b16 %v602, %v596
    %v651 = vpack.c.b16 %v603, %v597
    %700 = vmatprep.subr.bf16.mxu0 %v605
    %701 = vmatpush1.bf16.msra.mxu0 %v604
    %702 = vmatprep.subr.bf16.mxu0 %v611
    %703 = vmatpush1.bf16.msra.mxu0 %v610
    %704 = vmatprep.subr.bf16.mxu0 %v617
    %705 = vmatpush1.bf16.msra.mxu0 %v616
    %706 = vmatprep.subr.bf16.mxu0 %v623
    %707 = vmatpush1.bf16.msra.mxu0 %v622
    %708 = vmatprep.subr.bf16.mxu0 %v629
    %709 = vmatpush1.bf16.msra.mxu0 %v628
    %710 = vmatprep.subr.bf16.mxu0 %v635
    %711 = vmatpush1.bf16.msra.mxu0 %v634
    %712 = vmatprep.subr.bf16.mxu0 %v641
    %713 = vmatpush1.bf16.msra.mxu0 %v640
    %714 = vmatprep.subr.bf16.mxu0 %v647
    %715 = vmatpush1.bf16.msra.mxu0 %v646
    %716 = vmatprep.subr.bf16.mxu0 0
    %717 = vmatpush1.bf16.msra.mxu0 0
    %718 = vmatprep.subr.bf16.mxu0 0
    %719 = vmatpush1.bf16.msra.mxu0 0
    %720 = vmatprep.subr.bf16.mxu0 0
    %721 = vmatpush1.bf16.msra.mxu0 0
    %722 = vmatprep.subr.bf16.mxu0 0
    %723 = vmatpush1.bf16.msra.mxu0 0
    %724 = vmatprep.subr.bf16.mxu0 0
    %725 = vmatpush1.bf16.msra.mxu0 0
    %726 = vmatprep.subr.bf16.mxu0 0
    %727 = vmatpush1.bf16.msra.mxu0 0
    %728 = vmatprep.subr.bf16.mxu0 0
    %729 = vmatpush1.bf16.msra.mxu0 0
    %730 = vmatprep.subr.bf16.mxu0 0
    %731 = vmatpush1.bf16.msra.mxu0 0
    %732 = vmatprep.mubr.bf16.mxu0 0
    %733 = vmatmul.mubr.bf16.gmra.mrb[0].mxu0 %v379
    %v734 = vpop.f32.mrb[0].mxu0
    %v735 = vadd.f32 %v433, %v734
    %v736 = vpop.f32.mrb[0].mxu0
    %v737 = vadd.f32 %v437, %v736
    %v738 = vpop.f32.mrb[0].mxu0
    %v739 = vadd.f32 %v433, %v738
    %v740 = vpop.f32.mrb[0].mxu0
    %v741 = vadd.f32 %v437, %v740
    %742 = vdwg.mxu0
    %743 = vmatprep.subr.bf16.mxu0 %v607
    %744 = vmatpush1.bf16.msra.mxu0 %v606
    %745 = vmatprep.subr.bf16.mxu0 %v613
    %746 = vmatpush1.bf16.msra.mxu0 %v612
    %747 = vmatprep.subr.bf16.mxu0 %v619
    %748 = vmatpush1.bf16.msra.mxu0 %v618
    %749 = vmatprep.subr.bf16.mxu0 %v625
    %750 = vmatpush1.bf16.msra.mxu0 %v624
    %751 = vmatprep.subr.bf16.mxu0 %v631
    %752 = vmatpush1.bf16.msra.mxu0 %v630
    %753 = vmatprep.subr.bf16.mxu0 %v637
    %754 = vmatpush1.bf16.msra.mxu0 %v636
    %755 = vmatprep.subr.bf16.mxu0 %v643
    %756 = vmatpush1.bf16.msra.mxu0 %v642
    %757 = vmatprep.subr.bf16.mxu0 %v649
    %758 = vmatpush1.bf16.msra.mxu0 %v648
    %759 = vmatprep.subr.bf16.mxu0 0
    %760 = vmatpush1.bf16.msra.mxu0 0
    %761 = vmatprep.subr.bf16.mxu0 0
    %762 = vmatpush1.bf16.msra.mxu0 0
    %763 = vmatprep.subr.bf16.mxu0 0
    %764 = vmatpush1.bf16.msra.mxu0 0
    %765 = vmatprep.subr.bf16.mxu0 0
    %766 = vmatpush1.bf16.msra.mxu0 0
    %767 = vmatprep.subr.bf16.mxu0 0
    %768 = vmatpush1.bf16.msra.mxu0 0
    %769 = vmatprep.subr.bf16.mxu0 0
    %770 = vmatpush1.bf16.msra.mxu0 0
    %771 = vmatprep.subr.bf16.mxu0 0
    %772 = vmatpush1.bf16.msra.mxu0 0
    %773 = vmatprep.subr.bf16.mxu0 0
    %774 = vmatpush1.bf16.msra.mxu0 0
    %775 = vmatprep.mubr.bf16.mxu0 0
    %776 = vmatmul.mubr.bf16.gmra.mrb[0].mxu0 %v379
    %v777 = vpop.f32.mrb[0].mxu0
    %v778 = vadd.f32 %v441, %v777
    %v779 = vpop.f32.mrb[0].mxu0
    %v780 = vadd.f32 %v445, %v779
    %v781 = vpop.f32.mrb[0].mxu0
    %v782 = vadd.f32 %v441, %v781
    %v783 = vpop.f32.mrb[0].mxu0
    %v784 = vadd.f32 %v445, %v783
    %785 = vdwg.mxu0
    %786 = vmatprep.subr.bf16.mxu0 %v609
    %787 = vmatpush1.bf16.msra.mxu0 %v608
    %788 = vmatprep.subr.bf16.mxu0 %v615
    %789 = vmatpush1.bf16.msra.mxu0 %v614
    %790 = vmatprep.subr.bf16.mxu0 %v621
    %791 = vmatpush1.bf16.msra.mxu0 %v620
    %792 = vmatprep.subr.bf16.mxu0 %v627
    %793 = vmatpush1.bf16.msra.mxu0 %v626
    %794 = vmatprep.subr.bf16.mxu0 %v633
    %795 = vmatpush1.bf16.msra.mxu0 %v632
    %796 = vmatprep.subr.bf16.mxu0 %v639
    %797 = vmatpush1.bf16.msra.mxu0 %v638
    %798 = vmatprep.subr.bf16.mxu0 %v645
    %799 = vmatpush1.bf16.msra.mxu0 %v644
    %800 = vmatprep.subr.bf16.mxu0 %v651
    %801 = vmatpush1.bf16.msra.mxu0 %v650
    %802 = vmatprep.subr.bf16.mxu0 0
    %803 = vmatpush1.bf16.msra.mxu0 0
    %804 = vmatprep.subr.bf16.mxu0 0
    %805 = vmatpush1.bf16.msra.mxu0 0
    %806 = vmatprep.subr.bf16.mxu0 0
    %807 = vmatpush1.bf16.msra.mxu0 0
    %808 = vmatprep.subr.bf16.mxu0 0
    %809 = vmatpush1.bf16.msra.mxu0 0
    %810 = vmatprep.subr.bf16.mxu0 0
    %811 = vmatpush1.bf16.msra.mxu0 0
    %812 = vmatprep.subr.bf16.mxu0 0
    %813 = vmatpush1.bf16.msra.mxu0 0
    %814 = vmatprep.subr.bf16.mxu0 0
    %815 = vmatpush1.bf16.msra.mxu0 0
    %816 = vmatprep.subr.bf16.mxu0 0
    %817 = vmatpush1.bf16.msra.mxu0 0
    %818 = vmatprep.mubr.bf16.mxu0 0
    %819 = vmatmul.mubr.bf16.gmra.mrb[0].mxu0 %v379
    %v820 = vpop.f32.mrb[0].mxu0
    %v821 = vadd.f32 %v449, %v820
    %v822 = vpop.f32.mrb[0].mxu0
    %v823 = vadd.f32 %v453, %v822
    %v824 = vpop.f32.mrb[0].mxu0
    %v825 = vadd.f32 %v449, %v824
    %v826 = vpop.f32.mrb[0].mxu0
    %v827 = vadd.f32 %v453, %v826
    %828 = vdwg.mxu0
    %vm829 = vcmp.ge.f32.partialorder %v735, 0.0
    %vm830 = vcmp.ge.f32.partialorder %v737, 0.0
    %vm831 = vcmp.ge.f32.partialorder %v778, 0.0
    %vm832 = vcmp.ge.f32.partialorder %v780, 0.0
    %vm833 = vcmp.ge.f32.partialorder %v821, 0.0
    %vm834 = vcmp.ge.f32.partialorder %v823, 0.0
    %vm835 = vcmp.ge.f32.partialorder %v739, 0.0
    %vm836 = vcmp.ge.f32.partialorder %v741, 0.0
    %vm837 = vcmp.ge.f32.partialorder %v782, 0.0
    %vm838 = vcmp.ge.f32.partialorder %v784, 0.0
    %vm839 = vcmp.ge.f32.partialorder %v825, 0.0
    %vm840 = vcmp.ge.f32.partialorder %v827, 0.0
    %v841 = vmul.f32 %v735, 0.2
    %v842 = vmul.f32 %v737, 0.2
    %v843 = vmul.f32 %v778, 0.2
    %v844 = vmul.f32 %v780, 0.2
    %v845 = vmul.f32 %v821, 0.2
    %v846 = vmul.f32 %v823, 0.2
    %v847 = vmul.f32 %v739, 0.2
    %v848 = vmul.f32 %v741, 0.2
    %v849 = vmul.f32 %v782, 0.2
    %v850 = vmul.f32 %v784, 0.2
    %v851 = vmul.f32 %v825, 0.2
    %v852 = vmul.f32 %v827, 0.2
    %v853 = vsel %vm829, %v735, %v841
    %v854 = vsel %vm830, %v737, %v842
    %v855 = vsel %vm831, %v778, %v843
    %v856 = vsel %vm832, %v780, %v844
    %v857 = vsel %vm833, %v821, %v845
    %v858 = vsel %vm834, %v823, %v846
    %v859 = vsel %vm835, %v739, %v847
    %v860 = vsel %vm836, %v741, %v848
    %v861 = vsel %vm837, %v782, %v849
    %v862 = vsel %vm838, %v784, %v850
    %v863 = vsel %vm839, %v825, %v851
    %v864 = vsel %vm840, %v827, %v852
    %v865 = vpack.c.bf16 %v859, %v853
    %v866 = vpack.c.bf16 %v860, %v854
    %v867 = vpack.c.bf16 %v861, %v855
    %v868 = vpack.c.bf16 %v862, %v856
    %v869 = vpack.c.bf16 %v863, %v857
    %v870 = vpack.c.bf16 %v864, %v858
    %v877 = vunpack.c.l.b16 %v865
    %v878 = vunpack.c.l.b16 %v866
    %v879 = vunpack.c.l.b16 %v867
    %v880 = vunpack.c.l.b16 %v868
    %v881 = vunpack.c.l.b16 %v869
    %v882 = vunpack.c.l.b16 %v870
    %v883 = vunpack.c.h.b16 %v865
    %v884 = vunpack.c.h.b16 %v866
    %v885 = vunpack.c.h.b16 %v867
    %v886 = vunpack.c.h.b16 %v868
    %v887 = vunpack.c.h.b16 %v869
    %v888 = vunpack.c.h.b16 %v870
    %v889 = vpack.c.b16 %v878, %v877
    %v890 = vpack.c.b16 %v880, %v879
    %v891 = vpack.c.b16 %v882, %v881
    %v892 = vpack.c.b16 %v884, %v883
    %v893 = vpack.c.b16 %v886, %v885
    %v894 = vpack.c.b16 %v888, %v887
    %901 = vst [vmem:[%s5] sm:$0xff] %v889
    %902 = vst [vmem:[%s5 + $0x8] sm:$0xff] %v890
    %903 = vst [vmem:[%s5 + $0x10] sm:$0xff] %v891
    %904 = vst [vmem:[%s5 + $0x18] sm:$0xff] %v892
    %905 = vst [vmem:[%s5 + $0x20] sm:$0xff] %v893
    %906 = vst [vmem:[%s5 + $0x28] sm:$0xff] %v894
    // Predicated region
    $region38: #{generator_forward.7} parent=1 // pred_check
      _
    $region39: #{generator_forward.7} parent=1 // pred_check_branch
      %908 = sbr.rel (0) target = $region41
    $region40: #{generator_forward.7} parent=1 // pred_region
      _
    $region41: #{generator_forward.7} parent=1 // pred_fallthru
      _
    // Predicated region
    $region42: #{generator_forward.7} parent=1 // pred_check
      _
    $region43: #{generator_forward.7} parent=1 // pred_check_branch
      %910 = sbr.rel (0) target = $region45
    $region44: #{generator_forward.7} parent=1 // pred_region
      _
    $region45: #{generator_forward.7} parent=1 // pred_fallthru
      _
    %911 = vsyncpa [#allocation3], 1
    %912 = vsyncpa [#allocation5], 1
    %913 = vsyncpa [#allocation8], 1

// kernel: generator_forward.9
$region0: #{generator_forward.9}
  #allocation0 [shape = 'u32[]', space=smem, size = 0x4, offset = 0x4, fixed_abs, tag = 'smem constant byte address 0x4 - core index']
  #allocation1 [shape = 'u32[144,128]{1,0:T(1,128)}', space=vmem, size = 0x12000, scoped, tag = 'internal scratch']
  %s0 = inlined_call_operand.vmem [shape: bf16[144,256], index: 0, kind: input, shape index: {}]
  %s1 = inlined_call_operand.hbm [shape: bf16[256,256], index: 1, kind: input, shape index: {}]
  %s2 = inlined_call_operand.hbm [shape: f32[1,256], index: 2, kind: input, shape index: {}]
  %s3 = inlined_call_operand.vmem [shape: bf16[144,256], index: 3, kind: output, shape index: {}]
  %s4 = sld [smem:[#allocation0]]
  $region30: #{generator_forward.9} parent=0
    _
  %s6 = ssub.s32 1, %s4
  %s7 = scalar_select 0, %s6, %s4
  $region1: #{generator_forward.9} parent=0
    #allocation2 [shape = 'u8[131072]{0}', space=vmem, size = 0x20000, scoped, tag = 'input window, operand 1, single buffered']
    #allocation3 [shape = 's32[1]{0}', space=sflag, size = 0x4, scoped, tag = 'scoped memory for generator_forward.9']
    #allocation4 [shape = 'u8[1024]{0}', space=vmem, size = 0x400, scoped, tag = 'input window, operand 2, single buffered']
    #allocation5 [shape = 's32[1]{0}', space=sflag, size = 0x4, scoped, tag = 'scoped memory for generator_forward.9']
    %8 = vsyncpa [#allocation3], 0
    %9 = vsyncpa [#allocation5], 0
    // Predicated region
    $region2: #{generator_forward.9} parent=1 // pred_check
      _
    $region3: #{generator_forward.9} parent=1 // pred_check_branch
      %11 = sbr.rel (0) target = $region5
    $region4: #{generator_forward.9} parent=1 // pred_region
      _
    $region5: #{generator_forward.9} parent=1 // pred_fallthru
      _
    // Predicated region
    $region6: #{generator_forward.9} parent=1 // pred_check
      _
    $region7: #{generator_forward.9} parent=1 // pred_check_branch
      %13 = sbr.rel (0) target = $region9
    $region8: #{generator_forward.9} parent=1 // pred_region
      %s15 = ssub.s32 4096, 4096
      %16 = vsyncadd [#allocation3], %s15
      %s17 = sshll.u32 [#allocation2], 4
      %s18 = int_to_ptr.vmem [resolvable:$true] %s17
      %23 = dma.hbm_to_vmem [thread:$0]  %s1, 4096, %s18, [#allocation3], 128, 128, 8
    $region9: #{generator_forward.9} parent=1 // pred_fallthru
      _
    // Predicated region
    $region10: #{generator_forward.9} parent=1 // pred_check
      _
    $region11: #{generator_forward.9} parent=1 // pred_check_branch
      %25 = sbr.rel (0) target = $region13
    $region12: #{generator_forward.9} parent=1 // pred_region
      %s27 = ssub.s32 32, 32
      %28 = vsyncadd [#allocation5], %s27
      %s30 = sshll.u32 [#allocation4], 4
      %s31 = int_to_ptr.vmem [resolvable:$true] %s30
      %33 = dma.hbm_to_vmem [thread:$0]  %s2, 32, %s31, [#allocation5]
    $region13: #{generator_forward.9} parent=1 // pred_fallthru
      _
    // Predicated region
    $region14: #{generator_forward.9} parent=1 // pred_check
      _
    $region15: #{generator_forward.9} parent=1 // pred_check_branch
      %35 = sbr.rel (0) target = $region17
    $region16: #{generator_forward.9} parent=1 // pred_region
      %36 = dma.done [#allocation3], 4096
    $region17: #{generator_forward.9} parent=1 // pred_fallthru
      _
    // Predicated region
    $region18: #{generator_forward.9} parent=1 // pred_check
      _
    $region19: #{generator_forward.9} parent=1 // pred_check_branch
      %38 = sbr.rel (0) target = $region21
    $region20: #{generator_forward.9} parent=1 // pred_region
      %39 = dma.done [#allocation5], 32
    $region21: #{generator_forward.9} parent=1 // pred_fallthru
      _
    %v40 = vld [vmem:[%s0] sm:$0xff]
    %v41 = vld [vmem:[%s0 + $0x8] sm:$0xff]
    %v42 = vld [vmem:[%s0 + $0x10] sm:$0xff]
    %v43 = vld [vmem:[%s0 + $0x18] sm:$0xff]
    %v44 = vld [vmem:[%s0 + $0x20] sm:$0xff]
    %v45 = vld [vmem:[%s0 + $0x28] sm:$0xff]
    %v46 = vld [vmem:[%s0 + $0x30] sm:$0xff]
    %v47 = vld [vmem:[%s0 + $0x38] sm:$0xff]
    %v48 = vld [vmem:[%s0 + $0x40] sm:$0xff]
    %v49 = vld [vmem:[%s0 + $0x48] sm:$0xff]
    %v50 = vld [vmem:[%s0 + $0x50] sm:$0xff]
    %v51 = vld [vmem:[%s0 + $0x58] sm:$0xff]
    %v52 = vld [vmem:[%s0 + $0x60] sm:$0xff]
    %v53 = vld [vmem:[%s0 + $0x68] sm:$0xff]
    %v54 = vld [vmem:[%s0 + $0x70] sm:$0xff]
    %v55 = vld [vmem:[%s0 + $0x78] sm:$0xff]
    %v56 = vld [vmem:[%s0 + $0x80] sm:$0xff]
    %v57 = vld [vmem:[%s0 + $0x88] sm:$0xff]
    %v58 = vld [vmem:[#allocation2] sm:$0xff]
    %v59 = vld [vmem:[#allocation2 + $0x8] sm:$0xff]
    %v60 = vld [vmem:[#allocation2 + $0x10] sm:$0xff]
    %v61 = vld [vmem:[#allocation2 + $0x18] sm:$0xff]
    %v62 = vld [vmem:[#allocation2 + $0x20] sm:$0xff]
    %v63 = vld [vmem:[#allocation2 + $0x28] sm:$0xff]
    %v64 = vld [vmem:[#allocation2 + $0x30] sm:$0xff]
    %v65 = vld [vmem:[#allocation2 + $0x38] sm:$0xff]
    %v66 = vld [vmem:[#allocation2 + $0x40] sm:$0xff]
    %v67 = vld [vmem:[#allocation2 + $0x48] sm:$0xff]
    %v68 = vld [vmem:[#allocation2 + $0x50] sm:$0xff]
    %v69 = vld [vmem:[#allocation2 + $0x58] sm:$0xff]
    %v70 = vld [vmem:[#allocation2 + $0x60] sm:$0xff]
    %v71 = vld [vmem:[#allocation2 + $0x68] sm:$0xff]
    %v72 = vld [vmem:[#allocation2 + $0x70] sm:$0xff]
    %v73 = vld [vmem:[#allocation2 + $0x78] sm:$0xff]
    %v74 = vld [vmem:[#allocation2 + $0x80] sm:$0xff]
    %v75 = vld [vmem:[#allocation2 + $0x88] sm:$0xff]
    %v76 = vld [vmem:[#allocation2 + $0x90] sm:$0xff]
    %v77 = vld [vmem:[#allocation2 + $0x98] sm:$0xff]
    %v78 = vld [vmem:[#allocation2 + $0xa0] sm:$0xff]
    %v79 = vld [vmem:[#allocation2 + $0xa8] sm:$0xff]
    %v80 = vld [vmem:[#allocation2 + $0xb0] sm:$0xff]
    %v81 = vld [vmem:[#allocation2 + $0xb8] sm:$0xff]
    %v82 = vld [vmem:[#allocation2 + $0xc0] sm:$0xff]
    %v83 = vld [vmem:[#allocation2 + $0xc8] sm:$0xff]
    %v84 = vld [vmem:[#allocation2 + $0xd0] sm:$0xff]
    %v85 = vld [vmem:[#allocation2 + $0xd8] sm:$0xff]
    %v86 = vld [vmem:[#allocation2 + $0xe0] sm:$0xff]
    %v87 = vld [vmem:[#allocation2 + $0xe8] sm:$0xff]
    %v88 = vld [vmem:[#allocation2 + $0xf0] sm:$0xff]
    %v89 = vld [vmem:[#allocation2 + $0xf8] sm:$0xff]
    %v90 = vld [vmem:[#allocation4] sm:$0x3]
    %v92 = vlaneseq
    %v93 = vshrl.u32 %v92, 7
    %v94 = vsub.s32 0, %v93
    %v95 = vrot.slane %v90, %v94
    %v96 = vlaneseq
    %v97 = vshrl.u32 %v96, 7
    %v98 = vsub.s32 1, %v97
    %v99 = vrot.slane %v90, %v98
    %v120 = vunpack.c.l.b16 %v40
    %v121 = vunpack.c.h.b16 %v40
    %v122 = vunpack.c.l.b16 %v41
    %v123 = vunpack.c.h.b16 %v41
    %v124 = vunpack.c.l.b16 %v42
    %v125 = vunpack.c.h.b16 %v42
    %v126 = vunpack.c.l.b16 %v43
    %v127 = vunpack.c.h.b16 %v43
    %v128 = vunpack.c.l.b16 %v44
    %v129 = vunpack.c.h.b16 %v44
    %v130 = vunpack.c.l.b16 %v45
    %v131 = vunpack.c.h.b16 %v45
    %v132 = vunpack.c.l.b16 %v46
    %v133 = vunpack.c.h.b16 %v46
    %v134 = vunpack.c.l.b16 %v47
    %v135 = vunpack.c.h.b16 %v47
    %v136 = vunpack.c.l.b16 %v48
    %v137 = vunpack.c.h.b16 %v48
    %v138 = vunpack.c.l.b16 %v49
    %v139 = vunpack.c.h.b16 %v49
    %v140 = vunpack.c.l.b16 %v50
    %v141 = vunpack.c.h.b16 %v50
    %v142 = vunpack.c.l.b16 %v51
    %v143 = vunpack.c.h.b16 %v51
    %v144 = vunpack.c.l.b16 %v52
    %v145 = vunpack.c.h.b16 %v52
    %v146 = vunpack.c.l.b16 %v53
    %v147 = vunpack.c.h.b16 %v53
    %v148 = vunpack.c.l.b16 %v54
    %v149 = vunpack.c.h.b16 %v54
    %v150 = vunpack.c.l.b16 %v55
    %v151 = vunpack.c.h.b16 %v55
    %v152 = vunpack.c.l.b16 %v56
    %v153 = vunpack.c.h.b16 %v56
    %v154 = vunpack.c.l.b16 %v57
    %v155 = vunpack.c.h.b16 %v57
    %v156 = vpack.c.b16 %v122, %v120
    %v157 = vpack.c.b16 %v123, %v121
    %v158 = vpack.c.b16 %v126, %v124
    %v159 = vpack.c.b16 %v127, %v125
    %v160 = vpack.c.b16 %v130, %v128
    %v161 = vpack.c.b16 %v131, %v129
    %v162 = vpack.c.b16 %v134, %v132
    %v163 = vpack.c.b16 %v135, %v133
    %v164 = vpack.c.b16 %v138, %v136
    %v165 = vpack.c.b16 %v139, %v137
    %v166 = vpack.c.b16 %v142, %v140
    %v167 = vpack.c.b16 %v143, %v141
    %v168 = vpack.c.b16 %v146, %v144
    %v169 = vpack.c.b16 %v147, %v145
    %v170 = vpack.c.b16 %v150, %v148
    %v171 = vpack.c.b16 %v151, %v149
    %v172 = vpack.c.b16 %v154, %v152
    %v173 = vpack.c.b16 %v155, %v153
    %v224 = vunpack.c.l.b16 %v58
    %v225 = vunpack.c.h.b16 %v58
    %v226 = vunpack.c.l.b16 %v59
    %v227 = vunpack.c.h.b16 %v59
    %v228 = vunpack.c.l.b16 %v60
    %v229 = vunpack.c.h.b16 %v60
    %v230 = vunpack.c.l.b16 %v61
    %v231 = vunpack.c.h.b16 %v61
    %v232 = vunpack.c.l.b16 %v62
    %v233 = vunpack.c.h.b16 %v62
    %v234 = vunpack.c.l.b16 %v63
    %v235 = vunpack.c.h.b16 %v63
    %v236 = vunpack.c.l.b16 %v64
    %v237 = vunpack.c.h.b16 %v64
    %v238 = vunpack.c.l.b16 %v65
    %v239 = vunpack.c.h.b16 %v65
    %v240 = vunpack.c.l.b16 %v66
    %v241 = vunpack.c.h.b16 %v66
    %v242 = vunpack.c.l.b16 %v67
    %v243 = vunpack.c.h.b16 %v67
    %v244 = vunpack.c.l.b16 %v68
    %v245 = vunpack.c.h.b16 %v68
    %v246 = vunpack.c.l.b16 %v69
    %v247 = vunpack.c.h.b16 %v69
    %v248 = vunpack.c.l.b16 %v70
    %v249 = vunpack.c.h.b16 %v70
    %v250 = vunpack.c.l.b16 %v71
    %v251 = vunpack.c.h.b16 %v71
    %v252 = vunpack.c.l.b16 %v72
    %v253 = vunpack.c.h.b16 %v72
    %v254 = vunpack.c.l.b16 %v73
    %v255 = vunpack.c.h.b16 %v73
    %v256 = vunpack.c.l.b16 %v74
    %v257 = vunpack.c.h.b16 %v74
    %v258 = vunpack.c.l.b16 %v75
    %v259 = vunpack.c.h.b16 %v75
    %v260 = vunpack.c.l.b16 %v76
    %v261 = vunpack.c.h.b16 %v76
    %v262 = vunpack.c.l.b16 %v77
    %v263 = vunpack.c.h.b16 %v77
    %v264 = vunpack.c.l.b16 %v78
    %v265 = vunpack.c.h.b16 %v78
    %v266 = vunpack.c.l.b16 %v79
    %v267 = vunpack.c.h.b16 %v79
    %v268 = vunpack.c.l.b16 %v80
    %v269 = vunpack.c.h.b16 %v80
    %v270 = vunpack.c.l.b16 %v81
    %v271 = vunpack.c.h.b16 %v81
    %v272 = vunpack.c.l.b16 %v82
    %v273 = vunpack.c.h.b16 %v82
    %v274 = vunpack.c.l.b16 %v83
    %v275 = vunpack.c.h.b16 %v83
    %v276 = vunpack.c.l.b16 %v84
    %v277 = vunpack.c.h.b16 %v84
    %v278 = vunpack.c.l.b16 %v85
    %v279 = vunpack.c.h.b16 %v85
    %v280 = vunpack.c.l.b16 %v86
    %v281 = vunpack.c.h.b16 %v86
    %v282 = vunpack.c.l.b16 %v87
    %v283 = vunpack.c.h.b16 %v87
    %v284 = vunpack.c.l.b16 %v88
    %v285 = vunpack.c.h.b16 %v88
    %v286 = vunpack.c.l.b16 %v89
    %v287 = vunpack.c.h.b16 %v89
    %v288 = vpack.c.b16 %v226, %v224
    %v289 = vpack.c.b16 %v227, %v225
    %v290 = vpack.c.b16 %v230, %v228
    %v291 = vpack.c.b16 %v231, %v229
    %v292 = vpack.c.b16 %v234, %v232
    %v293 = vpack.c.b16 %v235, %v233
    %v294 = vpack.c.b16 %v238, %v236
    %v295 = vpack.c.b16 %v239, %v237
    %v296 = vpack.c.b16 %v242, %v240
    %v297 = vpack.c.b16 %v243, %v241
    %v298 = vpack.c.b16 %v246, %v244
    %v299 = vpack.c.b16 %v247, %v245
    %v300 = vpack.c.b16 %v250, %v248
    %v301 = vpack.c.b16 %v251, %v249
    %v302 = vpack.c.b16 %v254, %v252
    %v303 = vpack.c.b16 %v255, %v253
    %v304 = vpack.c.b16 %v258, %v256
    %v305 = vpack.c.b16 %v259, %v257
    %v306 = vpack.c.b16 %v262, %v260
    %v307 = vpack.c.b16 %v263, %v261
    %v308 = vpack.c.b16 %v266, %v264
    %v309 = vpack.c.b16 %v267, %v265
    %v310 = vpack.c.b16 %v270, %v268
    %v311 = vpack.c.b16 %v271, %v269
    %v312 = vpack.c.b16 %v274, %v272
    %v313 = vpack.c.b16 %v275, %v273
    %v314 = vpack.c.b16 %v278, %v276
    %v315 = vpack.c.b16 %v279, %v277
    %v316 = vpack.c.b16 %v282, %v280
    %v317 = vpack.c.b16 %v283, %v281
    %v318 = vpack.c.b16 %v286, %v284
    %v319 = vpack.c.b16 %v287, %v285
    %352 = vmatprep.subr.bf16.mxu0 %v289
    %353 = vmatpush1.bf16.msra.mxu0 %v288
    %354 = vmatprep.subr.bf16.mxu0 %v291
    %355 = vmatpush1.bf16.msra.mxu0 %v290
    %356 = vmatprep.subr.bf16.mxu0 %v293
    %357 = vmatpush1.bf16.msra.mxu0 %v292
    %358 = vmatprep.subr.bf16.mxu0 %v295
    %359 = vmatpush1.bf16.msra.mxu0 %v294
    %360 = vmatprep.subr.bf16.mxu0 %v297
    %361 = vmatpush1.bf16.msra.mxu0 %v296
    %362 = vmatprep.subr.bf16.mxu0 %v299
    %363 = vmatpush1.bf16.msra.mxu0 %v298
    %364 = vmatprep.subr.bf16.mxu0 %v301
    %365 = vmatpush1.bf16.msra.mxu0 %v300
    %366 = vmatprep.subr.bf16.mxu0 %v303
    %367 = vmatpush1.bf16.msra.mxu0 %v302
    %368 = vmatprep.subr.bf16.mxu0 %v305
    %369 = vmatpush1.bf16.msra.mxu0 %v304
    %370 = vmatprep.subr.bf16.mxu0 %v307
    %371 = vmatpush1.bf16.msra.mxu0 %v306
    %372 = vmatprep.subr.bf16.mxu0 %v309
    %373 = vmatpush1.bf16.msra.mxu0 %v308
    %374 = vmatprep.subr.bf16.mxu0 %v311
    %375 = vmatpush1.bf16.msra.mxu0 %v310
    %376 = vmatprep.subr.bf16.mxu0 %v313
    %377 = vmatpush1.bf16.msra.mxu0 %v312
    %378 = vmatprep.subr.bf16.mxu0 %v315
    %379 = vmatpush1.bf16.msra.mxu0 %v314
    %380 = vmatprep.subr.bf16.mxu0 %v317
    %381 = vmatpush1.bf16.msra.mxu0 %v316
    %382 = vmatprep.subr.bf16.mxu0 %v319
    %383 = vmatpush1.bf16.msra.mxu0 %v318
    %384 = vmatprep.mubr.bf16.mxu0 %v157
    %385 = vmatmul.mubr.bf16.gmra.mrb[0].mxu0 %v156
    %v386 = vpop.f32.mrb[0].mxu0
    %v387 = vadd.f32 %v95, %v386
    %v388 = vpop.f32.mrb[0].mxu0
    %v389 = vadd.f32 %v99, %v388
    %v390 = vpop.f32.mrb[0].mxu0
    %v391 = vadd.f32 %v95, %v390
    %v392 = vpop.f32.mrb[0].mxu0
    %v393 = vadd.f32 %v99, %v392
    %394 = vmatprep.mubr.bf16.mxu0 %v159
    %395 = vmatmul.mubr.bf16.gmra.mrb[0].mxu0 %v158
    %v396 = vpop.f32.mrb[0].mxu0
    %v397 = vadd.f32 %v95, %v396
    %v398 = vpop.f32.mrb[0].mxu0
    %v399 = vadd.f32 %v99, %v398
    %v400 = vpop.f32.mrb[0].mxu0
    %v401 = vadd.f32 %v95, %v400
    %v402 = vpop.f32.mrb[0].mxu0
    %v403 = vadd.f32 %v99, %v402
    %404 = vmatprep.mubr.bf16.mxu0 %v161
    %405 = vmatmul.mubr.bf16.gmra.mrb[0].mxu0 %v160
    %v406 = vpop.f32.mrb[0].mxu0
    %v407 = vadd.f32 %v95, %v406
    %v408 = vpop.f32.mrb[0].mxu0
    %v409 = vadd.f32 %v99, %v408
    %v410 = vpop.f32.mrb[0].mxu0
    %v411 = vadd.f32 %v95, %v410
    %v412 = vpop.f32.mrb[0].mxu0
    %v413 = vadd.f32 %v99, %v412
    %414 = vmatprep.mubr.bf16.mxu0 %v163
    %415 = vmatmul.mubr.bf16.gmra.mrb[0].mxu0 %v162
    %v416 = vpop.f32.mrb[0].mxu0
    %v417 = vadd.f32 %v95, %v416
    %v418 = vpop.f32.mrb[0].mxu0
    %v419 = vadd.f32 %v99, %v418
    %v420 = vpop.f32.mrb[0].mxu0
    %v421 = vadd.f32 %v95, %v420
    %v422 = vpop.f32.mrb[0].mxu0
    %v423 = vadd.f32 %v99, %v422
    %424 = vmatprep.mubr.bf16.mxu0 %v165
    %425 = vmatmul.mubr.bf16.gmra.mrb[0].mxu0 %v164
    %v426 = vpop.f32.mrb[0].mxu0
    %v427 = vadd.f32 %v95, %v426
    %v428 = vpop.f32.mrb[0].mxu0
    %v429 = vadd.f32 %v99, %v428
    %v430 = vpop.f32.mrb[0].mxu0
    %v431 = vadd.f32 %v95, %v430
    %v432 = vpop.f32.mrb[0].mxu0
    %v433 = vadd.f32 %v99, %v432
    %434 = vmatprep.mubr.bf16.mxu0 %v167
    %435 = vmatmul.mubr.bf16.gmra.mrb[0].mxu0 %v166
    %v436 = vpop.f32.mrb[0].mxu0
    %v437 = vadd.f32 %v95, %v436
    %v438 = vpop.f32.mrb[0].mxu0
    %v439 = vadd.f32 %v99, %v438
    %v440 = vpop.f32.mrb[0].mxu0
    %v441 = vadd.f32 %v95, %v440
    %v442 = vpop.f32.mrb[0].mxu0
    %v443 = vadd.f32 %v99, %v442
    %444 = vmatprep.mubr.bf16.mxu0 %v169
    %445 = vmatmul.mubr.bf16.gmra.mrb[0].mxu0 %v168
    %v446 = vpop.f32.mrb[0].mxu0
    %v447 = vadd.f32 %v95, %v446
    %v448 = vpop.f32.mrb[0].mxu0
    %v449 = vadd.f32 %v99, %v448
    %v450 = vpop.f32.mrb[0].mxu0
    %v451 = vadd.f32 %v95, %v450
    %v452 = vpop.f32.mrb[0].mxu0
    %v453 = vadd.f32 %v99, %v452
    %454 = vmatprep.mubr.bf16.mxu0 %v171
    %455 = vmatmul.mubr.bf16.gmra.mrb[0].mxu0 %v170
    %v456 = vpop.f32.mrb[0].mxu0
    %v457 = vadd.f32 %v95, %v456
    %v458 = vpop.f32.mrb[0].mxu0
    %v459 = vadd.f32 %v99, %v458
    %v460 = vpop.f32.mrb[0].mxu0
    %v461 = vadd.f32 %v95, %v460
    %v462 = vpop.f32.mrb[0].mxu0
    %v463 = vadd.f32 %v99, %v462
    %464 = vmatprep.mubr.bf16.mxu0 %v173
    %465 = vmatmul.mubr.bf16.gmra.mrb[0].mxu0 %v172
    %v466 = vpop.f32.mrb[0].mxu0
    %v467 = vadd.f32 %v95, %v466
    %v468 = vpop.f32.mrb[0].mxu0
    %v469 = vadd.f32 %v99, %v468
    %v470 = vpop.f32.mrb[0].mxu0
    %v471 = vadd.f32 %v95, %v470
    %v472 = vpop.f32.mrb[0].mxu0
    %v473 = vadd.f32 %v99, %v472
    %474 = vdwg.mxu0
    %vm475 = vcmp.ge.f32.partialorder %v387, 0.0
    %vm476 = vcmp.ge.f32.partialorder %v389, 0.0
    %vm477 = vcmp.ge.f32.partialorder %v391, 0.0
    %vm478 = vcmp.ge.f32.partialorder %v393, 0.0
    %vm479 = vcmp.ge.f32.partialorder %v397, 0.0
    %vm480 = vcmp.ge.f32.partialorder %v399, 0.0
    %vm481 = vcmp.ge.f32.partialorder %v401, 0.0
    %vm482 = vcmp.ge.f32.partialorder %v403, 0.0
    %vm483 = vcmp.ge.f32.partialorder %v407, 0.0
    %vm484 = vcmp.ge.f32.partialorder %v409, 0.0
    %vm485 = vcmp.ge.f32.partialorder %v411, 0.0
    %vm486 = vcmp.ge.f32.partialorder %v413, 0.0
    %vm487 = vcmp.ge.f32.partialorder %v417, 0.0
    %vm488 = vcmp.ge.f32.partialorder %v419, 0.0
    %vm489 = vcmp.ge.f32.partialorder %v421, 0.0
    %vm490 = vcmp.ge.f32.partialorder %v423, 0.0
    %vm491 = vcmp.ge.f32.partialorder %v427, 0.0
    %vm492 = vcmp.ge.f32.partialorder %v429, 0.0
    %vm493 = vcmp.ge.f32.partialorder %v431, 0.0
    %vm494 = vcmp.ge.f32.partialorder %v433, 0.0
    %vm495 = vcmp.ge.f32.partialorder %v437, 0.0
    %vm496 = vcmp.ge.f32.partialorder %v439, 0.0
    %vm497 = vcmp.ge.f32.partialorder %v441, 0.0
    %vm498 = vcmp.ge.f32.partialorder %v443, 0.0
    %vm499 = vcmp.ge.f32.partialorder %v447, 0.0
    %vm500 = vcmp.ge.f32.partialorder %v449, 0.0
    %vm501 = vcmp.ge.f32.partialorder %v451, 0.0
    %vm502 = vcmp.ge.f32.partialorder %v453, 0.0
    %vm503 = vcmp.ge.f32.partialorder %v457, 0.0
    %vm504 = vcmp.ge.f32.partialorder %v459, 0.0
    %vm505 = vcmp.ge.f32.partialorder %v461, 0.0
    %vm506 = vcmp.ge.f32.partialorder %v463, 0.0
    %vm507 = vcmp.ge.f32.partialorder %v467, 0.0
    %vm508 = vcmp.ge.f32.partialorder %v469, 0.0
    %vm509 = vcmp.ge.f32.partialorder %v471, 0.0
    %vm510 = vcmp.ge.f32.partialorder %v473, 0.0
    %v511 = vmul.f32 %v387, 0.2
    %v512 = vmul.f32 %v389, 0.2
    %v513 = vmul.f32 %v391, 0.2
    %v514 = vmul.f32 %v393, 0.2
    %v515 = vmul.f32 %v397, 0.2
    %v516 = vmul.f32 %v399, 0.2
    %v517 = vmul.f32 %v401, 0.2
    %v518 = vmul.f32 %v403, 0.2
    %v519 = vmul.f32 %v407, 0.2
    %v520 = vmul.f32 %v409, 0.2
    %v521 = vmul.f32 %v411, 0.2
    %v522 = vmul.f32 %v413, 0.2
    %v523 = vmul.f32 %v417, 0.2
    %v524 = vmul.f32 %v419, 0.2
    %v525 = vmul.f32 %v421, 0.2
    %v526 = vmul.f32 %v423, 0.2
    %v527 = vmul.f32 %v427, 0.2
    %v528 = vmul.f32 %v429, 0.2
    %v529 = vmul.f32 %v431, 0.2
    %v530 = vmul.f32 %v433, 0.2
    %v531 = vmul.f32 %v437, 0.2
    %v532 = vmul.f32 %v439, 0.2
    %v533 = vmul.f32 %v441, 0.2
    %v534 = vmul.f32 %v443, 0.2
    %v535 = vmul.f32 %v447, 0.2
    %v536 = vmul.f32 %v449, 0.2
    %v537 = vmul.f32 %v451, 0.2
    %v538 = vmul.f32 %v453, 0.2
    %v539 = vmul.f32 %v457, 0.2
    %v540 = vmul.f32 %v459, 0.2
    %v541 = vmul.f32 %v461, 0.2
    %v542 = vmul.f32 %v463, 0.2
    %v543 = vmul.f32 %v467, 0.2
    %v544 = vmul.f32 %v469, 0.2
    %v545 = vmul.f32 %v471, 0.2
    %v546 = vmul.f32 %v473, 0.2
    %v547 = vsel %vm475, %v387, %v511
    %v548 = vsel %vm476, %v389, %v512
    %v549 = vsel %vm477, %v391, %v513
    %v550 = vsel %vm478, %v393, %v514
    %v551 = vsel %vm479, %v397, %v515
    %v552 = vsel %vm480, %v399, %v516
    %v553 = vsel %vm481, %v401, %v517
    %v554 = vsel %vm482, %v403, %v518
    %v555 = vsel %vm483, %v407, %v519
    %v556 = vsel %vm484, %v409, %v520
    %v557 = vsel %vm485, %v411, %v521
    %v558 = vsel %vm486, %v413, %v522
    %v559 = vsel %vm487, %v417, %v523
    %v560 = vsel %vm488, %v419, %v524
    %v561 = vsel %vm489, %v421, %v525
    %v562 = vsel %vm490, %v423, %v526
    %v563 = vsel %vm491, %v427, %v527
    %v564 = vsel %vm492, %v429, %v528
    %v565 = vsel %vm493, %v431, %v529
    %v566 = vsel %vm494, %v433, %v530
    %v567 = vsel %vm495, %v437, %v531
    %v568 = vsel %vm496, %v439, %v532
    %v569 = vsel %vm497, %v441, %v533
    %v570 = vsel %vm498, %v443, %v534
    %v571 = vsel %vm499, %v447, %v535
    %v572 = vsel %vm500, %v449, %v536
    %v573 = vsel %vm501, %v451, %v537
    %v574 = vsel %vm502, %v453, %v538
    %v575 = vsel %vm503, %v457, %v539
    %v576 = vsel %vm504, %v459, %v540
    %v577 = vsel %vm505, %v461, %v541
    %v578 = vsel %vm506, %v463, %v542
    %v579 = vsel %vm507, %v467, %v543
    %v580 = vsel %vm508, %v469, %v544
    %v581 = vsel %vm509, %v471, %v545
    %v582 = vsel %vm510, %v473, %v546
    %v583 = vpack.c.bf16 %v549, %v547
    %v584 = vpack.c.bf16 %v550, %v548
    %v585 = vpack.c.bf16 %v553, %v551
    %v586 = vpack.c.bf16 %v554, %v552
    %v587 = vpack.c.bf16 %v557, %v555
    %v588 = vpack.c.bf16 %v558, %v556
    %v589 = vpack.c.bf16 %v561, %v559
    %v590 = vpack.c.bf16 %v562, %v560
    %v591 = vpack.c.bf16 %v565, %v563
    %v592 = vpack.c.bf16 %v566, %v564
    %v593 = vpack.c.bf16 %v569, %v567
    %v594 = vpack.c.bf16 %v570, %v568
    %v595 = vpack.c.bf16 %v573, %v571
    %v596 = vpack.c.bf16 %v574, %v572
    %v597 = vpack.c.bf16 %v577, %v575
    %v598 = vpack.c.bf16 %v578, %v576
    %v599 = vpack.c.bf16 %v581, %v579
    %v600 = vpack.c.bf16 %v582, %v580
    %v619 = vunpack.c.l.b16 %v583
    %v620 = vunpack.c.l.b16 %v584
    %v621 = vunpack.c.h.b16 %v583
    %v622 = vunpack.c.h.b16 %v584
    %v623 = vunpack.c.l.b16 %v585
    %v624 = vunpack.c.l.b16 %v586
    %v625 = vunpack.c.h.b16 %v585
    %v626 = vunpack.c.h.b16 %v586
    %v627 = vunpack.c.l.b16 %v587
    %v628 = vunpack.c.l.b16 %v588
    %v629 = vunpack.c.h.b16 %v587
    %v630 = vunpack.c.h.b16 %v588
    %v631 = vunpack.c.l.b16 %v589
    %v632 = vunpack.c.l.b16 %v590
    %v633 = vunpack.c.h.b16 %v589
    %v634 = vunpack.c.h.b16 %v590
    %v635 = vunpack.c.l.b16 %v591
    %v636 = vunpack.c.l.b16 %v592
    %v637 = vunpack.c.h.b16 %v591
    %v638 = vunpack.c.h.b16 %v592
    %v639 = vunpack.c.l.b16 %v593
    %v640 = vunpack.c.l.b16 %v594
    %v641 = vunpack.c.h.b16 %v593
    %v642 = vunpack.c.h.b16 %v594
    %v643 = vunpack.c.l.b16 %v595
    %v644 = vunpack.c.l.b16 %v596
    %v645 = vunpack.c.h.b16 %v595
    %v646 = vunpack.c.h.b16 %v596
    %v647 = vunpack.c.l.b16 %v597
    %v648 = vunpack.c.l.b16 %v598
    %v649 = vunpack.c.h.b16 %v597
    %v650 = vunpack.c.h.b16 %v598
    %v651 = vunpack.c.l.b16 %v599
    %v652 = vunpack.c.l.b16 %v600
    %v653 = vunpack.c.h.b16 %v599
    %v654 = vunpack.c.h.b16 %v600
    %v655 = vpack.c.b16 %v620, %v619
    %v656 = vpack.c.b16 %v622, %v621
    %v657 = vpack.c.b16 %v624, %v623
    %v658 = vpack.c.b16 %v626, %v625
    %v659 = vpack.c.b16 %v628, %v627
    %v660 = vpack.c.b16 %v630, %v629
    %v661 = vpack.c.b16 %v632, %v631
    %v662 = vpack.c.b16 %v634, %v633
    %v663 = vpack.c.b16 %v636, %v635
    %v664 = vpack.c.b16 %v638, %v637
    %v665 = vpack.c.b16 %v640, %v639
    %v666 = vpack.c.b16 %v642, %v641
    %v667 = vpack.c.b16 %v644, %v643
    %v668 = vpack.c.b16 %v646, %v645
    %v669 = vpack.c.b16 %v648, %v647
    %v670 = vpack.c.b16 %v650, %v649
    %v671 = vpack.c.b16 %v652, %v651
    %v672 = vpack.c.b16 %v654, %v653
    %691 = vst [vmem:[%s3] sm:$0xff] %v655
    %692 = vst [vmem:[%s3 + $0x8] sm:$0xff] %v656
    %693 = vst [vmem:[%s3 + $0x10] sm:$0xff] %v657
    %694 = vst [vmem:[%s3 + $0x18] sm:$0xff] %v658
    %695 = vst [vmem:[%s3 + $0x20] sm:$0xff] %v659
    %696 = vst [vmem:[%s3 + $0x28] sm:$0xff] %v660
    %697 = vst [vmem:[%s3 + $0x30] sm:$0xff] %v661
    %698 = vst [vmem:[%s3 + $0x38] sm:$0xff] %v662
    %699 = vst [vmem:[%s3 + $0x40] sm:$0xff] %v663
    %700 = vst [vmem:[%s3 + $0x48] sm:$0xff] %v664
    %701 = vst [vmem:[%s3 + $0x50] sm:$0xff] %v665
    %702 = vst [vmem:[%s3 + $0x58] sm:$0xff] %v666
    %703 = vst [vmem:[%s3 + $0x60] sm:$0xff] %v667
    %704 = vst [vmem:[%s3 + $0x68] sm:$0xff] %v668
    %705 = vst [vmem:[%s3 + $0x70] sm:$0xff] %v669
    %706 = vst [vmem:[%s3 + $0x78] sm:$0xff] %v670
    %707 = vst [vmem:[%s3 + $0x80] sm:$0xff] %v671
    %708 = vst [vmem:[%s3 + $0x88] sm:$0xff] %v672
    // Predicated region
    $region22: #{generator_forward.9} parent=1 // pred_check
      _
    $region23: #{generator_forward.9} parent=1 // pred_check_branch
      %710 = sbr.rel (0) target = $region25
    $region24: #{generator_forward.9} parent=1 // pred_region
      _
    $region25: #{generator_forward.9} parent=1 // pred_fallthru
      _
    // Predicated region
    $region26: #{generator_forward.9} parent=1 // pred_check
      _
    $region27: #{generator_forward.9} parent=1 // pred_check_branch
      %712 = sbr.rel (0) target = $region29
    $region28: #{generator_forward.9} parent=1 // pred_region
      _
    $region29: #{generator_forward.9} parent=1 // pred_fallthru
      _
    %713 = vsyncpa [#allocation3], 1
    %714 = vsyncpa [#allocation5], 1

// kernel: generator_forward.10
$region0: #{generator_forward.10}
  #allocation0 [shape = 'u32[]', space=smem, size = 0x4, offset = 0x4, fixed_abs, tag = 'smem constant byte address 0x4 - core index']
  #allocation1 [shape = 'u32[144,128]{1,0:T(1,128)}', space=vmem, size = 0x12000, scoped, tag = 'internal scratch']
  %s0 = inlined_call_operand.vmem [shape: bf16[464,256], index: 0, kind: input, shape index: {}]
  %s1 = inlined_call_operand.vmem [shape: bf16[256,128], index: 1, kind: input, shape index: {}]
  %s2 = inlined_call_operand.vmem [shape: f32[1,128], index: 2, kind: input, shape index: {}]
  %s3 = inlined_call_operand.vmem [shape: bf16[464,128], index: 3, kind: output, shape index: {}]
  %s4 = sld [smem:[#allocation0]]
  $region22: #{generator_forward.10} parent=0
    _
  %s6 = ssub.s32 1, %s4
  %s7 = scalar_select 0, %s6, %s4
  // Predicated region
  $region2: #{generator_forward.10} parent=0 // pred_check
    _
  $region3: #{generator_forward.10} parent=0 // pred_check_branch
    %9 = sbr.rel (0) target = $region5
  $region4: #{generator_forward.10} parent=0 // pred_region
    _
  $region5: #{generator_forward.10} parent=0 // pred_fallthru
    _
  // Predicated region
  $region6: #{generator_forward.10} parent=0 // pred_check
    _
  $region7: #{generator_forward.10} parent=0 // pred_check_branch
    %11 = sbr.rel (0) target = $region9
  $region8: #{generator_forward.10} parent=0 // pred_region
    _
  $region9: #{generator_forward.10} parent=0 // pred_fallthru
    _
  // Predicated region
  $region10: #{generator_forward.10} parent=0 // pred_check
    _
  $region11: #{generator_forward.10} parent=0 // pred_check_branch
    %13 = sbr.rel (0) target = $region13
  $region12: #{generator_forward.10} parent=0 // pred_region
    _
  $region13: #{generator_forward.10} parent=0 // pred_fallthru
    _
  %v15 = vld [vmem:[%s0] sm:$0xff]
  %v16 = vld [vmem:[%s0 + $0x8] sm:$0xff]
  %v17 = vld [vmem:[%s0 + $0x10] sm:$0xff]
  %v18 = vld [vmem:[%s0 + $0x18] sm:$0xff]
  %v19 = vld [vmem:[%s0 + $0x20] sm:$0xff]
  %v20 = vld [vmem:[%s0 + $0x28] sm:$0xff]
  %v21 = vld [vmem:[%s0 + $0x30] sm:$0xff]
  %v22 = vld [vmem:[%s0 + $0x38] sm:$0xff]
  %v23 = vld [vmem:[%s0 + $0x40] sm:$0xff]
  %v24 = vld [vmem:[%s0 + $0x48] sm:$0xff]
  %v25 = vld [vmem:[%s0 + $0x50] sm:$0xff]
  %v26 = vld [vmem:[%s0 + $0x58] sm:$0xff]
  %v27 = vld [vmem:[%s0 + $0x60] sm:$0xff]
  %v28 = vld [vmem:[%s0 + $0x68] sm:$0xff]
  %v29 = vld [vmem:[%s0 + $0x70] sm:$0xff]
  %v30 = vld [vmem:[%s0 + $0x78] sm:$0xff]
  %v31 = vld [vmem:[%s0 + $0x80] sm:$0xff]
  %v32 = vld [vmem:[%s0 + $0x88] sm:$0xff]
  %v33 = vld [vmem:[%s0 + $0x90] sm:$0xff]
  %v34 = vld [vmem:[%s0 + $0x98] sm:$0xff]
  %v35 = vld [vmem:[%s0 + $0xa0] sm:$0xff]
  %v36 = vld [vmem:[%s0 + $0xa8] sm:$0xff]
  %v37 = vld [vmem:[%s0 + $0xb0] sm:$0xff]
  %v38 = vld [vmem:[%s0 + $0xb8] sm:$0xff]
  %v39 = vld [vmem:[%s0 + $0xc0] sm:$0xff]
  %v40 = vld [vmem:[%s0 + $0xc8] sm:$0xff]
  %v41 = vld [vmem:[%s0 + $0xd0] sm:$0xff]
  %v42 = vld [vmem:[%s0 + $0xd8] sm:$0xff]
  %v43 = vld [vmem:[%s0 + $0xe0] sm:$0xff]
  %v44 = vld [vmem:[%s0 + $0xe8] sm:$0xff]
  %v45 = vld [vmem:[%s0 + $0xf0] sm:$0xff]
  %v46 = vld [vmem:[%s0 + $0xf8] sm:$0xff]
  %v47 = vld [vmem:[%s0 + $0x100] sm:$0xff]
  %v48 = vld [vmem:[%s0 + $0x108] sm:$0xff]
  %v49 = vld [vmem:[%s0 + $0x110] sm:$0xff]
  %v50 = vld [vmem:[%s0 + $0x118] sm:$0xff]
  %v51 = vld [vmem:[%s0 + $0x120] sm:$0xff]
  %v52 = vld [vmem:[%s0 + $0x128] sm:$0xff]
  %v53 = vld [vmem:[%s0 + $0x130] sm:$0xff]
  %v54 = vld [vmem:[%s0 + $0x138] sm:$0xff]
  %v55 = vld [vmem:[%s0 + $0x140] sm:$0xff]
  %v56 = vld [vmem:[%s0 + $0x148] sm:$0xff]
  %v57 = vld [vmem:[%s0 + $0x150] sm:$0xff]
  %v58 = vld [vmem:[%s0 + $0x158] sm:$0xff]
  %v59 = vld [vmem:[%s0 + $0x160] sm:$0xff]
  %v60 = vld [vmem:[%s0 + $0x168] sm:$0xff]
  %v61 = vld [vmem:[%s0 + $0x170] sm:$0xff]
  %v62 = vld [vmem:[%s0 + $0x178] sm:$0xff]
  %v63 = vld [vmem:[%s0 + $0x180] sm:$0xff]
  %v64 = vld [vmem:[%s0 + $0x188] sm:$0xff]
  %v65 = vld [vmem:[%s0 + $0x190] sm:$0xff]
  %v66 = vld [vmem:[%s0 + $0x198] sm:$0xff]
  %v67 = vld [vmem:[%s0 + $0x1a0] sm:$0xff]
  %v68 = vld [vmem:[%s0 + $0x1a8] sm:$0xff]
  %v69 = vld [vmem:[%s0 + $0x1b0] sm:$0xff]
  %v70 = vld [vmem:[%s0 + $0x1b8] sm:$0xff]
  %v71 = vld [vmem:[%s0 + $0x1c0] sm:$0xff]
  %v72 = vld [vmem:[%s0 + $0x1c8] sm:$0xff]
  %v73 = vld [vmem:[%s1] sm:$0xf]
  %v74 = vld [vmem:[%s1 + $0x4] sm:$0xf]
  %v75 = vld [vmem:[%s1 + $0x8] sm:$0xf]
  %v76 = vld [vmem:[%s1 + $0xc] sm:$0xf]
  %v77 = vld [vmem:[%s1 + $0x10] sm:$0xf]
  %v78 = vld [vmem:[%s1 + $0x14] sm:$0xf]
  %v79 = vld [vmem:[%s1 + $0x18] sm:$0xf]
  %v80 = vld [vmem:[%s1 + $0x1c] sm:$0xf]
  %v81 = vld [vmem:[%s1 + $0x20] sm:$0xf]
  %v82 = vld [vmem:[%s1 + $0x24] sm:$0xf]
  %v83 = vld [vmem:[%s1 + $0x28] sm:$0xf]
  %v84 = vld [vmem:[%s1 + $0x2c] sm:$0xf]
  %v85 = vld [vmem:[%s1 + $0x30] sm:$0xf]
  %v86 = vld [vmem:[%s1 + $0x34] sm:$0xf]
  %v87 = vld [vmem:[%s1 + $0x38] sm:$0xf]
  %v88 = vld [vmem:[%s1 + $0x3c] sm:$0xf]
  %v89 = vld [vmem:[%s1 + $0x40] sm:$0xf]
  %v90 = vld [vmem:[%s1 + $0x44] sm:$0xf]
  %v91 = vld [vmem:[%s1 + $0x48] sm:$0xf]
  %v92 = vld [vmem:[%s1 + $0x4c] sm:$0xf]
  %v93 = vld [vmem:[%s1 + $0x50] sm:$0xf]
  %v94 = vld [vmem:[%s1 + $0x54] sm:$0xf]
  %v95 = vld [vmem:[%s1 + $0x58] sm:$0xf]
  %v96 = vld [vmem:[%s1 + $0x5c] sm:$0xf]
  %v97 = vld [vmem:[%s1 + $0x60] sm:$0xf]
  %v98 = vld [vmem:[%s1 + $0x64] sm:$0xf]
  %v99 = vld [vmem:[%s1 + $0x68] sm:$0xf]
  %v100 = vld [vmem:[%s1 + $0x6c] sm:$0xf]
  %v101 = vld [vmem:[%s1 + $0x70] sm:$0xf]
  %v102 = vld [vmem:[%s1 + $0x74] sm:$0xf]
  %v103 = vld [vmem:[%s1 + $0x78] sm:$0xf]
  %v104 = vld [vmem:[%s1 + $0x7c] sm:$0xf]
  %v105 = vld [vmem:[%s2] sm:$0x1]
  %v107 = vlaneseq
  %v108 = vshrl.u32 %v107, 7
  %v109 = vsub.s32 0, %v108
  %v110 = vrot.slane %v105, %v109
  %v170 = vunpack.c.l.b16 %v15
  %v171 = vunpack.c.h.b16 %v15
  %v172 = vunpack.c.l.b16 %v16
  %v173 = vunpack.c.h.b16 %v16
  %v174 = vunpack.c.l.b16 %v17
  %v175 = vunpack.c.h.b16 %v17
  %v176 = vunpack.c.l.b16 %v18
  %v177 = vunpack.c.h.b16 %v18
  %v178 = vunpack.c.l.b16 %v19
  %v179 = vunpack.c.h.b16 %v19
  %v180 = vunpack.c.l.b16 %v20
  %v181 = vunpack.c.h.b16 %v20
  %v182 = vunpack.c.l.b16 %v21
  %v183 = vunpack.c.h.b16 %v21
  %v184 = vunpack.c.l.b16 %v22
  %v185 = vunpack.c.h.b16 %v22
  %v186 = vunpack.c.l.b16 %v23
  %v187 = vunpack.c.h.b16 %v23
  %v188 = vunpack.c.l.b16 %v24
  %v189 = vunpack.c.h.b16 %v24
  %v190 = vunpack.c.l.b16 %v25
  %v191 = vunpack.c.h.b16 %v25
  %v192 = vunpack.c.l.b16 %v26
  %v193 = vunpack.c.h.b16 %v26
  %v194 = vunpack.c.l.b16 %v27
  %v195 = vunpack.c.h.b16 %v27
  %v196 = vunpack.c.l.b16 %v28
  %v197 = vunpack.c.h.b16 %v28
  %v198 = vunpack.c.l.b16 %v29
  %v199 = vunpack.c.h.b16 %v29
  %v200 = vunpack.c.l.b16 %v30
  %v201 = vunpack.c.h.b16 %v30
  %v202 = vunpack.c.l.b16 %v31
  %v203 = vunpack.c.h.b16 %v31
  %v204 = vunpack.c.l.b16 %v32
  %v205 = vunpack.c.h.b16 %v32
  %v206 = vunpack.c.l.b16 %v33
  %v207 = vunpack.c.h.b16 %v33
  %v208 = vunpack.c.l.b16 %v34
  %v209 = vunpack.c.h.b16 %v34
  %v210 = vunpack.c.l.b16 %v35
  %v211 = vunpack.c.h.b16 %v35
  %v212 = vunpack.c.l.b16 %v36
  %v213 = vunpack.c.h.b16 %v36
  %v214 = vunpack.c.l.b16 %v37
  %v215 = vunpack.c.h.b16 %v37
  %v216 = vunpack.c.l.b16 %v38
  %v217 = vunpack.c.h.b16 %v38
  %v218 = vunpack.c.l.b16 %v39
  %v219 = vunpack.c.h.b16 %v39
  %v220 = vunpack.c.l.b16 %v40
  %v221 = vunpack.c.h.b16 %v40
  %v222 = vunpack.c.l.b16 %v41
  %v223 = vunpack.c.h.b16 %v41
  %v224 = vunpack.c.l.b16 %v42
  %v225 = vunpack.c.h.b16 %v42
  %v226 = vunpack.c.l.b16 %v43
  %v227 = vunpack.c.h.b16 %v43
  %v228 = vunpack.c.l.b16 %v44
  %v229 = vunpack.c.h.b16 %v44
  %v230 = vunpack.c.l.b16 %v45
  %v231 = vunpack.c.h.b16 %v45
  %v232 = vunpack.c.l.b16 %v46
  %v233 = vunpack.c.h.b16 %v46
  %v234 = vunpack.c.l.b16 %v47
  %v235 = vunpack.c.h.b16 %v47
  %v236 = vunpack.c.l.b16 %v48
  %v237 = vunpack.c.h.b16 %v48
  %v238 = vunpack.c.l.b16 %v49
  %v239 = vunpack.c.h.b16 %v49
  %v240 = vunpack.c.l.b16 %v50
  %v241 = vunpack.c.h.b16 %v50
  %v242 = vunpack.c.l.b16 %v51
  %v243 = vunpack.c.h.b16 %v51
  %v244 = vunpack.c.l.b16 %v52
  %v245 = vunpack.c.h.b16 %v52
  %v246 = vunpack.c.l.b16 %v53
  %v247 = vunpack.c.h.b16 %v53
  %v248 = vunpack.c.l.b16 %v54
  %v249 = vunpack.c.h.b16 %v54
  %v250 = vunpack.c.l.b16 %v55
  %v251 = vunpack.c.h.b16 %v55
  %v252 = vunpack.c.l.b16 %v56
  %v253 = vunpack.c.h.b16 %v56
  %v254 = vunpack.c.l.b16 %v57
  %v255 = vunpack.c.h.b16 %v57
  %v256 = vunpack.c.l.b16 %v58
  %v257 = vunpack.c.h.b16 %v58
  %v258 = vunpack.c.l.b16 %v59
  %v259 = vunpack.c.h.b16 %v59
  %v260 = vunpack.c.l.b16 %v60
  %v261 = vunpack.c.h.b16 %v60
  %v262 = vunpack.c.l.b16 %v61
  %v263 = vunpack.c.h.b16 %v61
  %v264 = vunpack.c.l.b16 %v62
  %v265 = vunpack.c.h.b16 %v62
  %v266 = vunpack.c.l.b16 %v63
  %v267 = vunpack.c.h.b16 %v63
  %v268 = vunpack.c.l.b16 %v64
  %v269 = vunpack.c.h.b16 %v64
  %v270 = vunpack.c.l.b16 %v65
  %v271 = vunpack.c.h.b16 %v65
  %v272 = vunpack.c.l.b16 %v66
  %v273 = vunpack.c.h.b16 %v66
  %v274 = vunpack.c.l.b16 %v67
  %v275 = vunpack.c.h.b16 %v67
  %v276 = vunpack.c.l.b16 %v68
  %v277 = vunpack.c.h.b16 %v68
  %v278 = vunpack.c.l.b16 %v69
  %v279 = vunpack.c.h.b16 %v69
  %v280 = vunpack.c.l.b16 %v70
  %v281 = vunpack.c.h.b16 %v70
  %v282 = vunpack.c.l.b16 %v71
  %v283 = vunpack.c.h.b16 %v71
  %v284 = vunpack.c.l.b16 %v72
  %v285 = vunpack.c.h.b16 %v72
  %v286 = vpack.c.b16 %v172, %v170
  %v287 = vpack.c.b16 %v173, %v171
  %v288 = vpack.c.b16 %v176, %v174
  %v289 = vpack.c.b16 %v177, %v175
  %v290 = vpack.c.b16 %v180, %v178
  %v291 = vpack.c.b16 %v181, %v179
  %v292 = vpack.c.b16 %v184, %v182
  %v293 = vpack.c.b16 %v185, %v183
  %v294 = vpack.c.b16 %v188, %v186
  %v295 = vpack.c.b16 %v189, %v187
  %v296 = vpack.c.b16 %v192, %v190
  %v297 = vpack.c.b16 %v193, %v191
  %v298 = vpack.c.b16 %v196, %v194
  %v299 = vpack.c.b16 %v197, %v195
  %v300 = vpack.c.b16 %v200, %v198
  %v301 = vpack.c.b16 %v201, %v199
  %v302 = vpack.c.b16 %v204, %v202
  %v303 = vpack.c.b16 %v205, %v203
  %v304 = vpack.c.b16 %v208, %v206
  %v305 = vpack.c.b16 %v209, %v207
  %v306 = vpack.c.b16 %v212, %v210
  %v307 = vpack.c.b16 %v213, %v211
  %v308 = vpack.c.b16 %v216, %v214
  %v309 = vpack.c.b16 %v217, %v215
  %v310 = vpack.c.b16 %v220, %v218
  %v311 = vpack.c.b16 %v221, %v219
  %v312 = vpack.c.b16 %v224, %v222
  %v313 = vpack.c.b16 %v225, %v223
  %v314 = vpack.c.b16 %v228, %v226
  %v315 = vpack.c.b16 %v229, %v227
  %v316 = vpack.c.b16 %v232, %v230
  %v317 = vpack.c.b16 %v233, %v231
  %v318 = vpack.c.b16 %v236, %v234
  %v319 = vpack.c.b16 %v237, %v235
  %v320 = vpack.c.b16 %v240, %v238
  %v321 = vpack.c.b16 %v241, %v239
  %v322 = vpack.c.b16 %v244, %v242
  %v323 = vpack.c.b16 %v245, %v243
  %v324 = vpack.c.b16 %v248, %v246
  %v325 = vpack.c.b16 %v249, %v247
  %v326 = vpack.c.b16 %v252, %v250
  %v327 = vpack.c.b16 %v253, %v251
  %v328 = vpack.c.b16 %v256, %v254
  %v329 = vpack.c.b16 %v257, %v255
  %v330 = vpack.c.b16 %v260, %v258
  %v331 = vpack.c.b16 %v261, %v259
  %v332 = vpack.c.b16 %v264, %v262
  %v333 = vpack.c.b16 %v265, %v263
  %v334 = vpack.c.b16 %v268, %v266
  %v335 = vpack.c.b16 %v269, %v267
  %v336 = vpack.c.b16 %v272, %v270
  %v337 = vpack.c.b16 %v273, %v271
  %v338 = vpack.c.b16 %v276, %v274
  %v339 = vpack.c.b16 %v277, %v275
  %v340 = vpack.c.b16 %v280, %v278
  %v341 = vpack.c.b16 %v281, %v279
  %v342 = vpack.c.b16 %v284, %v282
  %v343 = vpack.c.b16 %v285, %v283
  %v434 = vunpack.c.l.b16 %v73
  %v435 = vunpack.c.l.b16 %v74
  %v436 = vunpack.c.l.b16 %v75
  %v437 = vunpack.c.l.b16 %v76
  %v438 = vunpack.c.l.b16 %v77
  %v439 = vunpack.c.l.b16 %v78
  %v440 = vunpack.c.l.b16 %v79
  %v441 = vunpack.c.l.b16 %v80
  %v442 = vunpack.c.l.b16 %v81
  %v443 = vunpack.c.l.b16 %v82
  %v444 = vunpack.c.l.b16 %v83
  %v445 = vunpack.c.l.b16 %v84
  %v446 = vunpack.c.l.b16 %v85
  %v447 = vunpack.c.l.b16 %v86
  %v448 = vunpack.c.l.b16 %v87
  %v449 = vunpack.c.l.b16 %v88
  %v450 = vunpack.c.l.b16 %v89
  %v451 = vunpack.c.l.b16 %v90
  %v452 = vunpack.c.l.b16 %v91
  %v453 = vunpack.c.l.b16 %v92
  %v454 = vunpack.c.l.b16 %v93
  %v455 = vunpack.c.l.b16 %v94
  %v456 = vunpack.c.l.b16 %v95
  %v457 = vunpack.c.l.b16 %v96
  %v458 = vunpack.c.l.b16 %v97
  %v459 = vunpack.c.l.b16 %v98
  %v460 = vunpack.c.l.b16 %v99
  %v461 = vunpack.c.l.b16 %v100
  %v462 = vunpack.c.l.b16 %v101
  %v463 = vunpack.c.l.b16 %v102
  %v464 = vunpack.c.l.b16 %v103
  %v465 = vunpack.c.l.b16 %v104
  %v466 = vpack.c.b16 %v435, %v434
  %v467 = vpack.c.b16 %v437, %v436
  %v468 = vpack.c.b16 %v439, %v438
  %v469 = vpack.c.b16 %v441, %v440
  %v470 = vpack.c.b16 %v443, %v442
  %v471 = vpack.c.b16 %v445, %v444
  %v472 = vpack.c.b16 %v447, %v446
  %v473 = vpack.c.b16 %v449, %v448
  %v474 = vpack.c.b16 %v451, %v450
  %v475 = vpack.c.b16 %v453, %v452
  %v476 = vpack.c.b16 %v455, %v454
  %v477 = vpack.c.b16 %v457, %v456
  %v478 = vpack.c.b16 %v459, %v458
  %v479 = vpack.c.b16 %v461, %v460
  %v480 = vpack.c.b16 %v463, %v462
  %v481 = vpack.c.b16 %v465, %v464
  %498 = vmatprep.subr.bf16.mxu0 0
  %499 = vmatpush1.bf16.msra.mxu0 %v466
  %500 = vmatprep.subr.bf16.mxu0 0
  %501 = vmatpush1.bf16.msra.mxu0 %v467
  %502 = vmatprep.subr.bf16.mxu0 0
  %503 = vmatpush1.bf16.msra.mxu0 %v468
  %504 = vmatprep.subr.bf16.mxu0 0
  %505 = vmatpush1.bf16.msra.mxu0 %v469
  %506 = vmatprep.subr.bf16.mxu0 0
  %507 = vmatpush1.bf16.msra.mxu0 %v470
  %508 = vmatprep.subr.bf16.mxu0 0
  %509 = vmatpush1.bf16.msra.mxu0 %v471
  %510 = vmatprep.subr.bf16.mxu0 0
  %511 = vmatpush1.bf16.msra.mxu0 %v472
  %512 = vmatprep.subr.bf16.mxu0 0
  %513 = vmatpush1.bf16.msra.mxu0 %v473
  %514 = vmatprep.subr.bf16.mxu0 0
  %515 = vmatpush1.bf16.msra.mxu0 %v474
  %516 = vmatprep.subr.bf16.mxu0 0
  %517 = vmatpush1.bf16.msra.mxu0 %v475
  %518 = vmatprep.subr.bf16.mxu0 0
  %519 = vmatpush1.bf16.msra.mxu0 %v476
  %520 = vmatprep.subr.bf16.mxu0 0
  %521 = vmatpush1.bf16.msra.mxu0 %v477
  %522 = vmatprep.subr.bf16.mxu0 0
  %523 = vmatpush1.bf16.msra.mxu0 %v478
  %524 = vmatprep.subr.bf16.mxu0 0
  %525 = vmatpush1.bf16.msra.mxu0 %v479
  %526 = vmatprep.subr.bf16.mxu0 0
  %527 = vmatpush1.bf16.msra.mxu0 %v480
  %528 = vmatprep.subr.bf16.mxu0 0
  %529 = vmatpush1.bf16.msra.mxu0 %v481
  %530 = vmatprep.mubr.bf16.mxu0 %v287
  %531 = vmatmul.mubr.bf16.gmra.mrb[0].mxu0 %v286
  %v532 = vpop.f32.mrb[0].mxu0
  %v533 = vadd.f32 %v110, %v532
  %v534 = vpop.f32.mrb[0].mxu0
  %v535 = vpop.f32.mrb[0].mxu0
  %v536 = vadd.f32 %v110, %v535
  %v537 = vpop.f32.mrb[0].mxu0
  %538 = vmatprep.mubr.bf16.mxu0 %v289
  %539 = vmatmul.mubr.bf16.gmra.mrb[0].mxu0 %v288
  %v540 = vpop.f32.mrb[0].mxu0
  %v541 = vadd.f32 %v110, %v540
  %v542 = vpop.f32.mrb[0].mxu0
  %v543 = vpop.f32.mrb[0].mxu0
  %v544 = vadd.f32 %v110, %v543
  %v545 = vpop.f32.mrb[0].mxu0
  %546 = vmatprep.mubr.bf16.mxu0 %v291
  %547 = vmatmul.mubr.bf16.gmra.mrb[0].mxu0 %v290
  %v548 = vpop.f32.mrb[0].mxu0
  %v549 = vadd.f32 %v110, %v548
  %v550 = vpop.f32.mrb[0].mxu0
  %v551 = vpop.f32.mrb[0].mxu0
  %v552 = vadd.f32 %v110, %v551
  %v553 = vpop.f32.mrb[0].mxu0
  %554 = vmatprep.mubr.bf16.mxu0 %v293
  %555 = vmatmul.mubr.bf16.gmra.mrb[0].mxu0 %v292
  %v556 = vpop.f32.mrb[0].mxu0
  %v557 = vadd.f32 %v110, %v556
  %v558 = vpop.f32.mrb[0].mxu0
  %v559 = vpop.f32.mrb[0].mxu0
  %v560 = vadd.f32 %v110, %v559
  %v561 = vpop.f32.mrb[0].mxu0
  %562 = vmatprep.mubr.bf16.mxu0 %v295
  %563 = vmatmul.mubr.bf16.gmra.mrb[0].mxu0 %v294
  %v564 = vpop.f32.mrb[0].mxu0
  %v565 = vadd.f32 %v110, %v564
  %v566 = vpop.f32.mrb[0].mxu0
  %v567 = vpop.f32.mrb[0].mxu0
  %v568 = vadd.f32 %v110, %v567
  %v569 = vpop.f32.mrb[0].mxu0
  %570 = vmatprep.mubr.bf16.mxu0 %v297
  %571 = vmatmul.mubr.bf16.gmra.mrb[0].mxu0 %v296
  %v572 = vpop.f32.mrb[0].mxu0
  %v573 = vadd.f32 %v110, %v572
  %v574 = vpop.f32.mrb[0].mxu0
  %v575 = vpop.f32.mrb[0].mxu0
  %v576 = vadd.f32 %v110, %v575
  %v577 = vpop.f32.mrb[0].mxu0
  %578 = vmatprep.mubr.bf16.mxu0 %v299
  %579 = vmatmul.mubr.bf16.gmra.mrb[0].mxu0 %v298
  %v580 = vpop.f32.mrb[0].mxu0
  %v581 = vadd.f32 %v110, %v580
  %v582 = vpop.f32.mrb[0].mxu0
  %v583 = vpop.f32.mrb[0].mxu0
  %v584 = vadd.f32 %v110, %v583
  %v585 = vpop.f32.mrb[0].mxu0
  %586 = vmatprep.mubr.bf16.mxu0 %v301
  %587 = vmatmul.mubr.bf16.gmra.mrb[0].mxu0 %v300
  %v588 = vpop.f32.mrb[0].mxu0
  %v589 = vadd.f32 %v110, %v588
  %v590 = vpop.f32.mrb[0].mxu0
  %v591 = vpop.f32.mrb[0].mxu0
  %v592 = vadd.f32 %v110, %v591
  %v593 = vpop.f32.mrb[0].mxu0
  %594 = vmatprep.mubr.bf16.mxu0 %v303
  %595 = vmatmul.mubr.bf16.gmra.mrb[0].mxu0 %v302
  %v596 = vpop.f32.mrb[0].mxu0
  %v597 = vadd.f32 %v110, %v596
  %v598 = vpop.f32.mrb[0].mxu0
  %v599 = vpop.f32.mrb[0].mxu0
  %v600 = vadd.f32 %v110, %v599
  %v601 = vpop.f32.mrb[0].mxu0
  %602 = vmatprep.mubr.bf16.mxu0 %v305
  %603 = vmatmul.mubr.bf16.gmra.mrb[0].mxu0 %v304
  %v604 = vpop.f32.mrb[0].mxu0
  %v605 = vadd.f32 %v110, %v604
  %v606 = vpop.f32.mrb[0].mxu0
  %v607 = vpop.f32.mrb[0].mxu0
  %v608 = vadd.f32 %v110, %v607
  %v609 = vpop.f32.mrb[0].mxu0
  %610 = vmatprep.mubr.bf16.mxu0 %v307
  %611 = vmatmul.mubr.bf16.gmra.mrb[0].mxu0 %v306
  %v612 = vpop.f32.mrb[0].mxu0
  %v613 = vadd.f32 %v110, %v612
  %v614 = vpop.f32.mrb[0].mxu0
  %v615 = vpop.f32.mrb[0].mxu0
  %v616 = vadd.f32 %v110, %v615
  %v617 = vpop.f32.mrb[0].mxu0
  %618 = vmatprep.mubr.bf16.mxu0 %v309
  %619 = vmatmul.mubr.bf16.gmra.mrb[0].mxu0 %v308
  %v620 = vpop.f32.mrb[0].mxu0
  %v621 = vadd.f32 %v110, %v620
  %v622 = vpop.f32.mrb[0].mxu0
  %v623 = vpop.f32.mrb[0].mxu0
  %v624 = vadd.f32 %v110, %v623
  %v625 = vpop.f32.mrb[0].mxu0
  %626 = vmatprep.mubr.bf16.mxu0 %v311
  %627 = vmatmul.mubr.bf16.gmra.mrb[0].mxu0 %v310
  %v628 = vpop.f32.mrb[0].mxu0
  %v629 = vadd.f32 %v110, %v628
  %v630 = vpop.f32.mrb[0].mxu0
  %v631 = vpop.f32.mrb[0].mxu0
  %v632 = vadd.f32 %v110, %v631
  %v633 = vpop.f32.mrb[0].mxu0
  %634 = vmatprep.mubr.bf16.mxu0 %v313
  %635 = vmatmul.mubr.bf16.gmra.mrb[0].mxu0 %v312
  %v636 = vpop.f32.mrb[0].mxu0
  %v637 = vadd.f32 %v110, %v636
  %v638 = vpop.f32.mrb[0].mxu0
  %v639 = vpop.f32.mrb[0].mxu0
  %v640 = vadd.f32 %v110, %v639
  %v641 = vpop.f32.mrb[0].mxu0
  %642 = vmatprep.mubr.bf16.mxu0 %v315
  %643 = vmatmul.mubr.bf16.gmra.mrb[0].mxu0 %v314
  %v644 = vpop.f32.mrb[0].mxu0
  %v645 = vadd.f32 %v110, %v644
  %v646 = vpop.f32.mrb[0].mxu0
  %v647 = vpop.f32.mrb[0].mxu0
  %v648 = vadd.f32 %v110, %v647
  %v649 = vpop.f32.mrb[0].mxu0
  %650 = vmatprep.mubr.bf16.mxu0 %v317
  %651 = vmatmul.mubr.bf16.gmra.mrb[0].mxu0 %v316
  %v652 = vpop.f32.mrb[0].mxu0
  %v653 = vadd.f32 %v110, %v652
  %v654 = vpop.f32.mrb[0].mxu0
  %v655 = vpop.f32.mrb[0].mxu0
  %v656 = vadd.f32 %v110, %v655
  %v657 = vpop.f32.mrb[0].mxu0
  %658 = vmatprep.mubr.bf16.mxu0 %v319
  %659 = vmatmul.mubr.bf16.gmra.mrb[0].mxu0 %v318
  %v660 = vpop.f32.mrb[0].mxu0
  %v661 = vadd.f32 %v110, %v660
  %v662 = vpop.f32.mrb[0].mxu0
  %v663 = vpop.f32.mrb[0].mxu0
  %v664 = vadd.f32 %v110, %v663
  %v665 = vpop.f32.mrb[0].mxu0
  %666 = vmatprep.mubr.bf16.mxu0 %v321
  %667 = vmatmul.mubr.bf16.gmra.mrb[0].mxu0 %v320
  %v668 = vpop.f32.mrb[0].mxu0
  %v669 = vadd.f32 %v110, %v668
  %v670 = vpop.f32.mrb[0].mxu0
  %v671 = vpop.f32.mrb[0].mxu0
  %v672 = vadd.f32 %v110, %v671
  %v673 = vpop.f32.mrb[0].mxu0
  %674 = vmatprep.mubr.bf16.mxu0 %v323
  %675 = vmatmul.mubr.bf16.gmra.mrb[0].mxu0 %v322
  %v676 = vpop.f32.mrb[0].mxu0
  %v677 = vadd.f32 %v110, %v676
  %v678 = vpop.f32.mrb[0].mxu0
  %v679 = vpop.f32.mrb[0].mxu0
  %v680 = vadd.f32 %v110, %v679
  %v681 = vpop.f32.mrb[0].mxu0
  %682 = vmatprep.mubr.bf16.mxu0 %v325
  %683 = vmatmul.mubr.bf16.gmra.mrb[0].mxu0 %v324
  %v684 = vpop.f32.mrb[0].mxu0
  %v685 = vadd.f32 %v110, %v684
  %v686 = vpop.f32.mrb[0].mxu0
  %v687 = vpop.f32.mrb[0].mxu0
  %v688 = vadd.f32 %v110, %v687
  %v689 = vpop.f32.mrb[0].mxu0
  %690 = vmatprep.mubr.bf16.mxu0 %v327
  %691 = vmatmul.mubr.bf16.gmra.mrb[0].mxu0 %v326
  %v692 = vpop.f32.mrb[0].mxu0
  %v693 = vadd.f32 %v110, %v692
  %v694 = vpop.f32.mrb[0].mxu0
  %v695 = vpop.f32.mrb[0].mxu0
  %v696 = vadd.f32 %v110, %v695
  %v697 = vpop.f32.mrb[0].mxu0
  %698 = vmatprep.mubr.bf16.mxu0 %v329
  %699 = vmatmul.mubr.bf16.gmra.mrb[0].mxu0 %v328
  %v700 = vpop.f32.mrb[0].mxu0
  %v701 = vadd.f32 %v110, %v700
  %v702 = vpop.f32.mrb[0].mxu0
  %v703 = vpop.f32.mrb[0].mxu0
  %v704 = vadd.f32 %v110, %v703
  %v705 = vpop.f32.mrb[0].mxu0
  %706 = vmatprep.mubr.bf16.mxu0 %v331
  %707 = vmatmul.mubr.bf16.gmra.mrb[0].mxu0 %v330
  %v708 = vpop.f32.mrb[0].mxu0
  %v709 = vadd.f32 %v110, %v708
  %v710 = vpop.f32.mrb[0].mxu0
  %v711 = vpop.f32.mrb[0].mxu0
  %v712 = vadd.f32 %v110, %v711
  %v713 = vpop.f32.mrb[0].mxu0
  %714 = vmatprep.mubr.bf16.mxu0 %v333
  %715 = vmatmul.mubr.bf16.gmra.mrb[0].mxu0 %v332
  %v716 = vpop.f32.mrb[0].mxu0
  %v717 = vadd.f32 %v110, %v716
  %v718 = vpop.f32.mrb[0].mxu0
  %v719 = vpop.f32.mrb[0].mxu0
  %v720 = vadd.f32 %v110, %v719
  %v721 = vpop.f32.mrb[0].mxu0
  %722 = vmatprep.mubr.bf16.mxu0 %v335
  %723 = vmatmul.mubr.bf16.gmra.mrb[0].mxu0 %v334
  %v724 = vpop.f32.mrb[0].mxu0
  %v725 = vadd.f32 %v110, %v724
  %v726 = vpop.f32.mrb[0].mxu0
  %v727 = vpop.f32.mrb[0].mxu0
  %v728 = vadd.f32 %v110, %v727
  %v729 = vpop.f32.mrb[0].mxu0
  %730 = vmatprep.mubr.bf16.mxu0 %v337
  %731 = vmatmul.mubr.bf16.gmra.mrb[0].mxu0 %v336
  %v732 = vpop.f32.mrb[0].mxu0
  %v733 = vadd.f32 %v110, %v732
  %v734 = vpop.f32.mrb[0].mxu0
  %v735 = vpop.f32.mrb[0].mxu0
  %v736 = vadd.f32 %v110, %v735
  %v737 = vpop.f32.mrb[0].mxu0
  %738 = vmatprep.mubr.bf16.mxu0 %v339
  %739 = vmatmul.mubr.bf16.gmra.mrb[0].mxu0 %v338
  %v740 = vpop.f32.mrb[0].mxu0
  %v741 = vadd.f32 %v110, %v740
  %v742 = vpop.f32.mrb[0].mxu0
  %v743 = vpop.f32.mrb[0].mxu0
  %v744 = vadd.f32 %v110, %v743
  %v745 = vpop.f32.mrb[0].mxu0
  %746 = vmatprep.mubr.bf16.mxu0 %v341
  %747 = vmatmul.mubr.bf16.gmra.mrb[0].mxu0 %v340
  %v748 = vpop.f32.mrb[0].mxu0
  %v749 = vadd.f32 %v110, %v748
  %v750 = vpop.f32.mrb[0].mxu0
  %v751 = vpop.f32.mrb[0].mxu0
  %v752 = vadd.f32 %v110, %v751
  %v753 = vpop.f32.mrb[0].mxu0
  %754 = vmatprep.mubr.bf16.mxu0 %v343
  %755 = vmatmul.mubr.bf16.gmra.mrb[0].mxu0 %v342
  %v756 = vpop.f32.mrb[0].mxu0
  %v757 = vadd.f32 %v110, %v756
  %v758 = vpop.f32.mrb[0].mxu0
  %v759 = vpop.f32.mrb[0].mxu0
  %v760 = vadd.f32 %v110, %v759
  %v761 = vpop.f32.mrb[0].mxu0
  %762 = vdwg.mxu0
  %vm763 = vcmp.ge.f32.partialorder %v533, 0.0
  %vm764 = vcmp.ge.f32.partialorder %v536, 0.0
  %vm765 = vcmp.ge.f32.partialorder %v541, 0.0
  %vm766 = vcmp.ge.f32.partialorder %v544, 0.0
  %vm767 = vcmp.ge.f32.partialorder %v549, 0.0
  %vm768 = vcmp.ge.f32.partialorder %v552, 0.0
  %vm769 = vcmp.ge.f32.partialorder %v557, 0.0
  %vm770 = vcmp.ge.f32.partialorder %v560, 0.0
  %vm771 = vcmp.ge.f32.partialorder %v565, 0.0
  %vm772 = vcmp.ge.f32.partialorder %v568, 0.0
  %vm773 = vcmp.ge.f32.partialorder %v573, 0.0
  %vm774 = vcmp.ge.f32.partialorder %v576, 0.0
  %vm775 = vcmp.ge.f32.partialorder %v581, 0.0
  %vm776 = vcmp.ge.f32.partialorder %v584, 0.0
  %vm777 = vcmp.ge.f32.partialorder %v589, 0.0
  %vm778 = vcmp.ge.f32.partialorder %v592, 0.0
  %vm779 = vcmp.ge.f32.partialorder %v597, 0.0
  %vm780 = vcmp.ge.f32.partialorder %v600, 0.0
  %vm781 = vcmp.ge.f32.partialorder %v605, 0.0
  %vm782 = vcmp.ge.f32.partialorder %v608, 0.0
  %vm783 = vcmp.ge.f32.partialorder %v613, 0.0
  %vm784 = vcmp.ge.f32.partialorder %v616, 0.0
  %vm785 = vcmp.ge.f32.partialorder %v621, 0.0
  %vm786 = vcmp.ge.f32.partialorder %v624, 0.0
  %vm787 = vcmp.ge.f32.partialorder %v629, 0.0
  %vm788 = vcmp.ge.f32.partialorder %v632, 0.0
  %vm789 = vcmp.ge.f32.partialorder %v637, 0.0
  %vm790 = vcmp.ge.f32.partialorder %v640, 0.0
  %vm791 = vcmp.ge.f32.partialorder %v645, 0.0
  %vm792 = vcmp.ge.f32.partialorder %v648, 0.0
  %vm793 = vcmp.ge.f32.partialorder %v653, 0.0
  %vm794 = vcmp.ge.f32.partialorder %v656, 0.0
  %vm795 = vcmp.ge.f32.partialorder %v661, 0.0
  %vm796 = vcmp.ge.f32.partialorder %v664, 0.0
  %vm797 = vcmp.ge.f32.partialorder %v669, 0.0
  %vm798 = vcmp.ge.f32.partialorder %v672, 0.0
  %vm799 = vcmp.ge.f32.partialorder %v677, 0.0
  %vm800 = vcmp.ge.f32.partialorder %v680, 0.0
  %vm801 = vcmp.ge.f32.partialorder %v685, 0.0
  %vm802 = vcmp.ge.f32.partialorder %v688, 0.0
  %vm803 = vcmp.ge.f32.partialorder %v693, 0.0
  %vm804 = vcmp.ge.f32.partialorder %v696, 0.0
  %vm805 = vcmp.ge.f32.partialorder %v701, 0.0
  %vm806 = vcmp.ge.f32.partialorder %v704, 0.0
  %vm807 = vcmp.ge.f32.partialorder %v709, 0.0
  %vm808 = vcmp.ge.f32.partialorder %v712, 0.0
  %vm809 = vcmp.ge.f32.partialorder %v717, 0.0
  %vm810 = vcmp.ge.f32.partialorder %v720, 0.0
  %vm811 = vcmp.ge.f32.partialorder %v725, 0.0
  %vm812 = vcmp.ge.f32.partialorder %v728, 0.0
  %vm813 = vcmp.ge.f32.partialorder %v733, 0.0
  %vm814 = vcmp.ge.f32.partialorder %v736, 0.0
  %vm815 = vcmp.ge.f32.partialorder %v741, 0.0
  %vm816 = vcmp.ge.f32.partialorder %v744, 0.0
  %vm817 = vcmp.ge.f32.partialorder %v749, 0.0
  %vm818 = vcmp.ge.f32.partialorder %v752, 0.0
  %vm819 = vcmp.ge.f32.partialorder %v757, 0.0
  %vm820 = vcmp.ge.f32.partialorder %v760, 0.0
  %v821 = vmul.f32 %v533, 0.2
  %v822 = vmul.f32 %v536, 0.2
  %v823 = vmul.f32 %v541, 0.2
  %v824 = vmul.f32 %v544, 0.2
  %v825 = vmul.f32 %v549, 0.2
  %v826 = vmul.f32 %v552, 0.2
  %v827 = vmul.f32 %v557, 0.2
  %v828 = vmul.f32 %v560, 0.2
  %v829 = vmul.f32 %v565, 0.2
  %v830 = vmul.f32 %v568, 0.2
  %v831 = vmul.f32 %v573, 0.2
  %v832 = vmul.f32 %v576, 0.2
  %v833 = vmul.f32 %v581, 0.2
  %v834 = vmul.f32 %v584, 0.2
  %v835 = vmul.f32 %v589, 0.2
  %v836 = vmul.f32 %v592, 0.2
  %v837 = vmul.f32 %v597, 0.2
  %v838 = vmul.f32 %v600, 0.2
  %v839 = vmul.f32 %v605, 0.2
  %v840 = vmul.f32 %v608, 0.2
  %v841 = vmul.f32 %v613, 0.2
  %v842 = vmul.f32 %v616, 0.2
  %v843 = vmul.f32 %v621, 0.2
  %v844 = vmul.f32 %v624, 0.2
  %v845 = vmul.f32 %v629, 0.2
  %v846 = vmul.f32 %v632, 0.2
  %v847 = vmul.f32 %v637, 0.2
  %v848 = vmul.f32 %v640, 0.2
  %v849 = vmul.f32 %v645, 0.2
  %v850 = vmul.f32 %v648, 0.2
  %v851 = vmul.f32 %v653, 0.2
  %v852 = vmul.f32 %v656, 0.2
  %v853 = vmul.f32 %v661, 0.2
  %v854 = vmul.f32 %v664, 0.2
  %v855 = vmul.f32 %v669, 0.2
  %v856 = vmul.f32 %v672, 0.2
  %v857 = vmul.f32 %v677, 0.2
  %v858 = vmul.f32 %v680, 0.2
  %v859 = vmul.f32 %v685, 0.2
  %v860 = vmul.f32 %v688, 0.2
  %v861 = vmul.f32 %v693, 0.2
  %v862 = vmul.f32 %v696, 0.2
  %v863 = vmul.f32 %v701, 0.2
  %v864 = vmul.f32 %v704, 0.2
  %v865 = vmul.f32 %v709, 0.2
  %v866 = vmul.f32 %v712, 0.2
  %v867 = vmul.f32 %v717, 0.2
  %v868 = vmul.f32 %v720, 0.2
  %v869 = vmul.f32 %v725, 0.2
  %v870 = vmul.f32 %v728, 0.2
  %v871 = vmul.f32 %v733, 0.2
  %v872 = vmul.f32 %v736, 0.2
  %v873 = vmul.f32 %v741, 0.2
  %v874 = vmul.f32 %v744, 0.2
  %v875 = vmul.f32 %v749, 0.2
  %v876 = vmul.f32 %v752, 0.2
  %v877 = vmul.f32 %v757, 0.2
  %v878 = vmul.f32 %v760, 0.2
  %v879 = vsel %vm763, %v533, %v821
  %v880 = vsel %vm764, %v536, %v822
  %v881 = vsel %vm765, %v541, %v823
  %v882 = vsel %vm766, %v544, %v824
  %v883 = vsel %vm767, %v549, %v825
  %v884 = vsel %vm768, %v552, %v826
  %v885 = vsel %vm769, %v557, %v827
  %v886 = vsel %vm770, %v560, %v828
  %v887 = vsel %vm771, %v565, %v829
  %v888 = vsel %vm772, %v568, %v830
  %v889 = vsel %vm773, %v573, %v831
  %v890 = vsel %vm774, %v576, %v832
  %v891 = vsel %vm775, %v581, %v833
  %v892 = vsel %vm776, %v584, %v834
  %v893 = vsel %vm777, %v589, %v835
  %v894 = vsel %vm778, %v592, %v836
  %v895 = vsel %vm779, %v597, %v837
  %v896 = vsel %vm780, %v600, %v838
  %v897 = vsel %vm781, %v605, %v839
  %v898 = vsel %vm782, %v608, %v840
  %v899 = vsel %vm783, %v613, %v841
  %v900 = vsel %vm784, %v616, %v842
  %v901 = vsel %vm785, %v621, %v843
  %v902 = vsel %vm786, %v624, %v844
  %v903 = vsel %vm787, %v629, %v845
  %v904 = vsel %vm788, %v632, %v846
  %v905 = vsel %vm789, %v637, %v847
  %v906 = vsel %vm790, %v640, %v848
  %v907 = vsel %vm791, %v645, %v849
  %v908 = vsel %vm792, %v648, %v850
  %v909 = vsel %vm793, %v653, %v851
  %v910 = vsel %vm794, %v656, %v852
  %v911 = vsel %vm795, %v661, %v853
  %v912 = vsel %vm796, %v664, %v854
  %v913 = vsel %vm797, %v669, %v855
  %v914 = vsel %vm798, %v672, %v856
  %v915 = vsel %vm799, %v677, %v857
  %v916 = vsel %vm800, %v680, %v858
  %v917 = vsel %vm801, %v685, %v859
  %v918 = vsel %vm802, %v688, %v860
  %v919 = vsel %vm803, %v693, %v861
  %v920 = vsel %vm804, %v696, %v862
  %v921 = vsel %vm805, %v701, %v863
  %v922 = vsel %vm806, %v704, %v864
  %v923 = vsel %vm807, %v709, %v865
  %v924 = vsel %vm808, %v712, %v866
  %v925 = vsel %vm809, %v717, %v867
  %v926 = vsel %vm810, %v720, %v868
  %v927 = vsel %vm811, %v725, %v869
  %v928 = vsel %vm812, %v728, %v870
  %v929 = vsel %vm813, %v733, %v871
  %v930 = vsel %vm814, %v736, %v872
  %v931 = vsel %vm815, %v741, %v873
  %v932 = vsel %vm816, %v744, %v874
  %v933 = vsel %vm817, %v749, %v875
  %v934 = vsel %vm818, %v752, %v876
  %v935 = vsel %vm819, %v757, %v877
  %v936 = vsel %vm820, %v760, %v878
  %v937 = vpack.c.bf16 %v880, %v879
  %v938 = vpack.c.bf16 %v882, %v881
  %v939 = vpack.c.bf16 %v884, %v883
  %v940 = vpack.c.bf16 %v886, %v885
  %v941 = vpack.c.bf16 %v888, %v887
  %v942 = vpack.c.bf16 %v890, %v889
  %v943 = vpack.c.bf16 %v892, %v891
  %v944 = vpack.c.bf16 %v894, %v893
  %v945 = vpack.c.bf16 %v896, %v895
  %v946 = vpack.c.bf16 %v898, %v897
  %v947 = vpack.c.bf16 %v900, %v899
  %v948 = vpack.c.bf16 %v902, %v901
  %v949 = vpack.c.bf16 %v904, %v903
  %v950 = vpack.c.bf16 %v906, %v905
  %v951 = vpack.c.bf16 %v908, %v907
  %v952 = vpack.c.bf16 %v910, %v909
  %v953 = vpack.c.bf16 %v912, %v911
  %v954 = vpack.c.bf16 %v914, %v913
  %v955 = vpack.c.bf16 %v916, %v915
  %v956 = vpack.c.bf16 %v918, %v917
  %v957 = vpack.c.bf16 %v920, %v919
  %v958 = vpack.c.bf16 %v922, %v921
  %v959 = vpack.c.bf16 %v924, %v923
  %v960 = vpack.c.bf16 %v926, %v925
  %v961 = vpack.c.bf16 %v928, %v927
  %v962 = vpack.c.bf16 %v930, %v929
  %v963 = vpack.c.bf16 %v932, %v931
  %v964 = vpack.c.bf16 %v934, %v933
  %v965 = vpack.c.bf16 %v936, %v935
  %v995 = vunpack.c.l.b16 %v937
  %v996 = vunpack.c.h.b16 %v937
  %v997 = vunpack.c.l.b16 %v938
  %v998 = vunpack.c.h.b16 %v938
  %v999 = vunpack.c.l.b16 %v939
  %v1000 = vunpack.c.h.b16 %v939
  %v1001 = vunpack.c.l.b16 %v940
  %v1002 = vunpack.c.h.b16 %v940
  %v1003 = vunpack.c.l.b16 %v941
  %v1004 = vunpack.c.h.b16 %v941
  %v1005 = vunpack.c.l.b16 %v942
  %v1006 = vunpack.c.h.b16 %v942
  %v1007 = vunpack.c.l.b16 %v943
  %v1008 = vunpack.c.h.b16 %v943
  %v1009 = vunpack.c.l.b16 %v944
  %v1010 = vunpack.c.h.b16 %v944
  %v1011 = vunpack.c.l.b16 %v945
  %v1012 = vunpack.c.h.b16 %v945
  %v1013 = vunpack.c.l.b16 %v946
  %v1014 = vunpack.c.h.b16 %v946
  %v1015 = vunpack.c.l.b16 %v947
  %v1016 = vunpack.c.h.b16 %v947
  %v1017 = vunpack.c.l.b16 %v948
  %v1018 = vunpack.c.h.b16 %v948
  %v1019 = vunpack.c.l.b16 %v949
  %v1020 = vunpack.c.h.b16 %v949
  %v1021 = vunpack.c.l.b16 %v950
  %v1022 = vunpack.c.h.b16 %v950
  %v1023 = vunpack.c.l.b16 %v951
  %v1024 = vunpack.c.h.b16 %v951
  %v1025 = vunpack.c.l.b16 %v952
  %v1026 = vunpack.c.h.b16 %v952
  %v1027 = vunpack.c.l.b16 %v953
  %v1028 = vunpack.c.h.b16 %v953
  %v1029 = vunpack.c.l.b16 %v954
  %v1030 = vunpack.c.h.b16 %v954
  %v1031 = vunpack.c.l.b16 %v955
  %v1032 = vunpack.c.h.b16 %v955
  %v1033 = vunpack.c.l.b16 %v956
  %v1034 = vunpack.c.h.b16 %v956
  %v1035 = vunpack.c.l.b16 %v957
  %v1036 = vunpack.c.h.b16 %v957
  %v1037 = vunpack.c.l.b16 %v958
  %v1038 = vunpack.c.h.b16 %v958
  %v1039 = vunpack.c.l.b16 %v959
  %v1040 = vunpack.c.h.b16 %v959
  %v1041 = vunpack.c.l.b16 %v960
  %v1042 = vunpack.c.h.b16 %v960
  %v1043 = vunpack.c.l.b16 %v961
  %v1044 = vunpack.c.h.b16 %v961
  %v1045 = vunpack.c.l.b16 %v962
  %v1046 = vunpack.c.h.b16 %v962
  %v1047 = vunpack.c.l.b16 %v963
  %v1048 = vunpack.c.h.b16 %v963
  %v1049 = vunpack.c.l.b16 %v964
  %v1050 = vunpack.c.h.b16 %v964
  %v1051 = vunpack.c.l.b16 %v965
  %v1052 = vunpack.c.h.b16 %v965
  %v1053 = vpack.c.b16 %v995, %v995
  %v1054 = vpack.c.b16 %v996, %v996
  %v1055 = vpack.c.b16 %v997, %v997
  %v1056 = vpack.c.b16 %v998, %v998
  %v1057 = vpack.c.b16 %v999, %v999
  %v1058 = vpack.c.b16 %v1000, %v1000
  %v1059 = vpack.c.b16 %v1001, %v1001
  %v1060 = vpack.c.b16 %v1002, %v1002
  %v1061 = vpack.c.b16 %v1003, %v1003
  %v1062 = vpack.c.b16 %v1004, %v1004
  %v1063 = vpack.c.b16 %v1005, %v1005
  %v1064 = vpack.c.b16 %v1006, %v1006
  %v1065 = vpack.c.b16 %v1007, %v1007
  %v1066 = vpack.c.b16 %v1008, %v1008
  %v1067 = vpack.c.b16 %v1009, %v1009
  %v1068 = vpack.c.b16 %v1010, %v1010
  %v1069 = vpack.c.b16 %v1011, %v1011
  %v1070 = vpack.c.b16 %v1012, %v1012
  %v1071 = vpack.c.b16 %v1013, %v1013
  %v1072 = vpack.c.b16 %v1014, %v1014
  %v1073 = vpack.c.b16 %v1015, %v1015
  %v1074 = vpack.c.b16 %v1016, %v1016
  %v1075 = vpack.c.b16 %v1017, %v1017
  %v1076 = vpack.c.b16 %v1018, %v1018
  %v1077 = vpack.c.b16 %v1019, %v1019
  %v1078 = vpack.c.b16 %v1020, %v1020
  %v1079 = vpack.c.b16 %v1021, %v1021
  %v1080 = vpack.c.b16 %v1022, %v1022
  %v1081 = vpack.c.b16 %v1023, %v1023
  %v1082 = vpack.c.b16 %v1024, %v1024
  %v1083 = vpack.c.b16 %v1025, %v1025
  %v1084 = vpack.c.b16 %v1026, %v1026
  %v1085 = vpack.c.b16 %v1027, %v1027
  %v1086 = vpack.c.b16 %v1028, %v1028
  %v1087 = vpack.c.b16 %v1029, %v1029
  %v1088 = vpack.c.b16 %v1030, %v1030
  %v1089 = vpack.c.b16 %v1031, %v1031
  %v1090 = vpack.c.b16 %v1032, %v1032
  %v1091 = vpack.c.b16 %v1033, %v1033
  %v1092 = vpack.c.b16 %v1034, %v1034
  %v1093 = vpack.c.b16 %v1035, %v1035
  %v1094 = vpack.c.b16 %v1036, %v1036
  %v1095 = vpack.c.b16 %v1037, %v1037
  %v1096 = vpack.c.b16 %v1038, %v1038
  %v1097 = vpack.c.b16 %v1039, %v1039
  %v1098 = vpack.c.b16 %v1040, %v1040
  %v1099 = vpack.c.b16 %v1041, %v1041
  %v1100 = vpack.c.b16 %v1042, %v1042
  %v1101 = vpack.c.b16 %v1043, %v1043
  %v1102 = vpack.c.b16 %v1044, %v1044
  %v1103 = vpack.c.b16 %v1045, %v1045
  %v1104 = vpack.c.b16 %v1046, %v1046
  %v1105 = vpack.c.b16 %v1047, %v1047
  %v1106 = vpack.c.b16 %v1048, %v1048
  %v1107 = vpack.c.b16 %v1049, %v1049
  %v1108 = vpack.c.b16 %v1050, %v1050
  %v1109 = vpack.c.b16 %v1051, %v1051
  %v1110 = vpack.c.b16 %v1052, %v1052
  %1169 = vst [vmem:[%s3] sm:$0xf] %v1053
  %1170 = vst [vmem:[%s3 + $0x4] sm:$0xf] %v1054
  %1171 = vst [vmem:[%s3 + $0x8] sm:$0xf] %v1055
  %1172 = vst [vmem:[%s3 + $0xc] sm:$0xf] %v1056
  %1173 = vst [vmem:[%s3 + $0x10] sm:$0xf] %v1057
  %1174 = vst [vmem:[%s3 + $0x14] sm:$0xf] %v1058
  %1175 = vst [vmem:[%s3 + $0x18] sm:$0xf] %v1059
  %1176 = vst [vmem:[%s3 + $0x1c] sm:$0xf] %v1060
  %1177 = vst [vmem:[%s3 + $0x20] sm:$0xf] %v1061
  %1178 = vst [vmem:[%s3 + $0x24] sm:$0xf] %v1062
  %1179 = vst [vmem:[%s3 + $0x28] sm:$0xf] %v1063
  %1180 = vst [vmem:[%s3 + $0x2c] sm:$0xf] %v1064
  %1181 = vst [vmem:[%s3 + $0x30] sm:$0xf] %v1065
  %1182 = vst [vmem:[%s3 + $0x34] sm:$0xf] %v1066
  %1183 = vst [vmem:[%s3 + $0x38] sm:$0xf] %v1067
  %1184 = vst [vmem:[%s3 + $0x3c] sm:$0xf] %v1068
  %1185 = vst [vmem:[%s3 + $0x40] sm:$0xf] %v1069
  %1186 = vst [vmem:[%s3 + $0x44] sm:$0xf] %v1070
  %1187 = vst [vmem:[%s3 + $0x48] sm:$0xf] %v1071
  %1188 = vst [vmem:[%s3 + $0x4c] sm:$0xf] %v1072
  %1189 = vst [vmem:[%s3 + $0x50] sm:$0xf] %v1073
  %1190 = vst [vmem:[%s3 + $0x54] sm:$0xf] %v1074
  %1191 = vst [vmem:[%s3 + $0x58] sm:$0xf] %v1075
  %1192 = vst [vmem:[%s3 + $0x5c] sm:$0xf] %v1076
  %1193 = vst [vmem:[%s3 + $0x60] sm:$0xf] %v1077
  %1194 = vst [vmem:[%s3 + $0x64] sm:$0xf] %v1078
  %1195 = vst [vmem:[%s3 + $0x68] sm:$0xf] %v1079
  %1196 = vst [vmem:[%s3 + $0x6c] sm:$0xf] %v1080
  %1197 = vst [vmem:[%s3 + $0x70] sm:$0xf] %v1081
  %1198 = vst [vmem:[%s3 + $0x74] sm:$0xf] %v1082
  %1199 = vst [vmem:[%s3 + $0x78] sm:$0xf] %v1083
  %1200 = vst [vmem:[%s3 + $0x7c] sm:$0xf] %v1084
  %1201 = vst [vmem:[%s3 + $0x80] sm:$0xf] %v1085
  %1202 = vst [vmem:[%s3 + $0x84] sm:$0xf] %v1086
  %1203 = vst [vmem:[%s3 + $0x88] sm:$0xf] %v1087
  %1204 = vst [vmem:[%s3 + $0x8c] sm:$0xf] %v1088
  %1205 = vst [vmem:[%s3 + $0x90] sm:$0xf] %v1089
  %1206 = vst [vmem:[%s3 + $0x94] sm:$0xf] %v1090
  %1207 = vst [vmem:[%s3 + $0x98] sm:$0xf] %v1091
  %1208 = vst [vmem:[%s3 + $0x9c] sm:$0xf] %v1092
  %1209 = vst [vmem:[%s3 + $0xa0] sm:$0xf] %v1093
  %1210 = vst [vmem:[%s3 + $0xa4] sm:$0xf] %v1094
  %1211 = vst [vmem:[%s3 + $0xa8] sm:$0xf] %v1095
  %1212 = vst [vmem:[%s3 + $0xac] sm:$0xf] %v1096
  %1213 = vst [vmem:[%s3 + $0xb0] sm:$0xf] %v1097
  %1214 = vst [vmem:[%s3 + $0xb4] sm:$0xf] %v1098
  %1215 = vst [vmem:[%s3 + $0xb8] sm:$0xf] %v1099
  %1216 = vst [vmem:[%s3 + $0xbc] sm:$0xf] %v1100
  %1217 = vst [vmem:[%s3 + $0xc0] sm:$0xf] %v1101
  %1218 = vst [vmem:[%s3 + $0xc4] sm:$0xf] %v1102
  %1219 = vst [vmem:[%s3 + $0xc8] sm:$0xf] %v1103
  %1220 = vst [vmem:[%s3 + $0xcc] sm:$0xf] %v1104
  %1221 = vst [vmem:[%s3 + $0xd0] sm:$0xf] %v1105
  %1222 = vst [vmem:[%s3 + $0xd4] sm:$0xf] %v1106
  %1223 = vst [vmem:[%s3 + $0xd8] sm:$0xf] %v1107
  %1224 = vst [vmem:[%s3 + $0xdc] sm:$0xf] %v1108
  %1225 = vst [vmem:[%s3 + $0xe0] sm:$0xf] %v1109
  %1226 = vst [vmem:[%s3 + $0xe4] sm:$0xf] %v1110
  // Predicated region
  $region14: #{generator_forward.10} parent=0 // pred_check
    _
  $region15: #{generator_forward.10} parent=0 // pred_check_branch
    %1228 = sbr.rel (0) target = $region17
  $region16: #{generator_forward.10} parent=0 // pred_region
    _
  $region17: #{generator_forward.10} parent=0 // pred_fallthru
    _
  // Predicated region
  $region18: #{generator_forward.10} parent=0 // pred_check
    _
  $region19: #{generator_forward.10} parent=0 // pred_check_branch
    %1230 = sbr.rel (0) target = $region21
  $region20: #{generator_forward.10} parent=0 // pred_region
    _
  $region21: #{generator_forward.10} parent=0 // pred_fallthru
    _

// kernel: generator_forward.11
$region0: #{generator_forward.11}
  #allocation0 [shape = 'u32[]', space=smem, size = 0x4, offset = 0x4, fixed_abs, tag = 'smem constant byte address 0x4 - core index']
  #allocation1 [shape = 'u32[144,128]{1,0:T(1,128)}', space=vmem, size = 0x12000, scoped, tag = 'internal scratch']
  %s0 = inlined_call_operand.vmem [shape: bf16[2048,128], index: 0, kind: input, shape index: {}]
  %s1 = inlined_call_operand.vmem [shape: bf16[128,128], index: 1, kind: input, shape index: {}]
  %s2 = inlined_call_operand.vmem [shape: f32[1,128], index: 2, kind: input, shape index: {}]
  %s3 = inlined_call_operand.vmem [shape: bf16[2048,128], index: 3, kind: output, shape index: {}]
  %s4 = sld [smem:[#allocation0]]
  $region45: #{generator_forward.11} parent=0
    _
  %s6 = ssub.s32 1, %s4
  %s7 = scalar_select 0, %s6, %s4
  loop: start=0, step=1, limit=4
  $region2: #{generator_forward.11} parent=0 // loop_pre_header
    _
  $region3: #{generator_forward.11} parent=0 // loop_header
    %s9 = sphi 0, %s13
    %p10 = scmp.ge.s32.totalorder %s9, 4
    %s19 = sphi 0, %s21
    %s22 = sphi 0, %s19
    %s23 = sphi 0, %s22
    %s39 = sphi 0, %s23
    %s43 = sphi 0, %s43
    %s45 = sphi 0, %s43
    %s46 = sphi 0, %s45
    %s60 = sphi 0, %s46
    %s64 = sphi 0, %s64
    %s66 = sphi 0, %s64
    %s67 = sphi 0, %s66
    %s81 = sphi 0, %s67
    %s87 = sphi 0, %s89
    %s90 = sphi 0, %s87
    %s91 = sphi 0, %s90
    %s107 = sphi 0, %s91
  $region4: #{generator_forward.11} parent=0 // loop_header_branch
    %12 = sbr.rel (%p10) target = $region8
  $region5: #{generator_forward.11} parent=0 // loop_body
    %s14 = ssub.s32 %s9, 1
    %s15 = ssub.s32 %s9, 2
    %s16 = sadd.s32 %s9, 1
    %s17 = ssub.s32 %s9, %s16
    %p18 = scmp.eq.s32.totalorder %s17, 0
    %s20 = sadd.s32 %s19, 1
    %s21 = scalar_select %p18, %s19, %s20
    %p24 = pneg %p18
    %p25 = scmp.eq.s32.totalorder %s9, 1
    %p26 = por %p24, %p25
    %p27 = scmp.ne.s32.totalorder %s19, %s22
    %p28 = scmp.eq.s32.totalorder %s9, 0
    %p29 = por %p27, %p28
    %p30 = scmp.ne.s32.totalorder %s19, %s22
    %p31 = scmp.eq.s32.totalorder %s14, 1
    %p32 = por %p30, %p31
    %p33 = scmp.ne.s32.totalorder %s22, %s23
    %p34 = scmp.eq.s32.totalorder %s14, 0
    %p35 = por %p33, %p34
    %p36 = scmp.ne.s32.totalorder %s22, %s23
    %p37 = scmp.eq.s32.totalorder %s15, 1
    %p38 = por %p36, %p37
    %p40 = scmp.ne.s32.totalorder %s23, %s39
    %p41 = scmp.eq.s32.totalorder %s15, 0
    %p42 = por %p40, %p41
    %s44 = sadd.s32 %s43, 1
    %p47 = scmp.eq.s32.totalorder %s9, 1
    %p48 = scmp.ne.s32.totalorder %s43, %s45
    %p49 = scmp.eq.s32.totalorder %s9, 0
    %p50 = por %p48, %p49
    %p51 = scmp.ne.s32.totalorder %s43, %s45
    %p52 = scmp.eq.s32.totalorder %s14, 1
    %p53 = por %p51, %p52
    %p54 = scmp.ne.s32.totalorder %s45, %s46
    %p55 = scmp.eq.s32.totalorder %s14, 0
    %p56 = por %p54, %p55
    %p57 = scmp.ne.s32.totalorder %s45, %s46
    %p58 = scmp.eq.s32.totalorder %s15, 1
    %p59 = por %p57, %p58
    %p61 = scmp.ne.s32.totalorder %s46, %s60
    %p62 = scmp.eq.s32.totalorder %s15, 0
    %p63 = por %p61, %p62
    %s65 = sadd.s32 %s64, 1
    %p68 = scmp.eq.s32.totalorder %s9, 1
    %p69 = scmp.ne.s32.totalorder %s64, %s66
    %p70 = scmp.eq.s32.totalorder %s9, 0
    %p71 = por %p69, %p70
    %p72 = scmp.ne.s32.totalorder %s64, %s66
    %p73 = scmp.eq.s32.totalorder %s14, 1
    %p74 = por %p72, %p73
    %p75 = scmp.ne.s32.totalorder %s66, %s67
    %p76 = scmp.eq.s32.totalorder %s14, 0
    %p77 = por %p75, %p76
    %p78 = scmp.ne.s32.totalorder %s66, %s67
    %p79 = scmp.eq.s32.totalorder %s15, 1
    %p80 = por %p78, %p79
    %p82 = scmp.ne.s32.totalorder %s67, %s81
    %p83 = scmp.eq.s32.totalorder %s15, 0
    %p84 = por %p82, %p83
    %s85 = ssub.s32 %s9, %s16
    %p86 = scmp.eq.s32.totalorder %s85, 0
    %s88 = sadd.s32 %s87, 1
    %s89 = scalar_select %p86, %s87, %s88
    %p92 = pneg %p86
    %p93 = scmp.eq.s32.totalorder %s9, 1
    %p94 = por %p92, %p93
    %p95 = scmp.ne.s32.totalorder %s87, %s90
    %p96 = scmp.eq.s32.totalorder %s9, 0
    %p97 = por %p95, %p96
    %p98 = scmp.ne.s32.totalorder %s87, %s90
    %p99 = scmp.eq.s32.totalorder %s14, 1
    %p100 = por %p98, %p99
    %p101 = scmp.ne.s32.totalorder %s90, %s91
    %p102 = scmp.eq.s32.totalorder %s14, 0
    %p103 = por %p101, %p102
    %p104 = scmp.ne.s32.totalorder %s90, %s91
    %p105 = scmp.eq.s32.totalorder %s15, 1
    %p106 = por %p104, %p105
    %p108 = scmp.ne.s32.totalorder %s91, %s107
    %p109 = scmp.eq.s32.totalorder %s15, 0
    %p110 = por %p108, %p109
    %p111 = scmp.le.s32.totalorder 1, %s9
    %p112 = scmp.lt.s32.totalorder %s9, 3
    %p113 = pnand %p111, %p112
    %p114 = pneg %p113
    // Predicated region
    $region9: #{generator_forward.11} parent=5 // pred_check
      _
    $region10: #{generator_forward.11} parent=5 // pred_check_branch
      %116 = sbr.rel (%p113) target = $region12
    $region11: #{generator_forward.11} parent=5 // pred_region
      %s117 = ssub.s32 %s9, 1
      // Predicated region
      $region13: #{generator_forward.11} parent=11 // pred_check
        %p118 = pneg %p56
      $region14: #{generator_forward.11} parent=11 // pred_check_branch
        %120 = sbr.rel (%p118) target = $region16
      $region15: #{generator_forward.11} parent=11 // pred_region
        _
      $region16: #{generator_forward.11} parent=11 // pred_fallthru
        _
      // Predicated region
      $region17: #{generator_forward.11} parent=11 // pred_check
        %p121 = pneg %p77
      $region18: #{generator_forward.11} parent=11 // pred_check_branch
        %123 = sbr.rel (%p121) target = $region20
      $region19: #{generator_forward.11} parent=11 // pred_region
        _
      $region20: #{generator_forward.11} parent=11 // pred_fallthru
        _
    $region12: #{generator_forward.11} parent=5 // pred_fallthru
      _
    %p124 = scmp.lt.s32.totalorder %s9, 2
    // Predicated region
    $region21: #{generator_forward.11} parent=5 // pred_check
      %p125 = pneg %p124
    $region22: #{generator_forward.11} parent=5 // pred_check_branch
      %127 = sbr.rel (%p125) target = $region24
    $region23: #{generator_forward.11} parent=5 // pred_region
      // Predicated region
      $region25: #{generator_forward.11} parent=23 // pred_check
        %p128 = pneg %p29
      $region26: #{generator_forward.11} parent=23 // pred_check_branch
        %130 = sbr.rel (%p128) target = $region28
      $region27: #{generator_forward.11} parent=23 // pred_region
        %s131 = smul.u32 128, %s9
        %p132 = scmp.lt.s32.totalorder %s131, 255
        %s133 = scalar_select %p132, %s131, 255
        %s134 = smul.addr %s133, 4
        %s135 = scalar_lea.vmem %s0, %s134
        %s136 = smul.u32 128, %s9
      $region28: #{generator_forward.11} parent=23 // pred_fallthru
        _
    $region24: #{generator_forward.11} parent=5 // pred_fallthru
      _
    %p137 = scmp.le.s32.totalorder 1, %s9
    %p138 = scmp.lt.s32.totalorder %s9, 3
    %p139 = pnand %p137, %p138
    %p140 = pneg %p139
    // Predicated region
    $region29: #{generator_forward.11} parent=5 // pred_check
      _
    $region30: #{generator_forward.11} parent=5 // pred_check_branch
      %142 = sbr.rel (%p139) target = $region32
    $region31: #{generator_forward.11} parent=5 // pred_region
      %s143 = ssub.s32 %s9, 1
      %s144 = smul.u32 128, %s14
      %p145 = scmp.lt.s32.totalorder %s144, 255
      %s146 = scalar_select %p145, %s144, 255
      %s147 = smul.addr %s146, 4
      %s148 = scalar_lea.vmem %s0, %s147
      %p149 = pneg %p35
      %p150 = pneg %p32
      %p151 = pneg %p56
      %p152 = pneg %p53
      %p153 = pneg %p77
      %p154 = pneg %p74
      %p155 = pneg %p103
      %p156 = pneg %p100
      %s157 = smul.u32 128, %s14
      %p158 = scmp.lt.s32.totalorder %s157, 255
      %s159 = scalar_select %p158, %s157, 255
      %s160 = smul.addr %s159, 4
      %s161 = scalar_lea.vmem %s3, %s160
      %s162 = smul.u32 128, %s14
      %p163 = scmp.lt.s32.totalorder %s162, 255
      %s164 = scalar_select %p163, %s162, 255
      %s165 = smul.addr %s164, 4
      %s166 = scalar_lea.vmem %s0, %s165
      %s167 = smul.u32 128, %s14
      %s168 = smul.u32 128, %s14
      %p169 = scmp.lt.s32.totalorder %s168, 255
      %s170 = scalar_select %p169, %s168, 255
      %s171 = smul.addr %s170, 4
      %s172 = scalar_lea.vmem %s3, %s171
      %s173 = smul.u32 128, %s14
      %v175 = vld [vmem:[%s166] sm:$0xf]
      %v176 = vld [vmem:[%s166 + $0x4] sm:$0xf]
      %v177 = vld [vmem:[%s166 + $0x8] sm:$0xf]
      %v178 = vld [vmem:[%s166 + $0xc] sm:$0xf]
      %v179 = vld [vmem:[%s166 + $0x10] sm:$0xf]
      %v180 = vld [vmem:[%s166 + $0x14] sm:$0xf]
      %v181 = vld [vmem:[%s166 + $0x18] sm:$0xf]
      %v182 = vld [vmem:[%s166 + $0x1c] sm:$0xf]
      %v183 = vld [vmem:[%s166 + $0x20] sm:$0xf]
      %v184 = vld [vmem:[%s166 + $0x24] sm:$0xf]
      %v185 = vld [vmem:[%s166 + $0x28] sm:$0xf]
      %v186 = vld [vmem:[%s166 + $0x2c] sm:$0xf]
      %v187 = vld [vmem:[%s166 + $0x30] sm:$0xf]
      %v188 = vld [vmem:[%s166 + $0x34] sm:$0xf]
      %v189 = vld [vmem:[%s166 + $0x38] sm:$0xf]
      %v190 = vld [vmem:[%s166 + $0x3c] sm:$0xf]
      %v191 = vld [vmem:[%s166 + $0x40] sm:$0xf]
      %v192 = vld [vmem:[%s166 + $0x44] sm:$0xf]
      %v193 = vld [vmem:[%s166 + $0x48] sm:$0xf]
      %v194 = vld [vmem:[%s166 + $0x4c] sm:$0xf]
      %v195 = vld [vmem:[%s166 + $0x50] sm:$0xf]
      %v196 = vld [vmem:[%s166 + $0x54] sm:$0xf]
      %v197 = vld [vmem:[%s166 + $0x58] sm:$0xf]
      %v198 = vld [vmem:[%s166 + $0x5c] sm:$0xf]
      %v199 = vld [vmem:[%s166 + $0x60] sm:$0xf]
      %v200 = vld [vmem:[%s166 + $0x64] sm:$0xf]
      %v201 = vld [vmem:[%s166 + $0x68] sm:$0xf]
      %v202 = vld [vmem:[%s166 + $0x6c] sm:$0xf]
      %v203 = vld [vmem:[%s166 + $0x70] sm:$0xf]
      %v204 = vld [vmem:[%s166 + $0x74] sm:$0xf]
      %v205 = vld [vmem:[%s166 + $0x78] sm:$0xf]
      %v206 = vld [vmem:[%s166 + $0x7c] sm:$0xf]
      %v207 = vld [vmem:[%s166 + $0x80] sm:$0xf]
      %v208 = vld [vmem:[%s166 + $0x84] sm:$0xf]
      %v209 = vld [vmem:[%s166 + $0x88] sm:$0xf]
      %v210 = vld [vmem:[%s166 + $0x8c] sm:$0xf]
      %v211 = vld [vmem:[%s166 + $0x90] sm:$0xf]
      %v212 = vld [vmem:[%s166 + $0x94] sm:$0xf]
      %v213 = vld [vmem:[%s166 + $0x98] sm:$0xf]
      %v214 = vld [vmem:[%s166 + $0x9c] sm:$0xf]
      %v215 = vld [vmem:[%s166 + $0xa0] sm:$0xf]
      %v216 = vld [vmem:[%s166 + $0xa4] sm:$0xf]
      %v217 = vld [vmem:[%s166 + $0xa8] sm:$0xf]
      %v218 = vld [vmem:[%s166 + $0xac] sm:$0xf]
      %v219 = vld [vmem:[%s166 + $0xb0] sm:$0xf]
      %v220 = vld [vmem:[%s166 + $0xb4] sm:$0xf]
      %v221 = vld [vmem:[%s166 + $0xb8] sm:$0xf]
      %v222 = vld [vmem:[%s166 + $0xbc] sm:$0xf]
      %v223 = vld [vmem:[%s166 + $0xc0] sm:$0xf]
      %v224 = vld [vmem:[%s166 + $0xc4] sm:$0xf]
      %v225 = vld [vmem:[%s166 + $0xc8] sm:$0xf]
      %v226 = vld [vmem:[%s166 + $0xcc] sm:$0xf]
      %v227 = vld [vmem:[%s166 + $0xd0] sm:$0xf]
      %v228 = vld [vmem:[%s166 + $0xd4] sm:$0xf]
      %v229 = vld [vmem:[%s166 + $0xd8] sm:$0xf]
      %v230 = vld [vmem:[%s166 + $0xdc] sm:$0xf]
      %v231 = vld [vmem:[%s166 + $0xe0] sm:$0xf]
      %v232 = vld [vmem:[%s166 + $0xe4] sm:$0xf]
      %v233 = vld [vmem:[%s166 + $0xe8] sm:$0xf]
      %v234 = vld [vmem:[%s166 + $0xec] sm:$0xf]
      %v235 = vld [vmem:[%s166 + $0xf0] sm:$0xf]
      %v236 = vld [vmem:[%s166 + $0xf4] sm:$0xf]
      %v237 = vld [vmem:[%s166 + $0xf8] sm:$0xf]
      %v238 = vld [vmem:[%s166 + $0xfc] sm:$0xf]
      %v239 = vld [vmem:[%s166 + $0x100] sm:$0xf]
      %v240 = vld [vmem:[%s166 + $0x104] sm:$0xf]
      %v241 = vld [vmem:[%s166 + $0x108] sm:$0xf]
      %v242 = vld [vmem:[%s166 + $0x10c] sm:$0xf]
      %v243 = vld [vmem:[%s166 + $0x110] sm:$0xf]
      %v244 = vld [vmem:[%s166 + $0x114] sm:$0xf]
      %v245 = vld [vmem:[%s166 + $0x118] sm:$0xf]
      %v246 = vld [vmem:[%s166 + $0x11c] sm:$0xf]
      %v247 = vld [vmem:[%s166 + $0x120] sm:$0xf]
      %v248 = vld [vmem:[%s166 + $0x124] sm:$0xf]
      %v249 = vld [vmem:[%s166 + $0x128] sm:$0xf]
      %v250 = vld [vmem:[%s166 + $0x12c] sm:$0xf]
      %v251 = vld [vmem:[%s166 + $0x130] sm:$0xf]
      %v252 = vld [vmem:[%s166 + $0x134] sm:$0xf]
      %v253 = vld [vmem:[%s166 + $0x138] sm:$0xf]
      %v254 = vld [vmem:[%s166 + $0x13c] sm:$0xf]
      %v255 = vld [vmem:[%s166 + $0x140] sm:$0xf]
      %v256 = vld [vmem:[%s166 + $0x144] sm:$0xf]
      %v257 = vld [vmem:[%s166 + $0x148] sm:$0xf]
      %v258 = vld [vmem:[%s166 + $0x14c] sm:$0xf]
      %v259 = vld [vmem:[%s166 + $0x150] sm:$0xf]
      %v260 = vld [vmem:[%s166 + $0x154] sm:$0xf]
      %v261 = vld [vmem:[%s166 + $0x158] sm:$0xf]
      %v262 = vld [vmem:[%s166 + $0x15c] sm:$0xf]
      %v263 = vld [vmem:[%s166 + $0x160] sm:$0xf]
      %v264 = vld [vmem:[%s166 + $0x164] sm:$0xf]
      %v265 = vld [vmem:[%s166 + $0x168] sm:$0xf]
      %v266 = vld [vmem:[%s166 + $0x16c] sm:$0xf]
      %v267 = vld [vmem:[%s166 + $0x170] sm:$0xf]
      %v268 = vld [vmem:[%s166 + $0x174] sm:$0xf]
      %v269 = vld [vmem:[%s166 + $0x178] sm:$0xf]
      %v270 = vld [vmem:[%s166 + $0x17c] sm:$0xf]
      %v271 = vld [vmem:[%s166 + $0x180] sm:$0xf]
      %v272 = vld [vmem:[%s166 + $0x184] sm:$0xf]
      %v273 = vld [vmem:[%s166 + $0x188] sm:$0xf]
      %v274 = vld [vmem:[%s166 + $0x18c] sm:$0xf]
      %v275 = vld [vmem:[%s166 + $0x190] sm:$0xf]
      %v276 = vld [vmem:[%s166 + $0x194] sm:$0xf]
      %v277 = vld [vmem:[%s166 + $0x198] sm:$0xf]
      %v278 = vld [vmem:[%s166 + $0x19c] sm:$0xf]
      %v279 = vld [vmem:[%s166 + $0x1a0] sm:$0xf]
      %v280 = vld [vmem:[%s166 + $0x1a4] sm:$0xf]
      %v281 = vld [vmem:[%s166 + $0x1a8] sm:$0xf]
      %v282 = vld [vmem:[%s166 + $0x1ac] sm:$0xf]
      %v283 = vld [vmem:[%s166 + $0x1b0] sm:$0xf]
      %v284 = vld [vmem:[%s166 + $0x1b4] sm:$0xf]
      %v285 = vld [vmem:[%s166 + $0x1b8] sm:$0xf]
      %v286 = vld [vmem:[%s166 + $0x1bc] sm:$0xf]
      %v287 = vld [vmem:[%s166 + $0x1c0] sm:$0xf]
      %v288 = vld [vmem:[%s166 + $0x1c4] sm:$0xf]
      %v289 = vld [vmem:[%s166 + $0x1c8] sm:$0xf]
      %v290 = vld [vmem:[%s166 + $0x1cc] sm:$0xf]
      %v291 = vld [vmem:[%s166 + $0x1d0] sm:$0xf]
      %v292 = vld [vmem:[%s166 + $0x1d4] sm:$0xf]
      %v293 = vld [vmem:[%s166 + $0x1d8] sm:$0xf]
      %v294 = vld [vmem:[%s166 + $0x1dc] sm:$0xf]
      %v295 = vld [vmem:[%s166 + $0x1e0] sm:$0xf]
      %v296 = vld [vmem:[%s166 + $0x1e4] sm:$0xf]
      %v297 = vld [vmem:[%s166 + $0x1e8] sm:$0xf]
      %v298 = vld [vmem:[%s166 + $0x1ec] sm:$0xf]
      %v299 = vld [vmem:[%s166 + $0x1f0] sm:$0xf]
      %v300 = vld [vmem:[%s166 + $0x1f4] sm:$0xf]
      %v301 = vld [vmem:[%s166 + $0x1f8] sm:$0xf]
      %v302 = vld [vmem:[%s166 + $0x1fc] sm:$0xf]
      %v303 = vld [vmem:[%s1] sm:$0xf]
      %v304 = vld [vmem:[%s1 + $0x4] sm:$0xf]
      %v305 = vld [vmem:[%s1 + $0x8] sm:$0xf]
      %v306 = vld [vmem:[%s1 + $0xc] sm:$0xf]
      %v307 = vld [vmem:[%s1 + $0x10] sm:$0xf]
      %v308 = vld [vmem:[%s1 + $0x14] sm:$0xf]
      %v309 = vld [vmem:[%s1 + $0x18] sm:$0xf]
      %v310 = vld [vmem:[%s1 + $0x1c] sm:$0xf]
      %v311 = vld [vmem:[%s1 + $0x20] sm:$0xf]
      %v312 = vld [vmem:[%s1 + $0x24] sm:$0xf]
      %v313 = vld [vmem:[%s1 + $0x28] sm:$0xf]
      %v314 = vld [vmem:[%s1 + $0x2c] sm:$0xf]
      %v315 = vld [vmem:[%s1 + $0x30] sm:$0xf]
      %v316 = vld [vmem:[%s1 + $0x34] sm:$0xf]
      %v317 = vld [vmem:[%s1 + $0x38] sm:$0xf]
      %v318 = vld [vmem:[%s1 + $0x3c] sm:$0xf]
      %v319 = vld [vmem:[%s2] sm:$0x1]
      %v321 = vlaneseq
      %v322 = vshrl.u32 %v321, 7
      %v323 = vsub.s32 0, %v322
      %v324 = vrot.slane %v319, %v323
      %v454 = vunpack.c.l.b16 %v175
      %v455 = vunpack.c.l.b16 %v176
      %v456 = vunpack.c.l.b16 %v177
      %v457 = vunpack.c.l.b16 %v178
      %v458 = vunpack.c.l.b16 %v179
      %v459 = vunpack.c.l.b16 %v180
      %v460 = vunpack.c.l.b16 %v181
      %v461 = vunpack.c.l.b16 %v182
      %v462 = vunpack.c.l.b16 %v183
      %v463 = vunpack.c.l.b16 %v184
      %v464 = vunpack.c.l.b16 %v185
      %v465 = vunpack.c.l.b16 %v186
      %v466 = vunpack.c.l.b16 %v187
      %v467 = vunpack.c.l.b16 %v188
      %v468 = vunpack.c.l.b16 %v189
      %v469 = vunpack.c.l.b16 %v190
      %v470 = vunpack.c.l.b16 %v191
      %v471 = vunpack.c.l.b16 %v192
      %v472 = vunpack.c.l.b16 %v193
      %v473 = vunpack.c.l.b16 %v194
      %v474 = vunpack.c.l.b16 %v195
      %v475 = vunpack.c.l.b16 %v196
      %v476 = vunpack.c.l.b16 %v197
      %v477 = vunpack.c.l.b16 %v198
      %v478 = vunpack.c.l.b16 %v199
      %v479 = vunpack.c.l.b16 %v200
      %v480 = vunpack.c.l.b16 %v201
      %v481 = vunpack.c.l.b16 %v202
      %v482 = vunpack.c.l.b16 %v203
      %v483 = vunpack.c.l.b16 %v204
      %v484 = vunpack.c.l.b16 %v205
      %v485 = vunpack.c.l.b16 %v206
      %v486 = vunpack.c.l.b16 %v207
      %v487 = vunpack.c.l.b16 %v208
      %v488 = vunpack.c.l.b16 %v209
      %v489 = vunpack.c.l.b16 %v210
      %v490 = vunpack.c.l.b16 %v211
      %v491 = vunpack.c.l.b16 %v212
      %v492 = vunpack.c.l.b16 %v213
      %v493 = vunpack.c.l.b16 %v214
      %v494 = vunpack.c.l.b16 %v215
      %v495 = vunpack.c.l.b16 %v216
      %v496 = vunpack.c.l.b16 %v217
      %v497 = vunpack.c.l.b16 %v218
      %v498 = vunpack.c.l.b16 %v219
      %v499 = vunpack.c.l.b16 %v220
      %v500 = vunpack.c.l.b16 %v221
      %v501 = vunpack.c.l.b16 %v222
      %v502 = vunpack.c.l.b16 %v223
      %v503 = vunpack.c.l.b16 %v224
      %v504 = vunpack.c.l.b16 %v225
      %v505 = vunpack.c.l.b16 %v226
      %v506 = vunpack.c.l.b16 %v227
      %v507 = vunpack.c.l.b16 %v228
      %v508 = vunpack.c.l.b16 %v229
      %v509 = vunpack.c.l.b16 %v230
      %v510 = vunpack.c.l.b16 %v231
      %v511 = vunpack.c.l.b16 %v232
      %v512 = vunpack.c.l.b16 %v233
      %v513 = vunpack.c.l.b16 %v234
      %v514 = vunpack.c.l.b16 %v235
      %v515 = vunpack.c.l.b16 %v236
      %v516 = vunpack.c.l.b16 %v237
      %v517 = vunpack.c.l.b16 %v238
      %v518 = vunpack.c.l.b16 %v239
      %v519 = vunpack.c.l.b16 %v240
      %v520 = vunpack.c.l.b16 %v241
      %v521 = vunpack.c.l.b16 %v242
      %v522 = vunpack.c.l.b16 %v243
      %v523 = vunpack.c.l.b16 %v244
      %v524 = vunpack.c.l.b16 %v245
      %v525 = vunpack.c.l.b16 %v246
      %v526 = vunpack.c.l.b16 %v247
      %v527 = vunpack.c.l.b16 %v248
      %v528 = vunpack.c.l.b16 %v249
      %v529 = vunpack.c.l.b16 %v250
      %v530 = vunpack.c.l.b16 %v251
      %v531 = vunpack.c.l.b16 %v252
      %v532 = vunpack.c.l.b16 %v253
      %v533 = vunpack.c.l.b16 %v254
      %v534 = vunpack.c.l.b16 %v255
      %v535 = vunpack.c.l.b16 %v256
      %v536 = vunpack.c.l.b16 %v257
      %v537 = vunpack.c.l.b16 %v258
      %v538 = vunpack.c.l.b16 %v259
      %v539 = vunpack.c.l.b16 %v260
      %v540 = vunpack.c.l.b16 %v261
      %v541 = vunpack.c.l.b16 %v262
      %v542 = vunpack.c.l.b16 %v263
      %v543 = vunpack.c.l.b16 %v264
      %v544 = vunpack.c.l.b16 %v265
      %v545 = vunpack.c.l.b16 %v266
      %v546 = vunpack.c.l.b16 %v267
      %v547 = vunpack.c.l.b16 %v268
      %v548 = vunpack.c.l.b16 %v269
      %v549 = vunpack.c.l.b16 %v270
      %v550 = vunpack.c.l.b16 %v271
      %v551 = vunpack.c.l.b16 %v272
      %v552 = vunpack.c.l.b16 %v273
      %v553 = vunpack.c.l.b16 %v274
      %v554 = vunpack.c.l.b16 %v275
      %v555 = vunpack.c.l.b16 %v276
      %v556 = vunpack.c.l.b16 %v277
      %v557 = vunpack.c.l.b16 %v278
      %v558 = vunpack.c.l.b16 %v279
      %v559 = vunpack.c.l.b16 %v280
      %v560 = vunpack.c.l.b16 %v281
      %v561 = vunpack.c.l.b16 %v282
      %v562 = vunpack.c.l.b16 %v283
      %v563 = vunpack.c.l.b16 %v284
      %v564 = vunpack.c.l.b16 %v285
      %v565 = vunpack.c.l.b16 %v286
      %v566 = vunpack.c.l.b16 %v287
      %v567 = vunpack.c.l.b16 %v288
      %v568 = vunpack.c.l.b16 %v289
      %v569 = vunpack.c.l.b16 %v290
      %v570 = vunpack.c.l.b16 %v291
      %v571 = vunpack.c.l.b16 %v292
      %v572 = vunpack.c.l.b16 %v293
      %v573 = vunpack.c.l.b16 %v294
      %v574 = vunpack.c.l.b16 %v295
      %v575 = vunpack.c.l.b16 %v296
      %v576 = vunpack.c.l.b16 %v297
      %v577 = vunpack.c.l.b16 %v298
      %v578 = vunpack.c.l.b16 %v299
      %v579 = vunpack.c.l.b16 %v300
      %v580 = vunpack.c.l.b16 %v301
      %v581 = vunpack.c.l.b16 %v302
      %v582 = vpack.c.b16 %v455, %v454
      %v583 = vpack.c.b16 %v457, %v456
      %v584 = vpack.c.b16 %v459, %v458
      %v585 = vpack.c.b16 %v461, %v460
      %v586 = vpack.c.b16 %v463, %v462
      %v587 = vpack.c.b16 %v465, %v464
      %v588 = vpack.c.b16 %v467, %v466
      %v589 = vpack.c.b16 %v469, %v468
      %v590 = vpack.c.b16 %v471, %v470
      %v591 = vpack.c.b16 %v473, %v472
      %v592 = vpack.c.b16 %v475, %v474
      %v593 = vpack.c.b16 %v477, %v476
      %v594 = vpack.c.b16 %v479, %v478
      %v595 = vpack.c.b16 %v481, %v480
      %v596 = vpack.c.b16 %v483, %v482
      %v597 = vpack.c.b16 %v485, %v484
      %v598 = vpack.c.b16 %v487, %v486
      %v599 = vpack.c.b16 %v489, %v488
      %v600 = vpack.c.b16 %v491, %v490
      %v601 = vpack.c.b16 %v493, %v492
      %v602 = vpack.c.b16 %v495, %v494
      %v603 = vpack.c.b16 %v497, %v496
      %v604 = vpack.c.b16 %v499, %v498
      %v605 = vpack.c.b16 %v501, %v500
      %v606 = vpack.c.b16 %v503, %v502
      %v607 = vpack.c.b16 %v505, %v504
      %v608 = vpack.c.b16 %v507, %v506
      %v609 = vpack.c.b16 %v509, %v508
      %v610 = vpack.c.b16 %v511, %v510
      %v611 = vpack.c.b16 %v513, %v512
      %v612 = vpack.c.b16 %v515, %v514
      %v613 = vpack.c.b16 %v517, %v516
      %v614 = vpack.c.b16 %v519, %v518
      %v615 = vpack.c.b16 %v521, %v520
      %v616 = vpack.c.b16 %v523, %v522
      %v617 = vpack.c.b16 %v525, %v524
      %v618 = vpack.c.b16 %v527, %v526
      %v619 = vpack.c.b16 %v529, %v528
      %v620 = vpack.c.b16 %v531, %v530
      %v621 = vpack.c.b16 %v533, %v532
      %v622 = vpack.c.b16 %v535, %v534
      %v623 = vpack.c.b16 %v537, %v536
      %v624 = vpack.c.b16 %v539, %v538
      %v625 = vpack.c.b16 %v541, %v540
      %v626 = vpack.c.b16 %v543, %v542
      %v627 = vpack.c.b16 %v545, %v544
      %v628 = vpack.c.b16 %v547, %v546
      %v629 = vpack.c.b16 %v549, %v548
      %v630 = vpack.c.b16 %v551, %v550
      %v631 = vpack.c.b16 %v553, %v552
      %v632 = vpack.c.b16 %v555, %v554
      %v633 = vpack.c.b16 %v557, %v556
      %v634 = vpack.c.b16 %v559, %v558
      %v635 = vpack.c.b16 %v561, %v560
      %v636 = vpack.c.b16 %v563, %v562
      %v637 = vpack.c.b16 %v565, %v564
      %v638 = vpack.c.b16 %v567, %v566
      %v639 = vpack.c.b16 %v569, %v568
      %v640 = vpack.c.b16 %v571, %v570
      %v641 = vpack.c.b16 %v573, %v572
      %v642 = vpack.c.b16 %v575, %v574
      %v643 = vpack.c.b16 %v577, %v576
      %v644 = vpack.c.b16 %v579, %v578
      %v645 = vpack.c.b16 %v581, %v580
      %v726 = vunpack.c.l.b16 %v303
      %v727 = vunpack.c.l.b16 %v304
      %v728 = vunpack.c.l.b16 %v305
      %v729 = vunpack.c.l.b16 %v306
      %v730 = vunpack.c.l.b16 %v307
      %v731 = vunpack.c.l.b16 %v308
      %v732 = vunpack.c.l.b16 %v309
      %v733 = vunpack.c.l.b16 %v310
      %v734 = vunpack.c.l.b16 %v311
      %v735 = vunpack.c.l.b16 %v312
      %v736 = vunpack.c.l.b16 %v313
      %v737 = vunpack.c.l.b16 %v314
      %v738 = vunpack.c.l.b16 %v315
      %v739 = vunpack.c.l.b16 %v316
      %v740 = vunpack.c.l.b16 %v317
      %v741 = vunpack.c.l.b16 %v318
      %v742 = vpack.c.b16 %v727, %v726
      %v743 = vpack.c.b16 %v729, %v728
      %v744 = vpack.c.b16 %v731, %v730
      %v745 = vpack.c.b16 %v733, %v732
      %v746 = vpack.c.b16 %v735, %v734
      %v747 = vpack.c.b16 %v737, %v736
      %v748 = vpack.c.b16 %v739, %v738
      %v749 = vpack.c.b16 %v741, %v740
      %758 = vmatprep.subr.bf16.mxu0 0
      %759 = vmatpush1.bf16.msra.mxu0 %v742
      %760 = vmatprep.subr.bf16.mxu0 0
      %761 = vmatpush1.bf16.msra.mxu0 %v743
      %762 = vmatprep.subr.bf16.mxu0 0
      %763 = vmatpush1.bf16.msra.mxu0 %v744
      %764 = vmatprep.subr.bf16.mxu0 0
      %765 = vmatpush1.bf16.msra.mxu0 %v745
      %766 = vmatprep.subr.bf16.mxu0 0
      %767 = vmatpush1.bf16.msra.mxu0 %v746
      %768 = vmatprep.subr.bf16.mxu0 0
      %769 = vmatpush1.bf16.msra.mxu0 %v747
      %770 = vmatprep.subr.bf16.mxu0 0
      %771 = vmatpush1.bf16.msra.mxu0 %v748
      %772 = vmatprep.subr.bf16.mxu0 0
      %773 = vmatpush1.bf16.msra.mxu0 %v749
      %774 = vmatprep.subr.bf16.mxu0 0
      %775 = vmatpush1.bf16.msra.mxu0 0
      %776 = vmatprep.subr.bf16.mxu0 0
      %777 = vmatpush1.bf16.msra.mxu0 0
      %778 = vmatprep.subr.bf16.mxu0 0
      %779 = vmatpush1.bf16.msra.mxu0 0
      %780 = vmatprep.subr.bf16.mxu0 0
      %781 = vmatpush1.bf16.msra.mxu0 0
      %782 = vmatprep.subr.bf16.mxu0 0
      %783 = vmatpush1.bf16.msra.mxu0 0
      %784 = vmatprep.subr.bf16.mxu0 0
      %785 = vmatpush1.bf16.msra.mxu0 0
      %786 = vmatprep.subr.bf16.mxu0 0
      %787 = vmatpush1.bf16.msra.mxu0 0
      %788 = vmatprep.subr.bf16.mxu0 0
      %789 = vmatpush1.bf16.msra.mxu0 0
      %790 = vmatprep.mubr.bf16.mxu0 0
      %791 = vmatmul.mubr.bf16.gmra.mrb[0].mxu0 %v582
      %v792 = vpop.f32.mrb[0].mxu0
      %v793 = vadd.f32 %v324, %v792
      %v794 = vpop.f32.mrb[0].mxu0
      %v795 = vpop.f32.mrb[0].mxu0
      %v796 = vadd.f32 %v324, %v795
      %v797 = vpop.f32.mrb[0].mxu0
      %798 = vmatprep.mubr.bf16.mxu0 0
      %799 = vmatmul.mubr.bf16.gmra.mrb[0].mxu0 %v583
      %v800 = vpop.f32.mrb[0].mxu0
      %v801 = vadd.f32 %v324, %v800
      %v802 = vpop.f32.mrb[0].mxu0
      %v803 = vpop.f32.mrb[0].mxu0
      %v804 = vadd.f32 %v324, %v803
      %v805 = vpop.f32.mrb[0].mxu0
      %806 = vmatprep.mubr.bf16.mxu0 0
      %807 = vmatmul.mubr.bf16.gmra.mrb[0].mxu0 %v584
      %v808 = vpop.f32.mrb[0].mxu0
      %v809 = vadd.f32 %v324, %v808
      %v810 = vpop.f32.mrb[0].mxu0
      %v811 = vpop.f32.mrb[0].mxu0
      %v812 = vadd.f32 %v324, %v811
      %v813 = vpop.f32.mrb[0].mxu0
      %814 = vmatprep.mubr.bf16.mxu0 0
      %815 = vmatmul.mubr.bf16.gmra.mrb[0].mxu0 %v585
      %v816 = vpop.f32.mrb[0].mxu0
      %v817 = vadd.f32 %v324, %v816
      %v818 = vpop.f32.mrb[0].mxu0
      %v819 = vpop.f32.mrb[0].mxu0
      %v820 = vadd.f32 %v324, %v819
      %v821 = vpop.f32.mrb[0].mxu0
      %822 = vmatprep.mubr.bf16.mxu0 0
      %823 = vmatmul.mubr.bf16.gmra.mrb[0].mxu0 %v586
      %v824 = vpop.f32.mrb[0].mxu0
      %v825 = vadd.f32 %v324, %v824
      %v826 = vpop.f32.mrb[0].mxu0
      %v827 = vpop.f32.mrb[0].mxu0
      %v828 = vadd.f32 %v324, %v827
      %v829 = vpop.f32.mrb[0].mxu0
      %830 = vmatprep.mubr.bf16.mxu0 0
      %831 = vmatmul.mubr.bf16.gmra.mrb[0].mxu0 %v587
      %v832 = vpop.f32.mrb[0].mxu0
      %v833 = vadd.f32 %v324, %v832
      %v834 = vpop.f32.mrb[0].mxu0
      %v835 = vpop.f32.mrb[0].mxu0
      %v836 = vadd.f32 %v324, %v835
      %v837 = vpop.f32.mrb[0].mxu0
      %838 = vmatprep.mubr.bf16.mxu0 0
      %839 = vmatmul.mubr.bf16.gmra.mrb[0].mxu0 %v588
      %v840 = vpop.f32.mrb[0].mxu0
      %v841 = vadd.f32 %v324, %v840
      %v842 = vpop.f32.mrb[0].mxu0
      %v843 = vpop.f32.mrb[0].mxu0
      %v844 = vadd.f32 %v324, %v843
      %v845 = vpop.f32.mrb[0].mxu0
      %846 = vmatprep.mubr.bf16.mxu0 0
      %847 = vmatmul.mubr.bf16.gmra.mrb[0].mxu0 %v589
      %v848 = vpop.f32.mrb[0].mxu0
      %v849 = vadd.f32 %v324, %v848
      %v850 = vpop.f32.mrb[0].mxu0
      %v851 = vpop.f32.mrb[0].mxu0
      %v852 = vadd.f32 %v324, %v851
      %v853 = vpop.f32.mrb[0].mxu0
      %854 = vmatprep.mubr.bf16.mxu0 0
      %855 = vmatmul.mubr.bf16.gmra.mrb[0].mxu0 %v590
      %v856 = vpop.f32.mrb[0].mxu0
      %v857 = vadd.f32 %v324, %v856
      %v858 = vpop.f32.mrb[0].mxu0
      %v859 = vpop.f32.mrb[0].mxu0
      %v860 = vadd.f32 %v324, %v859
      %v861 = vpop.f32.mrb[0].mxu0
      %862 = vmatprep.mubr.bf16.mxu0 0
      %863 = vmatmul.mubr.bf16.gmra.mrb[0].mxu0 %v591
      %v864 = vpop.f32.mrb[0].mxu0
      %v865 = vadd.f32 %v324, %v864
      %v866 = vpop.f32.mrb[0].mxu0
      %v867 = vpop.f32.mrb[0].mxu0
      %v868 = vadd.f32 %v324, %v867
      %v869 = vpop.f32.mrb[0].mxu0
      %870 = vmatprep.mubr.bf16.mxu0 0
      %871 = vmatmul.mubr.bf16.gmra.mrb[0].mxu0 %v592
      %v872 = vpop.f32.mrb[0].mxu0
      %v873 = vadd.f32 %v324, %v872
      %v874 = vpop.f32.mrb[0].mxu0
      %v875 = vpop.f32.mrb[0].mxu0
      %v876 = vadd.f32 %v324, %v875
      %v877 = vpop.f32.mrb[0].mxu0
      %878 = vmatprep.mubr.bf16.mxu0 0
      %879 = vmatmul.mubr.bf16.gmra.mrb[0].mxu0 %v593
      %v880 = vpop.f32.mrb[0].mxu0
      %v881 = vadd.f32 %v324, %v880
      %v882 = vpop.f32.mrb[0].mxu0
      %v883 = vpop.f32.mrb[0].mxu0
      %v884 = vadd.f32 %v324, %v883
      %v885 = vpop.f32.mrb[0].mxu0
      %886 = vmatprep.mubr.bf16.mxu0 0
      %887 = vmatmul.mubr.bf16.gmra.mrb[0].mxu0 %v594
      %v888 = vpop.f32.mrb[0].mxu0
      %v889 = vadd.f32 %v324, %v888
      %v890 = vpop.f32.mrb[0].mxu0
      %v891 = vpop.f32.mrb[0].mxu0
      %v892 = vadd.f32 %v324, %v891
      %v893 = vpop.f32.mrb[0].mxu0
      %894 = vmatprep.mubr.bf16.mxu0 0
      %895 = vmatmul.mubr.bf16.gmra.mrb[0].mxu0 %v595
      %v896 = vpop.f32.mrb[0].mxu0
      %v897 = vadd.f32 %v324, %v896
      %v898 = vpop.f32.mrb[0].mxu0
      %v899 = vpop.f32.mrb[0].mxu0
      %v900 = vadd.f32 %v324, %v899
      %v901 = vpop.f32.mrb[0].mxu0
      %902 = vmatprep.mubr.bf16.mxu0 0
      %903 = vmatmul.mubr.bf16.gmra.mrb[0].mxu0 %v596
      %v904 = vpop.f32.mrb[0].mxu0
      %v905 = vadd.f32 %v324, %v904
      %v906 = vpop.f32.mrb[0].mxu0
      %v907 = vpop.f32.mrb[0].mxu0
      %v908 = vadd.f32 %v324, %v907
      %v909 = vpop.f32.mrb[0].mxu0
      %910 = vmatprep.mubr.bf16.mxu0 0
      %911 = vmatmul.mubr.bf16.gmra.mrb[0].mxu0 %v597
      %v912 = vpop.f32.mrb[0].mxu0
      %v913 = vadd.f32 %v324, %v912
      %v914 = vpop.f32.mrb[0].mxu0
      %v915 = vpop.f32.mrb[0].mxu0
      %v916 = vadd.f32 %v324, %v915
      %v917 = vpop.f32.mrb[0].mxu0
      %918 = vmatprep.mubr.bf16.mxu0 0
      %919 = vmatmul.mubr.bf16.gmra.mrb[0].mxu0 %v598
      %v920 = vpop.f32.mrb[0].mxu0
      %v921 = vadd.f32 %v324, %v920
      %v922 = vpop.f32.mrb[0].mxu0
      %v923 = vpop.f32.mrb[0].mxu0
      %v924 = vadd.f32 %v324, %v923
      %v925 = vpop.f32.mrb[0].mxu0
      %926 = vmatprep.mubr.bf16.mxu0 0
      %927 = vmatmul.mubr.bf16.gmra.mrb[0].mxu0 %v599
      %v928 = vpop.f32.mrb[0].mxu0
      %v929 = vadd.f32 %v324, %v928
      %v930 = vpop.f32.mrb[0].mxu0
      %v931 = vpop.f32.mrb[0].mxu0
      %v932 = vadd.f32 %v324, %v931
      %v933 = vpop.f32.mrb[0].mxu0
      %934 = vmatprep.mubr.bf16.mxu0 0
      %935 = vmatmul.mubr.bf16.gmra.mrb[0].mxu0 %v600
      %v936 = vpop.f32.mrb[0].mxu0
      %v937 = vadd.f32 %v324, %v936
      %v938 = vpop.f32.mrb[0].mxu0
      %v939 = vpop.f32.mrb[0].mxu0
      %v940 = vadd.f32 %v324, %v939
      %v941 = vpop.f32.mrb[0].mxu0
      %942 = vmatprep.mubr.bf16.mxu0 0
      %943 = vmatmul.mubr.bf16.gmra.mrb[0].mxu0 %v601
      %v944 = vpop.f32.mrb[0].mxu0
      %v945 = vadd.f32 %v324, %v944
      %v946 = vpop.f32.mrb[0].mxu0
      %v947 = vpop.f32.mrb[0].mxu0
      %v948 = vadd.f32 %v324, %v947
      %v949 = vpop.f32.mrb[0].mxu0
      %950 = vmatprep.mubr.bf16.mxu0 0
      %951 = vmatmul.mubr.bf16.gmra.mrb[0].mxu0 %v602
      %v952 = vpop.f32.mrb[0].mxu0
      %v953 = vadd.f32 %v324, %v952
      %v954 = vpop.f32.mrb[0].mxu0
      %v955 = vpop.f32.mrb[0].mxu0
      %v956 = vadd.f32 %v324, %v955
      %v957 = vpop.f32.mrb[0].mxu0
      %958 = vmatprep.mubr.bf16.mxu0 0
      %959 = vmatmul.mubr.bf16.gmra.mrb[0].mxu0 %v603
      %v960 = vpop.f32.mrb[0].mxu0
      %v961 = vadd.f32 %v324, %v960
      %v962 = vpop.f32.mrb[0].mxu0
      %v963 = vpop.f32.mrb[0].mxu0
      %v964 = vadd.f32 %v324, %v963
      %v965 = vpop.f32.mrb[0].mxu0
      %966 = vmatprep.mubr.bf16.mxu0 0
      %967 = vmatmul.mubr.bf16.gmra.mrb[0].mxu0 %v604
      %v968 = vpop.f32.mrb[0].mxu0
      %v969 = vadd.f32 %v324, %v968
      %v970 = vpop.f32.mrb[0].mxu0
      %v971 = vpop.f32.mrb[0].mxu0
      %v972 = vadd.f32 %v324, %v971
      %v973 = vpop.f32.mrb[0].mxu0
      %974 = vmatprep.mubr.bf16.mxu0 0
      %975 = vmatmul.mubr.bf16.gmra.mrb[0].mxu0 %v605
      %v976 = vpop.f32.mrb[0].mxu0
      %v977 = vadd.f32 %v324, %v976
      %v978 = vpop.f32.mrb[0].mxu0
      %v979 = vpop.f32.mrb[0].mxu0
      %v980 = vadd.f32 %v324, %v979
      %v981 = vpop.f32.mrb[0].mxu0
      %982 = vmatprep.mubr.bf16.mxu0 0
      %983 = vmatmul.mubr.bf16.gmra.mrb[0].mxu0 %v606
      %v984 = vpop.f32.mrb[0].mxu0
      %v985 = vadd.f32 %v324, %v984
      %v986 = vpop.f32.mrb[0].mxu0
      %v987 = vpop.f32.mrb[0].mxu0
      %v988 = vadd.f32 %v324, %v987
      %v989 = vpop.f32.mrb[0].mxu0
      %990 = vmatprep.mubr.bf16.mxu0 0
      %991 = vmatmul.mubr.bf16.gmra.mrb[0].mxu0 %v607
      %v992 = vpop.f32.mrb[0].mxu0
      %v993 = vadd.f32 %v324, %v992
      %v994 = vpop.f32.mrb[0].mxu0
      %v995 = vpop.f32.mrb[0].mxu0
      %v996 = vadd.f32 %v324, %v995
      %v997 = vpop.f32.mrb[0].mxu0
      %998 = vmatprep.mubr.bf16.mxu0 0
      %999 = vmatmul.mubr.bf16.gmra.mrb[0].mxu0 %v608
      %v1000 = vpop.f32.mrb[0].mxu0
      %v1001 = vadd.f32 %v324, %v1000
      %v1002 = vpop.f32.mrb[0].mxu0
      %v1003 = vpop.f32.mrb[0].mxu0
      %v1004 = vadd.f32 %v324, %v1003
      %v1005 = vpop.f32.mrb[0].mxu0
      %1006 = vmatprep.mubr.bf16.mxu0 0
      %1007 = vmatmul.mubr.bf16.gmra.mrb[0].mxu0 %v609
      %v1008 = vpop.f32.mrb[0].mxu0
      %v1009 = vadd.f32 %v324, %v1008
      %v1010 = vpop.f32.mrb[0].mxu0
      %v1011 = vpop.f32.mrb[0].mxu0
      %v1012 = vadd.f32 %v324, %v1011
      %v1013 = vpop.f32.mrb[0].mxu0
      %1014 = vmatprep.mubr.bf16.mxu0 0
      %1015 = vmatmul.mubr.bf16.gmra.mrb[0].mxu0 %v610
      %v1016 = vpop.f32.mrb[0].mxu0
      %v1017 = vadd.f32 %v324, %v1016
      %v1018 = vpop.f32.mrb[0].mxu0
      %v1019 = vpop.f32.mrb[0].mxu0
      %v1020 = vadd.f32 %v324, %v1019
      %v1021 = vpop.f32.mrb[0].mxu0
      %1022 = vmatprep.mubr.bf16.mxu0 0
      %1023 = vmatmul.mubr.bf16.gmra.mrb[0].mxu0 %v611
      %v1024 = vpop.f32.mrb[0].mxu0
      %v1025 = vadd.f32 %v324, %v1024
      %v1026 = vpop.f32.mrb[0].mxu0
      %v1027 = vpop.f32.mrb[0].mxu0
      %v1028 = vadd.f32 %v324, %v1027
      %v1029 = vpop.f32.mrb[0].mxu0
      %1030 = vmatprep.mubr.bf16.mxu0 0
      %1031 = vmatmul.mubr.bf16.gmra.mrb[0].mxu0 %v612
      %v1032 = vpop.f32.mrb[0].mxu0
      %v1033 = vadd.f32 %v324, %v1032
      %v1034 = vpop.f32.mrb[0].mxu0
      %v1035 = vpop.f32.mrb[0].mxu0
      %v1036 = vadd.f32 %v324, %v1035
      %v1037 = vpop.f32.mrb[0].mxu0
      %1038 = vmatprep.mubr.bf16.mxu0 0
      %1039 = vmatmul.mubr.bf16.gmra.mrb[0].mxu0 %v613
      %v1040 = vpop.f32.mrb[0].mxu0
      %v1041 = vadd.f32 %v324, %v1040
      %v1042 = vpop.f32.mrb[0].mxu0
      %v1043 = vpop.f32.mrb[0].mxu0
      %v1044 = vadd.f32 %v324, %v1043
      %v1045 = vpop.f32.mrb[0].mxu0
      %1046 = vmatprep.mubr.bf16.mxu0 0
      %1047 = vmatmul.mubr.bf16.gmra.mrb[0].mxu0 %v614
      %v1048 = vpop.f32.mrb[0].mxu0
      %v1049 = vadd.f32 %v324, %v1048
      %v1050 = vpop.f32.mrb[0].mxu0
      %v1051 = vpop.f32.mrb[0].mxu0
      %v1052 = vadd.f32 %v324, %v1051
      %v1053 = vpop.f32.mrb[0].mxu0
      %1054 = vmatprep.mubr.bf16.mxu0 0
      %1055 = vmatmul.mubr.bf16.gmra.mrb[0].mxu0 %v615
      %v1056 = vpop.f32.mrb[0].mxu0
      %v1057 = vadd.f32 %v324, %v1056
      %v1058 = vpop.f32.mrb[0].mxu0
      %v1059 = vpop.f32.mrb[0].mxu0
      %v1060 = vadd.f32 %v324, %v1059
      %v1061 = vpop.f32.mrb[0].mxu0
      %1062 = vmatprep.mubr.bf16.mxu0 0
      %1063 = vmatmul.mubr.bf16.gmra.mrb[0].mxu0 %v616
      %v1064 = vpop.f32.mrb[0].mxu0
      %v1065 = vadd.f32 %v324, %v1064
      %v1066 = vpop.f32.mrb[0].mxu0
      %v1067 = vpop.f32.mrb[0].mxu0
      %v1068 = vadd.f32 %v324, %v1067
      %v1069 = vpop.f32.mrb[0].mxu0
      %1070 = vmatprep.mubr.bf16.mxu0 0
      %1071 = vmatmul.mubr.bf16.gmra.mrb[0].mxu0 %v617
      %v1072 = vpop.f32.mrb[0].mxu0
      %v1073 = vadd.f32 %v324, %v1072
      %v1074 = vpop.f32.mrb[0].mxu0
      %v1075 = vpop.f32.mrb[0].mxu0
      %v1076 = vadd.f32 %v324, %v1075
      %v1077 = vpop.f32.mrb[0].mxu0
      %1078 = vmatprep.mubr.bf16.mxu0 0
      %1079 = vmatmul.mubr.bf16.gmra.mrb[0].mxu0 %v618
      %v1080 = vpop.f32.mrb[0].mxu0
      %v1081 = vadd.f32 %v324, %v1080
      %v1082 = vpop.f32.mrb[0].mxu0
      %v1083 = vpop.f32.mrb[0].mxu0
      %v1084 = vadd.f32 %v324, %v1083
      %v1085 = vpop.f32.mrb[0].mxu0
      %1086 = vmatprep.mubr.bf16.mxu0 0
      %1087 = vmatmul.mubr.bf16.gmra.mrb[0].mxu0 %v619
      %v1088 = vpop.f32.mrb[0].mxu0
      %v1089 = vadd.f32 %v324, %v1088
      %v1090 = vpop.f32.mrb[0].mxu0
      %v1091 = vpop.f32.mrb[0].mxu0
      %v1092 = vadd.f32 %v324, %v1091
      %v1093 = vpop.f32.mrb[0].mxu0
      %1094 = vmatprep.mubr.bf16.mxu0 0
      %1095 = vmatmul.mubr.bf16.gmra.mrb[0].mxu0 %v620
      %v1096 = vpop.f32.mrb[0].mxu0
      %v1097 = vadd.f32 %v324, %v1096
      %v1098 = vpop.f32.mrb[0].mxu0
      %v1099 = vpop.f32.mrb[0].mxu0
      %v1100 = vadd.f32 %v324, %v1099
      %v1101 = vpop.f32.mrb[0].mxu0
      %1102 = vmatprep.mubr.bf16.mxu0 0
      %1103 = vmatmul.mubr.bf16.gmra.mrb[0].mxu0 %v621
      %v1104 = vpop.f32.mrb[0].mxu0
      %v1105 = vadd.f32 %v324, %v1104
      %v1106 = vpop.f32.mrb[0].mxu0
      %v1107 = vpop.f32.mrb[0].mxu0
      %v1108 = vadd.f32 %v324, %v1107
      %v1109 = vpop.f32.mrb[0].mxu0
      %1110 = vmatprep.mubr.bf16.mxu0 0
      %1111 = vmatmul.mubr.bf16.gmra.mrb[0].mxu0 %v622
      %v1112 = vpop.f32.mrb[0].mxu0
      %v1113 = vadd.f32 %v324, %v1112
      %v1114 = vpop.f32.mrb[0].mxu0
      %v1115 = vpop.f32.mrb[0].mxu0
      %v1116 = vadd.f32 %v324, %v1115
      %v1117 = vpop.f32.mrb[0].mxu0
      %1118 = vmatprep.mubr.bf16.mxu0 0
      %1119 = vmatmul.mubr.bf16.gmra.mrb[0].mxu0 %v623
      %v1120 = vpop.f32.mrb[0].mxu0
      %v1121 = vadd.f32 %v324, %v1120
      %v1122 = vpop.f32.mrb[0].mxu0
      %v1123 = vpop.f32.mrb[0].mxu0
      %v1124 = vadd.f32 %v324, %v1123
      %v1125 = vpop.f32.mrb[0].mxu0
      %1126 = vmatprep.mubr.bf16.mxu0 0
      %1127 = vmatmul.mubr.bf16.gmra.mrb[0].mxu0 %v624
      %v1128 = vpop.f32.mrb[0].mxu0
      %v1129 = vadd.f32 %v324, %v1128
      %v1130 = vpop.f32.mrb[0].mxu0
      %v1131 = vpop.f32.mrb[0].mxu0
      %v1132 = vadd.f32 %v324, %v1131
      %v1133 = vpop.f32.mrb[0].mxu0
      %1134 = vmatprep.mubr.bf16.mxu0 0
      %1135 = vmatmul.mubr.bf16.gmra.mrb[0].mxu0 %v625
      %v1136 = vpop.f32.mrb[0].mxu0
      %v1137 = vadd.f32 %v324, %v1136
      %v1138 = vpop.f32.mrb[0].mxu0
      %v1139 = vpop.f32.mrb[0].mxu0
      %v1140 = vadd.f32 %v324, %v1139
      %v1141 = vpop.f32.mrb[0].mxu0
      %1142 = vmatprep.mubr.bf16.mxu0 0
      %1143 = vmatmul.mubr.bf16.gmra.mrb[0].mxu0 %v626
      %v1144 = vpop.f32.mrb[0].mxu0
      %v1145 = vadd.f32 %v324, %v1144
      %v1146 = vpop.f32.mrb[0].mxu0
      %v1147 = vpop.f32.mrb[0].mxu0
      %v1148 = vadd.f32 %v324, %v1147
      %v1149 = vpop.f32.mrb[0].mxu0
      %1150 = vmatprep.mubr.bf16.mxu0 0
      %1151 = vmatmul.mubr.bf16.gmra.mrb[0].mxu0 %v627
      %v1152 = vpop.f32.mrb[0].mxu0
      %v1153 = vadd.f32 %v324, %v1152
      %v1154 = vpop.f32.mrb[0].mxu0
      %v1155 = vpop.f32.mrb[0].mxu0
      %v1156 = vadd.f32 %v324, %v1155
      %v1157 = vpop.f32.mrb[0].mxu0
      %1158 = vmatprep.mubr.bf16.mxu0 0
      %1159 = vmatmul.mubr.bf16.gmra.mrb[0].mxu0 %v628
      %v1160 = vpop.f32.mrb[0].mxu0
      %v1161 = vadd.f32 %v324, %v1160
      %v1162 = vpop.f32.mrb[0].mxu0
      %v1163 = vpop.f32.mrb[0].mxu0
      %v1164 = vadd.f32 %v324, %v1163
      %v1165 = vpop.f32.mrb[0].mxu0
      %1166 = vmatprep.mubr.bf16.mxu0 0
      %1167 = vmatmul.mubr.bf16.gmra.mrb[0].mxu0 %v629
      %v1168 = vpop.f32.mrb[0].mxu0
      %v1169 = vadd.f32 %v324, %v1168
      %v1170 = vpop.f32.mrb[0].mxu0
      %v1171 = vpop.f32.mrb[0].mxu0
      %v1172 = vadd.f32 %v324, %v1171
      %v1173 = vpop.f32.mrb[0].mxu0
      %1174 = vmatprep.mubr.bf16.mxu0 0
      %1175 = vmatmul.mubr.bf16.gmra.mrb[0].mxu0 %v630
      %v1176 = vpop.f32.mrb[0].mxu0
      %v1177 = vadd.f32 %v324, %v1176
      %v1178 = vpop.f32.mrb[0].mxu0
      %v1179 = vpop.f32.mrb[0].mxu0
      %v1180 = vadd.f32 %v324, %v1179
      %v1181 = vpop.f32.mrb[0].mxu0
      %1182 = vmatprep.mubr.bf16.mxu0 0
      %1183 = vmatmul.mubr.bf16.gmra.mrb[0].mxu0 %v631
      %v1184 = vpop.f32.mrb[0].mxu0
      %v1185 = vadd.f32 %v324, %v1184
      %v1186 = vpop.f32.mrb[0].mxu0
      %v1187 = vpop.f32.mrb[0].mxu0
      %v1188 = vadd.f32 %v324, %v1187
      %v1189 = vpop.f32.mrb[0].mxu0
      %1190 = vmatprep.mubr.bf16.mxu0 0
      %1191 = vmatmul.mubr.bf16.gmra.mrb[0].mxu0 %v632
      %v1192 = vpop.f32.mrb[0].mxu0
      %v1193 = vadd.f32 %v324, %v1192
      %v1194 = vpop.f32.mrb[0].mxu0
      %v1195 = vpop.f32.mrb[0].mxu0
      %v1196 = vadd.f32 %v324, %v1195
      %v1197 = vpop.f32.mrb[0].mxu0
      %1198 = vmatprep.mubr.bf16.mxu0 0
      %1199 = vmatmul.mubr.bf16.gmra.mrb[0].mxu0 %v633
      %v1200 = vpop.f32.mrb[0].mxu0
      %v1201 = vadd.f32 %v324, %v1200
      %v1202 = vpop.f32.mrb[0].mxu0
      %v1203 = vpop.f32.mrb[0].mxu0
      %v1204 = vadd.f32 %v324, %v1203
      %v1205 = vpop.f32.mrb[0].mxu0
      %1206 = vmatprep.mubr.bf16.mxu0 0
      %1207 = vmatmul.mubr.bf16.gmra.mrb[0].mxu0 %v634
      %v1208 = vpop.f32.mrb[0].mxu0
      %v1209 = vadd.f32 %v324, %v1208
      %v1210 = vpop.f32.mrb[0].mxu0
      %v1211 = vpop.f32.mrb[0].mxu0
      %v1212 = vadd.f32 %v324, %v1211
      %v1213 = vpop.f32.mrb[0].mxu0
      %1214 = vmatprep.mubr.bf16.mxu0 0
      %1215 = vmatmul.mubr.bf16.gmra.mrb[0].mxu0 %v635
      %v1216 = vpop.f32.mrb[0].mxu0
      %v1217 = vadd.f32 %v324, %v1216
      %v1218 = vpop.f32.mrb[0].mxu0
      %v1219 = vpop.f32.mrb[0].mxu0
      %v1220 = vadd.f32 %v324, %v1219
      %v1221 = vpop.f32.mrb[0].mxu0
      %1222 = vmatprep.mubr.bf16.mxu0 0
      %1223 = vmatmul.mubr.bf16.gmra.mrb[0].mxu0 %v636
      %v1224 = vpop.f32.mrb[0].mxu0
      %v1225 = vadd.f32 %v324, %v1224
      %v1226 = vpop.f32.mrb[0].mxu0
      %v1227 = vpop.f32.mrb[0].mxu0
      %v1228 = vadd.f32 %v324, %v1227
      %v1229 = vpop.f32.mrb[0].mxu0
      %1230 = vmatprep.mubr.bf16.mxu0 0
      %1231 = vmatmul.mubr.bf16.gmra.mrb[0].mxu0 %v637
      %v1232 = vpop.f32.mrb[0].mxu0
      %v1233 = vadd.f32 %v324, %v1232
      %v1234 = vpop.f32.mrb[0].mxu0
      %v1235 = vpop.f32.mrb[0].mxu0
      %v1236 = vadd.f32 %v324, %v1235
      %v1237 = vpop.f32.mrb[0].mxu0
      %1238 = vmatprep.mubr.bf16.mxu0 0
      %1239 = vmatmul.mubr.bf16.gmra.mrb[0].mxu0 %v638
      %v1240 = vpop.f32.mrb[0].mxu0
      %v1241 = vadd.f32 %v324, %v1240
      %v1242 = vpop.f32.mrb[0].mxu0
      %v1243 = vpop.f32.mrb[0].mxu0
      %v1244 = vadd.f32 %v324, %v1243
      %v1245 = vpop.f32.mrb[0].mxu0
      %1246 = vmatprep.mubr.bf16.mxu0 0
      %1247 = vmatmul.mubr.bf16.gmra.mrb[0].mxu0 %v639
      %v1248 = vpop.f32.mrb[0].mxu0
      %v1249 = vadd.f32 %v324, %v1248
      %v1250 = vpop.f32.mrb[0].mxu0
      %v1251 = vpop.f32.mrb[0].mxu0
      %v1252 = vadd.f32 %v324, %v1251
      %v1253 = vpop.f32.mrb[0].mxu0
      %1254 = vmatprep.mubr.bf16.mxu0 0
      %1255 = vmatmul.mubr.bf16.gmra.mrb[0].mxu0 %v640
      %v1256 = vpop.f32.mrb[0].mxu0
      %v1257 = vadd.f32 %v324, %v1256
      %v1258 = vpop.f32.mrb[0].mxu0
      %v1259 = vpop.f32.mrb[0].mxu0
      %v1260 = vadd.f32 %v324, %v1259
      %v1261 = vpop.f32.mrb[0].mxu0
      %1262 = vmatprep.mubr.bf16.mxu0 0
      %1263 = vmatmul.mubr.bf16.gmra.mrb[0].mxu0 %v641
      %v1264 = vpop.f32.mrb[0].mxu0
      %v1265 = vadd.f32 %v324, %v1264
      %v1266 = vpop.f32.mrb[0].mxu0
      %v1267 = vpop.f32.mrb[0].mxu0
      %v1268 = vadd.f32 %v324, %v1267
      %v1269 = vpop.f32.mrb[0].mxu0
      %1270 = vmatprep.mubr.bf16.mxu0 0
      %1271 = vmatmul.mubr.bf16.gmra.mrb[0].mxu0 %v642
      %v1272 = vpop.f32.mrb[0].mxu0
      %v1273 = vadd.f32 %v324, %v1272
      %v1274 = vpop.f32.mrb[0].mxu0
      %v1275 = vpop.f32.mrb[0].mxu0
      %v1276 = vadd.f32 %v324, %v1275
      %v1277 = vpop.f32.mrb[0].mxu0
      %1278 = vmatprep.mubr.bf16.mxu0 0
      %1279 = vmatmul.mubr.bf16.gmra.mrb[0].mxu0 %v643
      %v1280 = vpop.f32.mrb[0].mxu0
      %v1281 = vadd.f32 %v324, %v1280
      %v1282 = vpop.f32.mrb[0].mxu0
      %v1283 = vpop.f32.mrb[0].mxu0
      %v1284 = vadd.f32 %v324, %v1283
      %v1285 = vpop.f32.mrb[0].mxu0
      %1286 = vmatprep.mubr.bf16.mxu0 0
      %1287 = vmatmul.mubr.bf16.gmra.mrb[0].mxu0 %v644
      %v1288 = vpop.f32.mrb[0].mxu0
      %v1289 = vadd.f32 %v324, %v1288
      %v1290 = vpop.f32.mrb[0].mxu0
      %v1291 = vpop.f32.mrb[0].mxu0
      %v1292 = vadd.f32 %v324, %v1291
      %v1293 = vpop.f32.mrb[0].mxu0
      %1294 = vmatprep.mubr.bf16.mxu0 0
      %1295 = vmatmul.mubr.bf16.gmra.mrb[0].mxu0 %v645
      %v1296 = vpop.f32.mrb[0].mxu0
      %v1297 = vadd.f32 %v324, %v1296
      %v1298 = vpop.f32.mrb[0].mxu0
      %v1299 = vpop.f32.mrb[0].mxu0
      %v1300 = vadd.f32 %v324, %v1299
      %v1301 = vpop.f32.mrb[0].mxu0
      %1302 = vdwg.mxu0
      %vm1303 = vcmp.ge.f32.partialorder %v793, 0.0
      %vm1304 = vcmp.ge.f32.partialorder %v796, 0.0
      %vm1305 = vcmp.ge.f32.partialorder %v801, 0.0
      %vm1306 = vcmp.ge.f32.partialorder %v804, 0.0
      %vm1307 = vcmp.ge.f32.partialorder %v809, 0.0
      %vm1308 = vcmp.ge.f32.partialorder %v812, 0.0
      %vm1309 = vcmp.ge.f32.partialorder %v817, 0.0
      %vm1310 = vcmp.ge.f32.partialorder %v820, 0.0
      %vm1311 = vcmp.ge.f32.partialorder %v825, 0.0
      %vm1312 = vcmp.ge.f32.partialorder %v828, 0.0
      %vm1313 = vcmp.ge.f32.partialorder %v833, 0.0
      %vm1314 = vcmp.ge.f32.partialorder %v836, 0.0
      %vm1315 = vcmp.ge.f32.partialorder %v841, 0.0
      %vm1316 = vcmp.ge.f32.partialorder %v844, 0.0
      %vm1317 = vcmp.ge.f32.partialorder %v849, 0.0
      %vm1318 = vcmp.ge.f32.partialorder %v852, 0.0
      %vm1319 = vcmp.ge.f32.partialorder %v857, 0.0
      %vm1320 = vcmp.ge.f32.partialorder %v860, 0.0
      %vm1321 = vcmp.ge.f32.partialorder %v865, 0.0
      %vm1322 = vcmp.ge.f32.partialorder %v868, 0.0
      %vm1323 = vcmp.ge.f32.partialorder %v873, 0.0
      %vm1324 = vcmp.ge.f32.partialorder %v876, 0.0
      %vm1325 = vcmp.ge.f32.partialorder %v881, 0.0
      %vm1326 = vcmp.ge.f32.partialorder %v884, 0.0
      %vm1327 = vcmp.ge.f32.partialorder %v889, 0.0
      %vm1328 = vcmp.ge.f32.partialorder %v892, 0.0
      %vm1329 = vcmp.ge.f32.partialorder %v897, 0.0
      %vm1330 = vcmp.ge.f32.partialorder %v900, 0.0
      %vm1331 = vcmp.ge.f32.partialorder %v905, 0.0
      %vm1332 = vcmp.ge.f32.partialorder %v908, 0.0
      %vm1333 = vcmp.ge.f32.partialorder %v913, 0.0
      %vm1334 = vcmp.ge.f32.partialorder %v916, 0.0
      %vm1335 = vcmp.ge.f32.partialorder %v921, 0.0
      %vm1336 = vcmp.ge.f32.partialorder %v924, 0.0
      %vm1337 = vcmp.ge.f32.partialorder %v929, 0.0
      %vm1338 = vcmp.ge.f32.partialorder %v932, 0.0
      %vm1339 = vcmp.ge.f32.partialorder %v937, 0.0
      %vm1340 = vcmp.ge.f32.partialorder %v940, 0.0
      %vm1341 = vcmp.ge.f32.partialorder %v945, 0.0
      %vm1342 = vcmp.ge.f32.partialorder %v948, 0.0
      %vm1343 = vcmp.ge.f32.partialorder %v953, 0.0
      %vm1344 = vcmp.ge.f32.partialorder %v956, 0.0
      %vm1345 = vcmp.ge.f32.partialorder %v961, 0.0
      %vm1346 = vcmp.ge.f32.partialorder %v964, 0.0
      %vm1347 = vcmp.ge.f32.partialorder %v969, 0.0
      %vm1348 = vcmp.ge.f32.partialorder %v972, 0.0
      %vm1349 = vcmp.ge.f32.partialorder %v977, 0.0
      %vm1350 = vcmp.ge.f32.partialorder %v980, 0.0
      %vm1351 = vcmp.ge.f32.partialorder %v985, 0.0
      %vm1352 = vcmp.ge.f32.partialorder %v988, 0.0
      %vm1353 = vcmp.ge.f32.partialorder %v993, 0.0
      %vm1354 = vcmp.ge.f32.partialorder %v996, 0.0
      %vm1355 = vcmp.ge.f32.partialorder %v1001, 0.0
      %vm1356 = vcmp.ge.f32.partialorder %v1004, 0.0
      %vm1357 = vcmp.ge.f32.partialorder %v1009, 0.0
      %vm1358 = vcmp.ge.f32.partialorder %v1012, 0.0
      %vm1359 = vcmp.ge.f32.partialorder %v1017, 0.0
      %vm1360 = vcmp.ge.f32.partialorder %v1020, 0.0
      %vm1361 = vcmp.ge.f32.partialorder %v1025, 0.0
      %vm1362 = vcmp.ge.f32.partialorder %v1028, 0.0
      %vm1363 = vcmp.ge.f32.partialorder %v1033, 0.0
      %vm1364 = vcmp.ge.f32.partialorder %v1036, 0.0
      %vm1365 = vcmp.ge.f32.partialorder %v1041, 0.0
      %vm1366 = vcmp.ge.f32.partialorder %v1044, 0.0
      %vm1367 = vcmp.ge.f32.partialorder %v1049, 0.0
      %vm1368 = vcmp.ge.f32.partialorder %v1052, 0.0
      %vm1369 = vcmp.ge.f32.partialorder %v1057, 0.0
      %vm1370 = vcmp.ge.f32.partialorder %v1060, 0.0
      %vm1371 = vcmp.ge.f32.partialorder %v1065, 0.0
      %vm1372 = vcmp.ge.f32.partialorder %v1068, 0.0
      %vm1373 = vcmp.ge.f32.partialorder %v1073, 0.0
      %vm1374 = vcmp.ge.f32.partialorder %v1076, 0.0
      %vm1375 = vcmp.ge.f32.partialorder %v1081, 0.0
      %vm1376 = vcmp.ge.f32.partialorder %v1084, 0.0
      %vm1377 = vcmp.ge.f32.partialorder %v1089, 0.0
      %vm1378 = vcmp.ge.f32.partialorder %v1092, 0.0
      %vm1379 = vcmp.ge.f32.partialorder %v1097, 0.0
      %vm1380 = vcmp.ge.f32.partialorder %v1100, 0.0
      %vm1381 = vcmp.ge.f32.partialorder %v1105, 0.0
      %vm1382 = vcmp.ge.f32.partialorder %v1108, 0.0
      %vm1383 = vcmp.ge.f32.partialorder %v1113, 0.0
      %vm1384 = vcmp.ge.f32.partialorder %v1116, 0.0
      %vm1385 = vcmp.ge.f32.partialorder %v1121, 0.0
      %vm1386 = vcmp.ge.f32.partialorder %v1124, 0.0
      %vm1387 = vcmp.ge.f32.partialorder %v1129, 0.0
      %vm1388 = vcmp.ge.f32.partialorder %v1132, 0.0
      %vm1389 = vcmp.ge.f32.partialorder %v1137, 0.0
      %vm1390 = vcmp.ge.f32.partialorder %v1140, 0.0
      %vm1391 = vcmp.ge.f32.partialorder %v1145, 0.0
      %vm1392 = vcmp.ge.f32.partialorder %v1148, 0.0
      %vm1393 = vcmp.ge.f32.partialorder %v1153, 0.0
      %vm1394 = vcmp.ge.f32.partialorder %v1156, 0.0
      %vm1395 = vcmp.ge.f32.partialorder %v1161, 0.0
      %vm1396 = vcmp.ge.f32.partialorder %v1164, 0.0
      %vm1397 = vcmp.ge.f32.partialorder %v1169, 0.0
      %vm1398 = vcmp.ge.f32.partialorder %v1172, 0.0
      %vm1399 = vcmp.ge.f32.partialorder %v1177, 0.0
      %vm1400 = vcmp.ge.f32.partialorder %v1180, 0.0
      %vm1401 = vcmp.ge.f32.partialorder %v1185, 0.0
      %vm1402 = vcmp.ge.f32.partialorder %v1188, 0.0
      %vm1403 = vcmp.ge.f32.partialorder %v1193, 0.0
      %vm1404 = vcmp.ge.f32.partialorder %v1196, 0.0
      %vm1405 = vcmp.ge.f32.partialorder %v1201, 0.0
      %vm1406 = vcmp.ge.f32.partialorder %v1204, 0.0
      %vm1407 = vcmp.ge.f32.partialorder %v1209, 0.0
      %vm1408 = vcmp.ge.f32.partialorder %v1212, 0.0
      %vm1409 = vcmp.ge.f32.partialorder %v1217, 0.0
      %vm1410 = vcmp.ge.f32.partialorder %v1220, 0.0
      %vm1411 = vcmp.ge.f32.partialorder %v1225, 0.0
      %vm1412 = vcmp.ge.f32.partialorder %v1228, 0.0
      %vm1413 = vcmp.ge.f32.partialorder %v1233, 0.0
      %vm1414 = vcmp.ge.f32.partialorder %v1236, 0.0
      %vm1415 = vcmp.ge.f32.partialorder %v1241, 0.0
      %vm1416 = vcmp.ge.f32.partialorder %v1244, 0.0
      %vm1417 = vcmp.ge.f32.partialorder %v1249, 0.0
      %vm1418 = vcmp.ge.f32.partialorder %v1252, 0.0
      %vm1419 = vcmp.ge.f32.partialorder %v1257, 0.0
      %vm1420 = vcmp.ge.f32.partialorder %v1260, 0.0
      %vm1421 = vcmp.ge.f32.partialorder %v1265, 0.0
      %vm1422 = vcmp.ge.f32.partialorder %v1268, 0.0
      %vm1423 = vcmp.ge.f32.partialorder %v1273, 0.0
      %vm1424 = vcmp.ge.f32.partialorder %v1276, 0.0
      %vm1425 = vcmp.ge.f32.partialorder %v1281, 0.0
      %vm1426 = vcmp.ge.f32.partialorder %v1284, 0.0
      %vm1427 = vcmp.ge.f32.partialorder %v1289, 0.0
      %vm1428 = vcmp.ge.f32.partialorder %v1292, 0.0
      %vm1429 = vcmp.ge.f32.partialorder %v1297, 0.0
      %vm1430 = vcmp.ge.f32.partialorder %v1300, 0.0
      %v1431 = vmul.f32 %v793, 0.2
      %v1432 = vmul.f32 %v796, 0.2
      %v1433 = vmul.f32 %v801, 0.2
      %v1434 = vmul.f32 %v804, 0.2
      %v1435 = vmul.f32 %v809, 0.2
      %v1436 = vmul.f32 %v812, 0.2
      %v1437 = vmul.f32 %v817, 0.2
      %v1438 = vmul.f32 %v820, 0.2
      %v1439 = vmul.f32 %v825, 0.2
      %v1440 = vmul.f32 %v828, 0.2
      %v1441 = vmul.f32 %v833, 0.2
      %v1442 = vmul.f32 %v836, 0.2
      %v1443 = vmul.f32 %v841, 0.2
      %v1444 = vmul.f32 %v844, 0.2
      %v1445 = vmul.f32 %v849, 0.2
      %v1446 = vmul.f32 %v852, 0.2
      %v1447 = vmul.f32 %v857, 0.2
      %v1448 = vmul.f32 %v860, 0.2
      %v1449 = vmul.f32 %v865, 0.2
      %v1450 = vmul.f32 %v868, 0.2
      %v1451 = vmul.f32 %v873, 0.2
      %v1452 = vmul.f32 %v876, 0.2
      %v1453 = vmul.f32 %v881, 0.2
      %v1454 = vmul.f32 %v884, 0.2
      %v1455 = vmul.f32 %v889, 0.2
      %v1456 = vmul.f32 %v892, 0.2
      %v1457 = vmul.f32 %v897, 0.2
      %v1458 = vmul.f32 %v900, 0.2
      %v1459 = vmul.f32 %v905, 0.2
      %v1460 = vmul.f32 %v908, 0.2
      %v1461 = vmul.f32 %v913, 0.2
      %v1462 = vmul.f32 %v916, 0.2
      %v1463 = vmul.f32 %v921, 0.2
      %v1464 = vmul.f32 %v924, 0.2
      %v1465 = vmul.f32 %v929, 0.2
      %v1466 = vmul.f32 %v932, 0.2
      %v1467 = vmul.f32 %v937, 0.2
      %v1468 = vmul.f32 %v940, 0.2
      %v1469 = vmul.f32 %v945, 0.2
      %v1470 = vmul.f32 %v948, 0.2
      %v1471 = vmul.f32 %v953, 0.2
      %v1472 = vmul.f32 %v956, 0.2
      %v1473 = vmul.f32 %v961, 0.2
      %v1474 = vmul.f32 %v964, 0.2
      %v1475 = vmul.f32 %v969, 0.2
      %v1476 = vmul.f32 %v972, 0.2
      %v1477 = vmul.f32 %v977, 0.2
      %v1478 = vmul.f32 %v980, 0.2
      %v1479 = vmul.f32 %v985, 0.2
      %v1480 = vmul.f32 %v988, 0.2
      %v1481 = vmul.f32 %v993, 0.2
      %v1482 = vmul.f32 %v996, 0.2
      %v1483 = vmul.f32 %v1001, 0.2
      %v1484 = vmul.f32 %v1004, 0.2
      %v1485 = vmul.f32 %v1009, 0.2
      %v1486 = vmul.f32 %v1012, 0.2
      %v1487 = vmul.f32 %v1017, 0.2
      %v1488 = vmul.f32 %v1020, 0.2
      %v1489 = vmul.f32 %v1025, 0.2
      %v1490 = vmul.f32 %v1028, 0.2
      %v1491 = vmul.f32 %v1033, 0.2
      %v1492 = vmul.f32 %v1036, 0.2
      %v1493 = vmul.f32 %v1041, 0.2
      %v1494 = vmul.f32 %v1044, 0.2
      %v1495 = vmul.f32 %v1049, 0.2
      %v1496 = vmul.f32 %v1052, 0.2
      %v1497 = vmul.f32 %v1057, 0.2
      %v1498 = vmul.f32 %v1060, 0.2
      %v1499 = vmul.f32 %v1065, 0.2
      %v1500 = vmul.f32 %v1068, 0.2
      %v1501 = vmul.f32 %v1073, 0.2
      %v1502 = vmul.f32 %v1076, 0.2
      %v1503 = vmul.f32 %v1081, 0.2
      %v1504 = vmul.f32 %v1084, 0.2
      %v1505 = vmul.f32 %v1089, 0.2
      %v1506 = vmul.f32 %v1092, 0.2
      %v1507 = vmul.f32 %v1097, 0.2
      %v1508 = vmul.f32 %v1100, 0.2
      %v1509 = vmul.f32 %v1105, 0.2
      %v1510 = vmul.f32 %v1108, 0.2
      %v1511 = vmul.f32 %v1113, 0.2
      %v1512 = vmul.f32 %v1116, 0.2
      %v1513 = vmul.f32 %v1121, 0.2
      %v1514 = vmul.f32 %v1124, 0.2
      %v1515 = vmul.f32 %v1129, 0.2
      %v1516 = vmul.f32 %v1132, 0.2
      %v1517 = vmul.f32 %v1137, 0.2
      %v1518 = vmul.f32 %v1140, 0.2
      %v1519 = vmul.f32 %v1145, 0.2
      %v1520 = vmul.f32 %v1148, 0.2
      %v1521 = vmul.f32 %v1153, 0.2
      %v1522 = vmul.f32 %v1156, 0.2
      %v1523 = vmul.f32 %v1161, 0.2
      %v1524 = vmul.f32 %v1164, 0.2
      %v1525 = vmul.f32 %v1169, 0.2
      %v1526 = vmul.f32 %v1172, 0.2
      %v1527 = vmul.f32 %v1177, 0.2
      %v1528 = vmul.f32 %v1180, 0.2
      %v1529 = vmul.f32 %v1185, 0.2
      %v1530 = vmul.f32 %v1188, 0.2
      %v1531 = vmul.f32 %v1193, 0.2
      %v1532 = vmul.f32 %v1196, 0.2
      %v1533 = vmul.f32 %v1201, 0.2
      %v1534 = vmul.f32 %v1204, 0.2
      %v1535 = vmul.f32 %v1209, 0.2
      %v1536 = vmul.f32 %v1212, 0.2
      %v1537 = vmul.f32 %v1217, 0.2
      %v1538 = vmul.f32 %v1220, 0.2
      %v1539 = vmul.f32 %v1225, 0.2
      %v1540 = vmul.f32 %v1228, 0.2
      %v1541 = vmul.f32 %v1233, 0.2
      %v1542 = vmul.f32 %v1236, 0.2
      %v1543 = vmul.f32 %v1241, 0.2
      %v1544 = vmul.f32 %v1244, 0.2
      %v1545 = vmul.f32 %v1249, 0.2
      %v1546 = vmul.f32 %v1252, 0.2
      %v1547 = vmul.f32 %v1257, 0.2
      %v1548 = vmul.f32 %v1260, 0.2
      %v1549 = vmul.f32 %v1265, 0.2
      %v1550 = vmul.f32 %v1268, 0.2
      %v1551 = vmul.f32 %v1273, 0.2
      %v1552 = vmul.f32 %v1276, 0.2
      %v1553 = vmul.f32 %v1281, 0.2
      %v1554 = vmul.f32 %v1284, 0.2
      %v1555 = vmul.f32 %v1289, 0.2
      %v1556 = vmul.f32 %v1292, 0.2
      %v1557 = vmul.f32 %v1297, 0.2
      %v1558 = vmul.f32 %v1300, 0.2
      %v1559 = vsel %vm1303, %v793, %v1431
      %v1560 = vsel %vm1304, %v796, %v1432
      %v1561 = vsel %vm1305, %v801, %v1433
      %v1562 = vsel %vm1306, %v804, %v1434
      %v1563 = vsel %vm1307, %v809, %v1435
      %v1564 = vsel %vm1308, %v812, %v1436
      %v1565 = vsel %vm1309, %v817, %v1437
      %v1566 = vsel %vm1310, %v820, %v1438
      %v1567 = vsel %vm1311, %v825, %v1439
      %v1568 = vsel %vm1312, %v828, %v1440
      %v1569 = vsel %vm1313, %v833, %v1441
      %v1570 = vsel %vm1314, %v836, %v1442
      %v1571 = vsel %vm1315, %v841, %v1443
      %v1572 = vsel %vm1316, %v844, %v1444
      %v1573 = vsel %vm1317, %v849, %v1445
      %v1574 = vsel %vm1318, %v852, %v1446
      %v1575 = vsel %vm1319, %v857, %v1447
      %v1576 = vsel %vm1320, %v860, %v1448
      %v1577 = vsel %vm1321, %v865, %v1449
      %v1578 = vsel %vm1322, %v868, %v1450
      %v1579 = vsel %vm1323, %v873, %v1451
      %v1580 = vsel %vm1324, %v876, %v1452
      %v1581 = vsel %vm1325, %v881, %v1453
      %v1582 = vsel %vm1326, %v884, %v1454
      %v1583 = vsel %vm1327, %v889, %v1455
      %v1584 = vsel %vm1328, %v892, %v1456
      %v1585 = vsel %vm1329, %v897, %v1457
      %v1586 = vsel %vm1330, %v900, %v1458
      %v1587 = vsel %vm1331, %v905, %v1459
      %v1588 = vsel %vm1332, %v908, %v1460
      %v1589 = vsel %vm1333, %v913, %v1461
      %v1590 = vsel %vm1334, %v916, %v1462
      %v1591 = vsel %vm1335, %v921, %v1463
      %v1592 = vsel %vm1336, %v924, %v1464
      %v1593 = vsel %vm1337, %v929, %v1465
      %v1594 = vsel %vm1338, %v932, %v1466
      %v1595 = vsel %vm1339, %v937, %v1467
      %v1596 = vsel %vm1340, %v940, %v1468
      %v1597 = vsel %vm1341, %v945, %v1469
      %v1598 = vsel %vm1342, %v948, %v1470
      %v1599 = vsel %vm1343, %v953, %v1471
      %v1600 = vsel %vm1344, %v956, %v1472
      %v1601 = vsel %vm1345, %v961, %v1473
      %v1602 = vsel %vm1346, %v964, %v1474
      %v1603 = vsel %vm1347, %v969, %v1475
      %v1604 = vsel %vm1348, %v972, %v1476
      %v1605 = vsel %vm1349, %v977, %v1477
      %v1606 = vsel %vm1350, %v980, %v1478
      %v1607 = vsel %vm1351, %v985, %v1479
      %v1608 = vsel %vm1352, %v988, %v1480
      %v1609 = vsel %vm1353, %v993, %v1481
      %v1610 = vsel %vm1354, %v996, %v1482
      %v1611 = vsel %vm1355, %v1001, %v1483
      %v1612 = vsel %vm1356, %v1004, %v1484
      %v1613 = vsel %vm1357, %v1009, %v1485
      %v1614 = vsel %vm1358, %v1012, %v1486
      %v1615 = vsel %vm1359, %v1017, %v1487
      %v1616 = vsel %vm1360, %v1020, %v1488
      %v1617 = vsel %vm1361, %v1025, %v1489
      %v1618 = vsel %vm1362, %v1028, %v1490
      %v1619 = vsel %vm1363, %v1033, %v1491
      %v1620 = vsel %vm1364, %v1036, %v1492
      %v1621 = vsel %vm1365, %v1041, %v1493
      %v1622 = vsel %vm1366, %v1044, %v1494
      %v1623 = vsel %vm1367, %v1049, %v1495
      %v1624 = vsel %vm1368, %v1052, %v1496
      %v1625 = vsel %vm1369, %v1057, %v1497
      %v1626 = vsel %vm1370, %v1060, %v1498
      %v1627 = vsel %vm1371, %v1065, %v1499
      %v1628 = vsel %vm1372, %v1068, %v1500
      %v1629 = vsel %vm1373, %v1073, %v1501
      %v1630 = vsel %vm1374, %v1076, %v1502
      %v1631 = vsel %vm1375, %v1081, %v1503
      %v1632 = vsel %vm1376, %v1084, %v1504
      %v1633 = vsel %vm1377, %v1089, %v1505
      %v1634 = vsel %vm1378, %v1092, %v1506
      %v1635 = vsel %vm1379, %v1097, %v1507
      %v1636 = vsel %vm1380, %v1100, %v1508
      %v1637 = vsel %vm1381, %v1105, %v1509
      %v1638 = vsel %vm1382, %v1108, %v1510
      %v1639 = vsel %vm1383, %v1113, %v1511
      %v1640 = vsel %vm1384, %v1116, %v1512
      %v1641 = vsel %vm1385, %v1121, %v1513
      %v1642 = vsel %vm1386, %v1124, %v1514
      %v1643 = vsel %vm1387, %v1129, %v1515
      %v1644 = vsel %vm1388, %v1132, %v1516
      %v1645 = vsel %vm1389, %v1137, %v1517
      %v1646 = vsel %vm1390, %v1140, %v1518
      %v1647 = vsel %vm1391, %v1145, %v1519
      %v1648 = vsel %vm1392, %v1148, %v1520
      %v1649 = vsel %vm1393, %v1153, %v1521
      %v1650 = vsel %vm1394, %v1156, %v1522
      %v1651 = vsel %vm1395, %v1161, %v1523
      %v1652 = vsel %vm1396, %v1164, %v1524
      %v1653 = vsel %vm1397, %v1169, %v1525
      %v1654 = vsel %vm1398, %v1172, %v1526
      %v1655 = vsel %vm1399, %v1177, %v1527
      %v1656 = vsel %vm1400, %v1180, %v1528
      %v1657 = vsel %vm1401, %v1185, %v1529
      %v1658 = vsel %vm1402, %v1188, %v1530
      %v1659 = vsel %vm1403, %v1193, %v1531
      %v1660 = vsel %vm1404, %v1196, %v1532
      %v1661 = vsel %vm1405, %v1201, %v1533
      %v1662 = vsel %vm1406, %v1204, %v1534
      %v1663 = vsel %vm1407, %v1209, %v1535
      %v1664 = vsel %vm1408, %v1212, %v1536
      %v1665 = vsel %vm1409, %v1217, %v1537
      %v1666 = vsel %vm1410, %v1220, %v1538
      %v1667 = vsel %vm1411, %v1225, %v1539
      %v1668 = vsel %vm1412, %v1228, %v1540
      %v1669 = vsel %vm1413, %v1233, %v1541
      %v1670 = vsel %vm1414, %v1236, %v1542
      %v1671 = vsel %vm1415, %v1241, %v1543
      %v1672 = vsel %vm1416, %v1244, %v1544
      %v1673 = vsel %vm1417, %v1249, %v1545
      %v1674 = vsel %vm1418, %v1252, %v1546
      %v1675 = vsel %vm1419, %v1257, %v1547
      %v1676 = vsel %vm1420, %v1260, %v1548
      %v1677 = vsel %vm1421, %v1265, %v1549
      %v1678 = vsel %vm1422, %v1268, %v1550
      %v1679 = vsel %vm1423, %v1273, %v1551
      %v1680 = vsel %vm1424, %v1276, %v1552
      %v1681 = vsel %vm1425, %v1281, %v1553
      %v1682 = vsel %vm1426, %v1284, %v1554
      %v1683 = vsel %vm1427, %v1289, %v1555
      %v1684 = vsel %vm1428, %v1292, %v1556
      %v1685 = vsel %vm1429, %v1297, %v1557
      %v1686 = vsel %vm1430, %v1300, %v1558
      %v1687 = vpack.c.bf16 %v1560, %v1559
      %v1688 = vpack.c.bf16 %v1562, %v1561
      %v1689 = vpack.c.bf16 %v1564, %v1563
      %v1690 = vpack.c.bf16 %v1566, %v1565
      %v1691 = vpack.c.bf16 %v1568, %v1567
      %v1692 = vpack.c.bf16 %v1570, %v1569
      %v1693 = vpack.c.bf16 %v1572, %v1571
      %v1694 = vpack.c.bf16 %v1574, %v1573
      %v1695 = vpack.c.bf16 %v1576, %v1575
      %v1696 = vpack.c.bf16 %v1578, %v1577
      %v1697 = vpack.c.bf16 %v1580, %v1579
      %v1698 = vpack.c.bf16 %v1582, %v1581
      %v1699 = vpack.c.bf16 %v1584, %v1583
      %v1700 = vpack.c.bf16 %v1586, %v1585
      %v1701 = vpack.c.bf16 %v1588, %v1587
      %v1702 = vpack.c.bf16 %v1590, %v1589
      %v1703 = vpack.c.bf16 %v1592, %v1591
      %v1704 = vpack.c.bf16 %v1594, %v1593
      %v1705 = vpack.c.bf16 %v1596, %v1595
      %v1706 = vpack.c.bf16 %v1598, %v1597
      %v1707 = vpack.c.bf16 %v1600, %v1599
      %v1708 = vpack.c.bf16 %v1602, %v1601
      %v1709 = vpack.c.bf16 %v1604, %v1603
      %v1710 = vpack.c.bf16 %v1606, %v1605
      %v1711 = vpack.c.bf16 %v1608, %v1607
      %v1712 = vpack.c.bf16 %v1610, %v1609
      %v1713 = vpack.c.bf16 %v1612, %v1611
      %v1714 = vpack.c.bf16 %v1614, %v1613
      %v1715 = vpack.c.bf16 %v1616, %v1615
      %v1716 = vpack.c.bf16 %v1618, %v1617
      %v1717 = vpack.c.bf16 %v1620, %v1619
      %v1718 = vpack.c.bf16 %v1622, %v1621
      %v1719 = vpack.c.bf16 %v1624, %v1623
      %v1720 = vpack.c.bf16 %v1626, %v1625
      %v1721 = vpack.c.bf16 %v1628, %v1627
      %v1722 = vpack.c.bf16 %v1630, %v1629
      %v1723 = vpack.c.bf16 %v1632, %v1631
      %v1724 = vpack.c.bf16 %v1634, %v1633
      %v1725 = vpack.c.bf16 %v1636, %v1635
      %v1726 = vpack.c.bf16 %v1638, %v1637
      %v1727 = vpack.c.bf16 %v1640, %v1639
      %v1728 = vpack.c.bf16 %v1642, %v1641
      %v1729 = vpack.c.bf16 %v1644, %v1643
      %v1730 = vpack.c.bf16 %v1646, %v1645
      %v1731 = vpack.c.bf16 %v1648, %v1647
      %v1732 = vpack.c.bf16 %v1650, %v1649
      %v1733 = vpack.c.bf16 %v1652, %v1651
      %v1734 = vpack.c.bf16 %v1654, %v1653
      %v1735 = vpack.c.bf16 %v1656, %v1655
      %v1736 = vpack.c.bf16 %v1658, %v1657
      %v1737 = vpack.c.bf16 %v1660, %v1659
      %v1738 = vpack.c.bf16 %v1662, %v1661
      %v1739 = vpack.c.bf16 %v1664, %v1663
      %v1740 = vpack.c.bf16 %v1666, %v1665
      %v1741 = vpack.c.bf16 %v1668, %v1667
      %v1742 = vpack.c.bf16 %v1670, %v1669
      %v1743 = vpack.c.bf16 %v1672, %v1671
      %v1744 = vpack.c.bf16 %v1674, %v1673
      %v1745 = vpack.c.bf16 %v1676, %v1675
      %v1746 = vpack.c.bf16 %v1678, %v1677
      %v1747 = vpack.c.bf16 %v1680, %v1679
      %v1748 = vpack.c.bf16 %v1682, %v1681
      %v1749 = vpack.c.bf16 %v1684, %v1683
      %v1750 = vpack.c.bf16 %v1686, %v1685
      %v1815 = vunpack.c.l.b16 %v1687
      %v1816 = vunpack.c.h.b16 %v1687
      %v1817 = vunpack.c.l.b16 %v1688
      %v1818 = vunpack.c.h.b16 %v1688
      %v1819 = vunpack.c.l.b16 %v1689
      %v1820 = vunpack.c.h.b16 %v1689
      %v1821 = vunpack.c.l.b16 %v1690
      %v1822 = vunpack.c.h.b16 %v1690
      %v1823 = vunpack.c.l.b16 %v1691
      %v1824 = vunpack.c.h.b16 %v1691
      %v1825 = vunpack.c.l.b16 %v1692
      %v1826 = vunpack.c.h.b16 %v1692
      %v1827 = vunpack.c.l.b16 %v1693
      %v1828 = vunpack.c.h.b16 %v1693
      %v1829 = vunpack.c.l.b16 %v1694
      %v1830 = vunpack.c.h.b16 %v1694
      %v1831 = vunpack.c.l.b16 %v1695
      %v1832 = vunpack.c.h.b16 %v1695
      %v1833 = vunpack.c.l.b16 %v1696
      %v1834 = vunpack.c.h.b16 %v1696
      %v1835 = vunpack.c.l.b16 %v1697
      %v1836 = vunpack.c.h.b16 %v1697
      %v1837 = vunpack.c.l.b16 %v1698
      %v1838 = vunpack.c.h.b16 %v1698
      %v1839 = vunpack.c.l.b16 %v1699
      %v1840 = vunpack.c.h.b16 %v1699
      %v1841 = vunpack.c.l.b16 %v1700
      %v1842 = vunpack.c.h.b16 %v1700
      %v1843 = vunpack.c.l.b16 %v1701
      %v1844 = vunpack.c.h.b16 %v1701
      %v1845 = vunpack.c.l.b16 %v1702
      %v1846 = vunpack.c.h.b16 %v1702
      %v1847 = vunpack.c.l.b16 %v1703
      %v1848 = vunpack.c.h.b16 %v1703
      %v1849 = vunpack.c.l.b16 %v1704
      %v1850 = vunpack.c.h.b16 %v1704
      %v1851 = vunpack.c.l.b16 %v1705
      %v1852 = vunpack.c.h.b16 %v1705
      %v1853 = vunpack.c.l.b16 %v1706
      %v1854 = vunpack.c.h.b16 %v1706
      %v1855 = vunpack.c.l.b16 %v1707
      %v1856 = vunpack.c.h.b16 %v1707
      %v1857 = vunpack.c.l.b16 %v1708
      %v1858 = vunpack.c.h.b16 %v1708
      %v1859 = vunpack.c.l.b16 %v1709
      %v1860 = vunpack.c.h.b16 %v1709
      %v1861 = vunpack.c.l.b16 %v1710
      %v1862 = vunpack.c.h.b16 %v1710
      %v1863 = vunpack.c.l.b16 %v1711
      %v1864 = vunpack.c.h.b16 %v1711
      %v1865 = vunpack.c.l.b16 %v1712
      %v1866 = vunpack.c.h.b16 %v1712
      %v1867 = vunpack.c.l.b16 %v1713
      %v1868 = vunpack.c.h.b16 %v1713
      %v1869 = vunpack.c.l.b16 %v1714
      %v1870 = vunpack.c.h.b16 %v1714
      %v1871 = vunpack.c.l.b16 %v1715
      %v1872 = vunpack.c.h.b16 %v1715
      %v1873 = vunpack.c.l.b16 %v1716
      %v1874 = vunpack.c.h.b16 %v1716
      %v1875 = vunpack.c.l.b16 %v1717
      %v1876 = vunpack.c.h.b16 %v1717
      %v1877 = vunpack.c.l.b16 %v1718
      %v1878 = vunpack.c.h.b16 %v1718
      %v1879 = vunpack.c.l.b16 %v1719
      %v1880 = vunpack.c.h.b16 %v1719
      %v1881 = vunpack.c.l.b16 %v1720
      %v1882 = vunpack.c.h.b16 %v1720
      %v1883 = vunpack.c.l.b16 %v1721
      %v1884 = vunpack.c.h.b16 %v1721
      %v1885 = vunpack.c.l.b16 %v1722
      %v1886 = vunpack.c.h.b16 %v1722
      %v1887 = vunpack.c.l.b16 %v1723
      %v1888 = vunpack.c.h.b16 %v1723
      %v1889 = vunpack.c.l.b16 %v1724
      %v1890 = vunpack.c.h.b16 %v1724
      %v1891 = vunpack.c.l.b16 %v1725
      %v1892 = vunpack.c.h.b16 %v1725
      %v1893 = vunpack.c.l.b16 %v1726
      %v1894 = vunpack.c.h.b16 %v1726
      %v1895 = vunpack.c.l.b16 %v1727
      %v1896 = vunpack.c.h.b16 %v1727
      %v1897 = vunpack.c.l.b16 %v1728
      %v1898 = vunpack.c.h.b16 %v1728
      %v1899 = vunpack.c.l.b16 %v1729
      %v1900 = vunpack.c.h.b16 %v1729
      %v1901 = vunpack.c.l.b16 %v1730
      %v1902 = vunpack.c.h.b16 %v1730
      %v1903 = vunpack.c.l.b16 %v1731
      %v1904 = vunpack.c.h.b16 %v1731
      %v1905 = vunpack.c.l.b16 %v1732
      %v1906 = vunpack.c.h.b16 %v1732
      %v1907 = vunpack.c.l.b16 %v1733
      %v1908 = vunpack.c.h.b16 %v1733
      %v1909 = vunpack.c.l.b16 %v1734
      %v1910 = vunpack.c.h.b16 %v1734
      %v1911 = vunpack.c.l.b16 %v1735
      %v1912 = vunpack.c.h.b16 %v1735
      %v1913 = vunpack.c.l.b16 %v1736
      %v1914 = vunpack.c.h.b16 %v1736
      %v1915 = vunpack.c.l.b16 %v1737
      %v1916 = vunpack.c.h.b16 %v1737
      %v1917 = vunpack.c.l.b16 %v1738
      %v1918 = vunpack.c.h.b16 %v1738
      %v1919 = vunpack.c.l.b16 %v1739
      %v1920 = vunpack.c.h.b16 %v1739
      %v1921 = vunpack.c.l.b16 %v1740
      %v1922 = vunpack.c.h.b16 %v1740
      %v1923 = vunpack.c.l.b16 %v1741
      %v1924 = vunpack.c.h.b16 %v1741
      %v1925 = vunpack.c.l.b16 %v1742
      %v1926 = vunpack.c.h.b16 %v1742
      %v1927 = vunpack.c.l.b16 %v1743
      %v1928 = vunpack.c.h.b16 %v1743
      %v1929 = vunpack.c.l.b16 %v1744
      %v1930 = vunpack.c.h.b16 %v1744
      %v1931 = vunpack.c.l.b16 %v1745
      %v1932 = vunpack.c.h.b16 %v1745
      %v1933 = vunpack.c.l.b16 %v1746
      %v1934 = vunpack.c.h.b16 %v1746
      %v1935 = vunpack.c.l.b16 %v1747
      %v1936 = vunpack.c.h.b16 %v1747
      %v1937 = vunpack.c.l.b16 %v1748
      %v1938 = vunpack.c.h.b16 %v1748
      %v1939 = vunpack.c.l.b16 %v1749
      %v1940 = vunpack.c.h.b16 %v1749
      %v1941 = vunpack.c.l.b16 %v1750
      %v1942 = vunpack.c.h.b16 %v1750
      %v1943 = vpack.c.b16 %v1815, %v1815
      %v1944 = vpack.c.b16 %v1816, %v1816
      %v1945 = vpack.c.b16 %v1817, %v1817
      %v1946 = vpack.c.b16 %v1818, %v1818
      %v1947 = vpack.c.b16 %v1819, %v1819
      %v1948 = vpack.c.b16 %v1820, %v1820
      %v1949 = vpack.c.b16 %v1821, %v1821
      %v1950 = vpack.c.b16 %v1822, %v1822
      %v1951 = vpack.c.b16 %v1823, %v1823
      %v1952 = vpack.c.b16 %v1824, %v1824
      %v1953 = vpack.c.b16 %v1825, %v1825
      %v1954 = vpack.c.b16 %v1826, %v1826
      %v1955 = vpack.c.b16 %v1827, %v1827
      %v1956 = vpack.c.b16 %v1828, %v1828
      %v1957 = vpack.c.b16 %v1829, %v1829
      %v1958 = vpack.c.b16 %v1830, %v1830
      %v1959 = vpack.c.b16 %v1831, %v1831
      %v1960 = vpack.c.b16 %v1832, %v1832
      %v1961 = vpack.c.b16 %v1833, %v1833
      %v1962 = vpack.c.b16 %v1834, %v1834
      %v1963 = vpack.c.b16 %v1835, %v1835
      %v1964 = vpack.c.b16 %v1836, %v1836
      %v1965 = vpack.c.b16 %v1837, %v1837
      %v1966 = vpack.c.b16 %v1838, %v1838
      %v1967 = vpack.c.b16 %v1839, %v1839
      %v1968 = vpack.c.b16 %v1840, %v1840
      %v1969 = vpack.c.b16 %v1841, %v1841
      %v1970 = vpack.c.b16 %v1842, %v1842
      %v1971 = vpack.c.b16 %v1843, %v1843
      %v1972 = vpack.c.b16 %v1844, %v1844
      %v1973 = vpack.c.b16 %v1845, %v1845
      %v1974 = vpack.c.b16 %v1846, %v1846
      %v1975 = vpack.c.b16 %v1847, %v1847
      %v1976 = vpack.c.b16 %v1848, %v1848
      %v1977 = vpack.c.b16 %v1849, %v1849
      %v1978 = vpack.c.b16 %v1850, %v1850
      %v1979 = vpack.c.b16 %v1851, %v1851
      %v1980 = vpack.c.b16 %v1852, %v1852
      %v1981 = vpack.c.b16 %v1853, %v1853
      %v1982 = vpack.c.b16 %v1854, %v1854
      %v1983 = vpack.c.b16 %v1855, %v1855
      %v1984 = vpack.c.b16 %v1856, %v1856
      %v1985 = vpack.c.b16 %v1857, %v1857
      %v1986 = vpack.c.b16 %v1858, %v1858
      %v1987 = vpack.c.b16 %v1859, %v1859
      %v1988 = vpack.c.b16 %v1860, %v1860
      %v1989 = vpack.c.b16 %v1861, %v1861
      %v1990 = vpack.c.b16 %v1862, %v1862
      %v1991 = vpack.c.b16 %v1863, %v1863
      %v1992 = vpack.c.b16 %v1864, %v1864
      %v1993 = vpack.c.b16 %v1865, %v1865
      %v1994 = vpack.c.b16 %v1866, %v1866
      %v1995 = vpack.c.b16 %v1867, %v1867
      %v1996 = vpack.c.b16 %v1868, %v1868
      %v1997 = vpack.c.b16 %v1869, %v1869
      %v1998 = vpack.c.b16 %v1870, %v1870
      %v1999 = vpack.c.b16 %v1871, %v1871
      %v2000 = vpack.c.b16 %v1872, %v1872
      %v2001 = vpack.c.b16 %v1873, %v1873
      %v2002 = vpack.c.b16 %v1874, %v1874
      %v2003 = vpack.c.b16 %v1875, %v1875
      %v2004 = vpack.c.b16 %v1876, %v1876
      %v2005 = vpack.c.b16 %v1877, %v1877
      %v2006 = vpack.c.b16 %v1878, %v1878
      %v2007 = vpack.c.b16 %v1879, %v1879
      %v2008 = vpack.c.b16 %v1880, %v1880
      %v2009 = vpack.c.b16 %v1881, %v1881
      %v2010 = vpack.c.b16 %v1882, %v1882
      %v2011 = vpack.c.b16 %v1883, %v1883
      %v2012 = vpack.c.b16 %v1884, %v1884
      %v2013 = vpack.c.b16 %v1885, %v1885
      %v2014 = vpack.c.b16 %v1886, %v1886
      %v2015 = vpack.c.b16 %v1887, %v1887
      %v2016 = vpack.c.b16 %v1888, %v1888
      %v2017 = vpack.c.b16 %v1889, %v1889
      %v2018 = vpack.c.b16 %v1890, %v1890
      %v2019 = vpack.c.b16 %v1891, %v1891
      %v2020 = vpack.c.b16 %v1892, %v1892
      %v2021 = vpack.c.b16 %v1893, %v1893
      %v2022 = vpack.c.b16 %v1894, %v1894
      %v2023 = vpack.c.b16 %v1895, %v1895
      %v2024 = vpack.c.b16 %v1896, %v1896
      %v2025 = vpack.c.b16 %v1897, %v1897
      %v2026 = vpack.c.b16 %v1898, %v1898
      %v2027 = vpack.c.b16 %v1899, %v1899
      %v2028 = vpack.c.b16 %v1900, %v1900
      %v2029 = vpack.c.b16 %v1901, %v1901
      %v2030 = vpack.c.b16 %v1902, %v1902
      %v2031 = vpack.c.b16 %v1903, %v1903
      %v2032 = vpack.c.b16 %v1904, %v1904
      %v2033 = vpack.c.b16 %v1905, %v1905
      %v2034 = vpack.c.b16 %v1906, %v1906
      %v2035 = vpack.c.b16 %v1907, %v1907
      %v2036 = vpack.c.b16 %v1908, %v1908
      %v2037 = vpack.c.b16 %v1909, %v1909
      %v2038 = vpack.c.b16 %v1910, %v1910
      %v2039 = vpack.c.b16 %v1911, %v1911
      %v2040 = vpack.c.b16 %v1912, %v1912
      %v2041 = vpack.c.b16 %v1913, %v1913
      %v2042 = vpack.c.b16 %v1914, %v1914
      %v2043 = vpack.c.b16 %v1915, %v1915
      %v2044 = vpack.c.b16 %v1916, %v1916
      %v2045 = vpack.c.b16 %v1917, %v1917
      %v2046 = vpack.c.b16 %v1918, %v1918
      %v2047 = vpack.c.b16 %v1919, %v1919
      %v2048 = vpack.c.b16 %v1920, %v1920
      %v2049 = vpack.c.b16 %v1921, %v1921
      %v2050 = vpack.c.b16 %v1922, %v1922
      %v2051 = vpack.c.b16 %v1923, %v1923
      %v2052 = vpack.c.b16 %v1924, %v1924
      %v2053 = vpack.c.b16 %v1925, %v1925
      %v2054 = vpack.c.b16 %v1926, %v1926
      %v2055 = vpack.c.b16 %v1927, %v1927
      %v2056 = vpack.c.b16 %v1928, %v1928
      %v2057 = vpack.c.b16 %v1929, %v1929
      %v2058 = vpack.c.b16 %v1930, %v1930
      %v2059 = vpack.c.b16 %v1931, %v1931
      %v2060 = vpack.c.b16 %v1932, %v1932
      %v2061 = vpack.c.b16 %v1933, %v1933
      %v2062 = vpack.c.b16 %v1934, %v1934
      %v2063 = vpack.c.b16 %v1935, %v1935
      %v2064 = vpack.c.b16 %v1936, %v1936
      %v2065 = vpack.c.b16 %v1937, %v1937
      %v2066 = vpack.c.b16 %v1938, %v1938
      %v2067 = vpack.c.b16 %v1939, %v1939
      %v2068 = vpack.c.b16 %v1940, %v1940
      %v2069 = vpack.c.b16 %v1941, %v1941
      %v2070 = vpack.c.b16 %v1942, %v1942
      %2199 = vst [vmem:[%s172] sm:$0xf] %v1943
      %2200 = vst [vmem:[%s172 + $0x4] sm:$0xf] %v1944
      %2201 = vst [vmem:[%s172 + $0x8] sm:$0xf] %v1945
      %2202 = vst [vmem:[%s172 + $0xc] sm:$0xf] %v1946
      %2203 = vst [vmem:[%s172 + $0x10] sm:$0xf] %v1947
      %2204 = vst [vmem:[%s172 + $0x14] sm:$0xf] %v1948
      %2205 = vst [vmem:[%s172 + $0x18] sm:$0xf] %v1949
      %2206 = vst [vmem:[%s172 + $0x1c] sm:$0xf] %v1950
      %2207 = vst [vmem:[%s172 + $0x20] sm:$0xf] %v1951
      %2208 = vst [vmem:[%s172 + $0x24] sm:$0xf] %v1952
      %2209 = vst [vmem:[%s172 + $0x28] sm:$0xf] %v1953
      %2210 = vst [vmem:[%s172 + $0x2c] sm:$0xf] %v1954
      %2211 = vst [vmem:[%s172 + $0x30] sm:$0xf] %v1955
      %2212 = vst [vmem:[%s172 + $0x34] sm:$0xf] %v1956
      %2213 = vst [vmem:[%s172 + $0x38] sm:$0xf] %v1957
      %2214 = vst [vmem:[%s172 + $0x3c] sm:$0xf] %v1958
      %2215 = vst [vmem:[%s172 + $0x40] sm:$0xf] %v1959
      %2216 = vst [vmem:[%s172 + $0x44] sm:$0xf] %v1960
      %2217 = vst [vmem:[%s172 + $0x48] sm:$0xf] %v1961
      %2218 = vst [vmem:[%s172 + $0x4c] sm:$0xf] %v1962
      %2219 = vst [vmem:[%s172 + $0x50] sm:$0xf] %v1963
      %2220 = vst [vmem:[%s172 + $0x54] sm:$0xf] %v1964
      %2221 = vst [vmem:[%s172 + $0x58] sm:$0xf] %v1965
      %2222 = vst [vmem:[%s172 + $0x5c] sm:$0xf] %v1966
      %2223 = vst [vmem:[%s172 + $0x60] sm:$0xf] %v1967
      %2224 = vst [vmem:[%s172 + $0x64] sm:$0xf] %v1968
      %2225 = vst [vmem:[%s172 + $0x68] sm:$0xf] %v1969
      %2226 = vst [vmem:[%s172 + $0x6c] sm:$0xf] %v1970
      %2227 = vst [vmem:[%s172 + $0x70] sm:$0xf] %v1971
      %2228 = vst [vmem:[%s172 + $0x74] sm:$0xf] %v1972
      %2229 = vst [vmem:[%s172 + $0x78] sm:$0xf] %v1973
      %2230 = vst [vmem:[%s172 + $0x7c] sm:$0xf] %v1974
      %2231 = vst [vmem:[%s172 + $0x80] sm:$0xf] %v1975
      %2232 = vst [vmem:[%s172 + $0x84] sm:$0xf] %v1976
      %2233 = vst [vmem:[%s172 + $0x88] sm:$0xf] %v1977
      %2234 = vst [vmem:[%s172 + $0x8c] sm:$0xf] %v1978
      %2235 = vst [vmem:[%s172 + $0x90] sm:$0xf] %v1979
      %2236 = vst [vmem:[%s172 + $0x94] sm:$0xf] %v1980
      %2237 = vst [vmem:[%s172 + $0x98] sm:$0xf] %v1981
      %2238 = vst [vmem:[%s172 + $0x9c] sm:$0xf] %v1982
      %2239 = vst [vmem:[%s172 + $0xa0] sm:$0xf] %v1983
      %2240 = vst [vmem:[%s172 + $0xa4] sm:$0xf] %v1984
      %2241 = vst [vmem:[%s172 + $0xa8] sm:$0xf] %v1985
      %2242 = vst [vmem:[%s172 + $0xac] sm:$0xf] %v1986
      %2243 = vst [vmem:[%s172 + $0xb0] sm:$0xf] %v1987
      %2244 = vst [vmem:[%s172 + $0xb4] sm:$0xf] %v1988
      %2245 = vst [vmem:[%s172 + $0xb8] sm:$0xf] %v1989
      %2246 = vst [vmem:[%s172 + $0xbc] sm:$0xf] %v1990
      %2247 = vst [vmem:[%s172 + $0xc0] sm:$0xf] %v1991
      %2248 = vst [vmem:[%s172 + $0xc4] sm:$0xf] %v1992
      %2249 = vst [vmem:[%s172 + $0xc8] sm:$0xf] %v1993
      %2250 = vst [vmem:[%s172 + $0xcc] sm:$0xf] %v1994
      %2251 = vst [vmem:[%s172 + $0xd0] sm:$0xf] %v1995
      %2252 = vst [vmem:[%s172 + $0xd4] sm:$0xf] %v1996
      %2253 = vst [vmem:[%s172 + $0xd8] sm:$0xf] %v1997
      %2254 = vst [vmem:[%s172 + $0xdc] sm:$0xf] %v1998
      %2255 = vst [vmem:[%s172 + $0xe0] sm:$0xf] %v1999
      %2256 = vst [vmem:[%s172 + $0xe4] sm:$0xf] %v2000
      %2257 = vst [vmem:[%s172 + $0xe8] sm:$0xf] %v2001
      %2258 = vst [vmem:[%s172 + $0xec] sm:$0xf] %v2002
      %2259 = vst [vmem:[%s172 + $0xf0] sm:$0xf] %v2003
      %2260 = vst [vmem:[%s172 + $0xf4] sm:$0xf] %v2004
      %2261 = vst [vmem:[%s172 + $0xf8] sm:$0xf] %v2005
      %2262 = vst [vmem:[%s172 + $0xfc] sm:$0xf] %v2006
      %2263 = vst [vmem:[%s172 + $0x100] sm:$0xf] %v2007
      %2264 = vst [vmem:[%s172 + $0x104] sm:$0xf] %v2008
      %2265 = vst [vmem:[%s172 + $0x108] sm:$0xf] %v2009
      %2266 = vst [vmem:[%s172 + $0x10c] sm:$0xf] %v2010
      %2267 = vst [vmem:[%s172 + $0x110] sm:$0xf] %v2011
      %2268 = vst [vmem:[%s172 + $0x114] sm:$0xf] %v2012
      %2269 = vst [vmem:[%s172 + $0x118] sm:$0xf] %v2013
      %2270 = vst [vmem:[%s172 + $0x11c] sm:$0xf] %v2014
      %2271 = vst [vmem:[%s172 + $0x120] sm:$0xf] %v2015
      %2272 = vst [vmem:[%s172 + $0x124] sm:$0xf] %v2016
      %2273 = vst [vmem:[%s172 + $0x128] sm:$0xf] %v2017
      %2274 = vst [vmem:[%s172 + $0x12c] sm:$0xf] %v2018
      %2275 = vst [vmem:[%s172 + $0x130] sm:$0xf] %v2019
      %2276 = vst [vmem:[%s172 + $0x134] sm:$0xf] %v2020
      %2277 = vst [vmem:[%s172 + $0x138] sm:$0xf] %v2021
      %2278 = vst [vmem:[%s172 + $0x13c] sm:$0xf] %v2022
      %2279 = vst [vmem:[%s172 + $0x140] sm:$0xf] %v2023
      %2280 = vst [vmem:[%s172 + $0x144] sm:$0xf] %v2024
      %2281 = vst [vmem:[%s172 + $0x148] sm:$0xf] %v2025
      %2282 = vst [vmem:[%s172 + $0x14c] sm:$0xf] %v2026
      %2283 = vst [vmem:[%s172 + $0x150] sm:$0xf] %v2027
      %2284 = vst [vmem:[%s172 + $0x154] sm:$0xf] %v2028
      %2285 = vst [vmem:[%s172 + $0x158] sm:$0xf] %v2029
      %2286 = vst [vmem:[%s172 + $0x15c] sm:$0xf] %v2030
      %2287 = vst [vmem:[%s172 + $0x160] sm:$0xf] %v2031
      %2288 = vst [vmem:[%s172 + $0x164] sm:$0xf] %v2032
      %2289 = vst [vmem:[%s172 + $0x168] sm:$0xf] %v2033
      %2290 = vst [vmem:[%s172 + $0x16c] sm:$0xf] %v2034
      %2291 = vst [vmem:[%s172 + $0x170] sm:$0xf] %v2035
      %2292 = vst [vmem:[%s172 + $0x174] sm:$0xf] %v2036
      %2293 = vst [vmem:[%s172 + $0x178] sm:$0xf] %v2037
      %2294 = vst [vmem:[%s172 + $0x17c] sm:$0xf] %v2038
      %2295 = vst [vmem:[%s172 + $0x180] sm:$0xf] %v2039
      %2296 = vst [vmem:[%s172 + $0x184] sm:$0xf] %v2040
      %2297 = vst [vmem:[%s172 + $0x188] sm:$0xf] %v2041
      %2298 = vst [vmem:[%s172 + $0x18c] sm:$0xf] %v2042
      %2299 = vst [vmem:[%s172 + $0x190] sm:$0xf] %v2043
      %2300 = vst [vmem:[%s172 + $0x194] sm:$0xf] %v2044
      %2301 = vst [vmem:[%s172 + $0x198] sm:$0xf] %v2045
      %2302 = vst [vmem:[%s172 + $0x19c] sm:$0xf] %v2046
      %2303 = vst [vmem:[%s172 + $0x1a0] sm:$0xf] %v2047
      %2304 = vst [vmem:[%s172 + $0x1a4] sm:$0xf] %v2048
      %2305 = vst [vmem:[%s172 + $0x1a8] sm:$0xf] %v2049
      %2306 = vst [vmem:[%s172 + $0x1ac] sm:$0xf] %v2050
      %2307 = vst [vmem:[%s172 + $0x1b0] sm:$0xf] %v2051
      %2308 = vst [vmem:[%s172 + $0x1b4] sm:$0xf] %v2052
      %2309 = vst [vmem:[%s172 + $0x1b8] sm:$0xf] %v2053
      %2310 = vst [vmem:[%s172 + $0x1bc] sm:$0xf] %v2054
      %2311 = vst [vmem:[%s172 + $0x1c0] sm:$0xf] %v2055
      %2312 = vst [vmem:[%s172 + $0x1c4] sm:$0xf] %v2056
      %2313 = vst [vmem:[%s172 + $0x1c8] sm:$0xf] %v2057
      %2314 = vst [vmem:[%s172 + $0x1cc] sm:$0xf] %v2058
      %2315 = vst [vmem:[%s172 + $0x1d0] sm:$0xf] %v2059
      %2316 = vst [vmem:[%s172 + $0x1d4] sm:$0xf] %v2060
      %2317 = vst [vmem:[%s172 + $0x1d8] sm:$0xf] %v2061
      %2318 = vst [vmem:[%s172 + $0x1dc] sm:$0xf] %v2062
      %2319 = vst [vmem:[%s172 + $0x1e0] sm:$0xf] %v2063
      %2320 = vst [vmem:[%s172 + $0x1e4] sm:$0xf] %v2064
      %2321 = vst [vmem:[%s172 + $0x1e8] sm:$0xf] %v2065
      %2322 = vst [vmem:[%s172 + $0x1ec] sm:$0xf] %v2066
      %2323 = vst [vmem:[%s172 + $0x1f0] sm:$0xf] %v2067
      %2324 = vst [vmem:[%s172 + $0x1f4] sm:$0xf] %v2068
      %2325 = vst [vmem:[%s172 + $0x1f8] sm:$0xf] %v2069
      %2326 = vst [vmem:[%s172 + $0x1fc] sm:$0xf] %v2070
      %s2327 = smul.u32 128, %s14
      %p2328 = scmp.lt.s32.totalorder %s2327, 255
      %s2329 = scalar_select %p2328, %s2327, 255
      %s2330 = smul.addr %s2329, 4
      %s2331 = scalar_lea.vmem %s3, %s2330
      // Predicated region
      $region33: #{generator_forward.11} parent=31 // pred_check
        %p2332 = pneg %p100
      $region34: #{generator_forward.11} parent=31 // pred_check_branch
        %2334 = sbr.rel (%p2332) target = $region36
      $region35: #{generator_forward.11} parent=31 // pred_region
        %s2335 = smul.u32 128, %s14
      $region36: #{generator_forward.11} parent=31 // pred_fallthru
        _
    $region32: #{generator_forward.11} parent=5 // pred_fallthru
      _
    %p2336 = scmp.le.s32.totalorder 2, %s9
    // Predicated region
    $region37: #{generator_forward.11} parent=5 // pred_check
      %p2337 = pneg %p2336
    $region38: #{generator_forward.11} parent=5 // pred_check_branch
      %2339 = sbr.rel (%p2337) target = $region40
    $region39: #{generator_forward.11} parent=5 // pred_region
      %s2340 = ssub.s32 %s9, 2
      // Predicated region
      $region41: #{generator_forward.11} parent=39 // pred_check
        %p2341 = pneg %p106
      $region42: #{generator_forward.11} parent=39 // pred_check_branch
        %2343 = sbr.rel (%p2341) target = $region44
      $region43: #{generator_forward.11} parent=39 // pred_region
        %s2344 = smul.u32 128, %s15
        %p2345 = scmp.lt.s32.totalorder %s2344, 255
        %s2346 = scalar_select %p2345, %s2344, 255
        %s2347 = smul.addr %s2346, 4
        %s2348 = scalar_lea.vmem %s3, %s2347
      $region44: #{generator_forward.11} parent=39 // pred_fallthru
        _
    $region40: #{generator_forward.11} parent=5 // pred_fallthru
      _
  $region6: #{generator_forward.11} parent=0 // loop_footer
    %s13 = sadd.s32 1, %s9
  $region7: #{generator_forward.11} parent=0 // loop_footer_branch
    %8 = sbr.rel target = $region3
  $region8: #{generator_forward.11} parent=0 // loop_exit
    _

// kernel: generator_forward.12
$region0: #{generator_forward.12}
  #allocation0 [shape = 'u32[]', space=smem, size = 0x4, offset = 0x4, fixed_abs, tag = 'smem constant byte address 0x4 - core index']
  #allocation1 [shape = 'u32[144,128]{1,0:T(1,128)}', space=vmem, size = 0x12000, scoped, tag = 'internal scratch']
  %s0 = inlined_call_operand.vmem [shape: bf16[7168,128], index: 0, kind: input, shape index: {}]
  %s1 = inlined_call_operand.vmem [shape: bf16[128,128], index: 1, kind: input, shape index: {}]
  %s2 = inlined_call_operand.vmem [shape: f32[1,128], index: 2, kind: input, shape index: {}]
  %s3 = inlined_call_operand.vmem [shape: bf16[7168,128], index: 3, kind: output, shape index: {}]
  %s4 = sld [smem:[#allocation0]]
  $region45: #{generator_forward.12} parent=0
    _
  %s6 = ssub.s32 1, %s4
  %s7 = scalar_select 0, %s6, %s4
  loop: start=0, step=1, limit=9
  $region2: #{generator_forward.12} parent=0 // loop_pre_header
    _
  $region3: #{generator_forward.12} parent=0 // loop_header
    %s9 = sphi 0, %s13
    %p10 = scmp.ge.s32.totalorder %s9, 9
    %s19 = sphi 0, %s21
    %s22 = sphi 0, %s19
    %s23 = sphi 0, %s22
    %s39 = sphi 0, %s23
    %s43 = sphi 0, %s43
    %s45 = sphi 0, %s43
    %s46 = sphi 0, %s45
    %s60 = sphi 0, %s46
    %s64 = sphi 0, %s64
    %s66 = sphi 0, %s64
    %s67 = sphi 0, %s66
    %s81 = sphi 0, %s67
    %s87 = sphi 0, %s89
    %s90 = sphi 0, %s87
    %s91 = sphi 0, %s90
    %s107 = sphi 0, %s91
  $region4: #{generator_forward.12} parent=0 // loop_header_branch
    %12 = sbr.rel (%p10) target = $region8
  $region5: #{generator_forward.12} parent=0 // loop_body
    %s14 = ssub.s32 %s9, 1
    %s15 = ssub.s32 %s9, 2
    %s16 = sadd.s32 %s9, 1
    %s17 = ssub.s32 %s9, %s16
    %p18 = scmp.eq.s32.totalorder %s17, 0
    %s20 = sadd.s32 %s19, 1
    %s21 = scalar_select %p18, %s19, %s20
    %p24 = pneg %p18
    %p25 = scmp.eq.s32.totalorder %s9, 6
    %p26 = por %p24, %p25
    %p27 = scmp.ne.s32.totalorder %s19, %s22
    %p28 = scmp.eq.s32.totalorder %s9, 0
    %p29 = por %p27, %p28
    %p30 = scmp.ne.s32.totalorder %s19, %s22
    %p31 = scmp.eq.s32.totalorder %s14, 6
    %p32 = por %p30, %p31
    %p33 = scmp.ne.s32.totalorder %s22, %s23
    %p34 = scmp.eq.s32.totalorder %s14, 0
    %p35 = por %p33, %p34
    %p36 = scmp.ne.s32.totalorder %s22, %s23
    %p37 = scmp.eq.s32.totalorder %s15, 6
    %p38 = por %p36, %p37
    %p40 = scmp.ne.s32.totalorder %s23, %s39
    %p41 = scmp.eq.s32.totalorder %s15, 0
    %p42 = por %p40, %p41
    %s44 = sadd.s32 %s43, 1
    %p47 = scmp.eq.s32.totalorder %s9, 6
    %p48 = scmp.ne.s32.totalorder %s43, %s45
    %p49 = scmp.eq.s32.totalorder %s9, 0
    %p50 = por %p48, %p49
    %p51 = scmp.ne.s32.totalorder %s43, %s45
    %p52 = scmp.eq.s32.totalorder %s14, 6
    %p53 = por %p51, %p52
    %p54 = scmp.ne.s32.totalorder %s45, %s46
    %p55 = scmp.eq.s32.totalorder %s14, 0
    %p56 = por %p54, %p55
    %p57 = scmp.ne.s32.totalorder %s45, %s46
    %p58 = scmp.eq.s32.totalorder %s15, 6
    %p59 = por %p57, %p58
    %p61 = scmp.ne.s32.totalorder %s46, %s60
    %p62 = scmp.eq.s32.totalorder %s15, 0
    %p63 = por %p61, %p62
    %s65 = sadd.s32 %s64, 1
    %p68 = scmp.eq.s32.totalorder %s9, 6
    %p69 = scmp.ne.s32.totalorder %s64, %s66
    %p70 = scmp.eq.s32.totalorder %s9, 0
    %p71 = por %p69, %p70
    %p72 = scmp.ne.s32.totalorder %s64, %s66
    %p73 = scmp.eq.s32.totalorder %s14, 6
    %p74 = por %p72, %p73
    %p75 = scmp.ne.s32.totalorder %s66, %s67
    %p76 = scmp.eq.s32.totalorder %s14, 0
    %p77 = por %p75, %p76
    %p78 = scmp.ne.s32.totalorder %s66, %s67
    %p79 = scmp.eq.s32.totalorder %s15, 6
    %p80 = por %p78, %p79
    %p82 = scmp.ne.s32.totalorder %s67, %s81
    %p83 = scmp.eq.s32.totalorder %s15, 0
    %p84 = por %p82, %p83
    %s85 = ssub.s32 %s9, %s16
    %p86 = scmp.eq.s32.totalorder %s85, 0
    %s88 = sadd.s32 %s87, 1
    %s89 = scalar_select %p86, %s87, %s88
    %p92 = pneg %p86
    %p93 = scmp.eq.s32.totalorder %s9, 6
    %p94 = por %p92, %p93
    %p95 = scmp.ne.s32.totalorder %s87, %s90
    %p96 = scmp.eq.s32.totalorder %s9, 0
    %p97 = por %p95, %p96
    %p98 = scmp.ne.s32.totalorder %s87, %s90
    %p99 = scmp.eq.s32.totalorder %s14, 6
    %p100 = por %p98, %p99
    %p101 = scmp.ne.s32.totalorder %s90, %s91
    %p102 = scmp.eq.s32.totalorder %s14, 0
    %p103 = por %p101, %p102
    %p104 = scmp.ne.s32.totalorder %s90, %s91
    %p105 = scmp.eq.s32.totalorder %s15, 6
    %p106 = por %p104, %p105
    %p108 = scmp.ne.s32.totalorder %s91, %s107
    %p109 = scmp.eq.s32.totalorder %s15, 0
    %p110 = por %p108, %p109
    %p111 = scmp.le.s32.totalorder 1, %s9
    %p112 = scmp.lt.s32.totalorder %s9, 8
    %p113 = pnand %p111, %p112
    %p114 = pneg %p113
    // Predicated region
    $region9: #{generator_forward.12} parent=5 // pred_check
      _
    $region10: #{generator_forward.12} parent=5 // pred_check_branch
      %116 = sbr.rel (%p113) target = $region12
    $region11: #{generator_forward.12} parent=5 // pred_region
      %s117 = ssub.s32 %s9, 1
      // Predicated region
      $region13: #{generator_forward.12} parent=11 // pred_check
        %p118 = pneg %p56
      $region14: #{generator_forward.12} parent=11 // pred_check_branch
        %120 = sbr.rel (%p118) target = $region16
      $region15: #{generator_forward.12} parent=11 // pred_region
        _
      $region16: #{generator_forward.12} parent=11 // pred_fallthru
        _
      // Predicated region
      $region17: #{generator_forward.12} parent=11 // pred_check
        %p121 = pneg %p77
      $region18: #{generator_forward.12} parent=11 // pred_check_branch
        %123 = sbr.rel (%p121) target = $region20
      $region19: #{generator_forward.12} parent=11 // pred_region
        _
      $region20: #{generator_forward.12} parent=11 // pred_fallthru
        _
    $region12: #{generator_forward.12} parent=5 // pred_fallthru
      _
    %p124 = scmp.lt.s32.totalorder %s9, 7
    // Predicated region
    $region21: #{generator_forward.12} parent=5 // pred_check
      %p125 = pneg %p124
    $region22: #{generator_forward.12} parent=5 // pred_check_branch
      %127 = sbr.rel (%p125) target = $region24
    $region23: #{generator_forward.12} parent=5 // pred_region
      // Predicated region
      $region25: #{generator_forward.12} parent=23 // pred_check
        %p128 = pneg %p29
      $region26: #{generator_forward.12} parent=23 // pred_check_branch
        %130 = sbr.rel (%p128) target = $region28
      $region27: #{generator_forward.12} parent=23 // pred_region
        %s131 = smul.u32 128, %s9
        %p132 = scmp.lt.s32.totalorder %s131, 895
        %s133 = scalar_select %p132, %s131, 895
        %s134 = smul.addr %s133, 4
        %s135 = scalar_lea.vmem %s0, %s134
        %s136 = smul.u32 128, %s9
      $region28: #{generator_forward.12} parent=23 // pred_fallthru
        _
    $region24: #{generator_forward.12} parent=5 // pred_fallthru
      _
    %p137 = scmp.le.s32.totalorder 1, %s9
    %p138 = scmp.lt.s32.totalorder %s9, 8
    %p139 = pnand %p137, %p138
    %p140 = pneg %p139
    // Predicated region
    $region29: #{generator_forward.12} parent=5 // pred_check
      _
    $region30: #{generator_forward.12} parent=5 // pred_check_branch
      %142 = sbr.rel (%p139) target = $region32
    $region31: #{generator_forward.12} parent=5 // pred_region
      %s143 = ssub.s32 %s9, 1
      %s144 = smul.u32 128, %s14
      %p145 = scmp.lt.s32.totalorder %s144, 895
      %s146 = scalar_select %p145, %s144, 895
      %s147 = smul.addr %s146, 4
      %s148 = scalar_lea.vmem %s0, %s147
      %p149 = pneg %p35
      %p150 = pneg %p32
      %p151 = pneg %p56
      %p152 = pneg %p53
      %p153 = pneg %p77
      %p154 = pneg %p74
      %p155 = pneg %p103
      %p156 = pneg %p100
      %s157 = smul.u32 128, %s14
      %p158 = scmp.lt.s32.totalorder %s157, 895
      %s159 = scalar_select %p158, %s157, 895
      %s160 = smul.addr %s159, 4
      %s161 = scalar_lea.vmem %s3, %s160
      %s162 = smul.u32 128, %s14
      %p163 = scmp.lt.s32.totalorder %s162, 895
      %s164 = scalar_select %p163, %s162, 895
      %s165 = smul.addr %s164, 4
      %s166 = scalar_lea.vmem %s0, %s165
      %s167 = smul.u32 128, %s14
      %s168 = smul.u32 128, %s14
      %p169 = scmp.lt.s32.totalorder %s168, 895
      %s170 = scalar_select %p169, %s168, 895
      %s171 = smul.addr %s170, 4
      %s172 = scalar_lea.vmem %s3, %s171
      %s173 = smul.u32 128, %s14
      %v175 = vld [vmem:[%s166] sm:$0xf]
      %v176 = vld [vmem:[%s166 + $0x4] sm:$0xf]
      %v177 = vld [vmem:[%s166 + $0x8] sm:$0xf]
      %v178 = vld [vmem:[%s166 + $0xc] sm:$0xf]
      %v179 = vld [vmem:[%s166 + $0x10] sm:$0xf]
      %v180 = vld [vmem:[%s166 + $0x14] sm:$0xf]
      %v181 = vld [vmem:[%s166 + $0x18] sm:$0xf]
      %v182 = vld [vmem:[%s166 + $0x1c] sm:$0xf]
      %v183 = vld [vmem:[%s166 + $0x20] sm:$0xf]
      %v184 = vld [vmem:[%s166 + $0x24] sm:$0xf]
      %v185 = vld [vmem:[%s166 + $0x28] sm:$0xf]
      %v186 = vld [vmem:[%s166 + $0x2c] sm:$0xf]
      %v187 = vld [vmem:[%s166 + $0x30] sm:$0xf]
      %v188 = vld [vmem:[%s166 + $0x34] sm:$0xf]
      %v189 = vld [vmem:[%s166 + $0x38] sm:$0xf]
      %v190 = vld [vmem:[%s166 + $0x3c] sm:$0xf]
      %v191 = vld [vmem:[%s166 + $0x40] sm:$0xf]
      %v192 = vld [vmem:[%s166 + $0x44] sm:$0xf]
      %v193 = vld [vmem:[%s166 + $0x48] sm:$0xf]
      %v194 = vld [vmem:[%s166 + $0x4c] sm:$0xf]
      %v195 = vld [vmem:[%s166 + $0x50] sm:$0xf]
      %v196 = vld [vmem:[%s166 + $0x54] sm:$0xf]
      %v197 = vld [vmem:[%s166 + $0x58] sm:$0xf]
      %v198 = vld [vmem:[%s166 + $0x5c] sm:$0xf]
      %v199 = vld [vmem:[%s166 + $0x60] sm:$0xf]
      %v200 = vld [vmem:[%s166 + $0x64] sm:$0xf]
      %v201 = vld [vmem:[%s166 + $0x68] sm:$0xf]
      %v202 = vld [vmem:[%s166 + $0x6c] sm:$0xf]
      %v203 = vld [vmem:[%s166 + $0x70] sm:$0xf]
      %v204 = vld [vmem:[%s166 + $0x74] sm:$0xf]
      %v205 = vld [vmem:[%s166 + $0x78] sm:$0xf]
      %v206 = vld [vmem:[%s166 + $0x7c] sm:$0xf]
      %v207 = vld [vmem:[%s166 + $0x80] sm:$0xf]
      %v208 = vld [vmem:[%s166 + $0x84] sm:$0xf]
      %v209 = vld [vmem:[%s166 + $0x88] sm:$0xf]
      %v210 = vld [vmem:[%s166 + $0x8c] sm:$0xf]
      %v211 = vld [vmem:[%s166 + $0x90] sm:$0xf]
      %v212 = vld [vmem:[%s166 + $0x94] sm:$0xf]
      %v213 = vld [vmem:[%s166 + $0x98] sm:$0xf]
      %v214 = vld [vmem:[%s166 + $0x9c] sm:$0xf]
      %v215 = vld [vmem:[%s166 + $0xa0] sm:$0xf]
      %v216 = vld [vmem:[%s166 + $0xa4] sm:$0xf]
      %v217 = vld [vmem:[%s166 + $0xa8] sm:$0xf]
      %v218 = vld [vmem:[%s166 + $0xac] sm:$0xf]
      %v219 = vld [vmem:[%s166 + $0xb0] sm:$0xf]
      %v220 = vld [vmem:[%s166 + $0xb4] sm:$0xf]
      %v221 = vld [vmem:[%s166 + $0xb8] sm:$0xf]
      %v222 = vld [vmem:[%s166 + $0xbc] sm:$0xf]
      %v223 = vld [vmem:[%s166 + $0xc0] sm:$0xf]
      %v224 = vld [vmem:[%s166 + $0xc4] sm:$0xf]
      %v225 = vld [vmem:[%s166 + $0xc8] sm:$0xf]
      %v226 = vld [vmem:[%s166 + $0xcc] sm:$0xf]
      %v227 = vld [vmem:[%s166 + $0xd0] sm:$0xf]
      %v228 = vld [vmem:[%s166 + $0xd4] sm:$0xf]
      %v229 = vld [vmem:[%s166 + $0xd8] sm:$0xf]
      %v230 = vld [vmem:[%s166 + $0xdc] sm:$0xf]
      %v231 = vld [vmem:[%s166 + $0xe0] sm:$0xf]
      %v232 = vld [vmem:[%s166 + $0xe4] sm:$0xf]
      %v233 = vld [vmem:[%s166 + $0xe8] sm:$0xf]
      %v234 = vld [vmem:[%s166 + $0xec] sm:$0xf]
      %v235 = vld [vmem:[%s166 + $0xf0] sm:$0xf]
      %v236 = vld [vmem:[%s166 + $0xf4] sm:$0xf]
      %v237 = vld [vmem:[%s166 + $0xf8] sm:$0xf]
      %v238 = vld [vmem:[%s166 + $0xfc] sm:$0xf]
      %v239 = vld [vmem:[%s166 + $0x100] sm:$0xf]
      %v240 = vld [vmem:[%s166 + $0x104] sm:$0xf]
      %v241 = vld [vmem:[%s166 + $0x108] sm:$0xf]
      %v242 = vld [vmem:[%s166 + $0x10c] sm:$0xf]
      %v243 = vld [vmem:[%s166 + $0x110] sm:$0xf]
      %v244 = vld [vmem:[%s166 + $0x114] sm:$0xf]
      %v245 = vld [vmem:[%s166 + $0x118] sm:$0xf]
      %v246 = vld [vmem:[%s166 + $0x11c] sm:$0xf]
      %v247 = vld [vmem:[%s166 + $0x120] sm:$0xf]
      %v248 = vld [vmem:[%s166 + $0x124] sm:$0xf]
      %v249 = vld [vmem:[%s166 + $0x128] sm:$0xf]
      %v250 = vld [vmem:[%s166 + $0x12c] sm:$0xf]
      %v251 = vld [vmem:[%s166 + $0x130] sm:$0xf]
      %v252 = vld [vmem:[%s166 + $0x134] sm:$0xf]
      %v253 = vld [vmem:[%s166 + $0x138] sm:$0xf]
      %v254 = vld [vmem:[%s166 + $0x13c] sm:$0xf]
      %v255 = vld [vmem:[%s166 + $0x140] sm:$0xf]
      %v256 = vld [vmem:[%s166 + $0x144] sm:$0xf]
      %v257 = vld [vmem:[%s166 + $0x148] sm:$0xf]
      %v258 = vld [vmem:[%s166 + $0x14c] sm:$0xf]
      %v259 = vld [vmem:[%s166 + $0x150] sm:$0xf]
      %v260 = vld [vmem:[%s166 + $0x154] sm:$0xf]
      %v261 = vld [vmem:[%s166 + $0x158] sm:$0xf]
      %v262 = vld [vmem:[%s166 + $0x15c] sm:$0xf]
      %v263 = vld [vmem:[%s166 + $0x160] sm:$0xf]
      %v264 = vld [vmem:[%s166 + $0x164] sm:$0xf]
      %v265 = vld [vmem:[%s166 + $0x168] sm:$0xf]
      %v266 = vld [vmem:[%s166 + $0x16c] sm:$0xf]
      %v267 = vld [vmem:[%s166 + $0x170] sm:$0xf]
      %v268 = vld [vmem:[%s166 + $0x174] sm:$0xf]
      %v269 = vld [vmem:[%s166 + $0x178] sm:$0xf]
      %v270 = vld [vmem:[%s166 + $0x17c] sm:$0xf]
      %v271 = vld [vmem:[%s166 + $0x180] sm:$0xf]
      %v272 = vld [vmem:[%s166 + $0x184] sm:$0xf]
      %v273 = vld [vmem:[%s166 + $0x188] sm:$0xf]
      %v274 = vld [vmem:[%s166 + $0x18c] sm:$0xf]
      %v275 = vld [vmem:[%s166 + $0x190] sm:$0xf]
      %v276 = vld [vmem:[%s166 + $0x194] sm:$0xf]
      %v277 = vld [vmem:[%s166 + $0x198] sm:$0xf]
      %v278 = vld [vmem:[%s166 + $0x19c] sm:$0xf]
      %v279 = vld [vmem:[%s166 + $0x1a0] sm:$0xf]
      %v280 = vld [vmem:[%s166 + $0x1a4] sm:$0xf]
      %v281 = vld [vmem:[%s166 + $0x1a8] sm:$0xf]
      %v282 = vld [vmem:[%s166 + $0x1ac] sm:$0xf]
      %v283 = vld [vmem:[%s166 + $0x1b0] sm:$0xf]
      %v284 = vld [vmem:[%s166 + $0x1b4] sm:$0xf]
      %v285 = vld [vmem:[%s166 + $0x1b8] sm:$0xf]
      %v286 = vld [vmem:[%s166 + $0x1bc] sm:$0xf]
      %v287 = vld [vmem:[%s166 + $0x1c0] sm:$0xf]
      %v288 = vld [vmem:[%s166 + $0x1c4] sm:$0xf]
      %v289 = vld [vmem:[%s166 + $0x1c8] sm:$0xf]
      %v290 = vld [vmem:[%s166 + $0x1cc] sm:$0xf]
      %v291 = vld [vmem:[%s166 + $0x1d0] sm:$0xf]
      %v292 = vld [vmem:[%s166 + $0x1d4] sm:$0xf]
      %v293 = vld [vmem:[%s166 + $0x1d8] sm:$0xf]
      %v294 = vld [vmem:[%s166 + $0x1dc] sm:$0xf]
      %v295 = vld [vmem:[%s166 + $0x1e0] sm:$0xf]
      %v296 = vld [vmem:[%s166 + $0x1e4] sm:$0xf]
      %v297 = vld [vmem:[%s166 + $0x1e8] sm:$0xf]
      %v298 = vld [vmem:[%s166 + $0x1ec] sm:$0xf]
      %v299 = vld [vmem:[%s166 + $0x1f0] sm:$0xf]
      %v300 = vld [vmem:[%s166 + $0x1f4] sm:$0xf]
      %v301 = vld [vmem:[%s166 + $0x1f8] sm:$0xf]
      %v302 = vld [vmem:[%s166 + $0x1fc] sm:$0xf]
      %v303 = vld [vmem:[%s1] sm:$0xf]
      %v304 = vld [vmem:[%s1 + $0x4] sm:$0xf]
      %v305 = vld [vmem:[%s1 + $0x8] sm:$0xf]
      %v306 = vld [vmem:[%s1 + $0xc] sm:$0xf]
      %v307 = vld [vmem:[%s1 + $0x10] sm:$0xf]
      %v308 = vld [vmem:[%s1 + $0x14] sm:$0xf]
      %v309 = vld [vmem:[%s1 + $0x18] sm:$0xf]
      %v310 = vld [vmem:[%s1 + $0x1c] sm:$0xf]
      %v311 = vld [vmem:[%s1 + $0x20] sm:$0xf]
      %v312 = vld [vmem:[%s1 + $0x24] sm:$0xf]
      %v313 = vld [vmem:[%s1 + $0x28] sm:$0xf]
      %v314 = vld [vmem:[%s1 + $0x2c] sm:$0xf]
      %v315 = vld [vmem:[%s1 + $0x30] sm:$0xf]
      %v316 = vld [vmem:[%s1 + $0x34] sm:$0xf]
      %v317 = vld [vmem:[%s1 + $0x38] sm:$0xf]
      %v318 = vld [vmem:[%s1 + $0x3c] sm:$0xf]
      %v319 = vld [vmem:[%s2] sm:$0x1]
      %v321 = vlaneseq
      %v322 = vshrl.u32 %v321, 7
      %v323 = vsub.s32 0, %v322
      %v324 = vrot.slane %v319, %v323
      %v454 = vunpack.c.l.b16 %v175
      %v455 = vunpack.c.l.b16 %v176
      %v456 = vunpack.c.l.b16 %v177
      %v457 = vunpack.c.l.b16 %v178
      %v458 = vunpack.c.l.b16 %v179
      %v459 = vunpack.c.l.b16 %v180
      %v460 = vunpack.c.l.b16 %v181
      %v461 = vunpack.c.l.b16 %v182
      %v462 = vunpack.c.l.b16 %v183
      %v463 = vunpack.c.l.b16 %v184
      %v464 = vunpack.c.l.b16 %v185
      %v465 = vunpack.c.l.b16 %v186
      %v466 = vunpack.c.l.b16 %v187
      %v467 = vunpack.c.l.b16 %v188
      %v468 = vunpack.c.l.b16 %v189
      %v469 = vunpack.c.l.b16 %v190
      %v470 = vunpack.c.l.b16 %v191
      %v471 = vunpack.c.l.b16 %v192
      %v472 = vunpack.c.l.b16 %v193
      %v473 = vunpack.c.l.b16 %v194
      %v474 = vunpack.c.l.b16 %v195
      %v475 = vunpack.c.l.b16 %v196
      %v476 = vunpack.c.l.b16 %v197
      %v477 = vunpack.c.l.b16 %v198
      %v478 = vunpack.c.l.b16 %v199
      %v479 = vunpack.c.l.b16 %v200
      %v480 = vunpack.c.l.b16 %v201
      %v481 = vunpack.c.l.b16 %v202
      %v482 = vunpack.c.l.b16 %v203
      %v483 = vunpack.c.l.b16 %v204
      %v484 = vunpack.c.l.b16 %v205
      %v485 = vunpack.c.l.b16 %v206
      %v486 = vunpack.c.l.b16 %v207
      %v487 = vunpack.c.l.b16 %v208
      %v488 = vunpack.c.l.b16 %v209
      %v489 = vunpack.c.l.b16 %v210
      %v490 = vunpack.c.l.b16 %v211
      %v491 = vunpack.c.l.b16 %v212
      %v492 = vunpack.c.l.b16 %v213
      %v493 = vunpack.c.l.b16 %v214
      %v494 = vunpack.c.l.b16 %v215
      %v495 = vunpack.c.l.b16 %v216
      %v496 = vunpack.c.l.b16 %v217
      %v497 = vunpack.c.l.b16 %v218
      %v498 = vunpack.c.l.b16 %v219
      %v499 = vunpack.c.l.b16 %v220
      %v500 = vunpack.c.l.b16 %v221
      %v501 = vunpack.c.l.b16 %v222
      %v502 = vunpack.c.l.b16 %v223
      %v503 = vunpack.c.l.b16 %v224
      %v504 = vunpack.c.l.b16 %v225
      %v505 = vunpack.c.l.b16 %v226
      %v506 = vunpack.c.l.b16 %v227
      %v507 = vunpack.c.l.b16 %v228
      %v508 = vunpack.c.l.b16 %v229
      %v509 = vunpack.c.l.b16 %v230
      %v510 = vunpack.c.l.b16 %v231
      %v511 = vunpack.c.l.b16 %v232
      %v512 = vunpack.c.l.b16 %v233
      %v513 = vunpack.c.l.b16 %v234
      %v514 = vunpack.c.l.b16 %v235
      %v515 = vunpack.c.l.b16 %v236
      %v516 = vunpack.c.l.b16 %v237
      %v517 = vunpack.c.l.b16 %v238
      %v518 = vunpack.c.l.b16 %v239
      %v519 = vunpack.c.l.b16 %v240
      %v520 = vunpack.c.l.b16 %v241
      %v521 = vunpack.c.l.b16 %v242
      %v522 = vunpack.c.l.b16 %v243
      %v523 = vunpack.c.l.b16 %v244
      %v524 = vunpack.c.l.b16 %v245
      %v525 = vunpack.c.l.b16 %v246
      %v526 = vunpack.c.l.b16 %v247
      %v527 = vunpack.c.l.b16 %v248
      %v528 = vunpack.c.l.b16 %v249
      %v529 = vunpack.c.l.b16 %v250
      %v530 = vunpack.c.l.b16 %v251
      %v531 = vunpack.c.l.b16 %v252
      %v532 = vunpack.c.l.b16 %v253
      %v533 = vunpack.c.l.b16 %v254
      %v534 = vunpack.c.l.b16 %v255
      %v535 = vunpack.c.l.b16 %v256
      %v536 = vunpack.c.l.b16 %v257
      %v537 = vunpack.c.l.b16 %v258
      %v538 = vunpack.c.l.b16 %v259
      %v539 = vunpack.c.l.b16 %v260
      %v540 = vunpack.c.l.b16 %v261
      %v541 = vunpack.c.l.b16 %v262
      %v542 = vunpack.c.l.b16 %v263
      %v543 = vunpack.c.l.b16 %v264
      %v544 = vunpack.c.l.b16 %v265
      %v545 = vunpack.c.l.b16 %v266
      %v546 = vunpack.c.l.b16 %v267
      %v547 = vunpack.c.l.b16 %v268
      %v548 = vunpack.c.l.b16 %v269
      %v549 = vunpack.c.l.b16 %v270
      %v550 = vunpack.c.l.b16 %v271
      %v551 = vunpack.c.l.b16 %v272
      %v552 = vunpack.c.l.b16 %v273
      %v553 = vunpack.c.l.b16 %v274
      %v554 = vunpack.c.l.b16 %v275
      %v555 = vunpack.c.l.b16 %v276
      %v556 = vunpack.c.l.b16 %v277
      %v557 = vunpack.c.l.b16 %v278
      %v558 = vunpack.c.l.b16 %v279
      %v559 = vunpack.c.l.b16 %v280
      %v560 = vunpack.c.l.b16 %v281
      %v561 = vunpack.c.l.b16 %v282
      %v562 = vunpack.c.l.b16 %v283
      %v563 = vunpack.c.l.b16 %v284
      %v564 = vunpack.c.l.b16 %v285
      %v565 = vunpack.c.l.b16 %v286
      %v566 = vunpack.c.l.b16 %v287
      %v567 = vunpack.c.l.b16 %v288
      %v568 = vunpack.c.l.b16 %v289
      %v569 = vunpack.c.l.b16 %v290
      %v570 = vunpack.c.l.b16 %v291
      %v571 = vunpack.c.l.b16 %v292
      %v572 = vunpack.c.l.b16 %v293
      %v573 = vunpack.c.l.b16 %v294
      %v574 = vunpack.c.l.b16 %v295
      %v575 = vunpack.c.l.b16 %v296
      %v576 = vunpack.c.l.b16 %v297
      %v577 = vunpack.c.l.b16 %v298
      %v578 = vunpack.c.l.b16 %v299
      %v579 = vunpack.c.l.b16 %v300
      %v580 = vunpack.c.l.b16 %v301
      %v581 = vunpack.c.l.b16 %v302
      %v582 = vpack.c.b16 %v455, %v454
      %v583 = vpack.c.b16 %v457, %v456
      %v584 = vpack.c.b16 %v459, %v458
      %v585 = vpack.c.b16 %v461, %v460
      %v586 = vpack.c.b16 %v463, %v462
      %v587 = vpack.c.b16 %v465, %v464
      %v588 = vpack.c.b16 %v467, %v466
      %v589 = vpack.c.b16 %v469, %v468
      %v590 = vpack.c.b16 %v471, %v470
      %v591 = vpack.c.b16 %v473, %v472
      %v592 = vpack.c.b16 %v475, %v474
      %v593 = vpack.c.b16 %v477, %v476
      %v594 = vpack.c.b16 %v479, %v478
      %v595 = vpack.c.b16 %v481, %v480
      %v596 = vpack.c.b16 %v483, %v482
      %v597 = vpack.c.b16 %v485, %v484
      %v598 = vpack.c.b16 %v487, %v486
      %v599 = vpack.c.b16 %v489, %v488
      %v600 = vpack.c.b16 %v491, %v490
      %v601 = vpack.c.b16 %v493, %v492
      %v602 = vpack.c.b16 %v495, %v494
      %v603 = vpack.c.b16 %v497, %v496
      %v604 = vpack.c.b16 %v499, %v498
      %v605 = vpack.c.b16 %v501, %v500
      %v606 = vpack.c.b16 %v503, %v502
      %v607 = vpack.c.b16 %v505, %v504
      %v608 = vpack.c.b16 %v507, %v506
      %v609 = vpack.c.b16 %v509, %v508
      %v610 = vpack.c.b16 %v511, %v510
      %v611 = vpack.c.b16 %v513, %v512
      %v612 = vpack.c.b16 %v515, %v514
      %v613 = vpack.c.b16 %v517, %v516
      %v614 = vpack.c.b16 %v519, %v518
      %v615 = vpack.c.b16 %v521, %v520
      %v616 = vpack.c.b16 %v523, %v522
      %v617 = vpack.c.b16 %v525, %v524
      %v618 = vpack.c.b16 %v527, %v526
      %v619 = vpack.c.b16 %v529, %v528
      %v620 = vpack.c.b16 %v531, %v530
      %v621 = vpack.c.b16 %v533, %v532
      %v622 = vpack.c.b16 %v535, %v534
      %v623 = vpack.c.b16 %v537, %v536
      %v624 = vpack.c.b16 %v539, %v538
      %v625 = vpack.c.b16 %v541, %v540
      %v626 = vpack.c.b16 %v543, %v542
      %v627 = vpack.c.b16 %v545, %v544
      %v628 = vpack.c.b16 %v547, %v546
      %v629 = vpack.c.b16 %v549, %v548
      %v630 = vpack.c.b16 %v551, %v550
      %v631 = vpack.c.b16 %v553, %v552
      %v632 = vpack.c.b16 %v555, %v554
      %v633 = vpack.c.b16 %v557, %v556
      %v634 = vpack.c.b16 %v559, %v558
      %v635 = vpack.c.b16 %v561, %v560
      %v636 = vpack.c.b16 %v563, %v562
      %v637 = vpack.c.b16 %v565, %v564
      %v638 = vpack.c.b16 %v567, %v566
      %v639 = vpack.c.b16 %v569, %v568
      %v640 = vpack.c.b16 %v571, %v570
      %v641 = vpack.c.b16 %v573, %v572
      %v642 = vpack.c.b16 %v575, %v574
      %v643 = vpack.c.b16 %v577, %v576
      %v644 = vpack.c.b16 %v579, %v578
      %v645 = vpack.c.b16 %v581, %v580
      %v726 = vunpack.c.l.b16 %v303
      %v727 = vunpack.c.l.b16 %v304
      %v728 = vunpack.c.l.b16 %v305
      %v729 = vunpack.c.l.b16 %v306
      %v730 = vunpack.c.l.b16 %v307
      %v731 = vunpack.c.l.b16 %v308
      %v732 = vunpack.c.l.b16 %v309
      %v733 = vunpack.c.l.b16 %v310
      %v734 = vunpack.c.l.b16 %v311
      %v735 = vunpack.c.l.b16 %v312
      %v736 = vunpack.c.l.b16 %v313
      %v737 = vunpack.c.l.b16 %v314
      %v738 = vunpack.c.l.b16 %v315
      %v739 = vunpack.c.l.b16 %v316
      %v740 = vunpack.c.l.b16 %v317
      %v741 = vunpack.c.l.b16 %v318
      %v742 = vpack.c.b16 %v727, %v726
      %v743 = vpack.c.b16 %v729, %v728
      %v744 = vpack.c.b16 %v731, %v730
      %v745 = vpack.c.b16 %v733, %v732
      %v746 = vpack.c.b16 %v735, %v734
      %v747 = vpack.c.b16 %v737, %v736
      %v748 = vpack.c.b16 %v739, %v738
      %v749 = vpack.c.b16 %v741, %v740
      %758 = vmatprep.subr.bf16.mxu0 0
      %759 = vmatpush1.bf16.msra.mxu0 %v742
      %760 = vmatprep.subr.bf16.mxu0 0
      %761 = vmatpush1.bf16.msra.mxu0 %v743
      %762 = vmatprep.subr.bf16.mxu0 0
      %763 = vmatpush1.bf16.msra.mxu0 %v744
      %764 = vmatprep.subr.bf16.mxu0 0
      %765 = vmatpush1.bf16.msra.mxu0 %v745
      %766 = vmatprep.subr.bf16.mxu0 0
      %767 = vmatpush1.bf16.msra.mxu0 %v746
      %768 = vmatprep.subr.bf16.mxu0 0
      %769 = vmatpush1.bf16.msra.mxu0 %v747
      %770 = vmatprep.subr.bf16.mxu0 0
      %771 = vmatpush1.bf16.msra.mxu0 %v748
      %772 = vmatprep.subr.bf16.mxu0 0
      %773 = vmatpush1.bf16.msra.mxu0 %v749
      %774 = vmatprep.subr.bf16.mxu0 0
      %775 = vmatpush1.bf16.msra.mxu0 0
      %776 = vmatprep.subr.bf16.mxu0 0
      %777 = vmatpush1.bf16.msra.mxu0 0
      %778 = vmatprep.subr.bf16.mxu0 0
      %779 = vmatpush1.bf16.msra.mxu0 0
      %780 = vmatprep.subr.bf16.mxu0 0
      %781 = vmatpush1.bf16.msra.mxu0 0
      %782 = vmatprep.subr.bf16.mxu0 0
      %783 = vmatpush1.bf16.msra.mxu0 0
      %784 = vmatprep.subr.bf16.mxu0 0
      %785 = vmatpush1.bf16.msra.mxu0 0
      %786 = vmatprep.subr.bf16.mxu0 0
      %787 = vmatpush1.bf16.msra.mxu0 0
      %788 = vmatprep.subr.bf16.mxu0 0
      %789 = vmatpush1.bf16.msra.mxu0 0
      %790 = vmatprep.mubr.bf16.mxu0 0
      %791 = vmatmul.mubr.bf16.gmra.mrb[0].mxu0 %v582
      %v792 = vpop.f32.mrb[0].mxu0
      %v793 = vadd.f32 %v324, %v792
      %v794 = vpop.f32.mrb[0].mxu0
      %v795 = vpop.f32.mrb[0].mxu0
      %v796 = vadd.f32 %v324, %v795
      %v797 = vpop.f32.mrb[0].mxu0
      %798 = vmatprep.mubr.bf16.mxu0 0
      %799 = vmatmul.mubr.bf16.gmra.mrb[0].mxu0 %v583
      %v800 = vpop.f32.mrb[0].mxu0
      %v801 = vadd.f32 %v324, %v800
      %v802 = vpop.f32.mrb[0].mxu0
      %v803 = vpop.f32.mrb[0].mxu0
      %v804 = vadd.f32 %v324, %v803
      %v805 = vpop.f32.mrb[0].mxu0
      %806 = vmatprep.mubr.bf16.mxu0 0
      %807 = vmatmul.mubr.bf16.gmra.mrb[0].mxu0 %v584
      %v808 = vpop.f32.mrb[0].mxu0
      %v809 = vadd.f32 %v324, %v808
      %v810 = vpop.f32.mrb[0].mxu0
      %v811 = vpop.f32.mrb[0].mxu0
      %v812 = vadd.f32 %v324, %v811
      %v813 = vpop.f32.mrb[0].mxu0
      %814 = vmatprep.mubr.bf16.mxu0 0
      %815 = vmatmul.mubr.bf16.gmra.mrb[0].mxu0 %v585
      %v816 = vpop.f32.mrb[0].mxu0
      %v817 = vadd.f32 %v324, %v816
      %v818 = vpop.f32.mrb[0].mxu0
      %v819 = vpop.f32.mrb[0].mxu0
      %v820 = vadd.f32 %v324, %v819
      %v821 = vpop.f32.mrb[0].mxu0
      %822 = vmatprep.mubr.bf16.mxu0 0
      %823 = vmatmul.mubr.bf16.gmra.mrb[0].mxu0 %v586
      %v824 = vpop.f32.mrb[0].mxu0
      %v825 = vadd.f32 %v324, %v824
      %v826 = vpop.f32.mrb[0].mxu0
      %v827 = vpop.f32.mrb[0].mxu0
      %v828 = vadd.f32 %v324, %v827
      %v829 = vpop.f32.mrb[0].mxu0
      %830 = vmatprep.mubr.bf16.mxu0 0
      %831 = vmatmul.mubr.bf16.gmra.mrb[0].mxu0 %v587
      %v832 = vpop.f32.mrb[0].mxu0
      %v833 = vadd.f32 %v324, %v832
      %v834 = vpop.f32.mrb[0].mxu0
      %v835 = vpop.f32.mrb[0].mxu0
      %v836 = vadd.f32 %v324, %v835
      %v837 = vpop.f32.mrb[0].mxu0
      %838 = vmatprep.mubr.bf16.mxu0 0
      %839 = vmatmul.mubr.bf16.gmra.mrb[0].mxu0 %v588
      %v840 = vpop.f32.mrb[0].mxu0
      %v841 = vadd.f32 %v324, %v840
      %v842 = vpop.f32.mrb[0].mxu0
      %v843 = vpop.f32.mrb[0].mxu0
      %v844 = vadd.f32 %v324, %v843
      %v845 = vpop.f32.mrb[0].mxu0
      %846 = vmatprep.mubr.bf16.mxu0 0
      %847 = vmatmul.mubr.bf16.gmra.mrb[0].mxu0 %v589
      %v848 = vpop.f32.mrb[0].mxu0
      %v849 = vadd.f32 %v324, %v848
      %v850 = vpop.f32.mrb[0].mxu0
      %v851 = vpop.f32.mrb[0].mxu0
      %v852 = vadd.f32 %v324, %v851
      %v853 = vpop.f32.mrb[0].mxu0
      %854 = vmatprep.mubr.bf16.mxu0 0
      %855 = vmatmul.mubr.bf16.gmra.mrb[0].mxu0 %v590
      %v856 = vpop.f32.mrb[0].mxu0
      %v857 = vadd.f32 %v324, %v856
      %v858 = vpop.f32.mrb[0].mxu0
      %v859 = vpop.f32.mrb[0].mxu0
      %v860 = vadd.f32 %v324, %v859
      %v861 = vpop.f32.mrb[0].mxu0
      %862 = vmatprep.mubr.bf16.mxu0 0
      %863 = vmatmul.mubr.bf16.gmra.mrb[0].mxu0 %v591
      %v864 = vpop.f32.mrb[0].mxu0
      %v865 = vadd.f32 %v324, %v864
      %v866 = vpop.f32.mrb[0].mxu0
      %v867 = vpop.f32.mrb[0].mxu0
      %v868 = vadd.f32 %v324, %v867
      %v869 = vpop.f32.mrb[0].mxu0
      %870 = vmatprep.mubr.bf16.mxu0 0
      %871 = vmatmul.mubr.bf16.gmra.mrb[0].mxu0 %v592
      %v872 = vpop.f32.mrb[0].mxu0
      %v873 = vadd.f32 %v324, %v872
      %v874 = vpop.f32.mrb[0].mxu0
      %v875 = vpop.f32.mrb[0].mxu0
      %v876 = vadd.f32 %v324, %v875
      %v877 = vpop.f32.mrb[0].mxu0
      %878 = vmatprep.mubr.bf16.mxu0 0
      %879 = vmatmul.mubr.bf16.gmra.mrb[0].mxu0 %v593
      %v880 = vpop.f32.mrb[0].mxu0
      %v881 = vadd.f32 %v324, %v880
      %v882 = vpop.f32.mrb[0].mxu0
      %v883 = vpop.f32.mrb[0].mxu0
      %v884 = vadd.f32 %v324, %v883
      %v885 = vpop.f32.mrb[0].mxu0
      %886 = vmatprep.mubr.bf16.mxu0 0
      %887 = vmatmul.mubr.bf16.gmra.mrb[0].mxu0 %v594
      %v888 = vpop.f32.mrb[0].mxu0
      %v889 = vadd.f32 %v324, %v888
      %v890 = vpop.f32.mrb[0].mxu0
      %v891 = vpop.f32.mrb[0].mxu0
      %v892 = vadd.f32 %v324, %v891
      %v893 = vpop.f32.mrb[0].mxu0
      %894 = vmatprep.mubr.bf16.mxu0 0
      %895 = vmatmul.mubr.bf16.gmra.mrb[0].mxu0 %v595
      %v896 = vpop.f32.mrb[0].mxu0
      %v897 = vadd.f32 %v324, %v896
      %v898 = vpop.f32.mrb[0].mxu0
      %v899 = vpop.f32.mrb[0].mxu0
      %v900 = vadd.f32 %v324, %v899
      %v901 = vpop.f32.mrb[0].mxu0
      %902 = vmatprep.mubr.bf16.mxu0 0
      %903 = vmatmul.mubr.bf16.gmra.mrb[0].mxu0 %v596
      %v904 = vpop.f32.mrb[0].mxu0
      %v905 = vadd.f32 %v324, %v904
      %v906 = vpop.f32.mrb[0].mxu0
      %v907 = vpop.f32.mrb[0].mxu0
      %v908 = vadd.f32 %v324, %v907
      %v909 = vpop.f32.mrb[0].mxu0
      %910 = vmatprep.mubr.bf16.mxu0 0
      %911 = vmatmul.mubr.bf16.gmra.mrb[0].mxu0 %v597
      %v912 = vpop.f32.mrb[0].mxu0
      %v913 = vadd.f32 %v324, %v912
      %v914 = vpop.f32.mrb[0].mxu0
      %v915 = vpop.f32.mrb[0].mxu0
      %v916 = vadd.f32 %v324, %v915
      %v917 = vpop.f32.mrb[0].mxu0
      %918 = vmatprep.mubr.bf16.mxu0 0
      %919 = vmatmul.mubr.bf16.gmra.mrb[0].mxu0 %v598
      %v920 = vpop.f32.mrb[0].mxu0
      %v921 = vadd.f32 %v324, %v920
      %v922 = vpop.f32.mrb[0].mxu0
      %v923 = vpop.f32.mrb[0].mxu0
      %v924 = vadd.f32 %v324, %v923
      %v925 = vpop.f32.mrb[0].mxu0
      %926 = vmatprep.mubr.bf16.mxu0 0
      %927 = vmatmul.mubr.bf16.gmra.mrb[0].mxu0 %v599
      %v928 = vpop.f32.mrb[0].mxu0
      %v929 = vadd.f32 %v324, %v928
      %v930 = vpop.f32.mrb[0].mxu0
      %v931 = vpop.f32.mrb[0].mxu0
      %v932 = vadd.f32 %v324, %v931
      %v933 = vpop.f32.mrb[0].mxu0
      %934 = vmatprep.mubr.bf16.mxu0 0
      %935 = vmatmul.mubr.bf16.gmra.mrb[0].mxu0 %v600
      %v936 = vpop.f32.mrb[0].mxu0
      %v937 = vadd.f32 %v324, %v936
      %v938 = vpop.f32.mrb[0].mxu0
      %v939 = vpop.f32.mrb[0].mxu0
      %v940 = vadd.f32 %v324, %v939
      %v941 = vpop.f32.mrb[0].mxu0
      %942 = vmatprep.mubr.bf16.mxu0 0
      %943 = vmatmul.mubr.bf16.gmra.mrb[0].mxu0 %v601
      %v944 = vpop.f32.mrb[0].mxu0
      %v945 = vadd.f32 %v324, %v944
      %v946 = vpop.f32.mrb[0].mxu0
      %v947 = vpop.f32.mrb[0].mxu0
      %v948 = vadd.f32 %v324, %v947
      %v949 = vpop.f32.mrb[0].mxu0
      %950 = vmatprep.mubr.bf16.mxu0 0
      %951 = vmatmul.mubr.bf16.gmra.mrb[0].mxu0 %v602
      %v952 = vpop.f32.mrb[0].mxu0
      %v953 = vadd.f32 %v324, %v952
      %v954 = vpop.f32.mrb[0].mxu0
      %v955 = vpop.f32.mrb[0].mxu0
      %v956 = vadd.f32 %v324, %v955
      %v957 = vpop.f32.mrb[0].mxu0
      %958 = vmatprep.mubr.bf16.mxu0 0
      %959 = vmatmul.mubr.bf16.gmra.mrb[0].mxu0 %v603
      %v960 = vpop.f32.mrb[0].mxu0
      %v961 = vadd.f32 %v324, %v960
      %v962 = vpop.f32.mrb[0].mxu0
      %v963 = vpop.f32.mrb[0].mxu0
      %v964 = vadd.f32 %v324, %v963
      %v965 = vpop.f32.mrb[0].mxu0
      %966 = vmatprep.mubr.bf16.mxu0 0
      %967 = vmatmul.mubr.bf16.gmra.mrb[0].mxu0 %v604
      %v968 = vpop.f32.mrb[0].mxu0
      %v969 = vadd.f32 %v324, %v968
      %v970 = vpop.f32.mrb[0].mxu0
      %v971 = vpop.f32.mrb[0].mxu0
      %v972 = vadd.f32 %v324, %v971
      %v973 = vpop.f32.mrb[0].mxu0
      %974 = vmatprep.mubr.bf16.mxu0 0
      %975 = vmatmul.mubr.bf16.gmra.mrb[0].mxu0 %v605
      %v976 = vpop.f32.mrb[0].mxu0
      %v977 = vadd.f32 %v324, %v976
      %v978 = vpop.f32.mrb[0].mxu0
      %v979 = vpop.f32.mrb[0].mxu0
      %v980 = vadd.f32 %v324, %v979
      %v981 = vpop.f32.mrb[0].mxu0
      %982 = vmatprep.mubr.bf16.mxu0 0
      %983 = vmatmul.mubr.bf16.gmra.mrb[0].mxu0 %v606
      %v984 = vpop.f32.mrb[0].mxu0
      %v985 = vadd.f32 %v324, %v984
      %v986 = vpop.f32.mrb[0].mxu0
      %v987 = vpop.f32.mrb[0].mxu0
      %v988 = vadd.f32 %v324, %v987
      %v989 = vpop.f32.mrb[0].mxu0
      %990 = vmatprep.mubr.bf16.mxu0 0
      %991 = vmatmul.mubr.bf16.gmra.mrb[0].mxu0 %v607
      %v992 = vpop.f32.mrb[0].mxu0
      %v993 = vadd.f32 %v324, %v992
      %v994 = vpop.f32.mrb[0].mxu0
      %v995 = vpop.f32.mrb[0].mxu0
      %v996 = vadd.f32 %v324, %v995
      %v997 = vpop.f32.mrb[0].mxu0
      %998 = vmatprep.mubr.bf16.mxu0 0
      %999 = vmatmul.mubr.bf16.gmra.mrb[0].mxu0 %v608
      %v1000 = vpop.f32.mrb[0].mxu0
      %v1001 = vadd.f32 %v324, %v1000
      %v1002 = vpop.f32.mrb[0].mxu0
      %v1003 = vpop.f32.mrb[0].mxu0
      %v1004 = vadd.f32 %v324, %v1003
      %v1005 = vpop.f32.mrb[0].mxu0
      %1006 = vmatprep.mubr.bf16.mxu0 0
      %1007 = vmatmul.mubr.bf16.gmra.mrb[0].mxu0 %v609
      %v1008 = vpop.f32.mrb[0].mxu0
      %v1009 = vadd.f32 %v324, %v1008
      %v1010 = vpop.f32.mrb[0].mxu0
      %v1011 = vpop.f32.mrb[0].mxu0
      %v1012 = vadd.f32 %v324, %v1011
      %v1013 = vpop.f32.mrb[0].mxu0
      %1014 = vmatprep.mubr.bf16.mxu0 0
      %1015 = vmatmul.mubr.bf16.gmra.mrb[0].mxu0 %v610
      %v1016 = vpop.f32.mrb[0].mxu0
      %v1017 = vadd.f32 %v324, %v1016
      %v1018 = vpop.f32.mrb[0].mxu0
      %v1019 = vpop.f32.mrb[0].mxu0
      %v1020 = vadd.f32 %v324, %v1019
      %v1021 = vpop.f32.mrb[0].mxu0
      %1022 = vmatprep.mubr.bf16.mxu0 0
      %1023 = vmatmul.mubr.bf16.gmra.mrb[0].mxu0 %v611
      %v1024 = vpop.f32.mrb[0].mxu0
      %v1025 = vadd.f32 %v324, %v1024
      %v1026 = vpop.f32.mrb[0].mxu0
      %v1027 = vpop.f32.mrb[0].mxu0
      %v1028 = vadd.f32 %v324, %v1027
      %v1029 = vpop.f32.mrb[0].mxu0
      %1030 = vmatprep.mubr.bf16.mxu0 0
      %1031 = vmatmul.mubr.bf16.gmra.mrb[0].mxu0 %v612
      %v1032 = vpop.f32.mrb[0].mxu0
      %v1033 = vadd.f32 %v324, %v1032
      %v1034 = vpop.f32.mrb[0].mxu0
      %v1035 = vpop.f32.mrb[0].mxu0
      %v1036 = vadd.f32 %v324, %v1035
      %v1037 = vpop.f32.mrb[0].mxu0
      %1038 = vmatprep.mubr.bf16.mxu0 0
      %1039 = vmatmul.mubr.bf16.gmra.mrb[0].mxu0 %v613
      %v1040 = vpop.f32.mrb[0].mxu0
      %v1041 = vadd.f32 %v324, %v1040
      %v1042 = vpop.f32.mrb[0].mxu0
      %v1043 = vpop.f32.mrb[0].mxu0
      %v1044 = vadd.f32 %v324, %v1043
      %v1045 = vpop.f32.mrb[0].mxu0
      %1046 = vmatprep.mubr.bf16.mxu0 0
      %1047 = vmatmul.mubr.bf16.gmra.mrb[0].mxu0 %v614
      %v1048 = vpop.f32.mrb[0].mxu0
      %v1049 = vadd.f32 %v324, %v1048
      %v1050 = vpop.f32.mrb[0].mxu0
      %v1051 = vpop.f32.mrb[0].mxu0
      %v1052 = vadd.f32 %v324, %v1051
      %v1053 = vpop.f32.mrb[0].mxu0
      %1054 = vmatprep.mubr.bf16.mxu0 0
      %1055 = vmatmul.mubr.bf16.gmra.mrb[0].mxu0 %v615
      %v1056 = vpop.f32.mrb[0].mxu0
      %v1057 = vadd.f32 %v324, %v1056
      %v1058 = vpop.f32.mrb[0].mxu0
      %v1059 = vpop.f32.mrb[0].mxu0
      %v1060 = vadd.f32 %v324, %v1059
      %v1061 = vpop.f32.mrb[0].mxu0
      %1062 = vmatprep.mubr.bf16.mxu0 0
      %1063 = vmatmul.mubr.bf16.gmra.mrb[0].mxu0 %v616
      %v1064 = vpop.f32.mrb[0].mxu0
      %v1065 = vadd.f32 %v324, %v1064
      %v1066 = vpop.f32.mrb[0].mxu0
      %v1067 = vpop.f32.mrb[0].mxu0
      %v1068 = vadd.f32 %v324, %v1067
      %v1069 = vpop.f32.mrb[0].mxu0
      %1070 = vmatprep.mubr.bf16.mxu0 0
      %1071 = vmatmul.mubr.bf16.gmra.mrb[0].mxu0 %v617
      %v1072 = vpop.f32.mrb[0].mxu0
      %v1073 = vadd.f32 %v324, %v1072
      %v1074 = vpop.f32.mrb[0].mxu0
      %v1075 = vpop.f32.mrb[0].mxu0
      %v1076 = vadd.f32 %v324, %v1075
      %v1077 = vpop.f32.mrb[0].mxu0
      %1078 = vmatprep.mubr.bf16.mxu0 0
      %1079 = vmatmul.mubr.bf16.gmra.mrb[0].mxu0 %v618
      %v1080 = vpop.f32.mrb[0].mxu0
      %v1081 = vadd.f32 %v324, %v1080
      %v1082 = vpop.f32.mrb[0].mxu0
      %v1083 = vpop.f32.mrb[0].mxu0
      %v1084 = vadd.f32 %v324, %v1083
      %v1085 = vpop.f32.mrb[0].mxu0
      %1086 = vmatprep.mubr.bf16.mxu0 0
      %1087 = vmatmul.mubr.bf16.gmra.mrb[0].mxu0 %v619
      %v1088 = vpop.f32.mrb[0].mxu0
      %v1089 = vadd.f32 %v324, %v1088
      %v1090 = vpop.f32.mrb[0].mxu0
      %v1091 = vpop.f32.mrb[0].mxu0
      %v1092 = vadd.f32 %v324, %v1091
      %v1093 = vpop.f32.mrb[0].mxu0
      %1094 = vmatprep.mubr.bf16.mxu0 0
      %1095 = vmatmul.mubr.bf16.gmra.mrb[0].mxu0 %v620
      %v1096 = vpop.f32.mrb[0].mxu0
      %v1097 = vadd.f32 %v324, %v1096
      %v1098 = vpop.f32.mrb[0].mxu0
      %v1099 = vpop.f32.mrb[0].mxu0
      %v1100 = vadd.f32 %v324, %v1099
      %v1101 = vpop.f32.mrb[0].mxu0
      %1102 = vmatprep.mubr.bf16.mxu0 0
      %1103 = vmatmul.mubr.bf16.gmra.mrb[0].mxu0 %v621
      %v1104 = vpop.f32.mrb[0].mxu0
      %v1105 = vadd.f32 %v324, %v1104
      %v1106 = vpop.f32.mrb[0].mxu0
      %v1107 = vpop.f32.mrb[0].mxu0
      %v1108 = vadd.f32 %v324, %v1107
      %v1109 = vpop.f32.mrb[0].mxu0
      %1110 = vmatprep.mubr.bf16.mxu0 0
      %1111 = vmatmul.mubr.bf16.gmra.mrb[0].mxu0 %v622
      %v1112 = vpop.f32.mrb[0].mxu0
      %v1113 = vadd.f32 %v324, %v1112
      %v1114 = vpop.f32.mrb[0].mxu0
      %v1115 = vpop.f32.mrb[0].mxu0
      %v1116 = vadd.f32 %v324, %v1115
      %v1117 = vpop.f32.mrb[0].mxu0
      %1118 = vmatprep.mubr.bf16.mxu0 0
      %1119 = vmatmul.mubr.bf16.gmra.mrb[0].mxu0 %v623
      %v1120 = vpop.f32.mrb[0].mxu0
      %v1121 = vadd.f32 %v324, %v1120
      %v1122 = vpop.f32.mrb[0].mxu0
      %v1123 = vpop.f32.mrb[0].mxu0
      %v1124 = vadd.f32 %v324, %v1123
      %v1125 = vpop.f32.mrb[0].mxu0
      %1126 = vmatprep.mubr.bf16.mxu0 0
      %1127 = vmatmul.mubr.bf16.gmra.mrb[0].mxu0 %v624
      %v1128 = vpop.f32.mrb[0].mxu0
      %v1129 = vadd.f32 %v324, %v1128
      %v1130 = vpop.f32.mrb[0].mxu0
      %v1131 = vpop.f32.mrb[0].mxu0
      %v1132 = vadd.f32 %v324, %v1131
      %v1133 = vpop.f32.mrb[0].mxu0
      %1134 = vmatprep.mubr.bf16.mxu0 0
      %1135 = vmatmul.mubr.bf16.gmra.mrb[0].mxu0 %v625
      %v1136 = vpop.f32.mrb[0].mxu0
      %v1137 = vadd.f32 %v324, %v1136
      %v1138 = vpop.f32.mrb[0].mxu0
      %v1139 = vpop.f32.mrb[0].mxu0
      %v1140 = vadd.f32 %v324, %v1139
      %v1141 = vpop.f32.mrb[0].mxu0
      %1142 = vmatprep.mubr.bf16.mxu0 0
      %1143 = vmatmul.mubr.bf16.gmra.mrb[0].mxu0 %v626
      %v1144 = vpop.f32.mrb[0].mxu0
      %v1145 = vadd.f32 %v324, %v1144
      %v1146 = vpop.f32.mrb[0].mxu0
      %v1147 = vpop.f32.mrb[0].mxu0
      %v1148 = vadd.f32 %v324, %v1147
      %v1149 = vpop.f32.mrb[0].mxu0
      %1150 = vmatprep.mubr.bf16.mxu0 0
      %1151 = vmatmul.mubr.bf16.gmra.mrb[0].mxu0 %v627
      %v1152 = vpop.f32.mrb[0].mxu0
      %v1153 = vadd.f32 %v324, %v1152
      %v1154 = vpop.f32.mrb[0].mxu0
      %v1155 = vpop.f32.mrb[0].mxu0
      %v1156 = vadd.f32 %v324, %v1155
      %v1157 = vpop.f32.mrb[0].mxu0
      %1158 = vmatprep.mubr.bf16.mxu0 0
      %1159 = vmatmul.mubr.bf16.gmra.mrb[0].mxu0 %v628
      %v1160 = vpop.f32.mrb[0].mxu0
      %v1161 = vadd.f32 %v324, %v1160
      %v1162 = vpop.f32.mrb[0].mxu0
      %v1163 = vpop.f32.mrb[0].mxu0
      %v1164 = vadd.f32 %v324, %v1163
      %v1165 = vpop.f32.mrb[0].mxu0
      %1166 = vmatprep.mubr.bf16.mxu0 0
      %1167 = vmatmul.mubr.bf16.gmra.mrb[0].mxu0 %v629
      %v1168 = vpop.f32.mrb[0].mxu0
      %v1169 = vadd.f32 %v324, %v1168
      %v1170 = vpop.f32.mrb[0].mxu0
      %v1171 = vpop.f32.mrb[0].mxu0
      %v1172 = vadd.f32 %v324, %v1171
      %v1173 = vpop.f32.mrb[0].mxu0
      %1174 = vmatprep.mubr.bf16.mxu0 0
      %1175 = vmatmul.mubr.bf16.gmra.mrb[0].mxu0 %v630
      %v1176 = vpop.f32.mrb[0].mxu0
      %v1177 = vadd.f32 %v324, %v1176
      %v1178 = vpop.f32.mrb[0].mxu0
      %v1179 = vpop.f32.mrb[0].mxu0
      %v1180 = vadd.f32 %v324, %v1179
      %v1181 = vpop.f32.mrb[0].mxu0
      %1182 = vmatprep.mubr.bf16.mxu0 0
      %1183 = vmatmul.mubr.bf16.gmra.mrb[0].mxu0 %v631
      %v1184 = vpop.f32.mrb[0].mxu0
      %v1185 = vadd.f32 %v324, %v1184
      %v1186 = vpop.f32.mrb[0].mxu0
      %v1187 = vpop.f32.mrb[0].mxu0
      %v1188 = vadd.f32 %v324, %v1187
      %v1189 = vpop.f32.mrb[0].mxu0
      %1190 = vmatprep.mubr.bf16.mxu0 0
      %1191 = vmatmul.mubr.bf16.gmra.mrb[0].mxu0 %v632
      %v1192 = vpop.f32.mrb[0].mxu0
      %v1193 = vadd.f32 %v324, %v1192
      %v1194 = vpop.f32.mrb[0].mxu0
      %v1195 = vpop.f32.mrb[0].mxu0
      %v1196 = vadd.f32 %v324, %v1195
      %v1197 = vpop.f32.mrb[0].mxu0
      %1198 = vmatprep.mubr.bf16.mxu0 0
      %1199 = vmatmul.mubr.bf16.gmra.mrb[0].mxu0 %v633
      %v1200 = vpop.f32.mrb[0].mxu0
      %v1201 = vadd.f32 %v324, %v1200
      %v1202 = vpop.f32.mrb[0].mxu0
      %v1203 = vpop.f32.mrb[0].mxu0
      %v1204 = vadd.f32 %v324, %v1203
      %v1205 = vpop.f32.mrb[0].mxu0
      %1206 = vmatprep.mubr.bf16.mxu0 0
      %1207 = vmatmul.mubr.bf16.gmra.mrb[0].mxu0 %v634
      %v1208 = vpop.f32.mrb[0].mxu0
      %v1209 = vadd.f32 %v324, %v1208
      %v1210 = vpop.f32.mrb[0].mxu0
      %v1211 = vpop.f32.mrb[0].mxu0
      %v1212 = vadd.f32 %v324, %v1211
      %v1213 = vpop.f32.mrb[0].mxu0
      %1214 = vmatprep.mubr.bf16.mxu0 0
      %1215 = vmatmul.mubr.bf16.gmra.mrb[0].mxu0 %v635
      %v1216 = vpop.f32.mrb[0].mxu0
      %v1217 = vadd.f32 %v324, %v1216
      %v1218 = vpop.f32.mrb[0].mxu0
      %v1219 = vpop.f32.mrb[0].mxu0
      %v1220 = vadd.f32 %v324, %v1219
      %v1221 = vpop.f32.mrb[0].mxu0
      %1222 = vmatprep.mubr.bf16.mxu0 0
      %1223 = vmatmul.mubr.bf16.gmra.mrb[0].mxu0 %v636
      %v1224 = vpop.f32.mrb[0].mxu0
      %v1225 = vadd.f32 %v324, %v1224
      %v1226 = vpop.f32.mrb[0].mxu0
      %v1227 = vpop.f32.mrb[0].mxu0
      %v1228 = vadd.f32 %v324, %v1227
      %v1229 = vpop.f32.mrb[0].mxu0
      %1230 = vmatprep.mubr.bf16.mxu0 0
      %1231 = vmatmul.mubr.bf16.gmra.mrb[0].mxu0 %v637
      %v1232 = vpop.f32.mrb[0].mxu0
      %v1233 = vadd.f32 %v324, %v1232
      %v1234 = vpop.f32.mrb[0].mxu0
      %v1235 = vpop.f32.mrb[0].mxu0
      %v1236 = vadd.f32 %v324, %v1235
      %v1237 = vpop.f32.mrb[0].mxu0
      %1238 = vmatprep.mubr.bf16.mxu0 0
      %1239 = vmatmul.mubr.bf16.gmra.mrb[0].mxu0 %v638
      %v1240 = vpop.f32.mrb[0].mxu0
      %v1241 = vadd.f32 %v324, %v1240
      %v1242 = vpop.f32.mrb[0].mxu0
      %v1243 = vpop.f32.mrb[0].mxu0
      %v1244 = vadd.f32 %v324, %v1243
      %v1245 = vpop.f32.mrb[0].mxu0
      %1246 = vmatprep.mubr.bf16.mxu0 0
      %1247 = vmatmul.mubr.bf16.gmra.mrb[0].mxu0 %v639
      %v1248 = vpop.f32.mrb[0].mxu0
      %v1249 = vadd.f32 %v324, %v1248
      %v1250 = vpop.f32.mrb[0].mxu0
      %v1251 = vpop.f32.mrb[0].mxu0
      %v1252 = vadd.f32 %v324, %v1251
      %v1253 = vpop.f32.mrb[0].mxu0
      %1254 = vmatprep.mubr.bf16.mxu0 0
      %1255 = vmatmul.mubr.bf16.gmra.mrb[0].mxu0 %v640
      %v1256 = vpop.f32.mrb[0].mxu0
      %v1257 = vadd.f32 %v324, %v1256
      %v1258 = vpop.f32.mrb[0].mxu0
      %v1259 = vpop.f32.mrb[0].mxu0
      %v1260 = vadd.f32 %v324, %v1259
      %v1261 = vpop.f32.mrb[0].mxu0
      %1262 = vmatprep.mubr.bf16.mxu0 0
      %1263 = vmatmul.mubr.bf16.gmra.mrb[0].mxu0 %v641
      %v1264 = vpop.f32.mrb[0].mxu0
      %v1265 = vadd.f32 %v324, %v1264
      %v1266 = vpop.f32.mrb[0].mxu0
      %v1267 = vpop.f32.mrb[0].mxu0
      %v1268 = vadd.f32 %v324, %v1267
      %v1269 = vpop.f32.mrb[0].mxu0
      %1270 = vmatprep.mubr.bf16.mxu0 0
      %1271 = vmatmul.mubr.bf16.gmra.mrb[0].mxu0 %v642
      %v1272 = vpop.f32.mrb[0].mxu0
      %v1273 = vadd.f32 %v324, %v1272
      %v1274 = vpop.f32.mrb[0].mxu0
      %v1275 = vpop.f32.mrb[0].mxu0
      %v1276 = vadd.f32 %v324, %v1275
      %v1277 = vpop.f32.mrb[0].mxu0
      %1278 = vmatprep.mubr.bf16.mxu0 0
      %1279 = vmatmul.mubr.bf16.gmra.mrb[0].mxu0 %v643
      %v1280 = vpop.f32.mrb[0].mxu0
      %v1281 = vadd.f32 %v324, %v1280
      %v1282 = vpop.f32.mrb[0].mxu0
      %v1283 = vpop.f32.mrb[0].mxu0
      %v1284 = vadd.f32 %v324, %v1283
      %v1285 = vpop.f32.mrb[0].mxu0
      %1286 = vmatprep.mubr.bf16.mxu0 0
      %1287 = vmatmul.mubr.bf16.gmra.mrb[0].mxu0 %v644
      %v1288 = vpop.f32.mrb[0].mxu0
      %v1289 = vadd.f32 %v324, %v1288
      %v1290 = vpop.f32.mrb[0].mxu0
      %v1291 = vpop.f32.mrb[0].mxu0
      %v1292 = vadd.f32 %v324, %v1291
      %v1293 = vpop.f32.mrb[0].mxu0
      %1294 = vmatprep.mubr.bf16.mxu0 0
      %1295 = vmatmul.mubr.bf16.gmra.mrb[0].mxu0 %v645
      %v1296 = vpop.f32.mrb[0].mxu0
      %v1297 = vadd.f32 %v324, %v1296
      %v1298 = vpop.f32.mrb[0].mxu0
      %v1299 = vpop.f32.mrb[0].mxu0
      %v1300 = vadd.f32 %v324, %v1299
      %v1301 = vpop.f32.mrb[0].mxu0
      %1302 = vdwg.mxu0
      %vm1303 = vcmp.ge.f32.partialorder %v793, 0.0
      %vm1304 = vcmp.ge.f32.partialorder %v796, 0.0
      %vm1305 = vcmp.ge.f32.partialorder %v801, 0.0
      %vm1306 = vcmp.ge.f32.partialorder %v804, 0.0
      %vm1307 = vcmp.ge.f32.partialorder %v809, 0.0
      %vm1308 = vcmp.ge.f32.partialorder %v812, 0.0
      %vm1309 = vcmp.ge.f32.partialorder %v817, 0.0
      %vm1310 = vcmp.ge.f32.partialorder %v820, 0.0
      %vm1311 = vcmp.ge.f32.partialorder %v825, 0.0
      %vm1312 = vcmp.ge.f32.partialorder %v828, 0.0
      %vm1313 = vcmp.ge.f32.partialorder %v833, 0.0
      %vm1314 = vcmp.ge.f32.partialorder %v836, 0.0
      %vm1315 = vcmp.ge.f32.partialorder %v841, 0.0
      %vm1316 = vcmp.ge.f32.partialorder %v844, 0.0
      %vm1317 = vcmp.ge.f32.partialorder %v849, 0.0
      %vm1318 = vcmp.ge.f32.partialorder %v852, 0.0
      %vm1319 = vcmp.ge.f32.partialorder %v857, 0.0
      %vm1320 = vcmp.ge.f32.partialorder %v860, 0.0
      %vm1321 = vcmp.ge.f32.partialorder %v865, 0.0
      %vm1322 = vcmp.ge.f32.partialorder %v868, 0.0
      %vm1323 = vcmp.ge.f32.partialorder %v873, 0.0
      %vm1324 = vcmp.ge.f32.partialorder %v876, 0.0
      %vm1325 = vcmp.ge.f32.partialorder %v881, 0.0
      %vm1326 = vcmp.ge.f32.partialorder %v884, 0.0
      %vm1327 = vcmp.ge.f32.partialorder %v889, 0.0
      %vm1328 = vcmp.ge.f32.partialorder %v892, 0.0
      %vm1329 = vcmp.ge.f32.partialorder %v897, 0.0
      %vm1330 = vcmp.ge.f32.partialorder %v900, 0.0
      %vm1331 = vcmp.ge.f32.partialorder %v905, 0.0
      %vm1332 = vcmp.ge.f32.partialorder %v908, 0.0
      %vm1333 = vcmp.ge.f32.partialorder %v913, 0.0
      %vm1334 = vcmp.ge.f32.partialorder %v916, 0.0
      %vm1335 = vcmp.ge.f32.partialorder %v921, 0.0
      %vm1336 = vcmp.ge.f32.partialorder %v924, 0.0
      %vm1337 = vcmp.ge.f32.partialorder %v929, 0.0
      %vm1338 = vcmp.ge.f32.partialorder %v932, 0.0
      %vm1339 = vcmp.ge.f32.partialorder %v937, 0.0
      %vm1340 = vcmp.ge.f32.partialorder %v940, 0.0
      %vm1341 = vcmp.ge.f32.partialorder %v945, 0.0
      %vm1342 = vcmp.ge.f32.partialorder %v948, 0.0
      %vm1343 = vcmp.ge.f32.partialorder %v953, 0.0
      %vm1344 = vcmp.ge.f32.partialorder %v956, 0.0
      %vm1345 = vcmp.ge.f32.partialorder %v961, 0.0
      %vm1346 = vcmp.ge.f32.partialorder %v964, 0.0
      %vm1347 = vcmp.ge.f32.partialorder %v969, 0.0
      %vm1348 = vcmp.ge.f32.partialorder %v972, 0.0
      %vm1349 = vcmp.ge.f32.partialorder %v977, 0.0
      %vm1350 = vcmp.ge.f32.partialorder %v980, 0.0
      %vm1351 = vcmp.ge.f32.partialorder %v985, 0.0
      %vm1352 = vcmp.ge.f32.partialorder %v988, 0.0
      %vm1353 = vcmp.ge.f32.partialorder %v993, 0.0
      %vm1354 = vcmp.ge.f32.partialorder %v996, 0.0
      %vm1355 = vcmp.ge.f32.partialorder %v1001, 0.0
      %vm1356 = vcmp.ge.f32.partialorder %v1004, 0.0
      %vm1357 = vcmp.ge.f32.partialorder %v1009, 0.0
      %vm1358 = vcmp.ge.f32.partialorder %v1012, 0.0
      %vm1359 = vcmp.ge.f32.partialorder %v1017, 0.0
      %vm1360 = vcmp.ge.f32.partialorder %v1020, 0.0
      %vm1361 = vcmp.ge.f32.partialorder %v1025, 0.0
      %vm1362 = vcmp.ge.f32.partialorder %v1028, 0.0
      %vm1363 = vcmp.ge.f32.partialorder %v1033, 0.0
      %vm1364 = vcmp.ge.f32.partialorder %v1036, 0.0
      %vm1365 = vcmp.ge.f32.partialorder %v1041, 0.0
      %vm1366 = vcmp.ge.f32.partialorder %v1044, 0.0
      %vm1367 = vcmp.ge.f32.partialorder %v1049, 0.0
      %vm1368 = vcmp.ge.f32.partialorder %v1052, 0.0
      %vm1369 = vcmp.ge.f32.partialorder %v1057, 0.0
      %vm1370 = vcmp.ge.f32.partialorder %v1060, 0.0
      %vm1371 = vcmp.ge.f32.partialorder %v1065, 0.0
      %vm1372 = vcmp.ge.f32.partialorder %v1068, 0.0
      %vm1373 = vcmp.ge.f32.partialorder %v1073, 0.0
      %vm1374 = vcmp.ge.f32.partialorder %v1076, 0.0
      %vm1375 = vcmp.ge.f32.partialorder %v1081, 0.0
      %vm1376 = vcmp.ge.f32.partialorder %v1084, 0.0
      %vm1377 = vcmp.ge.f32.partialorder %v1089, 0.0
      %vm1378 = vcmp.ge.f32.partialorder %v1092, 0.0
      %vm1379 = vcmp.ge.f32.partialorder %v1097, 0.0
      %vm1380 = vcmp.ge.f32.partialorder %v1100, 0.0
      %vm1381 = vcmp.ge.f32.partialorder %v1105, 0.0
      %vm1382 = vcmp.ge.f32.partialorder %v1108, 0.0
      %vm1383 = vcmp.ge.f32.partialorder %v1113, 0.0
      %vm1384 = vcmp.ge.f32.partialorder %v1116, 0.0
      %vm1385 = vcmp.ge.f32.partialorder %v1121, 0.0
      %vm1386 = vcmp.ge.f32.partialorder %v1124, 0.0
      %vm1387 = vcmp.ge.f32.partialorder %v1129, 0.0
      %vm1388 = vcmp.ge.f32.partialorder %v1132, 0.0
      %vm1389 = vcmp.ge.f32.partialorder %v1137, 0.0
      %vm1390 = vcmp.ge.f32.partialorder %v1140, 0.0
      %vm1391 = vcmp.ge.f32.partialorder %v1145, 0.0
      %vm1392 = vcmp.ge.f32.partialorder %v1148, 0.0
      %vm1393 = vcmp.ge.f32.partialorder %v1153, 0.0
      %vm1394 = vcmp.ge.f32.partialorder %v1156, 0.0
      %vm1395 = vcmp.ge.f32.partialorder %v1161, 0.0
      %vm1396 = vcmp.ge.f32.partialorder %v1164, 0.0
      %vm1397 = vcmp.ge.f32.partialorder %v1169, 0.0
      %vm1398 = vcmp.ge.f32.partialorder %v1172, 0.0
      %vm1399 = vcmp.ge.f32.partialorder %v1177, 0.0
      %vm1400 = vcmp.ge.f32.partialorder %v1180, 0.0
      %vm1401 = vcmp.ge.f32.partialorder %v1185, 0.0
      %vm1402 = vcmp.ge.f32.partialorder %v1188, 0.0
      %vm1403 = vcmp.ge.f32.partialorder %v1193, 0.0
      %vm1404 = vcmp.ge.f32.partialorder %v1196, 0.0
      %vm1405 = vcmp.ge.f32.partialorder %v1201, 0.0
      %vm1406 = vcmp.ge.f32.partialorder %v1204, 0.0
      %vm1407 = vcmp.ge.f32.partialorder %v1209, 0.0
      %vm1408 = vcmp.ge.f32.partialorder %v1212, 0.0
      %vm1409 = vcmp.ge.f32.partialorder %v1217, 0.0
      %vm1410 = vcmp.ge.f32.partialorder %v1220, 0.0
      %vm1411 = vcmp.ge.f32.partialorder %v1225, 0.0
      %vm1412 = vcmp.ge.f32.partialorder %v1228, 0.0
      %vm1413 = vcmp.ge.f32.partialorder %v1233, 0.0
      %vm1414 = vcmp.ge.f32.partialorder %v1236, 0.0
      %vm1415 = vcmp.ge.f32.partialorder %v1241, 0.0
      %vm1416 = vcmp.ge.f32.partialorder %v1244, 0.0
      %vm1417 = vcmp.ge.f32.partialorder %v1249, 0.0
      %vm1418 = vcmp.ge.f32.partialorder %v1252, 0.0
      %vm1419 = vcmp.ge.f32.partialorder %v1257, 0.0
      %vm1420 = vcmp.ge.f32.partialorder %v1260, 0.0
      %vm1421 = vcmp.ge.f32.partialorder %v1265, 0.0
      %vm1422 = vcmp.ge.f32.partialorder %v1268, 0.0
      %vm1423 = vcmp.ge.f32.partialorder %v1273, 0.0
      %vm1424 = vcmp.ge.f32.partialorder %v1276, 0.0
      %vm1425 = vcmp.ge.f32.partialorder %v1281, 0.0
      %vm1426 = vcmp.ge.f32.partialorder %v1284, 0.0
      %vm1427 = vcmp.ge.f32.partialorder %v1289, 0.0
      %vm1428 = vcmp.ge.f32.partialorder %v1292, 0.0
      %vm1429 = vcmp.ge.f32.partialorder %v1297, 0.0
      %vm1430 = vcmp.ge.f32.partialorder %v1300, 0.0
      %v1431 = vmul.f32 %v793, 0.2
      %v1432 = vmul.f32 %v796, 0.2
      %v1433 = vmul.f32 %v801, 0.2
      %v1434 = vmul.f32 %v804, 0.2
      %v1435 = vmul.f32 %v809, 0.2
      %v1436 = vmul.f32 %v812, 0.2
      %v1437 = vmul.f32 %v817, 0.2
      %v1438 = vmul.f32 %v820, 0.2
      %v1439 = vmul.f32 %v825, 0.2
      %v1440 = vmul.f32 %v828, 0.2
      %v1441 = vmul.f32 %v833, 0.2
      %v1442 = vmul.f32 %v836, 0.2
      %v1443 = vmul.f32 %v841, 0.2
      %v1444 = vmul.f32 %v844, 0.2
      %v1445 = vmul.f32 %v849, 0.2
      %v1446 = vmul.f32 %v852, 0.2
      %v1447 = vmul.f32 %v857, 0.2
      %v1448 = vmul.f32 %v860, 0.2
      %v1449 = vmul.f32 %v865, 0.2
      %v1450 = vmul.f32 %v868, 0.2
      %v1451 = vmul.f32 %v873, 0.2
      %v1452 = vmul.f32 %v876, 0.2
      %v1453 = vmul.f32 %v881, 0.2
      %v1454 = vmul.f32 %v884, 0.2
      %v1455 = vmul.f32 %v889, 0.2
      %v1456 = vmul.f32 %v892, 0.2
      %v1457 = vmul.f32 %v897, 0.2
      %v1458 = vmul.f32 %v900, 0.2
      %v1459 = vmul.f32 %v905, 0.2
      %v1460 = vmul.f32 %v908, 0.2
      %v1461 = vmul.f32 %v913, 0.2
      %v1462 = vmul.f32 %v916, 0.2
      %v1463 = vmul.f32 %v921, 0.2
      %v1464 = vmul.f32 %v924, 0.2
      %v1465 = vmul.f32 %v929, 0.2
      %v1466 = vmul.f32 %v932, 0.2
      %v1467 = vmul.f32 %v937, 0.2
      %v1468 = vmul.f32 %v940, 0.2
      %v1469 = vmul.f32 %v945, 0.2
      %v1470 = vmul.f32 %v948, 0.2
      %v1471 = vmul.f32 %v953, 0.2
      %v1472 = vmul.f32 %v956, 0.2
      %v1473 = vmul.f32 %v961, 0.2
      %v1474 = vmul.f32 %v964, 0.2
      %v1475 = vmul.f32 %v969, 0.2
      %v1476 = vmul.f32 %v972, 0.2
      %v1477 = vmul.f32 %v977, 0.2
      %v1478 = vmul.f32 %v980, 0.2
      %v1479 = vmul.f32 %v985, 0.2
      %v1480 = vmul.f32 %v988, 0.2
      %v1481 = vmul.f32 %v993, 0.2
      %v1482 = vmul.f32 %v996, 0.2
      %v1483 = vmul.f32 %v1001, 0.2
      %v1484 = vmul.f32 %v1004, 0.2
      %v1485 = vmul.f32 %v1009, 0.2
      %v1486 = vmul.f32 %v1012, 0.2
      %v1487 = vmul.f32 %v1017, 0.2
      %v1488 = vmul.f32 %v1020, 0.2
      %v1489 = vmul.f32 %v1025, 0.2
      %v1490 = vmul.f32 %v1028, 0.2
      %v1491 = vmul.f32 %v1033, 0.2
      %v1492 = vmul.f32 %v1036, 0.2
      %v1493 = vmul.f32 %v1041, 0.2
      %v1494 = vmul.f32 %v1044, 0.2
      %v1495 = vmul.f32 %v1049, 0.2
      %v1496 = vmul.f32 %v1052, 0.2
      %v1497 = vmul.f32 %v1057, 0.2
      %v1498 = vmul.f32 %v1060, 0.2
      %v1499 = vmul.f32 %v1065, 0.2
      %v1500 = vmul.f32 %v1068, 0.2
      %v1501 = vmul.f32 %v1073, 0.2
      %v1502 = vmul.f32 %v1076, 0.2
      %v1503 = vmul.f32 %v1081, 0.2
      %v1504 = vmul.f32 %v1084, 0.2
      %v1505 = vmul.f32 %v1089, 0.2
      %v1506 = vmul.f32 %v1092, 0.2
      %v1507 = vmul.f32 %v1097, 0.2
      %v1508 = vmul.f32 %v1100, 0.2
      %v1509 = vmul.f32 %v1105, 0.2
      %v1510 = vmul.f32 %v1108, 0.2
      %v1511 = vmul.f32 %v1113, 0.2
      %v1512 = vmul.f32 %v1116, 0.2
      %v1513 = vmul.f32 %v1121, 0.2
      %v1514 = vmul.f32 %v1124, 0.2
      %v1515 = vmul.f32 %v1129, 0.2
      %v1516 = vmul.f32 %v1132, 0.2
      %v1517 = vmul.f32 %v1137, 0.2
      %v1518 = vmul.f32 %v1140, 0.2
      %v1519 = vmul.f32 %v1145, 0.2
      %v1520 = vmul.f32 %v1148, 0.2
      %v1521 = vmul.f32 %v1153, 0.2
      %v1522 = vmul.f32 %v1156, 0.2
      %v1523 = vmul.f32 %v1161, 0.2
      %v1524 = vmul.f32 %v1164, 0.2
      %v1525 = vmul.f32 %v1169, 0.2
      %v1526 = vmul.f32 %v1172, 0.2
      %v1527 = vmul.f32 %v1177, 0.2
      %v1528 = vmul.f32 %v1180, 0.2
      %v1529 = vmul.f32 %v1185, 0.2
      %v1530 = vmul.f32 %v1188, 0.2
      %v1531 = vmul.f32 %v1193, 0.2
      %v1532 = vmul.f32 %v1196, 0.2
      %v1533 = vmul.f32 %v1201, 0.2
      %v1534 = vmul.f32 %v1204, 0.2
      %v1535 = vmul.f32 %v1209, 0.2
      %v1536 = vmul.f32 %v1212, 0.2
      %v1537 = vmul.f32 %v1217, 0.2
      %v1538 = vmul.f32 %v1220, 0.2
      %v1539 = vmul.f32 %v1225, 0.2
      %v1540 = vmul.f32 %v1228, 0.2
      %v1541 = vmul.f32 %v1233, 0.2
      %v1542 = vmul.f32 %v1236, 0.2
      %v1543 = vmul.f32 %v1241, 0.2
      %v1544 = vmul.f32 %v1244, 0.2
      %v1545 = vmul.f32 %v1249, 0.2
      %v1546 = vmul.f32 %v1252, 0.2
      %v1547 = vmul.f32 %v1257, 0.2
      %v1548 = vmul.f32 %v1260, 0.2
      %v1549 = vmul.f32 %v1265, 0.2
      %v1550 = vmul.f32 %v1268, 0.2
      %v1551 = vmul.f32 %v1273, 0.2
      %v1552 = vmul.f32 %v1276, 0.2
      %v1553 = vmul.f32 %v1281, 0.2
      %v1554 = vmul.f32 %v1284, 0.2
      %v1555 = vmul.f32 %v1289, 0.2
      %v1556 = vmul.f32 %v1292, 0.2
      %v1557 = vmul.f32 %v1297, 0.2
      %v1558 = vmul.f32 %v1300, 0.2
      %v1559 = vsel %vm1303, %v793, %v1431
      %v1560 = vsel %vm1304, %v796, %v1432
      %v1561 = vsel %vm1305, %v801, %v1433
      %v1562 = vsel %vm1306, %v804, %v1434
      %v1563 = vsel %vm1307, %v809, %v1435
      %v1564 = vsel %vm1308, %v812, %v1436
      %v1565 = vsel %vm1309, %v817, %v1437
      %v1566 = vsel %vm1310, %v820, %v1438
      %v1567 = vsel %vm1311, %v825, %v1439
      %v1568 = vsel %vm1312, %v828, %v1440
      %v1569 = vsel %vm1313, %v833, %v1441
      %v1570 = vsel %vm1314, %v836, %v1442
      %v1571 = vsel %vm1315, %v841, %v1443
      %v1572 = vsel %vm1316, %v844, %v1444
      %v1573 = vsel %vm1317, %v849, %v1445
      %v1574 = vsel %vm1318, %v852, %v1446
      %v1575 = vsel %vm1319, %v857, %v1447
      %v1576 = vsel %vm1320, %v860, %v1448
      %v1577 = vsel %vm1321, %v865, %v1449
      %v1578 = vsel %vm1322, %v868, %v1450
      %v1579 = vsel %vm1323, %v873, %v1451
      %v1580 = vsel %vm1324, %v876, %v1452
      %v1581 = vsel %vm1325, %v881, %v1453
      %v1582 = vsel %vm1326, %v884, %v1454
      %v1583 = vsel %vm1327, %v889, %v1455
      %v1584 = vsel %vm1328, %v892, %v1456
      %v1585 = vsel %vm1329, %v897, %v1457
      %v1586 = vsel %vm1330, %v900, %v1458
      %v1587 = vsel %vm1331, %v905, %v1459
      %v1588 = vsel %vm1332, %v908, %v1460
      %v1589 = vsel %vm1333, %v913, %v1461
      %v1590 = vsel %vm1334, %v916, %v1462
      %v1591 = vsel %vm1335, %v921, %v1463
      %v1592 = vsel %vm1336, %v924, %v1464
      %v1593 = vsel %vm1337, %v929, %v1465
      %v1594 = vsel %vm1338, %v932, %v1466
      %v1595 = vsel %vm1339, %v937, %v1467
      %v1596 = vsel %vm1340, %v940, %v1468
      %v1597 = vsel %vm1341, %v945, %v1469
      %v1598 = vsel %vm1342, %v948, %v1470
      %v1599 = vsel %vm1343, %v953, %v1471
      %v1600 = vsel %vm1344, %v956, %v1472
      %v1601 = vsel %vm1345, %v961, %v1473
      %v1602 = vsel %vm1346, %v964, %v1474
      %v1603 = vsel %vm1347, %v969, %v1475
      %v1604 = vsel %vm1348, %v972, %v1476
      %v1605 = vsel %vm1349, %v977, %v1477
      %v1606 = vsel %vm1350, %v980, %v1478
      %v1607 = vsel %vm1351, %v985, %v1479
      %v1608 = vsel %vm1352, %v988, %v1480
      %v1609 = vsel %vm1353, %v993, %v1481
      %v1610 = vsel %vm1354, %v996, %v1482
      %v1611 = vsel %vm1355, %v1001, %v1483
      %v1612 = vsel %vm1356, %v1004, %v1484
      %v1613 = vsel %vm1357, %v1009, %v1485
      %v1614 = vsel %vm1358, %v1012, %v1486
      %v1615 = vsel %vm1359, %v1017, %v1487
      %v1616 = vsel %vm1360, %v1020, %v1488
      %v1617 = vsel %vm1361, %v1025, %v1489
      %v1618 = vsel %vm1362, %v1028, %v1490
      %v1619 = vsel %vm1363, %v1033, %v1491
      %v1620 = vsel %vm1364, %v1036, %v1492
      %v1621 = vsel %vm1365, %v1041, %v1493
      %v1622 = vsel %vm1366, %v1044, %v1494
      %v1623 = vsel %vm1367, %v1049, %v1495
      %v1624 = vsel %vm1368, %v1052, %v1496
      %v1625 = vsel %vm1369, %v1057, %v1497
      %v1626 = vsel %vm1370, %v1060, %v1498
      %v1627 = vsel %vm1371, %v1065, %v1499
      %v1628 = vsel %vm1372, %v1068, %v1500
      %v1629 = vsel %vm1373, %v1073, %v1501
      %v1630 = vsel %vm1374, %v1076, %v1502
      %v1631 = vsel %vm1375, %v1081, %v1503
      %v1632 = vsel %vm1376, %v1084, %v1504
      %v1633 = vsel %vm1377, %v1089, %v1505
      %v1634 = vsel %vm1378, %v1092, %v1506
      %v1635 = vsel %vm1379, %v1097, %v1507
      %v1636 = vsel %vm1380, %v1100, %v1508
      %v1637 = vsel %vm1381, %v1105, %v1509
      %v1638 = vsel %vm1382, %v1108, %v1510
      %v1639 = vsel %vm1383, %v1113, %v1511
      %v1640 = vsel %vm1384, %v1116, %v1512
      %v1641 = vsel %vm1385, %v1121, %v1513
      %v1642 = vsel %vm1386, %v1124, %v1514
      %v1643 = vsel %vm1387, %v1129, %v1515
      %v1644 = vsel %vm1388, %v1132, %v1516
      %v1645 = vsel %vm1389, %v1137, %v1517
      %v1646 = vsel %vm1390, %v1140, %v1518
      %v1647 = vsel %vm1391, %v1145, %v1519
      %v1648 = vsel %vm1392, %v1148, %v1520
      %v1649 = vsel %vm1393, %v1153, %v1521
      %v1650 = vsel %vm1394, %v1156, %v1522
      %v1651 = vsel %vm1395, %v1161, %v1523
      %v1652 = vsel %vm1396, %v1164, %v1524
      %v1653 = vsel %vm1397, %v1169, %v1525
      %v1654 = vsel %vm1398, %v1172, %v1526
      %v1655 = vsel %vm1399, %v1177, %v1527
      %v1656 = vsel %vm1400, %v1180, %v1528
      %v1657 = vsel %vm1401, %v1185, %v1529
      %v1658 = vsel %vm1402, %v1188, %v1530
      %v1659 = vsel %vm1403, %v1193, %v1531
      %v1660 = vsel %vm1404, %v1196, %v1532
      %v1661 = vsel %vm1405, %v1201, %v1533
      %v1662 = vsel %vm1406, %v1204, %v1534
      %v1663 = vsel %vm1407, %v1209, %v1535
      %v1664 = vsel %vm1408, %v1212, %v1536
      %v1665 = vsel %vm1409, %v1217, %v1537
      %v1666 = vsel %vm1410, %v1220, %v1538
      %v1667 = vsel %vm1411, %v1225, %v1539
      %v1668 = vsel %vm1412, %v1228, %v1540
      %v1669 = vsel %vm1413, %v1233, %v1541
      %v1670 = vsel %vm1414, %v1236, %v1542
      %v1671 = vsel %vm1415, %v1241, %v1543
      %v1672 = vsel %vm1416, %v1244, %v1544
      %v1673 = vsel %vm1417, %v1249, %v1545
      %v1674 = vsel %vm1418, %v1252, %v1546
      %v1675 = vsel %vm1419, %v1257, %v1547
      %v1676 = vsel %vm1420, %v1260, %v1548
      %v1677 = vsel %vm1421, %v1265, %v1549
      %v1678 = vsel %vm1422, %v1268, %v1550
      %v1679 = vsel %vm1423, %v1273, %v1551
      %v1680 = vsel %vm1424, %v1276, %v1552
      %v1681 = vsel %vm1425, %v1281, %v1553
      %v1682 = vsel %vm1426, %v1284, %v1554
      %v1683 = vsel %vm1427, %v1289, %v1555
      %v1684 = vsel %vm1428, %v1292, %v1556
      %v1685 = vsel %vm1429, %v1297, %v1557
      %v1686 = vsel %vm1430, %v1300, %v1558
      %v1687 = vpack.c.bf16 %v1560, %v1559
      %v1688 = vpack.c.bf16 %v1562, %v1561
      %v1689 = vpack.c.bf16 %v1564, %v1563
      %v1690 = vpack.c.bf16 %v1566, %v1565
      %v1691 = vpack.c.bf16 %v1568, %v1567
      %v1692 = vpack.c.bf16 %v1570, %v1569
      %v1693 = vpack.c.bf16 %v1572, %v1571
      %v1694 = vpack.c.bf16 %v1574, %v1573
      %v1695 = vpack.c.bf16 %v1576, %v1575
      %v1696 = vpack.c.bf16 %v1578, %v1577
      %v1697 = vpack.c.bf16 %v1580, %v1579
      %v1698 = vpack.c.bf16 %v1582, %v1581
      %v1699 = vpack.c.bf16 %v1584, %v1583
      %v1700 = vpack.c.bf16 %v1586, %v1585
      %v1701 = vpack.c.bf16 %v1588, %v1587
      %v1702 = vpack.c.bf16 %v1590, %v1589
      %v1703 = vpack.c.bf16 %v1592, %v1591
      %v1704 = vpack.c.bf16 %v1594, %v1593
      %v1705 = vpack.c.bf16 %v1596, %v1595
      %v1706 = vpack.c.bf16 %v1598, %v1597
      %v1707 = vpack.c.bf16 %v1600, %v1599
      %v1708 = vpack.c.bf16 %v1602, %v1601
      %v1709 = vpack.c.bf16 %v1604, %v1603
      %v1710 = vpack.c.bf16 %v1606, %v1605
      %v1711 = vpack.c.bf16 %v1608, %v1607
      %v1712 = vpack.c.bf16 %v1610, %v1609
      %v1713 = vpack.c.bf16 %v1612, %v1611
      %v1714 = vpack.c.bf16 %v1614, %v1613
      %v1715 = vpack.c.bf16 %v1616, %v1615
      %v1716 = vpack.c.bf16 %v1618, %v1617
      %v1717 = vpack.c.bf16 %v1620, %v1619
      %v1718 = vpack.c.bf16 %v1622, %v1621
      %v1719 = vpack.c.bf16 %v1624, %v1623
      %v1720 = vpack.c.bf16 %v1626, %v1625
      %v1721 = vpack.c.bf16 %v1628, %v1627
      %v1722 = vpack.c.bf16 %v1630, %v1629
      %v1723 = vpack.c.bf16 %v1632, %v1631
      %v1724 = vpack.c.bf16 %v1634, %v1633
      %v1725 = vpack.c.bf16 %v1636, %v1635
      %v1726 = vpack.c.bf16 %v1638, %v1637
      %v1727 = vpack.c.bf16 %v1640, %v1639
      %v1728 = vpack.c.bf16 %v1642, %v1641
      %v1729 = vpack.c.bf16 %v1644, %v1643
      %v1730 = vpack.c.bf16 %v1646, %v1645
      %v1731 = vpack.c.bf16 %v1648, %v1647
      %v1732 = vpack.c.bf16 %v1650, %v1649
      %v1733 = vpack.c.bf16 %v1652, %v1651
      %v1734 = vpack.c.bf16 %v1654, %v1653
      %v1735 = vpack.c.bf16 %v1656, %v1655
      %v1736 = vpack.c.bf16 %v1658, %v1657
      %v1737 = vpack.c.bf16 %v1660, %v1659
      %v1738 = vpack.c.bf16 %v1662, %v1661
      %v1739 = vpack.c.bf16 %v1664, %v1663
      %v1740 = vpack.c.bf16 %v1666, %v1665
      %v1741 = vpack.c.bf16 %v1668, %v1667
      %v1742 = vpack.c.bf16 %v1670, %v1669
      %v1743 = vpack.c.bf16 %v1672, %v1671
      %v1744 = vpack.c.bf16 %v1674, %v1673
      %v1745 = vpack.c.bf16 %v1676, %v1675
      %v1746 = vpack.c.bf16 %v1678, %v1677
      %v1747 = vpack.c.bf16 %v1680, %v1679
      %v1748 = vpack.c.bf16 %v1682, %v1681
      %v1749 = vpack.c.bf16 %v1684, %v1683
      %v1750 = vpack.c.bf16 %v1686, %v1685
      %v1815 = vunpack.c.l.b16 %v1687
      %v1816 = vunpack.c.h.b16 %v1687
      %v1817 = vunpack.c.l.b16 %v1688
      %v1818 = vunpack.c.h.b16 %v1688
      %v1819 = vunpack.c.l.b16 %v1689
      %v1820 = vunpack.c.h.b16 %v1689
      %v1821 = vunpack.c.l.b16 %v1690
      %v1822 = vunpack.c.h.b16 %v1690
      %v1823 = vunpack.c.l.b16 %v1691
      %v1824 = vunpack.c.h.b16 %v1691
      %v1825 = vunpack.c.l.b16 %v1692
      %v1826 = vunpack.c.h.b16 %v1692
      %v1827 = vunpack.c.l.b16 %v1693
      %v1828 = vunpack.c.h.b16 %v1693
      %v1829 = vunpack.c.l.b16 %v1694
      %v1830 = vunpack.c.h.b16 %v1694
      %v1831 = vunpack.c.l.b16 %v1695
      %v1832 = vunpack.c.h.b16 %v1695
      %v1833 = vunpack.c.l.b16 %v1696
      %v1834 = vunpack.c.h.b16 %v1696
      %v1835 = vunpack.c.l.b16 %v1697
      %v1836 = vunpack.c.h.b16 %v1697
      %v1837 = vunpack.c.l.b16 %v1698
      %v1838 = vunpack.c.h.b16 %v1698
      %v1839 = vunpack.c.l.b16 %v1699
      %v1840 = vunpack.c.h.b16 %v1699
      %v1841 = vunpack.c.l.b16 %v1700
      %v1842 = vunpack.c.h.b16 %v1700
      %v1843 = vunpack.c.l.b16 %v1701
      %v1844 = vunpack.c.h.b16 %v1701
      %v1845 = vunpack.c.l.b16 %v1702
      %v1846 = vunpack.c.h.b16 %v1702
      %v1847 = vunpack.c.l.b16 %v1703
      %v1848 = vunpack.c.h.b16 %v1703
      %v1849 = vunpack.c.l.b16 %v1704
      %v1850 = vunpack.c.h.b16 %v1704
      %v1851 = vunpack.c.l.b16 %v1705
      %v1852 = vunpack.c.h.b16 %v1705
      %v1853 = vunpack.c.l.b16 %v1706
      %v1854 = vunpack.c.h.b16 %v1706
      %v1855 = vunpack.c.l.b16 %v1707
      %v1856 = vunpack.c.h.b16 %v1707
      %v1857 = vunpack.c.l.b16 %v1708
      %v1858 = vunpack.c.h.b16 %v1708
      %v1859 = vunpack.c.l.b16 %v1709
      %v1860 = vunpack.c.h.b16 %v1709
      %v1861 = vunpack.c.l.b16 %v1710
      %v1862 = vunpack.c.h.b16 %v1710
      %v1863 = vunpack.c.l.b16 %v1711
      %v1864 = vunpack.c.h.b16 %v1711
      %v1865 = vunpack.c.l.b16 %v1712
      %v1866 = vunpack.c.h.b16 %v1712
      %v1867 = vunpack.c.l.b16 %v1713
      %v1868 = vunpack.c.h.b16 %v1713
      %v1869 = vunpack.c.l.b16 %v1714
      %v1870 = vunpack.c.h.b16 %v1714
      %v1871 = vunpack.c.l.b16 %v1715
      %v1872 = vunpack.c.h.b16 %v1715
      %v1873 = vunpack.c.l.b16 %v1716
      %v1874 = vunpack.c.h.b16 %v1716
      %v1875 = vunpack.c.l.b16 %v1717
      %v1876 = vunpack.c.h.b16 %v1717
      %v1877 = vunpack.c.l.b16 %v1718
      %v1878 = vunpack.c.h.b16 %v1718
      %v1879 = vunpack.c.l.b16 %v1719
      %v1880 = vunpack.c.h.b16 %v1719
      %v1881 = vunpack.c.l.b16 %v1720
      %v1882 = vunpack.c.h.b16 %v1720
      %v1883 = vunpack.c.l.b16 %v1721
      %v1884 = vunpack.c.h.b16 %v1721
      %v1885 = vunpack.c.l.b16 %v1722
      %v1886 = vunpack.c.h.b16 %v1722
      %v1887 = vunpack.c.l.b16 %v1723
      %v1888 = vunpack.c.h.b16 %v1723
      %v1889 = vunpack.c.l.b16 %v1724
      %v1890 = vunpack.c.h.b16 %v1724
      %v1891 = vunpack.c.l.b16 %v1725
      %v1892 = vunpack.c.h.b16 %v1725
      %v1893 = vunpack.c.l.b16 %v1726
      %v1894 = vunpack.c.h.b16 %v1726
      %v1895 = vunpack.c.l.b16 %v1727
      %v1896 = vunpack.c.h.b16 %v1727
      %v1897 = vunpack.c.l.b16 %v1728
      %v1898 = vunpack.c.h.b16 %v1728
      %v1899 = vunpack.c.l.b16 %v1729
      %v1900 = vunpack.c.h.b16 %v1729
      %v1901 = vunpack.c.l.b16 %v1730
      %v1902 = vunpack.c.h.b16 %v1730
      %v1903 = vunpack.c.l.b16 %v1731
      %v1904 = vunpack.c.h.b16 %v1731
      %v1905 = vunpack.c.l.b16 %v1732
      %v1906 = vunpack.c.h.b16 %v1732
      %v1907 = vunpack.c.l.b16 %v1733
      %v1908 = vunpack.c.h.b16 %v1733
      %v1909 = vunpack.c.l.b16 %v1734
      %v1910 = vunpack.c.h.b16 %v1734
      %v1911 = vunpack.c.l.b16 %v1735
      %v1912 = vunpack.c.h.b16 %v1735
      %v1913 = vunpack.c.l.b16 %v1736
      %v1914 = vunpack.c.h.b16 %v1736
      %v1915 = vunpack.c.l.b16 %v1737
      %v1916 = vunpack.c.h.b16 %v1737
      %v1917 = vunpack.c.l.b16 %v1738
      %v1918 = vunpack.c.h.b16 %v1738
      %v1919 = vunpack.c.l.b16 %v1739
      %v1920 = vunpack.c.h.b16 %v1739
      %v1921 = vunpack.c.l.b16 %v1740
      %v1922 = vunpack.c.h.b16 %v1740
      %v1923 = vunpack.c.l.b16 %v1741
      %v1924 = vunpack.c.h.b16 %v1741
      %v1925 = vunpack.c.l.b16 %v1742
      %v1926 = vunpack.c.h.b16 %v1742
      %v1927 = vunpack.c.l.b16 %v1743
      %v1928 = vunpack.c.h.b16 %v1743
      %v1929 = vunpack.c.l.b16 %v1744
      %v1930 = vunpack.c.h.b16 %v1744
      %v1931 = vunpack.c.l.b16 %v1745
      %v1932 = vunpack.c.h.b16 %v1745
      %v1933 = vunpack.c.l.b16 %v1746
      %v1934 = vunpack.c.h.b16 %v1746
      %v1935 = vunpack.c.l.b16 %v1747
      %v1936 = vunpack.c.h.b16 %v1747
      %v1937 = vunpack.c.l.b16 %v1748
      %v1938 = vunpack.c.h.b16 %v1748
      %v1939 = vunpack.c.l.b16 %v1749
      %v1940 = vunpack.c.h.b16 %v1749
      %v1941 = vunpack.c.l.b16 %v1750
      %v1942 = vunpack.c.h.b16 %v1750
      %v1943 = vpack.c.b16 %v1815, %v1815
      %v1944 = vpack.c.b16 %v1816, %v1816
      %v1945 = vpack.c.b16 %v1817, %v1817
      %v1946 = vpack.c.b16 %v1818, %v1818
      %v1947 = vpack.c.b16 %v1819, %v1819
      %v1948 = vpack.c.b16 %v1820, %v1820
      %v1949 = vpack.c.b16 %v1821, %v1821
      %v1950 = vpack.c.b16 %v1822, %v1822
      %v1951 = vpack.c.b16 %v1823, %v1823
      %v1952 = vpack.c.b16 %v1824, %v1824
      %v1953 = vpack.c.b16 %v1825, %v1825
      %v1954 = vpack.c.b16 %v1826, %v1826
      %v1955 = vpack.c.b16 %v1827, %v1827
      %v1956 = vpack.c.b16 %v1828, %v1828
      %v1957 = vpack.c.b16 %v1829, %v1829
      %v1958 = vpack.c.b16 %v1830, %v1830
      %v1959 = vpack.c.b16 %v1831, %v1831
      %v1960 = vpack.c.b16 %v1832, %v1832
      %v1961 = vpack.c.b16 %v1833, %v1833
      %v1962 = vpack.c.b16 %v1834, %v1834
      %v1963 = vpack.c.b16 %v1835, %v1835
      %v1964 = vpack.c.b16 %v1836, %v1836
      %v1965 = vpack.c.b16 %v1837, %v1837
      %v1966 = vpack.c.b16 %v1838, %v1838
      %v1967 = vpack.c.b16 %v1839, %v1839
      %v1968 = vpack.c.b16 %v1840, %v1840
      %v1969 = vpack.c.b16 %v1841, %v1841
      %v1970 = vpack.c.b16 %v1842, %v1842
      %v1971 = vpack.c.b16 %v1843, %v1843
      %v1972 = vpack.c.b16 %v1844, %v1844
      %v1973 = vpack.c.b16 %v1845, %v1845
      %v1974 = vpack.c.b16 %v1846, %v1846
      %v1975 = vpack.c.b16 %v1847, %v1847
      %v1976 = vpack.c.b16 %v1848, %v1848
      %v1977 = vpack.c.b16 %v1849, %v1849
      %v1978 = vpack.c.b16 %v1850, %v1850
      %v1979 = vpack.c.b16 %v1851, %v1851
      %v1980 = vpack.c.b16 %v1852, %v1852
      %v1981 = vpack.c.b16 %v1853, %v1853
      %v1982 = vpack.c.b16 %v1854, %v1854
      %v1983 = vpack.c.b16 %v1855, %v1855
      %v1984 = vpack.c.b16 %v1856, %v1856
      %v1985 = vpack.c.b16 %v1857, %v1857
      %v1986 = vpack.c.b16 %v1858, %v1858
      %v1987 = vpack.c.b16 %v1859, %v1859
      %v1988 = vpack.c.b16 %v1860, %v1860
      %v1989 = vpack.c.b16 %v1861, %v1861
      %v1990 = vpack.c.b16 %v1862, %v1862
      %v1991 = vpack.c.b16 %v1863, %v1863
      %v1992 = vpack.c.b16 %v1864, %v1864
      %v1993 = vpack.c.b16 %v1865, %v1865
      %v1994 = vpack.c.b16 %v1866, %v1866
      %v1995 = vpack.c.b16 %v1867, %v1867
      %v1996 = vpack.c.b16 %v1868, %v1868
      %v1997 = vpack.c.b16 %v1869, %v1869
      %v1998 = vpack.c.b16 %v1870, %v1870
      %v1999 = vpack.c.b16 %v1871, %v1871
      %v2000 = vpack.c.b16 %v1872, %v1872
      %v2001 = vpack.c.b16 %v1873, %v1873
      %v2002 = vpack.c.b16 %v1874, %v1874
      %v2003 = vpack.c.b16 %v1875, %v1875
      %v2004 = vpack.c.b16 %v1876, %v1876
      %v2005 = vpack.c.b16 %v1877, %v1877
      %v2006 = vpack.c.b16 %v1878, %v1878
      %v2007 = vpack.c.b16 %v1879, %v1879
      %v2008 = vpack.c.b16 %v1880, %v1880
      %v2009 = vpack.c.b16 %v1881, %v1881
      %v2010 = vpack.c.b16 %v1882, %v1882
      %v2011 = vpack.c.b16 %v1883, %v1883
      %v2012 = vpack.c.b16 %v1884, %v1884
      %v2013 = vpack.c.b16 %v1885, %v1885
      %v2014 = vpack.c.b16 %v1886, %v1886
      %v2015 = vpack.c.b16 %v1887, %v1887
      %v2016 = vpack.c.b16 %v1888, %v1888
      %v2017 = vpack.c.b16 %v1889, %v1889
      %v2018 = vpack.c.b16 %v1890, %v1890
      %v2019 = vpack.c.b16 %v1891, %v1891
      %v2020 = vpack.c.b16 %v1892, %v1892
      %v2021 = vpack.c.b16 %v1893, %v1893
      %v2022 = vpack.c.b16 %v1894, %v1894
      %v2023 = vpack.c.b16 %v1895, %v1895
      %v2024 = vpack.c.b16 %v1896, %v1896
      %v2025 = vpack.c.b16 %v1897, %v1897
      %v2026 = vpack.c.b16 %v1898, %v1898
      %v2027 = vpack.c.b16 %v1899, %v1899
      %v2028 = vpack.c.b16 %v1900, %v1900
      %v2029 = vpack.c.b16 %v1901, %v1901
      %v2030 = vpack.c.b16 %v1902, %v1902
      %v2031 = vpack.c.b16 %v1903, %v1903
      %v2032 = vpack.c.b16 %v1904, %v1904
      %v2033 = vpack.c.b16 %v1905, %v1905
      %v2034 = vpack.c.b16 %v1906, %v1906
      %v2035 = vpack.c.b16 %v1907, %v1907
      %v2036 = vpack.c.b16 %v1908, %v1908
      %v2037 = vpack.c.b16 %v1909, %v1909
      %v2038 = vpack.c.b16 %v1910, %v1910
      %v2039 = vpack.c.b16 %v1911, %v1911
      %v2040 = vpack.c.b16 %v1912, %v1912
      %v2041 = vpack.c.b16 %v1913, %v1913
      %v2042 = vpack.c.b16 %v1914, %v1914
      %v2043 = vpack.c.b16 %v1915, %v1915
      %v2044 = vpack.c.b16 %v1916, %v1916
      %v2045 = vpack.c.b16 %v1917, %v1917
      %v2046 = vpack.c.b16 %v1918, %v1918
      %v2047 = vpack.c.b16 %v1919, %v1919
      %v2048 = vpack.c.b16 %v1920, %v1920
      %v2049 = vpack.c.b16 %v1921, %v1921
      %v2050 = vpack.c.b16 %v1922, %v1922
      %v2051 = vpack.c.b16 %v1923, %v1923
      %v2052 = vpack.c.b16 %v1924, %v1924
      %v2053 = vpack.c.b16 %v1925, %v1925
      %v2054 = vpack.c.b16 %v1926, %v1926
      %v2055 = vpack.c.b16 %v1927, %v1927
      %v2056 = vpack.c.b16 %v1928, %v1928
      %v2057 = vpack.c.b16 %v1929, %v1929
      %v2058 = vpack.c.b16 %v1930, %v1930
      %v2059 = vpack.c.b16 %v1931, %v1931
      %v2060 = vpack.c.b16 %v1932, %v1932
      %v2061 = vpack.c.b16 %v1933, %v1933
      %v2062 = vpack.c.b16 %v1934, %v1934
      %v2063 = vpack.c.b16 %v1935, %v1935
      %v2064 = vpack.c.b16 %v1936, %v1936
      %v2065 = vpack.c.b16 %v1937, %v1937
      %v2066 = vpack.c.b16 %v1938, %v1938
      %v2067 = vpack.c.b16 %v1939, %v1939
      %v2068 = vpack.c.b16 %v1940, %v1940
      %v2069 = vpack.c.b16 %v1941, %v1941
      %v2070 = vpack.c.b16 %v1942, %v1942
      %2199 = vst [vmem:[%s172] sm:$0xf] %v1943
      %2200 = vst [vmem:[%s172 + $0x4] sm:$0xf] %v1944
      %2201 = vst [vmem:[%s172 + $0x8] sm:$0xf] %v1945
      %2202 = vst [vmem:[%s172 + $0xc] sm:$0xf] %v1946
      %2203 = vst [vmem:[%s172 + $0x10] sm:$0xf] %v1947
      %2204 = vst [vmem:[%s172 + $0x14] sm:$0xf] %v1948
      %2205 = vst [vmem:[%s172 + $0x18] sm:$0xf] %v1949
      %2206 = vst [vmem:[%s172 + $0x1c] sm:$0xf] %v1950
      %2207 = vst [vmem:[%s172 + $0x20] sm:$0xf] %v1951
      %2208 = vst [vmem:[%s172 + $0x24] sm:$0xf] %v1952
      %2209 = vst [vmem:[%s172 + $0x28] sm:$0xf] %v1953
      %2210 = vst [vmem:[%s172 + $0x2c] sm:$0xf] %v1954
      %2211 = vst [vmem:[%s172 + $0x30] sm:$0xf] %v1955
      %2212 = vst [vmem:[%s172 + $0x34] sm:$0xf] %v1956
      %2213 = vst [vmem:[%s172 + $0x38] sm:$0xf] %v1957
      %2214 = vst [vmem:[%s172 + $0x3c] sm:$0xf] %v1958
      %2215 = vst [vmem:[%s172 + $0x40] sm:$0xf] %v1959
      %2216 = vst [vmem:[%s172 + $0x44] sm:$0xf] %v1960
      %2217 = vst [vmem:[%s172 + $0x48] sm:$0xf] %v1961
      %2218 = vst [vmem:[%s172 + $0x4c] sm:$0xf] %v1962
      %2219 = vst [vmem:[%s172 + $0x50] sm:$0xf] %v1963
      %2220 = vst [vmem:[%s172 + $0x54] sm:$0xf] %v1964
      %2221 = vst [vmem:[%s172 + $0x58] sm:$0xf] %v1965
      %2222 = vst [vmem:[%s172 + $0x5c] sm:$0xf] %v1966
      %2223 = vst [vmem:[%s172 + $0x60] sm:$0xf] %v1967
      %2224 = vst [vmem:[%s172 + $0x64] sm:$0xf] %v1968
      %2225 = vst [vmem:[%s172 + $0x68] sm:$0xf] %v1969
      %2226 = vst [vmem:[%s172 + $0x6c] sm:$0xf] %v1970
      %2227 = vst [vmem:[%s172 + $0x70] sm:$0xf] %v1971
      %2228 = vst [vmem:[%s172 + $0x74] sm:$0xf] %v1972
      %2229 = vst [vmem:[%s172 + $0x78] sm:$0xf] %v1973
      %2230 = vst [vmem:[%s172 + $0x7c] sm:$0xf] %v1974
      %2231 = vst [vmem:[%s172 + $0x80] sm:$0xf] %v1975
      %2232 = vst [vmem:[%s172 + $0x84] sm:$0xf] %v1976
      %2233 = vst [vmem:[%s172 + $0x88] sm:$0xf] %v1977
      %2234 = vst [vmem:[%s172 + $0x8c] sm:$0xf] %v1978
      %2235 = vst [vmem:[%s172 + $0x90] sm:$0xf] %v1979
      %2236 = vst [vmem:[%s172 + $0x94] sm:$0xf] %v1980
      %2237 = vst [vmem:[%s172 + $0x98] sm:$0xf] %v1981
      %2238 = vst [vmem:[%s172 + $0x9c] sm:$0xf] %v1982
      %2239 = vst [vmem:[%s172 + $0xa0] sm:$0xf] %v1983
      %2240 = vst [vmem:[%s172 + $0xa4] sm:$0xf] %v1984
      %2241 = vst [vmem:[%s172 + $0xa8] sm:$0xf] %v1985
      %2242 = vst [vmem:[%s172 + $0xac] sm:$0xf] %v1986
      %2243 = vst [vmem:[%s172 + $0xb0] sm:$0xf] %v1987
      %2244 = vst [vmem:[%s172 + $0xb4] sm:$0xf] %v1988
      %2245 = vst [vmem:[%s172 + $0xb8] sm:$0xf] %v1989
      %2246 = vst [vmem:[%s172 + $0xbc] sm:$0xf] %v1990
      %2247 = vst [vmem:[%s172 + $0xc0] sm:$0xf] %v1991
      %2248 = vst [vmem:[%s172 + $0xc4] sm:$0xf] %v1992
      %2249 = vst [vmem:[%s172 + $0xc8] sm:$0xf] %v1993
      %2250 = vst [vmem:[%s172 + $0xcc] sm:$0xf] %v1994
      %2251 = vst [vmem:[%s172 + $0xd0] sm:$0xf] %v1995
      %2252 = vst [vmem:[%s172 + $0xd4] sm:$0xf] %v1996
      %2253 = vst [vmem:[%s172 + $0xd8] sm:$0xf] %v1997
      %2254 = vst [vmem:[%s172 + $0xdc] sm:$0xf] %v1998
      %2255 = vst [vmem:[%s172 + $0xe0] sm:$0xf] %v1999
      %2256 = vst [vmem:[%s172 + $0xe4] sm:$0xf] %v2000
      %2257 = vst [vmem:[%s172 + $0xe8] sm:$0xf] %v2001
      %2258 = vst [vmem:[%s172 + $0xec] sm:$0xf] %v2002
      %2259 = vst [vmem:[%s172 + $0xf0] sm:$0xf] %v2003
      %2260 = vst [vmem:[%s172 + $0xf4] sm:$0xf] %v2004
      %2261 = vst [vmem:[%s172 + $0xf8] sm:$0xf] %v2005
      %2262 = vst [vmem:[%s172 + $0xfc] sm:$0xf] %v2006
      %2263 = vst [vmem:[%s172 + $0x100] sm:$0xf] %v2007
      %2264 = vst [vmem:[%s172 + $0x104] sm:$0xf] %v2008
      %2265 = vst [vmem:[%s172 + $0x108] sm:$0xf] %v2009
      %2266 = vst [vmem:[%s172 + $0x10c] sm:$0xf] %v2010
      %2267 = vst [vmem:[%s172 + $0x110] sm:$0xf] %v2011
      %2268 = vst [vmem:[%s172 + $0x114] sm:$0xf] %v2012
      %2269 = vst [vmem:[%s172 + $0x118] sm:$0xf] %v2013
      %2270 = vst [vmem:[%s172 + $0x11c] sm:$0xf] %v2014
      %2271 = vst [vmem:[%s172 + $0x120] sm:$0xf] %v2015
      %2272 = vst [vmem:[%s172 + $0x124] sm:$0xf] %v2016
      %2273 = vst [vmem:[%s172 + $0x128] sm:$0xf] %v2017
      %2274 = vst [vmem:[%s172 + $0x12c] sm:$0xf] %v2018
      %2275 = vst [vmem:[%s172 + $0x130] sm:$0xf] %v2019
      %2276 = vst [vmem:[%s172 + $0x134] sm:$0xf] %v2020
      %2277 = vst [vmem:[%s172 + $0x138] sm:$0xf] %v2021
      %2278 = vst [vmem:[%s172 + $0x13c] sm:$0xf] %v2022
      %2279 = vst [vmem:[%s172 + $0x140] sm:$0xf] %v2023
      %2280 = vst [vmem:[%s172 + $0x144] sm:$0xf] %v2024
      %2281 = vst [vmem:[%s172 + $0x148] sm:$0xf] %v2025
      %2282 = vst [vmem:[%s172 + $0x14c] sm:$0xf] %v2026
      %2283 = vst [vmem:[%s172 + $0x150] sm:$0xf] %v2027
      %2284 = vst [vmem:[%s172 + $0x154] sm:$0xf] %v2028
      %2285 = vst [vmem:[%s172 + $0x158] sm:$0xf] %v2029
      %2286 = vst [vmem:[%s172 + $0x15c] sm:$0xf] %v2030
      %2287 = vst [vmem:[%s172 + $0x160] sm:$0xf] %v2031
      %2288 = vst [vmem:[%s172 + $0x164] sm:$0xf] %v2032
      %2289 = vst [vmem:[%s172 + $0x168] sm:$0xf] %v2033
      %2290 = vst [vmem:[%s172 + $0x16c] sm:$0xf] %v2034
      %2291 = vst [vmem:[%s172 + $0x170] sm:$0xf] %v2035
      %2292 = vst [vmem:[%s172 + $0x174] sm:$0xf] %v2036
      %2293 = vst [vmem:[%s172 + $0x178] sm:$0xf] %v2037
      %2294 = vst [vmem:[%s172 + $0x17c] sm:$0xf] %v2038
      %2295 = vst [vmem:[%s172 + $0x180] sm:$0xf] %v2039
      %2296 = vst [vmem:[%s172 + $0x184] sm:$0xf] %v2040
      %2297 = vst [vmem:[%s172 + $0x188] sm:$0xf] %v2041
      %2298 = vst [vmem:[%s172 + $0x18c] sm:$0xf] %v2042
      %2299 = vst [vmem:[%s172 + $0x190] sm:$0xf] %v2043
      %2300 = vst [vmem:[%s172 + $0x194] sm:$0xf] %v2044
      %2301 = vst [vmem:[%s172 + $0x198] sm:$0xf] %v2045
      %2302 = vst [vmem:[%s172 + $0x19c] sm:$0xf] %v2046
      %2303 = vst [vmem:[%s172 + $0x1a0] sm:$0xf] %v2047
      %2304 = vst [vmem:[%s172 + $0x1a4] sm:$0xf] %v2048
      %2305 = vst [vmem:[%s172 + $0x1a8] sm:$0xf] %v2049
      %2306 = vst [vmem:[%s172 + $0x1ac] sm:$0xf] %v2050
      %2307 = vst [vmem:[%s172 + $0x1b0] sm:$0xf] %v2051
      %2308 = vst [vmem:[%s172 + $0x1b4] sm:$0xf] %v2052
      %2309 = vst [vmem:[%s172 + $0x1b8] sm:$0xf] %v2053
      %2310 = vst [vmem:[%s172 + $0x1bc] sm:$0xf] %v2054
      %2311 = vst [vmem:[%s172 + $0x1c0] sm:$0xf] %v2055
      %2312 = vst [vmem:[%s172 + $0x1c4] sm:$0xf] %v2056
      %2313 = vst [vmem:[%s172 + $0x1c8] sm:$0xf] %v2057
      %2314 = vst [vmem:[%s172 + $0x1cc] sm:$0xf] %v2058
      %2315 = vst [vmem:[%s172 + $0x1d0] sm:$0xf] %v2059
      %2316 = vst [vmem:[%s172 + $0x1d4] sm:$0xf] %v2060
      %2317 = vst [vmem:[%s172 + $0x1d8] sm:$0xf] %v2061
      %2318 = vst [vmem:[%s172 + $0x1dc] sm:$0xf] %v2062
      %2319 = vst [vmem:[%s172 + $0x1e0] sm:$0xf] %v2063
      %2320 = vst [vmem:[%s172 + $0x1e4] sm:$0xf] %v2064
      %2321 = vst [vmem:[%s172 + $0x1e8] sm:$0xf] %v2065
      %2322 = vst [vmem:[%s172 + $0x1ec] sm:$0xf] %v2066
      %2323 = vst [vmem:[%s172 + $0x1f0] sm:$0xf] %v2067
      %2324 = vst [vmem:[%s172 + $0x1f4] sm:$0xf] %v2068
      %2325 = vst [vmem:[%s172 + $0x1f8] sm:$0xf] %v2069
      %2326 = vst [vmem:[%s172 + $0x1fc] sm:$0xf] %v2070
      %s2327 = smul.u32 128, %s14
      %p2328 = scmp.lt.s32.totalorder %s2327, 895
      %s2329 = scalar_select %p2328, %s2327, 895
      %s2330 = smul.addr %s2329, 4
      %s2331 = scalar_lea.vmem %s3, %s2330
      // Predicated region
      $region33: #{generator_forward.12} parent=31 // pred_check
        %p2332 = pneg %p100
      $region34: #{generator_forward.12} parent=31 // pred_check_branch
        %2334 = sbr.rel (%p2332) target = $region36
      $region35: #{generator_forward.12} parent=31 // pred_region
        %s2335 = smul.u32 128, %s14
      $region36: #{generator_forward.12} parent=31 // pred_fallthru
        _
    $region32: #{generator_forward.12} parent=5 // pred_fallthru
      _
    %p2336 = scmp.le.s32.totalorder 2, %s9
    // Predicated region
    $region37: #{generator_forward.12} parent=5 // pred_check
      %p2337 = pneg %p2336
    $region38: #{generator_forward.12} parent=5 // pred_check_branch
      %2339 = sbr.rel (%p2337) target = $region40
    $region39: #{generator_forward.12} parent=5 // pred_region
      %s2340 = ssub.s32 %s9, 2
      // Predicated region
      $region41: #{generator_forward.12} parent=39 // pred_check
        %p2341 = pneg %p106
      $region42: #{generator_forward.12} parent=39 // pred_check_branch
        %2343 = sbr.rel (%p2341) target = $region44
      $region43: #{generator_forward.12} parent=39 // pred_region
        %s2344 = smul.u32 128, %s15
        %p2345 = scmp.lt.s32.totalorder %s2344, 895
        %s2346 = scalar_select %p2345, %s2344, 895
        %s2347 = smul.addr %s2346, 4
        %s2348 = scalar_lea.vmem %s3, %s2347
      $region44: #{generator_forward.12} parent=39 // pred_fallthru
        _
    $region40: #{generator_forward.12} parent=5 // pred_fallthru
      _
  $region6: #{generator_forward.12} parent=0 // loop_footer
    %s13 = sadd.s32 1, %s9
  $region7: #{generator_forward.12} parent=0 // loop_footer_branch
    %8 = sbr.rel target = $region3
  $region8: #{generator_forward.12} parent=0 // loop_exit
    _

// kernel: generator_forward.13
$region0: #{generator_forward.13}
  #allocation0 [shape = 'u32[]', space=smem, size = 0x4, offset = 0x4, fixed_abs, tag = 'smem constant byte address 0x4 - core index']
  #allocation1 [shape = 'u32[144,128]{1,0:T(1,128)}', space=vmem, size = 0x12000, scoped, tag = 'internal scratch']
  %s0 = inlined_call_operand.vmem [shape: bf16[25600,128], index: 0, kind: input, shape index: {}]
  %s1 = inlined_call_operand.vmem [shape: bf16[128,128], index: 1, kind: input, shape index: {}]
  %s2 = inlined_call_operand.vmem [shape: f32[1,128], index: 2, kind: input, shape index: {}]
  %s3 = inlined_call_operand.vmem [shape: f32[25600,128], index: 3, kind: output, shape index: {}]
  %s4 = sld [smem:[#allocation0]]
  $region45: #{generator_forward.13} parent=0
    _
  %s6 = ssub.s32 1, %s4
  %s7 = scalar_select 0, %s6, %s4
  loop: start=0, step=1, limit=27
  $region2: #{generator_forward.13} parent=0 // loop_pre_header
    _
  $region3: #{generator_forward.13} parent=0 // loop_header
    %s9 = sphi 0, %s13
    %p10 = scmp.ge.s32.totalorder %s9, 27
    %s19 = sphi 0, %s21
    %s22 = sphi 0, %s19
    %s23 = sphi 0, %s22
    %s39 = sphi 0, %s23
    %s43 = sphi 0, %s43
    %s45 = sphi 0, %s43
    %s46 = sphi 0, %s45
    %s60 = sphi 0, %s46
    %s64 = sphi 0, %s64
    %s66 = sphi 0, %s64
    %s67 = sphi 0, %s66
    %s81 = sphi 0, %s67
    %s87 = sphi 0, %s89
    %s90 = sphi 0, %s87
    %s91 = sphi 0, %s90
    %s107 = sphi 0, %s91
  $region4: #{generator_forward.13} parent=0 // loop_header_branch
    %12 = sbr.rel (%p10) target = $region8
  $region5: #{generator_forward.13} parent=0 // loop_body
    %s14 = ssub.s32 %s9, 1
    %s15 = ssub.s32 %s9, 2
    %s16 = sadd.s32 %s9, 1
    %s17 = ssub.s32 %s9, %s16
    %p18 = scmp.eq.s32.totalorder %s17, 0
    %s20 = sadd.s32 %s19, 1
    %s21 = scalar_select %p18, %s19, %s20
    %p24 = pneg %p18
    %p25 = scmp.eq.s32.totalorder %s9, 24
    %p26 = por %p24, %p25
    %p27 = scmp.ne.s32.totalorder %s19, %s22
    %p28 = scmp.eq.s32.totalorder %s9, 0
    %p29 = por %p27, %p28
    %p30 = scmp.ne.s32.totalorder %s19, %s22
    %p31 = scmp.eq.s32.totalorder %s14, 24
    %p32 = por %p30, %p31
    %p33 = scmp.ne.s32.totalorder %s22, %s23
    %p34 = scmp.eq.s32.totalorder %s14, 0
    %p35 = por %p33, %p34
    %p36 = scmp.ne.s32.totalorder %s22, %s23
    %p37 = scmp.eq.s32.totalorder %s15, 24
    %p38 = por %p36, %p37
    %p40 = scmp.ne.s32.totalorder %s23, %s39
    %p41 = scmp.eq.s32.totalorder %s15, 0
    %p42 = por %p40, %p41
    %s44 = sadd.s32 %s43, 1
    %p47 = scmp.eq.s32.totalorder %s9, 24
    %p48 = scmp.ne.s32.totalorder %s43, %s45
    %p49 = scmp.eq.s32.totalorder %s9, 0
    %p50 = por %p48, %p49
    %p51 = scmp.ne.s32.totalorder %s43, %s45
    %p52 = scmp.eq.s32.totalorder %s14, 24
    %p53 = por %p51, %p52
    %p54 = scmp.ne.s32.totalorder %s45, %s46
    %p55 = scmp.eq.s32.totalorder %s14, 0
    %p56 = por %p54, %p55
    %p57 = scmp.ne.s32.totalorder %s45, %s46
    %p58 = scmp.eq.s32.totalorder %s15, 24
    %p59 = por %p57, %p58
    %p61 = scmp.ne.s32.totalorder %s46, %s60
    %p62 = scmp.eq.s32.totalorder %s15, 0
    %p63 = por %p61, %p62
    %s65 = sadd.s32 %s64, 1
    %p68 = scmp.eq.s32.totalorder %s9, 24
    %p69 = scmp.ne.s32.totalorder %s64, %s66
    %p70 = scmp.eq.s32.totalorder %s9, 0
    %p71 = por %p69, %p70
    %p72 = scmp.ne.s32.totalorder %s64, %s66
    %p73 = scmp.eq.s32.totalorder %s14, 24
    %p74 = por %p72, %p73
    %p75 = scmp.ne.s32.totalorder %s66, %s67
    %p76 = scmp.eq.s32.totalorder %s14, 0
    %p77 = por %p75, %p76
    %p78 = scmp.ne.s32.totalorder %s66, %s67
    %p79 = scmp.eq.s32.totalorder %s15, 24
    %p80 = por %p78, %p79
    %p82 = scmp.ne.s32.totalorder %s67, %s81
    %p83 = scmp.eq.s32.totalorder %s15, 0
    %p84 = por %p82, %p83
    %s85 = ssub.s32 %s9, %s16
    %p86 = scmp.eq.s32.totalorder %s85, 0
    %s88 = sadd.s32 %s87, 1
    %s89 = scalar_select %p86, %s87, %s88
    %p92 = pneg %p86
    %p93 = scmp.eq.s32.totalorder %s9, 24
    %p94 = por %p92, %p93
    %p95 = scmp.ne.s32.totalorder %s87, %s90
    %p96 = scmp.eq.s32.totalorder %s9, 0
    %p97 = por %p95, %p96
    %p98 = scmp.ne.s32.totalorder %s87, %s90
    %p99 = scmp.eq.s32.totalorder %s14, 24
    %p100 = por %p98, %p99
    %p101 = scmp.ne.s32.totalorder %s90, %s91
    %p102 = scmp.eq.s32.totalorder %s14, 0
    %p103 = por %p101, %p102
    %p104 = scmp.ne.s32.totalorder %s90, %s91
    %p105 = scmp.eq.s32.totalorder %s15, 24
    %p106 = por %p104, %p105
    %p108 = scmp.ne.s32.totalorder %s91, %s107
    %p109 = scmp.eq.s32.totalorder %s15, 0
    %p110 = por %p108, %p109
    %p111 = scmp.le.s32.totalorder 1, %s9
    %p112 = scmp.lt.s32.totalorder %s9, 26
    %p113 = pnand %p111, %p112
    %p114 = pneg %p113
    // Predicated region
    $region9: #{generator_forward.13} parent=5 // pred_check
      _
    $region10: #{generator_forward.13} parent=5 // pred_check_branch
      %116 = sbr.rel (%p113) target = $region12
    $region11: #{generator_forward.13} parent=5 // pred_region
      %s117 = ssub.s32 %s9, 1
      // Predicated region
      $region13: #{generator_forward.13} parent=11 // pred_check
        %p118 = pneg %p56
      $region14: #{generator_forward.13} parent=11 // pred_check_branch
        %120 = sbr.rel (%p118) target = $region16
      $region15: #{generator_forward.13} parent=11 // pred_region
        _
      $region16: #{generator_forward.13} parent=11 // pred_fallthru
        _
      // Predicated region
      $region17: #{generator_forward.13} parent=11 // pred_check
        %p121 = pneg %p77
      $region18: #{generator_forward.13} parent=11 // pred_check_branch
        %123 = sbr.rel (%p121) target = $region20
      $region19: #{generator_forward.13} parent=11 // pred_region
        _
      $region20: #{generator_forward.13} parent=11 // pred_fallthru
        _
    $region12: #{generator_forward.13} parent=5 // pred_fallthru
      _
    %p124 = scmp.lt.s32.totalorder %s9, 25
    // Predicated region
    $region21: #{generator_forward.13} parent=5 // pred_check
      %p125 = pneg %p124
    $region22: #{generator_forward.13} parent=5 // pred_check_branch
      %127 = sbr.rel (%p125) target = $region24
    $region23: #{generator_forward.13} parent=5 // pred_region
      // Predicated region
      $region25: #{generator_forward.13} parent=23 // pred_check
        %p128 = pneg %p29
      $region26: #{generator_forward.13} parent=23 // pred_check_branch
        %130 = sbr.rel (%p128) target = $region28
      $region27: #{generator_forward.13} parent=23 // pred_region
        %s131 = smul.u32 128, %s9
        %p132 = scmp.lt.s32.totalorder %s131, 3199
        %s133 = scalar_select %p132, %s131, 3199
        %s134 = smul.addr %s133, 4
        %s135 = scalar_lea.vmem %s0, %s134
        %s136 = smul.u32 128, %s9
      $region28: #{generator_forward.13} parent=23 // pred_fallthru
        _
    $region24: #{generator_forward.13} parent=5 // pred_fallthru
      _
    %p137 = scmp.le.s32.totalorder 1, %s9
    %p138 = scmp.lt.s32.totalorder %s9, 26
    %p139 = pnand %p137, %p138
    %p140 = pneg %p139
    // Predicated region
    $region29: #{generator_forward.13} parent=5 // pred_check
      _
    $region30: #{generator_forward.13} parent=5 // pred_check_branch
      %142 = sbr.rel (%p139) target = $region32
    $region31: #{generator_forward.13} parent=5 // pred_region
      %s143 = ssub.s32 %s9, 1
      %s144 = smul.u32 128, %s14
      %p145 = scmp.lt.s32.totalorder %s144, 3199
      %s146 = scalar_select %p145, %s144, 3199
      %s147 = smul.addr %s146, 4
      %s148 = scalar_lea.vmem %s0, %s147
      %p149 = pneg %p35
      %p150 = pneg %p32
      %p151 = pneg %p56
      %p152 = pneg %p53
      %p153 = pneg %p77
      %p154 = pneg %p74
      %p155 = pneg %p103
      %p156 = pneg %p100
      %s157 = smul.u32 128, %s14
      %p158 = scmp.lt.s32.totalorder %s157, 3199
      %s159 = scalar_select %p158, %s157, 3199
      %s160 = smul.addr %s159, 8
      %s161 = scalar_lea.vmem %s3, %s160
      %s162 = smul.u32 128, %s14
      %p163 = scmp.lt.s32.totalorder %s162, 3199
      %s164 = scalar_select %p163, %s162, 3199
      %s165 = smul.addr %s164, 4
      %s166 = scalar_lea.vmem %s0, %s165
      %s167 = smul.u32 128, %s14
      %s168 = smul.u32 128, %s14
      %p169 = scmp.lt.s32.totalorder %s168, 3199
      %s170 = scalar_select %p169, %s168, 3199
      %s171 = smul.addr %s170, 8
      %s172 = scalar_lea.vmem %s3, %s171
      %s173 = smul.u32 128, %s14
      %v175 = vld [vmem:[%s166] sm:$0xf]
      %v176 = vld [vmem:[%s166 + $0x4] sm:$0xf]
      %v177 = vld [vmem:[%s166 + $0x8] sm:$0xf]
      %v178 = vld [vmem:[%s166 + $0xc] sm:$0xf]
      %v179 = vld [vmem:[%s166 + $0x10] sm:$0xf]
      %v180 = vld [vmem:[%s166 + $0x14] sm:$0xf]
      %v181 = vld [vmem:[%s166 + $0x18] sm:$0xf]
      %v182 = vld [vmem:[%s166 + $0x1c] sm:$0xf]
      %v183 = vld [vmem:[%s166 + $0x20] sm:$0xf]
      %v184 = vld [vmem:[%s166 + $0x24] sm:$0xf]
      %v185 = vld [vmem:[%s166 + $0x28] sm:$0xf]
      %v186 = vld [vmem:[%s166 + $0x2c] sm:$0xf]
      %v187 = vld [vmem:[%s166 + $0x30] sm:$0xf]
      %v188 = vld [vmem:[%s166 + $0x34] sm:$0xf]
      %v189 = vld [vmem:[%s166 + $0x38] sm:$0xf]
      %v190 = vld [vmem:[%s166 + $0x3c] sm:$0xf]
      %v191 = vld [vmem:[%s166 + $0x40] sm:$0xf]
      %v192 = vld [vmem:[%s166 + $0x44] sm:$0xf]
      %v193 = vld [vmem:[%s166 + $0x48] sm:$0xf]
      %v194 = vld [vmem:[%s166 + $0x4c] sm:$0xf]
      %v195 = vld [vmem:[%s166 + $0x50] sm:$0xf]
      %v196 = vld [vmem:[%s166 + $0x54] sm:$0xf]
      %v197 = vld [vmem:[%s166 + $0x58] sm:$0xf]
      %v198 = vld [vmem:[%s166 + $0x5c] sm:$0xf]
      %v199 = vld [vmem:[%s166 + $0x60] sm:$0xf]
      %v200 = vld [vmem:[%s166 + $0x64] sm:$0xf]
      %v201 = vld [vmem:[%s166 + $0x68] sm:$0xf]
      %v202 = vld [vmem:[%s166 + $0x6c] sm:$0xf]
      %v203 = vld [vmem:[%s166 + $0x70] sm:$0xf]
      %v204 = vld [vmem:[%s166 + $0x74] sm:$0xf]
      %v205 = vld [vmem:[%s166 + $0x78] sm:$0xf]
      %v206 = vld [vmem:[%s166 + $0x7c] sm:$0xf]
      %v207 = vld [vmem:[%s166 + $0x80] sm:$0xf]
      %v208 = vld [vmem:[%s166 + $0x84] sm:$0xf]
      %v209 = vld [vmem:[%s166 + $0x88] sm:$0xf]
      %v210 = vld [vmem:[%s166 + $0x8c] sm:$0xf]
      %v211 = vld [vmem:[%s166 + $0x90] sm:$0xf]
      %v212 = vld [vmem:[%s166 + $0x94] sm:$0xf]
      %v213 = vld [vmem:[%s166 + $0x98] sm:$0xf]
      %v214 = vld [vmem:[%s166 + $0x9c] sm:$0xf]
      %v215 = vld [vmem:[%s166 + $0xa0] sm:$0xf]
      %v216 = vld [vmem:[%s166 + $0xa4] sm:$0xf]
      %v217 = vld [vmem:[%s166 + $0xa8] sm:$0xf]
      %v218 = vld [vmem:[%s166 + $0xac] sm:$0xf]
      %v219 = vld [vmem:[%s166 + $0xb0] sm:$0xf]
      %v220 = vld [vmem:[%s166 + $0xb4] sm:$0xf]
      %v221 = vld [vmem:[%s166 + $0xb8] sm:$0xf]
      %v222 = vld [vmem:[%s166 + $0xbc] sm:$0xf]
      %v223 = vld [vmem:[%s166 + $0xc0] sm:$0xf]
      %v224 = vld [vmem:[%s166 + $0xc4] sm:$0xf]
      %v225 = vld [vmem:[%s166 + $0xc8] sm:$0xf]
      %v226 = vld [vmem:[%s166 + $0xcc] sm:$0xf]
      %v227 = vld [vmem:[%s166 + $0xd0] sm:$0xf]
      %v228 = vld [vmem:[%s166 + $0xd4] sm:$0xf]
      %v229 = vld [vmem:[%s166 + $0xd8] sm:$0xf]
      %v230 = vld [vmem:[%s166 + $0xdc] sm:$0xf]
      %v231 = vld [vmem:[%s166 + $0xe0] sm:$0xf]
      %v232 = vld [vmem:[%s166 + $0xe4] sm:$0xf]
      %v233 = vld [vmem:[%s166 + $0xe8] sm:$0xf]
      %v234 = vld [vmem:[%s166 + $0xec] sm:$0xf]
      %v235 = vld [vmem:[%s166 + $0xf0] sm:$0xf]
      %v236 = vld [vmem:[%s166 + $0xf4] sm:$0xf]
      %v237 = vld [vmem:[%s166 + $0xf8] sm:$0xf]
      %v238 = vld [vmem:[%s166 + $0xfc] sm:$0xf]
      %v239 = vld [vmem:[%s166 + $0x100] sm:$0xf]
      %v240 = vld [vmem:[%s166 + $0x104] sm:$0xf]
      %v241 = vld [vmem:[%s166 + $0x108] sm:$0xf]
      %v242 = vld [vmem:[%s166 + $0x10c] sm:$0xf]
      %v243 = vld [vmem:[%s166 + $0x110] sm:$0xf]
      %v244 = vld [vmem:[%s166 + $0x114] sm:$0xf]
      %v245 = vld [vmem:[%s166 + $0x118] sm:$0xf]
      %v246 = vld [vmem:[%s166 + $0x11c] sm:$0xf]
      %v247 = vld [vmem:[%s166 + $0x120] sm:$0xf]
      %v248 = vld [vmem:[%s166 + $0x124] sm:$0xf]
      %v249 = vld [vmem:[%s166 + $0x128] sm:$0xf]
      %v250 = vld [vmem:[%s166 + $0x12c] sm:$0xf]
      %v251 = vld [vmem:[%s166 + $0x130] sm:$0xf]
      %v252 = vld [vmem:[%s166 + $0x134] sm:$0xf]
      %v253 = vld [vmem:[%s166 + $0x138] sm:$0xf]
      %v254 = vld [vmem:[%s166 + $0x13c] sm:$0xf]
      %v255 = vld [vmem:[%s166 + $0x140] sm:$0xf]
      %v256 = vld [vmem:[%s166 + $0x144] sm:$0xf]
      %v257 = vld [vmem:[%s166 + $0x148] sm:$0xf]
      %v258 = vld [vmem:[%s166 + $0x14c] sm:$0xf]
      %v259 = vld [vmem:[%s166 + $0x150] sm:$0xf]
      %v260 = vld [vmem:[%s166 + $0x154] sm:$0xf]
      %v261 = vld [vmem:[%s166 + $0x158] sm:$0xf]
      %v262 = vld [vmem:[%s166 + $0x15c] sm:$0xf]
      %v263 = vld [vmem:[%s166 + $0x160] sm:$0xf]
      %v264 = vld [vmem:[%s166 + $0x164] sm:$0xf]
      %v265 = vld [vmem:[%s166 + $0x168] sm:$0xf]
      %v266 = vld [vmem:[%s166 + $0x16c] sm:$0xf]
      %v267 = vld [vmem:[%s166 + $0x170] sm:$0xf]
      %v268 = vld [vmem:[%s166 + $0x174] sm:$0xf]
      %v269 = vld [vmem:[%s166 + $0x178] sm:$0xf]
      %v270 = vld [vmem:[%s166 + $0x17c] sm:$0xf]
      %v271 = vld [vmem:[%s166 + $0x180] sm:$0xf]
      %v272 = vld [vmem:[%s166 + $0x184] sm:$0xf]
      %v273 = vld [vmem:[%s166 + $0x188] sm:$0xf]
      %v274 = vld [vmem:[%s166 + $0x18c] sm:$0xf]
      %v275 = vld [vmem:[%s166 + $0x190] sm:$0xf]
      %v276 = vld [vmem:[%s166 + $0x194] sm:$0xf]
      %v277 = vld [vmem:[%s166 + $0x198] sm:$0xf]
      %v278 = vld [vmem:[%s166 + $0x19c] sm:$0xf]
      %v279 = vld [vmem:[%s166 + $0x1a0] sm:$0xf]
      %v280 = vld [vmem:[%s166 + $0x1a4] sm:$0xf]
      %v281 = vld [vmem:[%s166 + $0x1a8] sm:$0xf]
      %v282 = vld [vmem:[%s166 + $0x1ac] sm:$0xf]
      %v283 = vld [vmem:[%s166 + $0x1b0] sm:$0xf]
      %v284 = vld [vmem:[%s166 + $0x1b4] sm:$0xf]
      %v285 = vld [vmem:[%s166 + $0x1b8] sm:$0xf]
      %v286 = vld [vmem:[%s166 + $0x1bc] sm:$0xf]
      %v287 = vld [vmem:[%s166 + $0x1c0] sm:$0xf]
      %v288 = vld [vmem:[%s166 + $0x1c4] sm:$0xf]
      %v289 = vld [vmem:[%s166 + $0x1c8] sm:$0xf]
      %v290 = vld [vmem:[%s166 + $0x1cc] sm:$0xf]
      %v291 = vld [vmem:[%s166 + $0x1d0] sm:$0xf]
      %v292 = vld [vmem:[%s166 + $0x1d4] sm:$0xf]
      %v293 = vld [vmem:[%s166 + $0x1d8] sm:$0xf]
      %v294 = vld [vmem:[%s166 + $0x1dc] sm:$0xf]
      %v295 = vld [vmem:[%s166 + $0x1e0] sm:$0xf]
      %v296 = vld [vmem:[%s166 + $0x1e4] sm:$0xf]
      %v297 = vld [vmem:[%s166 + $0x1e8] sm:$0xf]
      %v298 = vld [vmem:[%s166 + $0x1ec] sm:$0xf]
      %v299 = vld [vmem:[%s166 + $0x1f0] sm:$0xf]
      %v300 = vld [vmem:[%s166 + $0x1f4] sm:$0xf]
      %v301 = vld [vmem:[%s166 + $0x1f8] sm:$0xf]
      %v302 = vld [vmem:[%s166 + $0x1fc] sm:$0xf]
      %v303 = vld [vmem:[%s1] sm:$0xf]
      %v304 = vld [vmem:[%s1 + $0x4] sm:$0xf]
      %v305 = vld [vmem:[%s1 + $0x8] sm:$0xf]
      %v306 = vld [vmem:[%s1 + $0xc] sm:$0xf]
      %v307 = vld [vmem:[%s1 + $0x10] sm:$0xf]
      %v308 = vld [vmem:[%s1 + $0x14] sm:$0xf]
      %v309 = vld [vmem:[%s1 + $0x18] sm:$0xf]
      %v310 = vld [vmem:[%s1 + $0x1c] sm:$0xf]
      %v311 = vld [vmem:[%s1 + $0x20] sm:$0xf]
      %v312 = vld [vmem:[%s1 + $0x24] sm:$0xf]
      %v313 = vld [vmem:[%s1 + $0x28] sm:$0xf]
      %v314 = vld [vmem:[%s1 + $0x2c] sm:$0xf]
      %v315 = vld [vmem:[%s1 + $0x30] sm:$0xf]
      %v316 = vld [vmem:[%s1 + $0x34] sm:$0xf]
      %v317 = vld [vmem:[%s1 + $0x38] sm:$0xf]
      %v318 = vld [vmem:[%s1 + $0x3c] sm:$0xf]
      %v319 = vld [vmem:[%s2] sm:$0x1]
      %v321 = vlaneseq
      %v322 = vshrl.u32 %v321, 7
      %v323 = vsub.s32 0, %v322
      %v324 = vrot.slane %v319, %v323
      %v454 = vunpack.c.l.b16 %v175
      %v455 = vunpack.c.l.b16 %v176
      %v456 = vunpack.c.l.b16 %v177
      %v457 = vunpack.c.l.b16 %v178
      %v458 = vunpack.c.l.b16 %v179
      %v459 = vunpack.c.l.b16 %v180
      %v460 = vunpack.c.l.b16 %v181
      %v461 = vunpack.c.l.b16 %v182
      %v462 = vunpack.c.l.b16 %v183
      %v463 = vunpack.c.l.b16 %v184
      %v464 = vunpack.c.l.b16 %v185
      %v465 = vunpack.c.l.b16 %v186
      %v466 = vunpack.c.l.b16 %v187
      %v467 = vunpack.c.l.b16 %v188
      %v468 = vunpack.c.l.b16 %v189
      %v469 = vunpack.c.l.b16 %v190
      %v470 = vunpack.c.l.b16 %v191
      %v471 = vunpack.c.l.b16 %v192
      %v472 = vunpack.c.l.b16 %v193
      %v473 = vunpack.c.l.b16 %v194
      %v474 = vunpack.c.l.b16 %v195
      %v475 = vunpack.c.l.b16 %v196
      %v476 = vunpack.c.l.b16 %v197
      %v477 = vunpack.c.l.b16 %v198
      %v478 = vunpack.c.l.b16 %v199
      %v479 = vunpack.c.l.b16 %v200
      %v480 = vunpack.c.l.b16 %v201
      %v481 = vunpack.c.l.b16 %v202
      %v482 = vunpack.c.l.b16 %v203
      %v483 = vunpack.c.l.b16 %v204
      %v484 = vunpack.c.l.b16 %v205
      %v485 = vunpack.c.l.b16 %v206
      %v486 = vunpack.c.l.b16 %v207
      %v487 = vunpack.c.l.b16 %v208
      %v488 = vunpack.c.l.b16 %v209
      %v489 = vunpack.c.l.b16 %v210
      %v490 = vunpack.c.l.b16 %v211
      %v491 = vunpack.c.l.b16 %v212
      %v492 = vunpack.c.l.b16 %v213
      %v493 = vunpack.c.l.b16 %v214
      %v494 = vunpack.c.l.b16 %v215
      %v495 = vunpack.c.l.b16 %v216
      %v496 = vunpack.c.l.b16 %v217
      %v497 = vunpack.c.l.b16 %v218
      %v498 = vunpack.c.l.b16 %v219
      %v499 = vunpack.c.l.b16 %v220
      %v500 = vunpack.c.l.b16 %v221
      %v501 = vunpack.c.l.b16 %v222
      %v502 = vunpack.c.l.b16 %v223
      %v503 = vunpack.c.l.b16 %v224
      %v504 = vunpack.c.l.b16 %v225
      %v505 = vunpack.c.l.b16 %v226
      %v506 = vunpack.c.l.b16 %v227
      %v507 = vunpack.c.l.b16 %v228
      %v508 = vunpack.c.l.b16 %v229
      %v509 = vunpack.c.l.b16 %v230
      %v510 = vunpack.c.l.b16 %v231
      %v511 = vunpack.c.l.b16 %v232
      %v512 = vunpack.c.l.b16 %v233
      %v513 = vunpack.c.l.b16 %v234
      %v514 = vunpack.c.l.b16 %v235
      %v515 = vunpack.c.l.b16 %v236
      %v516 = vunpack.c.l.b16 %v237
      %v517 = vunpack.c.l.b16 %v238
      %v518 = vunpack.c.l.b16 %v239
      %v519 = vunpack.c.l.b16 %v240
      %v520 = vunpack.c.l.b16 %v241
      %v521 = vunpack.c.l.b16 %v242
      %v522 = vunpack.c.l.b16 %v243
      %v523 = vunpack.c.l.b16 %v244
      %v524 = vunpack.c.l.b16 %v245
      %v525 = vunpack.c.l.b16 %v246
      %v526 = vunpack.c.l.b16 %v247
      %v527 = vunpack.c.l.b16 %v248
      %v528 = vunpack.c.l.b16 %v249
      %v529 = vunpack.c.l.b16 %v250
      %v530 = vunpack.c.l.b16 %v251
      %v531 = vunpack.c.l.b16 %v252
      %v532 = vunpack.c.l.b16 %v253
      %v533 = vunpack.c.l.b16 %v254
      %v534 = vunpack.c.l.b16 %v255
      %v535 = vunpack.c.l.b16 %v256
      %v536 = vunpack.c.l.b16 %v257
      %v537 = vunpack.c.l.b16 %v258
      %v538 = vunpack.c.l.b16 %v259
      %v539 = vunpack.c.l.b16 %v260
      %v540 = vunpack.c.l.b16 %v261
      %v541 = vunpack.c.l.b16 %v262
      %v542 = vunpack.c.l.b16 %v263
      %v543 = vunpack.c.l.b16 %v264
      %v544 = vunpack.c.l.b16 %v265
      %v545 = vunpack.c.l.b16 %v266
      %v546 = vunpack.c.l.b16 %v267
      %v547 = vunpack.c.l.b16 %v268
      %v548 = vunpack.c.l.b16 %v269
      %v549 = vunpack.c.l.b16 %v270
      %v550 = vunpack.c.l.b16 %v271
      %v551 = vunpack.c.l.b16 %v272
      %v552 = vunpack.c.l.b16 %v273
      %v553 = vunpack.c.l.b16 %v274
      %v554 = vunpack.c.l.b16 %v275
      %v555 = vunpack.c.l.b16 %v276
      %v556 = vunpack.c.l.b16 %v277
      %v557 = vunpack.c.l.b16 %v278
      %v558 = vunpack.c.l.b16 %v279
      %v559 = vunpack.c.l.b16 %v280
      %v560 = vunpack.c.l.b16 %v281
      %v561 = vunpack.c.l.b16 %v282
      %v562 = vunpack.c.l.b16 %v283
      %v563 = vunpack.c.l.b16 %v284
      %v564 = vunpack.c.l.b16 %v285
      %v565 = vunpack.c.l.b16 %v286
      %v566 = vunpack.c.l.b16 %v287
      %v567 = vunpack.c.l.b16 %v288
      %v568 = vunpack.c.l.b16 %v289
      %v569 = vunpack.c.l.b16 %v290
      %v570 = vunpack.c.l.b16 %v291
      %v571 = vunpack.c.l.b16 %v292
      %v572 = vunpack.c.l.b16 %v293
      %v573 = vunpack.c.l.b16 %v294
      %v574 = vunpack.c.l.b16 %v295
      %v575 = vunpack.c.l.b16 %v296
      %v576 = vunpack.c.l.b16 %v297
      %v577 = vunpack.c.l.b16 %v298
      %v578 = vunpack.c.l.b16 %v299
      %v579 = vunpack.c.l.b16 %v300
      %v580 = vunpack.c.l.b16 %v301
      %v581 = vunpack.c.l.b16 %v302
      %v582 = vpack.c.b16 %v455, %v454
      %v583 = vpack.c.b16 %v457, %v456
      %v584 = vpack.c.b16 %v459, %v458
      %v585 = vpack.c.b16 %v461, %v460
      %v586 = vpack.c.b16 %v463, %v462
      %v587 = vpack.c.b16 %v465, %v464
      %v588 = vpack.c.b16 %v467, %v466
      %v589 = vpack.c.b16 %v469, %v468
      %v590 = vpack.c.b16 %v471, %v470
      %v591 = vpack.c.b16 %v473, %v472
      %v592 = vpack.c.b16 %v475, %v474
      %v593 = vpack.c.b16 %v477, %v476
      %v594 = vpack.c.b16 %v479, %v478
      %v595 = vpack.c.b16 %v481, %v480
      %v596 = vpack.c.b16 %v483, %v482
      %v597 = vpack.c.b16 %v485, %v484
      %v598 = vpack.c.b16 %v487, %v486
      %v599 = vpack.c.b16 %v489, %v488
      %v600 = vpack.c.b16 %v491, %v490
      %v601 = vpack.c.b16 %v493, %v492
      %v602 = vpack.c.b16 %v495, %v494
      %v603 = vpack.c.b16 %v497, %v496
      %v604 = vpack.c.b16 %v499, %v498
      %v605 = vpack.c.b16 %v501, %v500
      %v606 = vpack.c.b16 %v503, %v502
      %v607 = vpack.c.b16 %v505, %v504
      %v608 = vpack.c.b16 %v507, %v506
      %v609 = vpack.c.b16 %v509, %v508
      %v610 = vpack.c.b16 %v511, %v510
      %v611 = vpack.c.b16 %v513, %v512
      %v612 = vpack.c.b16 %v515, %v514
      %v613 = vpack.c.b16 %v517, %v516
      %v614 = vpack.c.b16 %v519, %v518
      %v615 = vpack.c.b16 %v521, %v520
      %v616 = vpack.c.b16 %v523, %v522
      %v617 = vpack.c.b16 %v525, %v524
      %v618 = vpack.c.b16 %v527, %v526
      %v619 = vpack.c.b16 %v529, %v528
      %v620 = vpack.c.b16 %v531, %v530
      %v621 = vpack.c.b16 %v533, %v532
      %v622 = vpack.c.b16 %v535, %v534
      %v623 = vpack.c.b16 %v537, %v536
      %v624 = vpack.c.b16 %v539, %v538
      %v625 = vpack.c.b16 %v541, %v540
      %v626 = vpack.c.b16 %v543, %v542
      %v627 = vpack.c.b16 %v545, %v544
      %v628 = vpack.c.b16 %v547, %v546
      %v629 = vpack.c.b16 %v549, %v548
      %v630 = vpack.c.b16 %v551, %v550
      %v631 = vpack.c.b16 %v553, %v552
      %v632 = vpack.c.b16 %v555, %v554
      %v633 = vpack.c.b16 %v557, %v556
      %v634 = vpack.c.b16 %v559, %v558
      %v635 = vpack.c.b16 %v561, %v560
      %v636 = vpack.c.b16 %v563, %v562
      %v637 = vpack.c.b16 %v565, %v564
      %v638 = vpack.c.b16 %v567, %v566
      %v639 = vpack.c.b16 %v569, %v568
      %v640 = vpack.c.b16 %v571, %v570
      %v641 = vpack.c.b16 %v573, %v572
      %v642 = vpack.c.b16 %v575, %v574
      %v643 = vpack.c.b16 %v577, %v576
      %v644 = vpack.c.b16 %v579, %v578
      %v645 = vpack.c.b16 %v581, %v580
      %v726 = vunpack.c.l.b16 %v303
      %v727 = vunpack.c.l.b16 %v304
      %v728 = vunpack.c.l.b16 %v305
      %v729 = vunpack.c.l.b16 %v306
      %v730 = vunpack.c.l.b16 %v307
      %v731 = vunpack.c.l.b16 %v308
      %v732 = vunpack.c.l.b16 %v309
      %v733 = vunpack.c.l.b16 %v310
      %v734 = vunpack.c.l.b16 %v311
      %v735 = vunpack.c.l.b16 %v312
      %v736 = vunpack.c.l.b16 %v313
      %v737 = vunpack.c.l.b16 %v314
      %v738 = vunpack.c.l.b16 %v315
      %v739 = vunpack.c.l.b16 %v316
      %v740 = vunpack.c.l.b16 %v317
      %v741 = vunpack.c.l.b16 %v318
      %v742 = vpack.c.b16 %v727, %v726
      %v743 = vpack.c.b16 %v729, %v728
      %v744 = vpack.c.b16 %v731, %v730
      %v745 = vpack.c.b16 %v733, %v732
      %v746 = vpack.c.b16 %v735, %v734
      %v747 = vpack.c.b16 %v737, %v736
      %v748 = vpack.c.b16 %v739, %v738
      %v749 = vpack.c.b16 %v741, %v740
      %758 = vmatprep.subr.bf16.mxu0 0
      %759 = vmatpush1.bf16.msra.mxu0 %v742
      %760 = vmatprep.subr.bf16.mxu0 0
      %761 = vmatpush1.bf16.msra.mxu0 %v743
      %762 = vmatprep.subr.bf16.mxu0 0
      %763 = vmatpush1.bf16.msra.mxu0 %v744
      %764 = vmatprep.subr.bf16.mxu0 0
      %765 = vmatpush1.bf16.msra.mxu0 %v745
      %766 = vmatprep.subr.bf16.mxu0 0
      %767 = vmatpush1.bf16.msra.mxu0 %v746
      %768 = vmatprep.subr.bf16.mxu0 0
      %769 = vmatpush1.bf16.msra.mxu0 %v747
      %770 = vmatprep.subr.bf16.mxu0 0
      %771 = vmatpush1.bf16.msra.mxu0 %v748
      %772 = vmatprep.subr.bf16.mxu0 0
      %773 = vmatpush1.bf16.msra.mxu0 %v749
      %774 = vmatprep.subr.bf16.mxu0 0
      %775 = vmatpush1.bf16.msra.mxu0 0
      %776 = vmatprep.subr.bf16.mxu0 0
      %777 = vmatpush1.bf16.msra.mxu0 0
      %778 = vmatprep.subr.bf16.mxu0 0
      %779 = vmatpush1.bf16.msra.mxu0 0
      %780 = vmatprep.subr.bf16.mxu0 0
      %781 = vmatpush1.bf16.msra.mxu0 0
      %782 = vmatprep.subr.bf16.mxu0 0
      %783 = vmatpush1.bf16.msra.mxu0 0
      %784 = vmatprep.subr.bf16.mxu0 0
      %785 = vmatpush1.bf16.msra.mxu0 0
      %786 = vmatprep.subr.bf16.mxu0 0
      %787 = vmatpush1.bf16.msra.mxu0 0
      %788 = vmatprep.subr.bf16.mxu0 0
      %789 = vmatpush1.bf16.msra.mxu0 0
      %790 = vmatprep.mubr.bf16.mxu0 0
      %791 = vmatmul.mubr.bf16.gmra.mrb[0].mxu0 %v582
      %v792 = vpop.f32.mrb[0].mxu0
      %v793 = vadd.f32 %v324, %v792
      %v794 = vpop.f32.mrb[0].mxu0
      %v795 = vpop.f32.mrb[0].mxu0
      %v796 = vadd.f32 %v324, %v795
      %v797 = vpop.f32.mrb[0].mxu0
      %798 = vmatprep.mubr.bf16.mxu0 0
      %799 = vmatmul.mubr.bf16.gmra.mrb[0].mxu0 %v583
      %v800 = vpop.f32.mrb[0].mxu0
      %v801 = vadd.f32 %v324, %v800
      %v802 = vpop.f32.mrb[0].mxu0
      %v803 = vpop.f32.mrb[0].mxu0
      %v804 = vadd.f32 %v324, %v803
      %v805 = vpop.f32.mrb[0].mxu0
      %806 = vmatprep.mubr.bf16.mxu0 0
      %807 = vmatmul.mubr.bf16.gmra.mrb[0].mxu0 %v584
      %v808 = vpop.f32.mrb[0].mxu0
      %v809 = vadd.f32 %v324, %v808
      %v810 = vpop.f32.mrb[0].mxu0
      %v811 = vpop.f32.mrb[0].mxu0
      %v812 = vadd.f32 %v324, %v811
      %v813 = vpop.f32.mrb[0].mxu0
      %814 = vmatprep.mubr.bf16.mxu0 0
      %815 = vmatmul.mubr.bf16.gmra.mrb[0].mxu0 %v585
      %v816 = vpop.f32.mrb[0].mxu0
      %v817 = vadd.f32 %v324, %v816
      %v818 = vpop.f32.mrb[0].mxu0
      %v819 = vpop.f32.mrb[0].mxu0
      %v820 = vadd.f32 %v324, %v819
      %v821 = vpop.f32.mrb[0].mxu0
      %822 = vmatprep.mubr.bf16.mxu0 0
      %823 = vmatmul.mubr.bf16.gmra.mrb[0].mxu0 %v586
      %v824 = vpop.f32.mrb[0].mxu0
      %v825 = vadd.f32 %v324, %v824
      %v826 = vpop.f32.mrb[0].mxu0
      %v827 = vpop.f32.mrb[0].mxu0
      %v828 = vadd.f32 %v324, %v827
      %v829 = vpop.f32.mrb[0].mxu0
      %830 = vmatprep.mubr.bf16.mxu0 0
      %831 = vmatmul.mubr.bf16.gmra.mrb[0].mxu0 %v587
      %v832 = vpop.f32.mrb[0].mxu0
      %v833 = vadd.f32 %v324, %v832
      %v834 = vpop.f32.mrb[0].mxu0
      %v835 = vpop.f32.mrb[0].mxu0
      %v836 = vadd.f32 %v324, %v835
      %v837 = vpop.f32.mrb[0].mxu0
      %838 = vmatprep.mubr.bf16.mxu0 0
      %839 = vmatmul.mubr.bf16.gmra.mrb[0].mxu0 %v588
      %v840 = vpop.f32.mrb[0].mxu0
      %v841 = vadd.f32 %v324, %v840
      %v842 = vpop.f32.mrb[0].mxu0
      %v843 = vpop.f32.mrb[0].mxu0
      %v844 = vadd.f32 %v324, %v843
      %v845 = vpop.f32.mrb[0].mxu0
      %846 = vmatprep.mubr.bf16.mxu0 0
      %847 = vmatmul.mubr.bf16.gmra.mrb[0].mxu0 %v589
      %v848 = vpop.f32.mrb[0].mxu0
      %v849 = vadd.f32 %v324, %v848
      %v850 = vpop.f32.mrb[0].mxu0
      %v851 = vpop.f32.mrb[0].mxu0
      %v852 = vadd.f32 %v324, %v851
      %v853 = vpop.f32.mrb[0].mxu0
      %854 = vmatprep.mubr.bf16.mxu0 0
      %855 = vmatmul.mubr.bf16.gmra.mrb[0].mxu0 %v590
      %v856 = vpop.f32.mrb[0].mxu0
      %v857 = vadd.f32 %v324, %v856
      %v858 = vpop.f32.mrb[0].mxu0
      %v859 = vpop.f32.mrb[0].mxu0
      %v860 = vadd.f32 %v324, %v859
      %v861 = vpop.f32.mrb[0].mxu0
      %862 = vmatprep.mubr.bf16.mxu0 0
      %863 = vmatmul.mubr.bf16.gmra.mrb[0].mxu0 %v591
      %v864 = vpop.f32.mrb[0].mxu0
      %v865 = vadd.f32 %v324, %v864
      %v866 = vpop.f32.mrb[0].mxu0
      %v867 = vpop.f32.mrb[0].mxu0
      %v868 = vadd.f32 %v324, %v867
      %v869 = vpop.f32.mrb[0].mxu0
      %870 = vmatprep.mubr.bf16.mxu0 0
      %871 = vmatmul.mubr.bf16.gmra.mrb[0].mxu0 %v592
      %v872 = vpop.f32.mrb[0].mxu0
      %v873 = vadd.f32 %v324, %v872
      %v874 = vpop.f32.mrb[0].mxu0
      %v875 = vpop.f32.mrb[0].mxu0
      %v876 = vadd.f32 %v324, %v875
      %v877 = vpop.f32.mrb[0].mxu0
      %878 = vmatprep.mubr.bf16.mxu0 0
      %879 = vmatmul.mubr.bf16.gmra.mrb[0].mxu0 %v593
      %v880 = vpop.f32.mrb[0].mxu0
      %v881 = vadd.f32 %v324, %v880
      %v882 = vpop.f32.mrb[0].mxu0
      %v883 = vpop.f32.mrb[0].mxu0
      %v884 = vadd.f32 %v324, %v883
      %v885 = vpop.f32.mrb[0].mxu0
      %886 = vmatprep.mubr.bf16.mxu0 0
      %887 = vmatmul.mubr.bf16.gmra.mrb[0].mxu0 %v594
      %v888 = vpop.f32.mrb[0].mxu0
      %v889 = vadd.f32 %v324, %v888
      %v890 = vpop.f32.mrb[0].mxu0
      %v891 = vpop.f32.mrb[0].mxu0
      %v892 = vadd.f32 %v324, %v891
      %v893 = vpop.f32.mrb[0].mxu0
      %894 = vmatprep.mubr.bf16.mxu0 0
      %895 = vmatmul.mubr.bf16.gmra.mrb[0].mxu0 %v595
      %v896 = vpop.f32.mrb[0].mxu0
      %v897 = vadd.f32 %v324, %v896
      %v898 = vpop.f32.mrb[0].mxu0
      %v899 = vpop.f32.mrb[0].mxu0
      %v900 = vadd.f32 %v324, %v899
      %v901 = vpop.f32.mrb[0].mxu0
      %902 = vmatprep.mubr.bf16.mxu0 0
      %903 = vmatmul.mubr.bf16.gmra.mrb[0].mxu0 %v596
      %v904 = vpop.f32.mrb[0].mxu0
      %v905 = vadd.f32 %v324, %v904
      %v906 = vpop.f32.mrb[0].mxu0
      %v907 = vpop.f32.mrb[0].mxu0
      %v908 = vadd.f32 %v324, %v907
      %v909 = vpop.f32.mrb[0].mxu0
      %910 = vmatprep.mubr.bf16.mxu0 0
      %911 = vmatmul.mubr.bf16.gmra.mrb[0].mxu0 %v597
      %v912 = vpop.f32.mrb[0].mxu0
      %v913 = vadd.f32 %v324, %v912
      %v914 = vpop.f32.mrb[0].mxu0
      %v915 = vpop.f32.mrb[0].mxu0
      %v916 = vadd.f32 %v324, %v915
      %v917 = vpop.f32.mrb[0].mxu0
      %918 = vmatprep.mubr.bf16.mxu0 0
      %919 = vmatmul.mubr.bf16.gmra.mrb[0].mxu0 %v598
      %v920 = vpop.f32.mrb[0].mxu0
      %v921 = vadd.f32 %v324, %v920
      %v922 = vpop.f32.mrb[0].mxu0
      %v923 = vpop.f32.mrb[0].mxu0
      %v924 = vadd.f32 %v324, %v923
      %v925 = vpop.f32.mrb[0].mxu0
      %926 = vmatprep.mubr.bf16.mxu0 0
      %927 = vmatmul.mubr.bf16.gmra.mrb[0].mxu0 %v599
      %v928 = vpop.f32.mrb[0].mxu0
      %v929 = vadd.f32 %v324, %v928
      %v930 = vpop.f32.mrb[0].mxu0
      %v931 = vpop.f32.mrb[0].mxu0
      %v932 = vadd.f32 %v324, %v931
      %v933 = vpop.f32.mrb[0].mxu0
      %934 = vmatprep.mubr.bf16.mxu0 0
      %935 = vmatmul.mubr.bf16.gmra.mrb[0].mxu0 %v600
      %v936 = vpop.f32.mrb[0].mxu0
      %v937 = vadd.f32 %v324, %v936
      %v938 = vpop.f32.mrb[0].mxu0
      %v939 = vpop.f32.mrb[0].mxu0
      %v940 = vadd.f32 %v324, %v939
      %v941 = vpop.f32.mrb[0].mxu0
      %942 = vmatprep.mubr.bf16.mxu0 0
      %943 = vmatmul.mubr.bf16.gmra.mrb[0].mxu0 %v601
      %v944 = vpop.f32.mrb[0].mxu0
      %v945 = vadd.f32 %v324, %v944
      %v946 = vpop.f32.mrb[0].mxu0
      %v947 = vpop.f32.mrb[0].mxu0
      %v948 = vadd.f32 %v324, %v947
      %v949 = vpop.f32.mrb[0].mxu0
      %950 = vmatprep.mubr.bf16.mxu0 0
      %951 = vmatmul.mubr.bf16.gmra.mrb[0].mxu0 %v602
      %v952 = vpop.f32.mrb[0].mxu0
      %v953 = vadd.f32 %v324, %v952
      %v954 = vpop.f32.mrb[0].mxu0
      %v955 = vpop.f32.mrb[0].mxu0
      %v956 = vadd.f32 %v324, %v955
      %v957 = vpop.f32.mrb[0].mxu0
      %958 = vmatprep.mubr.bf16.mxu0 0
      %959 = vmatmul.mubr.bf16.gmra.mrb[0].mxu0 %v603
      %v960 = vpop.f32.mrb[0].mxu0
      %v961 = vadd.f32 %v324, %v960
      %v962 = vpop.f32.mrb[0].mxu0
      %v963 = vpop.f32.mrb[0].mxu0
      %v964 = vadd.f32 %v324, %v963
      %v965 = vpop.f32.mrb[0].mxu0
      %966 = vmatprep.mubr.bf16.mxu0 0
      %967 = vmatmul.mubr.bf16.gmra.mrb[0].mxu0 %v604
      %v968 = vpop.f32.mrb[0].mxu0
      %v969 = vadd.f32 %v324, %v968
      %v970 = vpop.f32.mrb[0].mxu0
      %v971 = vpop.f32.mrb[0].mxu0
      %v972 = vadd.f32 %v324, %v971
      %v973 = vpop.f32.mrb[0].mxu0
      %974 = vmatprep.mubr.bf16.mxu0 0
      %975 = vmatmul.mubr.bf16.gmra.mrb[0].mxu0 %v605
      %v976 = vpop.f32.mrb[0].mxu0
      %v977 = vadd.f32 %v324, %v976
      %v978 = vpop.f32.mrb[0].mxu0
      %v979 = vpop.f32.mrb[0].mxu0
      %v980 = vadd.f32 %v324, %v979
      %v981 = vpop.f32.mrb[0].mxu0
      %982 = vmatprep.mubr.bf16.mxu0 0
      %983 = vmatmul.mubr.bf16.gmra.mrb[0].mxu0 %v606
      %v984 = vpop.f32.mrb[0].mxu0
      %v985 = vadd.f32 %v324, %v984
      %v986 = vpop.f32.mrb[0].mxu0
      %v987 = vpop.f32.mrb[0].mxu0
      %v988 = vadd.f32 %v324, %v987
      %v989 = vpop.f32.mrb[0].mxu0
      %990 = vmatprep.mubr.bf16.mxu0 0
      %991 = vmatmul.mubr.bf16.gmra.mrb[0].mxu0 %v607
      %v992 = vpop.f32.mrb[0].mxu0
      %v993 = vadd.f32 %v324, %v992
      %v994 = vpop.f32.mrb[0].mxu0
      %v995 = vpop.f32.mrb[0].mxu0
      %v996 = vadd.f32 %v324, %v995
      %v997 = vpop.f32.mrb[0].mxu0
      %998 = vmatprep.mubr.bf16.mxu0 0
      %999 = vmatmul.mubr.bf16.gmra.mrb[0].mxu0 %v608
      %v1000 = vpop.f32.mrb[0].mxu0
      %v1001 = vadd.f32 %v324, %v1000
      %v1002 = vpop.f32.mrb[0].mxu0
      %v1003 = vpop.f32.mrb[0].mxu0
      %v1004 = vadd.f32 %v324, %v1003
      %v1005 = vpop.f32.mrb[0].mxu0
      %1006 = vmatprep.mubr.bf16.mxu0 0
      %1007 = vmatmul.mubr.bf16.gmra.mrb[0].mxu0 %v609
      %v1008 = vpop.f32.mrb[0].mxu0
      %v1009 = vadd.f32 %v324, %v1008
      %v1010 = vpop.f32.mrb[0].mxu0
      %v1011 = vpop.f32.mrb[0].mxu0
      %v1012 = vadd.f32 %v324, %v1011
      %v1013 = vpop.f32.mrb[0].mxu0
      %1014 = vmatprep.mubr.bf16.mxu0 0
      %1015 = vmatmul.mubr.bf16.gmra.mrb[0].mxu0 %v610
      %v1016 = vpop.f32.mrb[0].mxu0
      %v1017 = vadd.f32 %v324, %v1016
      %v1018 = vpop.f32.mrb[0].mxu0
      %v1019 = vpop.f32.mrb[0].mxu0
      %v1020 = vadd.f32 %v324, %v1019
      %v1021 = vpop.f32.mrb[0].mxu0
      %1022 = vmatprep.mubr.bf16.mxu0 0
      %1023 = vmatmul.mubr.bf16.gmra.mrb[0].mxu0 %v611
      %v1024 = vpop.f32.mrb[0].mxu0
      %v1025 = vadd.f32 %v324, %v1024
      %v1026 = vpop.f32.mrb[0].mxu0
      %v1027 = vpop.f32.mrb[0].mxu0
      %v1028 = vadd.f32 %v324, %v1027
      %v1029 = vpop.f32.mrb[0].mxu0
      %1030 = vmatprep.mubr.bf16.mxu0 0
      %1031 = vmatmul.mubr.bf16.gmra.mrb[0].mxu0 %v612
      %v1032 = vpop.f32.mrb[0].mxu0
      %v1033 = vadd.f32 %v324, %v1032
      %v1034 = vpop.f32.mrb[0].mxu0
      %v1035 = vpop.f32.mrb[0].mxu0
      %v1036 = vadd.f32 %v324, %v1035
      %v1037 = vpop.f32.mrb[0].mxu0
      %1038 = vmatprep.mubr.bf16.mxu0 0
      %1039 = vmatmul.mubr.bf16.gmra.mrb[0].mxu0 %v613
      %v1040 = vpop.f32.mrb[0].mxu0
      %v1041 = vadd.f32 %v324, %v1040
      %v1042 = vpop.f32.mrb[0].mxu0
      %v1043 = vpop.f32.mrb[0].mxu0
      %v1044 = vadd.f32 %v324, %v1043
      %v1045 = vpop.f32.mrb[0].mxu0
      %1046 = vmatprep.mubr.bf16.mxu0 0
      %1047 = vmatmul.mubr.bf16.gmra.mrb[0].mxu0 %v614
      %v1048 = vpop.f32.mrb[0].mxu0
      %v1049 = vadd.f32 %v324, %v1048
      %v1050 = vpop.f32.mrb[0].mxu0
      %v1051 = vpop.f32.mrb[0].mxu0
      %v1052 = vadd.f32 %v324, %v1051
      %v1053 = vpop.f32.mrb[0].mxu0
      %1054 = vmatprep.mubr.bf16.mxu0 0
      %1055 = vmatmul.mubr.bf16.gmra.mrb[0].mxu0 %v615
      %v1056 = vpop.f32.mrb[0].mxu0
      %v1057 = vadd.f32 %v324, %v1056
      %v1058 = vpop.f32.mrb[0].mxu0
      %v1059 = vpop.f32.mrb[0].mxu0
      %v1060 = vadd.f32 %v324, %v1059
      %v1061 = vpop.f32.mrb[0].mxu0
      %1062 = vmatprep.mubr.bf16.mxu0 0
      %1063 = vmatmul.mubr.bf16.gmra.mrb[0].mxu0 %v616
      %v1064 = vpop.f32.mrb[0].mxu0
      %v1065 = vadd.f32 %v324, %v1064
      %v1066 = vpop.f32.mrb[0].mxu0
      %v1067 = vpop.f32.mrb[0].mxu0
      %v1068 = vadd.f32 %v324, %v1067
      %v1069 = vpop.f32.mrb[0].mxu0
      %1070 = vmatprep.mubr.bf16.mxu0 0
      %1071 = vmatmul.mubr.bf16.gmra.mrb[0].mxu0 %v617
      %v1072 = vpop.f32.mrb[0].mxu0
      %v1073 = vadd.f32 %v324, %v1072
      %v1074 = vpop.f32.mrb[0].mxu0
      %v1075 = vpop.f32.mrb[0].mxu0
      %v1076 = vadd.f32 %v324, %v1075
      %v1077 = vpop.f32.mrb[0].mxu0
      %1078 = vmatprep.mubr.bf16.mxu0 0
      %1079 = vmatmul.mubr.bf16.gmra.mrb[0].mxu0 %v618
      %v1080 = vpop.f32.mrb[0].mxu0
      %v1081 = vadd.f32 %v324, %v1080
      %v1082 = vpop.f32.mrb[0].mxu0
      %v1083 = vpop.f32.mrb[0].mxu0
      %v1084 = vadd.f32 %v324, %v1083
      %v1085 = vpop.f32.mrb[0].mxu0
      %1086 = vmatprep.mubr.bf16.mxu0 0
      %1087 = vmatmul.mubr.bf16.gmra.mrb[0].mxu0 %v619
      %v1088 = vpop.f32.mrb[0].mxu0
      %v1089 = vadd.f32 %v324, %v1088
      %v1090 = vpop.f32.mrb[0].mxu0
      %v1091 = vpop.f32.mrb[0].mxu0
      %v1092 = vadd.f32 %v324, %v1091
      %v1093 = vpop.f32.mrb[0].mxu0
      %1094 = vmatprep.mubr.bf16.mxu0 0
      %1095 = vmatmul.mubr.bf16.gmra.mrb[0].mxu0 %v620
      %v1096 = vpop.f32.mrb[0].mxu0
      %v1097 = vadd.f32 %v324, %v1096
      %v1098 = vpop.f32.mrb[0].mxu0
      %v1099 = vpop.f32.mrb[0].mxu0
      %v1100 = vadd.f32 %v324, %v1099
      %v1101 = vpop.f32.mrb[0].mxu0
      %1102 = vmatprep.mubr.bf16.mxu0 0
      %1103 = vmatmul.mubr.bf16.gmra.mrb[0].mxu0 %v621
      %v1104 = vpop.f32.mrb[0].mxu0
      %v1105 = vadd.f32 %v324, %v1104
      %v1106 = vpop.f32.mrb[0].mxu0
      %v1107 = vpop.f32.mrb[0].mxu0
      %v1108 = vadd.f32 %v324, %v1107
      %v1109 = vpop.f32.mrb[0].mxu0
      %1110 = vmatprep.mubr.bf16.mxu0 0
      %1111 = vmatmul.mubr.bf16.gmra.mrb[0].mxu0 %v622
      %v1112 = vpop.f32.mrb[0].mxu0
      %v1113 = vadd.f32 %v324, %v1112
      %v1114 = vpop.f32.mrb[0].mxu0
      %v1115 = vpop.f32.mrb[0].mxu0
      %v1116 = vadd.f32 %v324, %v1115
      %v1117 = vpop.f32.mrb[0].mxu0
      %1118 = vmatprep.mubr.bf16.mxu0 0
      %1119 = vmatmul.mubr.bf16.gmra.mrb[0].mxu0 %v623
      %v1120 = vpop.f32.mrb[0].mxu0
      %v1121 = vadd.f32 %v324, %v1120
      %v1122 = vpop.f32.mrb[0].mxu0
      %v1123 = vpop.f32.mrb[0].mxu0
      %v1124 = vadd.f32 %v324, %v1123
      %v1125 = vpop.f32.mrb[0].mxu0
      %1126 = vmatprep.mubr.bf16.mxu0 0
      %1127 = vmatmul.mubr.bf16.gmra.mrb[0].mxu0 %v624
      %v1128 = vpop.f32.mrb[0].mxu0
      %v1129 = vadd.f32 %v324, %v1128
      %v1130 = vpop.f32.mrb[0].mxu0
      %v1131 = vpop.f32.mrb[0].mxu0
      %v1132 = vadd.f32 %v324, %v1131
      %v1133 = vpop.f32.mrb[0].mxu0
      %1134 = vmatprep.mubr.bf16.mxu0 0
      %1135 = vmatmul.mubr.bf16.gmra.mrb[0].mxu0 %v625
      %v1136 = vpop.f32.mrb[0].mxu0
      %v1137 = vadd.f32 %v324, %v1136
      %v1138 = vpop.f32.mrb[0].mxu0
      %v1139 = vpop.f32.mrb[0].mxu0
      %v1140 = vadd.f32 %v324, %v1139
      %v1141 = vpop.f32.mrb[0].mxu0
      %1142 = vmatprep.mubr.bf16.mxu0 0
      %1143 = vmatmul.mubr.bf16.gmra.mrb[0].mxu0 %v626
      %v1144 = vpop.f32.mrb[0].mxu0
      %v1145 = vadd.f32 %v324, %v1144
      %v1146 = vpop.f32.mrb[0].mxu0
      %v1147 = vpop.f32.mrb[0].mxu0
      %v1148 = vadd.f32 %v324, %v1147
      %v1149 = vpop.f32.mrb[0].mxu0
      %1150 = vmatprep.mubr.bf16.mxu0 0
      %1151 = vmatmul.mubr.bf16.gmra.mrb[0].mxu0 %v627
      %v1152 = vpop.f32.mrb[0].mxu0
      %v1153 = vadd.f32 %v324, %v1152
      %v1154 = vpop.f32.mrb[0].mxu0
      %v1155 = vpop.f32.mrb[0].mxu0
      %v1156 = vadd.f32 %v324, %v1155
      %v1157 = vpop.f32.mrb[0].mxu0
      %1158 = vmatprep.mubr.bf16.mxu0 0
      %1159 = vmatmul.mubr.bf16.gmra.mrb[0].mxu0 %v628
      %v1160 = vpop.f32.mrb[0].mxu0
      %v1161 = vadd.f32 %v324, %v1160
      %v1162 = vpop.f32.mrb[0].mxu0
      %v1163 = vpop.f32.mrb[0].mxu0
      %v1164 = vadd.f32 %v324, %v1163
      %v1165 = vpop.f32.mrb[0].mxu0
      %1166 = vmatprep.mubr.bf16.mxu0 0
      %1167 = vmatmul.mubr.bf16.gmra.mrb[0].mxu0 %v629
      %v1168 = vpop.f32.mrb[0].mxu0
      %v1169 = vadd.f32 %v324, %v1168
      %v1170 = vpop.f32.mrb[0].mxu0
      %v1171 = vpop.f32.mrb[0].mxu0
      %v1172 = vadd.f32 %v324, %v1171
      %v1173 = vpop.f32.mrb[0].mxu0
      %1174 = vmatprep.mubr.bf16.mxu0 0
      %1175 = vmatmul.mubr.bf16.gmra.mrb[0].mxu0 %v630
      %v1176 = vpop.f32.mrb[0].mxu0
      %v1177 = vadd.f32 %v324, %v1176
      %v1178 = vpop.f32.mrb[0].mxu0
      %v1179 = vpop.f32.mrb[0].mxu0
      %v1180 = vadd.f32 %v324, %v1179
      %v1181 = vpop.f32.mrb[0].mxu0
      %1182 = vmatprep.mubr.bf16.mxu0 0
      %1183 = vmatmul.mubr.bf16.gmra.mrb[0].mxu0 %v631
      %v1184 = vpop.f32.mrb[0].mxu0
      %v1185 = vadd.f32 %v324, %v1184
      %v1186 = vpop.f32.mrb[0].mxu0
      %v1187 = vpop.f32.mrb[0].mxu0
      %v1188 = vadd.f32 %v324, %v1187
      %v1189 = vpop.f32.mrb[0].mxu0
      %1190 = vmatprep.mubr.bf16.mxu0 0
      %1191 = vmatmul.mubr.bf16.gmra.mrb[0].mxu0 %v632
      %v1192 = vpop.f32.mrb[0].mxu0
      %v1193 = vadd.f32 %v324, %v1192
      %v1194 = vpop.f32.mrb[0].mxu0
      %v1195 = vpop.f32.mrb[0].mxu0
      %v1196 = vadd.f32 %v324, %v1195
      %v1197 = vpop.f32.mrb[0].mxu0
      %1198 = vmatprep.mubr.bf16.mxu0 0
      %1199 = vmatmul.mubr.bf16.gmra.mrb[0].mxu0 %v633
      %v1200 = vpop.f32.mrb[0].mxu0
      %v1201 = vadd.f32 %v324, %v1200
      %v1202 = vpop.f32.mrb[0].mxu0
      %v1203 = vpop.f32.mrb[0].mxu0
      %v1204 = vadd.f32 %v324, %v1203
      %v1205 = vpop.f32.mrb[0].mxu0
      %1206 = vmatprep.mubr.bf16.mxu0 0
      %1207 = vmatmul.mubr.bf16.gmra.mrb[0].mxu0 %v634
      %v1208 = vpop.f32.mrb[0].mxu0
      %v1209 = vadd.f32 %v324, %v1208
      %v1210 = vpop.f32.mrb[0].mxu0
      %v1211 = vpop.f32.mrb[0].mxu0
      %v1212 = vadd.f32 %v324, %v1211
      %v1213 = vpop.f32.mrb[0].mxu0
      %1214 = vmatprep.mubr.bf16.mxu0 0
      %1215 = vmatmul.mubr.bf16.gmra.mrb[0].mxu0 %v635
      %v1216 = vpop.f32.mrb[0].mxu0
      %v1217 = vadd.f32 %v324, %v1216
      %v1218 = vpop.f32.mrb[0].mxu0
      %v1219 = vpop.f32.mrb[0].mxu0
      %v1220 = vadd.f32 %v324, %v1219
      %v1221 = vpop.f32.mrb[0].mxu0
      %1222 = vmatprep.mubr.bf16.mxu0 0
      %1223 = vmatmul.mubr.bf16.gmra.mrb[0].mxu0 %v636
      %v1224 = vpop.f32.mrb[0].mxu0
      %v1225 = vadd.f32 %v324, %v1224
      %v1226 = vpop.f32.mrb[0].mxu0
      %v1227 = vpop.f32.mrb[0].mxu0
      %v1228 = vadd.f32 %v324, %v1227
      %v1229 = vpop.f32.mrb[0].mxu0
      %1230 = vmatprep.mubr.bf16.mxu0 0
      %1231 = vmatmul.mubr.bf16.gmra.mrb[0].mxu0 %v637
      %v1232 = vpop.f32.mrb[0].mxu0
      %v1233 = vadd.f32 %v324, %v1232
      %v1234 = vpop.f32.mrb[0].mxu0
      %v1235 = vpop.f32.mrb[0].mxu0
      %v1236 = vadd.f32 %v324, %v1235
      %v1237 = vpop.f32.mrb[0].mxu0
      %1238 = vmatprep.mubr.bf16.mxu0 0
      %1239 = vmatmul.mubr.bf16.gmra.mrb[0].mxu0 %v638
      %v1240 = vpop.f32.mrb[0].mxu0
      %v1241 = vadd.f32 %v324, %v1240
      %v1242 = vpop.f32.mrb[0].mxu0
      %v1243 = vpop.f32.mrb[0].mxu0
      %v1244 = vadd.f32 %v324, %v1243
      %v1245 = vpop.f32.mrb[0].mxu0
      %1246 = vmatprep.mubr.bf16.mxu0 0
      %1247 = vmatmul.mubr.bf16.gmra.mrb[0].mxu0 %v639
      %v1248 = vpop.f32.mrb[0].mxu0
      %v1249 = vadd.f32 %v324, %v1248
      %v1250 = vpop.f32.mrb[0].mxu0
      %v1251 = vpop.f32.mrb[0].mxu0
      %v1252 = vadd.f32 %v324, %v1251
      %v1253 = vpop.f32.mrb[0].mxu0
      %1254 = vmatprep.mubr.bf16.mxu0 0
      %1255 = vmatmul.mubr.bf16.gmra.mrb[0].mxu0 %v640
      %v1256 = vpop.f32.mrb[0].mxu0
      %v1257 = vadd.f32 %v324, %v1256
      %v1258 = vpop.f32.mrb[0].mxu0
      %v1259 = vpop.f32.mrb[0].mxu0
      %v1260 = vadd.f32 %v324, %v1259
      %v1261 = vpop.f32.mrb[0].mxu0
      %1262 = vmatprep.mubr.bf16.mxu0 0
      %1263 = vmatmul.mubr.bf16.gmra.mrb[0].mxu0 %v641
      %v1264 = vpop.f32.mrb[0].mxu0
      %v1265 = vadd.f32 %v324, %v1264
      %v1266 = vpop.f32.mrb[0].mxu0
      %v1267 = vpop.f32.mrb[0].mxu0
      %v1268 = vadd.f32 %v324, %v1267
      %v1269 = vpop.f32.mrb[0].mxu0
      %1270 = vmatprep.mubr.bf16.mxu0 0
      %1271 = vmatmul.mubr.bf16.gmra.mrb[0].mxu0 %v642
      %v1272 = vpop.f32.mrb[0].mxu0
      %v1273 = vadd.f32 %v324, %v1272
      %v1274 = vpop.f32.mrb[0].mxu0
      %v1275 = vpop.f32.mrb[0].mxu0
      %v1276 = vadd.f32 %v324, %v1275
      %v1277 = vpop.f32.mrb[0].mxu0
      %1278 = vmatprep.mubr.bf16.mxu0 0
      %1279 = vmatmul.mubr.bf16.gmra.mrb[0].mxu0 %v643
      %v1280 = vpop.f32.mrb[0].mxu0
      %v1281 = vadd.f32 %v324, %v1280
      %v1282 = vpop.f32.mrb[0].mxu0
      %v1283 = vpop.f32.mrb[0].mxu0
      %v1284 = vadd.f32 %v324, %v1283
      %v1285 = vpop.f32.mrb[0].mxu0
      %1286 = vmatprep.mubr.bf16.mxu0 0
      %1287 = vmatmul.mubr.bf16.gmra.mrb[0].mxu0 %v644
      %v1288 = vpop.f32.mrb[0].mxu0
      %v1289 = vadd.f32 %v324, %v1288
      %v1290 = vpop.f32.mrb[0].mxu0
      %v1291 = vpop.f32.mrb[0].mxu0
      %v1292 = vadd.f32 %v324, %v1291
      %v1293 = vpop.f32.mrb[0].mxu0
      %1294 = vmatprep.mubr.bf16.mxu0 0
      %1295 = vmatmul.mubr.bf16.gmra.mrb[0].mxu0 %v645
      %v1296 = vpop.f32.mrb[0].mxu0
      %v1297 = vadd.f32 %v324, %v1296
      %v1298 = vpop.f32.mrb[0].mxu0
      %v1299 = vpop.f32.mrb[0].mxu0
      %v1300 = vadd.f32 %v324, %v1299
      %v1301 = vpop.f32.mrb[0].mxu0
      %1302 = vdwg.mxu0
      %v1303 = vtanh.pop %v793
      %v1304 = vtanh.pop %v796
      %v1305 = vtanh.pop %v801
      %v1306 = vtanh.pop %v804
      %v1307 = vtanh.pop %v809
      %v1308 = vtanh.pop %v812
      %v1309 = vtanh.pop %v817
      %v1310 = vtanh.pop %v820
      %v1311 = vtanh.pop %v825
      %v1312 = vtanh.pop %v828
      %v1313 = vtanh.pop %v833
      %v1314 = vtanh.pop %v836
      %v1315 = vtanh.pop %v841
      %v1316 = vtanh.pop %v844
      %v1317 = vtanh.pop %v849
      %v1318 = vtanh.pop %v852
      %v1319 = vtanh.pop %v857
      %v1320 = vtanh.pop %v860
      %v1321 = vtanh.pop %v865
      %v1322 = vtanh.pop %v868
      %v1323 = vtanh.pop %v873
      %v1324 = vtanh.pop %v876
      %v1325 = vtanh.pop %v881
      %v1326 = vtanh.pop %v884
      %v1327 = vtanh.pop %v889
      %v1328 = vtanh.pop %v892
      %v1329 = vtanh.pop %v897
      %v1330 = vtanh.pop %v900
      %v1331 = vtanh.pop %v905
      %v1332 = vtanh.pop %v908
      %v1333 = vtanh.pop %v913
      %v1334 = vtanh.pop %v916
      %v1335 = vtanh.pop %v921
      %v1336 = vtanh.pop %v924
      %v1337 = vtanh.pop %v929
      %v1338 = vtanh.pop %v932
      %v1339 = vtanh.pop %v937
      %v1340 = vtanh.pop %v940
      %v1341 = vtanh.pop %v945
      %v1342 = vtanh.pop %v948
      %v1343 = vtanh.pop %v953
      %v1344 = vtanh.pop %v956
      %v1345 = vtanh.pop %v961
      %v1346 = vtanh.pop %v964
      %v1347 = vtanh.pop %v969
      %v1348 = vtanh.pop %v972
      %v1349 = vtanh.pop %v977
      %v1350 = vtanh.pop %v980
      %v1351 = vtanh.pop %v985
      %v1352 = vtanh.pop %v988
      %v1353 = vtanh.pop %v993
      %v1354 = vtanh.pop %v996
      %v1355 = vtanh.pop %v1001
      %v1356 = vtanh.pop %v1004
      %v1357 = vtanh.pop %v1009
      %v1358 = vtanh.pop %v1012
      %v1359 = vtanh.pop %v1017
      %v1360 = vtanh.pop %v1020
      %v1361 = vtanh.pop %v1025
      %v1362 = vtanh.pop %v1028
      %v1363 = vtanh.pop %v1033
      %v1364 = vtanh.pop %v1036
      %v1365 = vtanh.pop %v1041
      %v1366 = vtanh.pop %v1044
      %v1367 = vtanh.pop %v1049
      %v1368 = vtanh.pop %v1052
      %v1369 = vtanh.pop %v1057
      %v1370 = vtanh.pop %v1060
      %v1371 = vtanh.pop %v1065
      %v1372 = vtanh.pop %v1068
      %v1373 = vtanh.pop %v1073
      %v1374 = vtanh.pop %v1076
      %v1375 = vtanh.pop %v1081
      %v1376 = vtanh.pop %v1084
      %v1377 = vtanh.pop %v1089
      %v1378 = vtanh.pop %v1092
      %v1379 = vtanh.pop %v1097
      %v1380 = vtanh.pop %v1100
      %v1381 = vtanh.pop %v1105
      %v1382 = vtanh.pop %v1108
      %v1383 = vtanh.pop %v1113
      %v1384 = vtanh.pop %v1116
      %v1385 = vtanh.pop %v1121
      %v1386 = vtanh.pop %v1124
      %v1387 = vtanh.pop %v1129
      %v1388 = vtanh.pop %v1132
      %v1389 = vtanh.pop %v1137
      %v1390 = vtanh.pop %v1140
      %v1391 = vtanh.pop %v1145
      %v1392 = vtanh.pop %v1148
      %v1393 = vtanh.pop %v1153
      %v1394 = vtanh.pop %v1156
      %v1395 = vtanh.pop %v1161
      %v1396 = vtanh.pop %v1164
      %v1397 = vtanh.pop %v1169
      %v1398 = vtanh.pop %v1172
      %v1399 = vtanh.pop %v1177
      %v1400 = vtanh.pop %v1180
      %v1401 = vtanh.pop %v1185
      %v1402 = vtanh.pop %v1188
      %v1403 = vtanh.pop %v1193
      %v1404 = vtanh.pop %v1196
      %v1405 = vtanh.pop %v1201
      %v1406 = vtanh.pop %v1204
      %v1407 = vtanh.pop %v1209
      %v1408 = vtanh.pop %v1212
      %v1409 = vtanh.pop %v1217
      %v1410 = vtanh.pop %v1220
      %v1411 = vtanh.pop %v1225
      %v1412 = vtanh.pop %v1228
      %v1413 = vtanh.pop %v1233
      %v1414 = vtanh.pop %v1236
      %v1415 = vtanh.pop %v1241
      %v1416 = vtanh.pop %v1244
      %v1417 = vtanh.pop %v1249
      %v1418 = vtanh.pop %v1252
      %v1419 = vtanh.pop %v1257
      %v1420 = vtanh.pop %v1260
      %v1421 = vtanh.pop %v1265
      %v1422 = vtanh.pop %v1268
      %v1423 = vtanh.pop %v1273
      %v1424 = vtanh.pop %v1276
      %v1425 = vtanh.pop %v1281
      %v1426 = vtanh.pop %v1284
      %v1427 = vtanh.pop %v1289
      %v1428 = vtanh.pop %v1292
      %v1429 = vtanh.pop %v1297
      %v1430 = vtanh.pop %v1300
      %1431 = vst [vmem:[%s172] sm:$0xff] %v1303
      %1432 = vst [vmem:[%s172 + $0x8] sm:$0xff] %v1304
      %1433 = vst [vmem:[%s172 + $0x10] sm:$0xff] %v1305
      %1434 = vst [vmem:[%s172 + $0x18] sm:$0xff] %v1306
      %1435 = vst [vmem:[%s172 + $0x20] sm:$0xff] %v1307
      %1436 = vst [vmem:[%s172 + $0x28] sm:$0xff] %v1308
      %1437 = vst [vmem:[%s172 + $0x30] sm:$0xff] %v1309
      %1438 = vst [vmem:[%s172 + $0x38] sm:$0xff] %v1310
      %1439 = vst [vmem:[%s172 + $0x40] sm:$0xff] %v1311
      %1440 = vst [vmem:[%s172 + $0x48] sm:$0xff] %v1312
      %1441 = vst [vmem:[%s172 + $0x50] sm:$0xff] %v1313
      %1442 = vst [vmem:[%s172 + $0x58] sm:$0xff] %v1314
      %1443 = vst [vmem:[%s172 + $0x60] sm:$0xff] %v1315
      %1444 = vst [vmem:[%s172 + $0x68] sm:$0xff] %v1316
      %1445 = vst [vmem:[%s172 + $0x70] sm:$0xff] %v1317
      %1446 = vst [vmem:[%s172 + $0x78] sm:$0xff] %v1318
      %1447 = vst [vmem:[%s172 + $0x80] sm:$0xff] %v1319
      %1448 = vst [vmem:[%s172 + $0x88] sm:$0xff] %v1320
      %1449 = vst [vmem:[%s172 + $0x90] sm:$0xff] %v1321
      %1450 = vst [vmem:[%s172 + $0x98] sm:$0xff] %v1322
      %1451 = vst [vmem:[%s172 + $0xa0] sm:$0xff] %v1323
      %1452 = vst [vmem:[%s172 + $0xa8] sm:$0xff] %v1324
      %1453 = vst [vmem:[%s172 + $0xb0] sm:$0xff] %v1325
      %1454 = vst [vmem:[%s172 + $0xb8] sm:$0xff] %v1326
      %1455 = vst [vmem:[%s172 + $0xc0] sm:$0xff] %v1327
      %1456 = vst [vmem:[%s172 + $0xc8] sm:$0xff] %v1328
      %1457 = vst [vmem:[%s172 + $0xd0] sm:$0xff] %v1329
      %1458 = vst [vmem:[%s172 + $0xd8] sm:$0xff] %v1330
      %1459 = vst [vmem:[%s172 + $0xe0] sm:$0xff] %v1331
      %1460 = vst [vmem:[%s172 + $0xe8] sm:$0xff] %v1332
      %1461 = vst [vmem:[%s172 + $0xf0] sm:$0xff] %v1333
      %1462 = vst [vmem:[%s172 + $0xf8] sm:$0xff] %v1334
      %1463 = vst [vmem:[%s172 + $0x100] sm:$0xff] %v1335
      %1464 = vst [vmem:[%s172 + $0x108] sm:$0xff] %v1336
      %1465 = vst [vmem:[%s172 + $0x110] sm:$0xff] %v1337
      %1466 = vst [vmem:[%s172 + $0x118] sm:$0xff] %v1338
      %1467 = vst [vmem:[%s172 + $0x120] sm:$0xff] %v1339
      %1468 = vst [vmem:[%s172 + $0x128] sm:$0xff] %v1340
      %1469 = vst [vmem:[%s172 + $0x130] sm:$0xff] %v1341
      %1470 = vst [vmem:[%s172 + $0x138] sm:$0xff] %v1342
      %1471 = vst [vmem:[%s172 + $0x140] sm:$0xff] %v1343
      %1472 = vst [vmem:[%s172 + $0x148] sm:$0xff] %v1344
      %1473 = vst [vmem:[%s172 + $0x150] sm:$0xff] %v1345
      %1474 = vst [vmem:[%s172 + $0x158] sm:$0xff] %v1346
      %1475 = vst [vmem:[%s172 + $0x160] sm:$0xff] %v1347
      %1476 = vst [vmem:[%s172 + $0x168] sm:$0xff] %v1348
      %1477 = vst [vmem:[%s172 + $0x170] sm:$0xff] %v1349
      %1478 = vst [vmem:[%s172 + $0x178] sm:$0xff] %v1350
      %1479 = vst [vmem:[%s172 + $0x180] sm:$0xff] %v1351
      %1480 = vst [vmem:[%s172 + $0x188] sm:$0xff] %v1352
      %1481 = vst [vmem:[%s172 + $0x190] sm:$0xff] %v1353
      %1482 = vst [vmem:[%s172 + $0x198] sm:$0xff] %v1354
      %1483 = vst [vmem:[%s172 + $0x1a0] sm:$0xff] %v1355
      %1484 = vst [vmem:[%s172 + $0x1a8] sm:$0xff] %v1356
      %1485 = vst [vmem:[%s172 + $0x1b0] sm:$0xff] %v1357
      %1486 = vst [vmem:[%s172 + $0x1b8] sm:$0xff] %v1358
      %1487 = vst [vmem:[%s172 + $0x1c0] sm:$0xff] %v1359
      %1488 = vst [vmem:[%s172 + $0x1c8] sm:$0xff] %v1360
      %1489 = vst [vmem:[%s172 + $0x1d0] sm:$0xff] %v1361
      %1490 = vst [vmem:[%s172 + $0x1d8] sm:$0xff] %v1362
      %1491 = vst [vmem:[%s172 + $0x1e0] sm:$0xff] %v1363
      %1492 = vst [vmem:[%s172 + $0x1e8] sm:$0xff] %v1364
      %1493 = vst [vmem:[%s172 + $0x1f0] sm:$0xff] %v1365
      %1494 = vst [vmem:[%s172 + $0x1f8] sm:$0xff] %v1366
      %1495 = vst [vmem:[%s172 + $0x200] sm:$0xff] %v1367
      %1496 = vst [vmem:[%s172 + $0x208] sm:$0xff] %v1368
      %1497 = vst [vmem:[%s172 + $0x210] sm:$0xff] %v1369
      %1498 = vst [vmem:[%s172 + $0x218] sm:$0xff] %v1370
      %1499 = vst [vmem:[%s172 + $0x220] sm:$0xff] %v1371
      %1500 = vst [vmem:[%s172 + $0x228] sm:$0xff] %v1372
      %1501 = vst [vmem:[%s172 + $0x230] sm:$0xff] %v1373
      %1502 = vst [vmem:[%s172 + $0x238] sm:$0xff] %v1374
      %1503 = vst [vmem:[%s172 + $0x240] sm:$0xff] %v1375
      %1504 = vst [vmem:[%s172 + $0x248] sm:$0xff] %v1376
      %1505 = vst [vmem:[%s172 + $0x250] sm:$0xff] %v1377
      %1506 = vst [vmem:[%s172 + $0x258] sm:$0xff] %v1378
      %1507 = vst [vmem:[%s172 + $0x260] sm:$0xff] %v1379
      %1508 = vst [vmem:[%s172 + $0x268] sm:$0xff] %v1380
      %1509 = vst [vmem:[%s172 + $0x270] sm:$0xff] %v1381
      %1510 = vst [vmem:[%s172 + $0x278] sm:$0xff] %v1382
      %1511 = vst [vmem:[%s172 + $0x280] sm:$0xff] %v1383
      %1512 = vst [vmem:[%s172 + $0x288] sm:$0xff] %v1384
      %1513 = vst [vmem:[%s172 + $0x290] sm:$0xff] %v1385
      %1514 = vst [vmem:[%s172 + $0x298] sm:$0xff] %v1386
      %1515 = vst [vmem:[%s172 + $0x2a0] sm:$0xff] %v1387
      %1516 = vst [vmem:[%s172 + $0x2a8] sm:$0xff] %v1388
      %1517 = vst [vmem:[%s172 + $0x2b0] sm:$0xff] %v1389
      %1518 = vst [vmem:[%s172 + $0x2b8] sm:$0xff] %v1390
      %1519 = vst [vmem:[%s172 + $0x2c0] sm:$0xff] %v1391
      %1520 = vst [vmem:[%s172 + $0x2c8] sm:$0xff] %v1392
      %1521 = vst [vmem:[%s172 + $0x2d0] sm:$0xff] %v1393
      %1522 = vst [vmem:[%s172 + $0x2d8] sm:$0xff] %v1394
      %1523 = vst [vmem:[%s172 + $0x2e0] sm:$0xff] %v1395
      %1524 = vst [vmem:[%s172 + $0x2e8] sm:$0xff] %v1396
      %1525 = vst [vmem:[%s172 + $0x2f0] sm:$0xff] %v1397
      %1526 = vst [vmem:[%s172 + $0x2f8] sm:$0xff] %v1398
      %1527 = vst [vmem:[%s172 + $0x300] sm:$0xff] %v1399
      %1528 = vst [vmem:[%s172 + $0x308] sm:$0xff] %v1400
      %1529 = vst [vmem:[%s172 + $0x310] sm:$0xff] %v1401
      %1530 = vst [vmem:[%s172 + $0x318] sm:$0xff] %v1402
      %1531 = vst [vmem:[%s172 + $0x320] sm:$0xff] %v1403
      %1532 = vst [vmem:[%s172 + $0x328] sm:$0xff] %v1404
      %1533 = vst [vmem:[%s172 + $0x330] sm:$0xff] %v1405
      %1534 = vst [vmem:[%s172 + $0x338] sm:$0xff] %v1406
      %1535 = vst [vmem:[%s172 + $0x340] sm:$0xff] %v1407
      %1536 = vst [vmem:[%s172 + $0x348] sm:$0xff] %v1408
      %1537 = vst [vmem:[%s172 + $0x350] sm:$0xff] %v1409
      %1538 = vst [vmem:[%s172 + $0x358] sm:$0xff] %v1410
      %1539 = vst [vmem:[%s172 + $0x360] sm:$0xff] %v1411
      %1540 = vst [vmem:[%s172 + $0x368] sm:$0xff] %v1412
      %1541 = vst [vmem:[%s172 + $0x370] sm:$0xff] %v1413
      %1542 = vst [vmem:[%s172 + $0x378] sm:$0xff] %v1414
      %1543 = vst [vmem:[%s172 + $0x380] sm:$0xff] %v1415
      %1544 = vst [vmem:[%s172 + $0x388] sm:$0xff] %v1416
      %1545 = vst [vmem:[%s172 + $0x390] sm:$0xff] %v1417
      %1546 = vst [vmem:[%s172 + $0x398] sm:$0xff] %v1418
      %1547 = vst [vmem:[%s172 + $0x3a0] sm:$0xff] %v1419
      %1548 = vst [vmem:[%s172 + $0x3a8] sm:$0xff] %v1420
      %1549 = vst [vmem:[%s172 + $0x3b0] sm:$0xff] %v1421
      %1550 = vst [vmem:[%s172 + $0x3b8] sm:$0xff] %v1422
      %1551 = vst [vmem:[%s172 + $0x3c0] sm:$0xff] %v1423
      %1552 = vst [vmem:[%s172 + $0x3c8] sm:$0xff] %v1424
      %1553 = vst [vmem:[%s172 + $0x3d0] sm:$0xff] %v1425
      %1554 = vst [vmem:[%s172 + $0x3d8] sm:$0xff] %v1426
      %1555 = vst [vmem:[%s172 + $0x3e0] sm:$0xff] %v1427
      %1556 = vst [vmem:[%s172 + $0x3e8] sm:$0xff] %v1428
      %1557 = vst [vmem:[%s172 + $0x3f0] sm:$0xff] %v1429
      %1558 = vst [vmem:[%s172 + $0x3f8] sm:$0xff] %v1430
      %s1559 = smul.u32 128, %s14
      %p1560 = scmp.lt.s32.totalorder %s1559, 3199
      %s1561 = scalar_select %p1560, %s1559, 3199
      %s1562 = smul.addr %s1561, 8
      %s1563 = scalar_lea.vmem %s3, %s1562
      // Predicated region
      $region33: #{generator_forward.13} parent=31 // pred_check
        %p1564 = pneg %p100
      $region34: #{generator_forward.13} parent=31 // pred_check_branch
        %1566 = sbr.rel (%p1564) target = $region36
      $region35: #{generator_forward.13} parent=31 // pred_region
        %s1567 = smul.u32 128, %s14
      $region36: #{generator_forward.13} parent=31 // pred_fallthru
        _
    $region32: #{generator_forward.13} parent=5 // pred_fallthru
      _
    %p1568 = scmp.le.s32.totalorder 2, %s9
    // Predicated region
    $region37: #{generator_forward.13} parent=5 // pred_check
      %p1569 = pneg %p1568
    $region38: #{generator_forward.13} parent=5 // pred_check_branch
      %1571 = sbr.rel (%p1569) target = $region40
    $region39: #{generator_forward.13} parent=5 // pred_region
      %s1572 = ssub.s32 %s9, 2
      // Predicated region
      $region41: #{generator_forward.13} parent=39 // pred_check
        %p1573 = pneg %p106
      $region42: #{generator_forward.13} parent=39 // pred_check_branch
        %1575 = sbr.rel (%p1573) target = $region44
      $region43: #{generator_forward.13} parent=39 // pred_region
        %s1576 = smul.u32 128, %s15
        %p1577 = scmp.lt.s32.totalorder %s1576, 3199
        %s1578 = scalar_select %p1577, %s1576, 3199
        %s1579 = smul.addr %s1578, 8
        %s1580 = scalar_lea.vmem %s3, %s1579
      $region44: #{generator_forward.13} parent=39 // pred_fallthru
        _
    $region40: #{generator_forward.13} parent=5 // pred_fallthru
      _
  $region6: #{generator_forward.13} parent=0 // loop_footer
    %s13 = sadd.s32 1, %s9
  $region7: #{generator_forward.13} parent=0 // loop_footer_branch
    %8 = sbr.rel target = $region3
  $region8: #{generator_forward.13} parent=0 // loop_exit
    _

</llo_original>
